<compile_context>
chip_gen: v6e
topology: v6e:2x2x1
jax: 0.10.0
libtpu: 0.0.40
codegen_flags: <defaults>
</compile_context>

<pallas_src>
import math
import functools

import jax
import jax.numpy as jnp
from jax.experimental import pallas as pl
from jax.experimental.pallas import tpu as pltpu


_NEG_INF = -1e9


# ----------------------------------------------------------------------------
# BlockSpec helpers
# ----------------------------------------------------------------------------

def _const_spec(shape):
    """Whole-array block, same block for every grid step (stays VMEM-resident)."""
    zeros = (0,) * len(shape)
    return pl.BlockSpec(tuple(shape), lambda l: zeros)


def _layer_spec(per_layer_shape):
    """Stacked-per-layer array: pick slice `l` along the (squeezed) layer axis."""
    zeros = (0,) * len(per_layer_shape)
    return pl.BlockSpec((None,) + tuple(per_layer_shape),
                        lambda l: (l,) + zeros)


# ----------------------------------------------------------------------------
# In-kernel building blocks (traced only inside Pallas kernel bodies)
# ----------------------------------------------------------------------------

def _layernorm(x, gamma, beta, eps):
    """Annotated-transformer LayerNorm: unbiased std, eps added to std."""
    d = x.shape[-1]
    mean = jnp.mean(x, axis=-1, keepdims=True)
    diff = x - mean
    var = jnp.sum(diff * diff, axis=-1, keepdims=True) * (1.0 / (d - 1))
    inv = pl.reciprocal(jnp.sqrt(var) + eps, approx=True)
    return gamma * diff * inv + beta


def _mha(q, k, v, amask, B, Lq, Lk, H):
    """All-heads attention, batched over H*B.

    q: (B*Lq, H*dk)   k, v: (B*Lk, H*dk)   amask: additive mask, (B,1,Lk) or
    (B,Lq,Lk).  The 1/sqrt(dk) scale is already folded into the Q weights.
    Returns ctx: (B*Lq, H*dk) with heads concatenated along lanes.
    """
    D = q.shape[-1]
    dk = D // H
    bf = jnp.bfloat16

    # Head-major (H*B, L, dk) stacks via lane slices + leading-dim concat.
    qh = jnp.concatenate(
        [q[:, h * dk:(h + 1) * dk].reshape(B, Lq, dk) for h in range(H)], axis=0)
    kh = jnp.concatenate(
        [k[:, h * dk:(h + 1) * dk].reshape(B, Lk, dk) for h in range(H)], axis=0)
    vh = jnp.concatenate(
        [v[:, h * dk:(h + 1) * dk].reshape(B, Lk, dk) for h in range(H)], axis=0)

    # One batched matmul for all heads' scores.
    s = jnp.einsum('bqd,bkd->bqk', qh.astype(bf), kh.astype(bf),
                   preferred_element_type=jnp.float32)          # (H*B, Lq, Lk)
    # Additive mask, broadcast over heads (and query rows) on-chip.
    s = s.reshape(H, B, Lq, Lk) + amask
    s = s.reshape(H * B, Lq, Lk)

    s = s - jnp.max(s, axis=-1, keepdims=True)                  # stable softmax
    p = jnp.exp(s)
    p = p * pl.reciprocal(jnp.sum(p, axis=-1, keepdims=True), approx=True)

    ctx = jnp.einsum('bqk,bkd->bqd', p.astype(bf), vh.astype(bf),
                     preferred_element_type=jnp.float32)        # (H*B, Lq, dk)

    # Merge heads back to lane-dense (B*Lq, D).
    heads = [ctx[h * B:(h + 1) * B].reshape(B * Lq, dk) for h in range(H)]
    return jnp.concatenate(heads, axis=-1)


# ----------------------------------------------------------------------------
# Fused Pallas kernels
# ----------------------------------------------------------------------------

def _encoder_kernel(x_ref, amask_ref,
                    wqkv_ref, bqkv_ref, wo_ref, bo_ref, ln1g_ref, ln1b_ref,
                    w1_ref, b1_ref, w2_ref, b2_ref, ln2g_ref, ln2b_ref,
                    lnfg_ref, lnfb_ref,
                    o_ref, *, B, L, H, eps):
    l = pl.program_id(0)
    D = o_ref.shape[-1]
    bf = jnp.bfloat16

    @pl.when(l == 0)
    def _():
        o_ref[...] = x_ref[...]          # residual stream stays in VMEM output

    x = o_ref[...]
    amask = amask_ref[...]

    # --- self-attention sublayer: x += Wo(MHA(LN(x))) ---
    y = _layernorm(x, ln1g_ref[...], ln1b_ref[...], eps)
    qkv = jnp.dot(y.astype(bf), wqkv_ref[...],
                  preferred_element_type=jnp.float32) + bqkv_ref[...]
    ctx = _mha(qkv[:, :D], qkv[:, D:2 * D], qkv[:, 2 * D:], amask, B, L, L, H)
    x = x + jnp.dot(ctx.astype(bf), wo_ref[...],
                    preferred_element_type=jnp.float32) + bo_ref[...]

    # --- feed-forward sublayer: x += W2(relu(W1(LN(x)))) ---
    y = _layernorm(x, ln2g_ref[...], ln2b_ref[...], eps)
    h1 = jnp.dot(y.astype(bf), w1_ref[...],
                 preferred_element_type=jnp.float32) + b1_ref[...]
    h1 = jnp.maximum(h1, 0.0)
    x = x + jnp.dot(h1.astype(bf), w2_ref[...],
                    preferred_element_type=jnp.float32) + b2_ref[...]

    o_ref[...] = x

    @pl.when(l == pl.num_programs(0) - 1)
    def _():
        o_ref[...] = _layernorm(x, lnfg_ref[...], lnfb_ref[...], eps)


def _decoder_kernel(x_ref, mem_ref, self_amask_ref, cross_amask_ref,
                    wqkv_ref, bqkv_ref, wo1_ref, bo1_ref, ln1g_ref, ln1b_ref,
                    wq_ref, bq_ref, wkv_ref, bkv_ref, wo2_ref, bo2_ref,
                    ln2g_ref, ln2b_ref,
                    w1_ref, b1_ref, w2_ref, b2_ref, ln3g_ref, ln3b_ref,
                    o_ref, *, B, Lq, Lk, H, eps):
    l = pl.program_id(0)
    D = o_ref.shape[-1]
    bf = jnp.bfloat16

    @pl.when(l == 0)
    def _():
        o_ref[...] = x_ref[...]

    x = o_ref[...]

    # --- masked self-attention ---
    y = _layernorm(x, ln1g_ref[...], ln1b_ref[...], eps)
    qkv = jnp.dot(y.astype(bf), wqkv_ref[...],
                  preferred_element_type=jnp.float32) + bqkv_ref[...]
    ctx = _mha(qkv[:, :D], qkv[:, D:2 * D], qkv[:, 2 * D:],
               self_amask_ref[...], B, Lq, Lq, H)
    x = x + jnp.dot(ctx.astype(bf), wo1_ref[...],
                    preferred_element_type=jnp.float32) + bo1_ref[...]

    # --- cross-attention over encoder memory (memory is bf16 in VMEM) ---
    y = _layernorm(x, ln2g_ref[...], ln2b_ref[...], eps)
    q = jnp.dot(y.astype(bf), wq_ref[...],
                preferred_element_type=jnp.float32) + bq_ref[...]
    kv = jnp.dot(mem_ref[...], wkv_ref[...],
                 preferred_element_type=jnp.float32) + bkv_ref[...]
    ctx = _mha(q, kv[:, :D], kv[:, D:], cross_amask_ref[...], B, Lq, Lk, H)
    x = x + jnp.dot(ctx.astype(bf), wo2_ref[...],
                    preferred_element_type=jnp.float32) + bo2_ref[...]

    # --- feed-forward ---
    y = _layernorm(x, ln3g_ref[...], ln3b_ref[...], eps)
    h1 = jnp.dot(y.astype(bf), w1_ref[...],
                 preferred_element_type=jnp.float32) + b1_ref[...]
    h1 = jnp.maximum(h1, 0.0)
    x = x + jnp.dot(h1.astype(bf), w2_ref[...],
                    preferred_element_type=jnp.float32) + b2_ref[...]

    o_ref[...] = x


def _generator_kernel(x_ref, g_ref, b_ref, w_ref, bias_ref, o_ref, *, eps):
    """Final decoder LayerNorm + vocab projection + exact log_softmax.

    Vocab is padded to a lane-dense width; padded columns carry bias -1e9, so
    they do not perturb the log_softmax over the real vocabulary.
    """
    y = _layernorm(x_ref[...], g_ref[...], b_ref[...], eps)
    logits = jnp.dot(y.astype(jnp.bfloat16), w_ref[...],
                     preferred_element_type=jnp.float32) + bias_ref[...]
    m = jnp.max(logits, axis=-1, keepdims=True)
    s = logits - m
    o_ref[...] = s - jnp.log(jnp.sum(jnp.exp(s), axis=-1, keepdims=True))


# ----------------------------------------------------------------------------
# pallas_call wrappers
# ----------------------------------------------------------------------------

_ARBITRARY = pltpu.CompilerParams(dimension_semantics=("arbitrary",))


def encoder_forward(x2d, amask, stk, lnf, *, B, L, H, eps=1e-6):
    M, D = x2d.shape
    n_layers = stk['wqkv'].shape[0]
    keys = ('wqkv', 'bqkv', 'wo', 'bo', 'ln1g', 'ln1b',
            'w1', 'b1', 'w2', 'b2', 'ln2g', 'ln2b')
    args = [x2d, amask] + [stk[k] for k in keys] + [lnf[0], lnf[1]]
    specs = ([_const_spec(x2d.shape), _const_spec(amask.shape)]
             + [_layer_spec(stk[k].shape[1:]) for k in keys]
             + [_const_spec(lnf[0].shape), _const_spec(lnf[1].shape)])
    return pl.pallas_call(
        functools.partial(_encoder_kernel, B=B, L=L, H=H, eps=eps),
        out_shape=jax.ShapeDtypeStruct((M, D), jnp.float32),
        grid=(n_layers,),
        in_specs=specs,
        out_specs=_const_spec((M, D)),
        compiler_params=_ARBITRARY,
    )(*args)


def decoder_forward(x2d, mem2d, self_amask, cross_amask, stk,
                    *, B, Lq, Lk, H, eps=1e-6):
    M, D = x2d.shape
    n_layers = stk['wqkv'].shape[0]
    keys = ('wqkv', 'bqkv', 'wo1', 'bo1', 'ln1g', 'ln1b',
            'wq', 'bq', 'wkv', 'bkv', 'wo2', 'bo2', 'ln2g', 'ln2b',
            'w1', 'b1', 'w2', 'b2', 'ln3g', 'ln3b')
    args = ([x2d, mem2d, self_amask, cross_amask] + [stk[k] for k in keys])
    specs = ([_const_spec(x2d.shape), _const_spec(mem2d.shape),
              _const_spec(self_amask.shape), _const_spec(cross_amask.shape)]
             + [_layer_spec(stk[k].shape[1:]) for k in keys])
    return pl.pallas_call(
        functools.partial(_decoder_kernel, B=B, Lq=Lq, Lk=Lk, H=H, eps=eps),
        out_shape=jax.ShapeDtypeStruct((M, D), jnp.float32),
        grid=(n_layers,),
        in_specs=specs,
        out_specs=_const_spec((M, D)),
        compiler_params=_ARBITRARY,
    )(*args)


def generator_forward(x2d, gamma, beta, w, b, *, eps=1e-6):
    M, D = x2d.shape
    Vpad = w.shape[1]
    args = (x2d, gamma, beta, w, b)
    return pl.pallas_call(
        functools.partial(_generator_kernel, eps=eps),
        out_shape=jax.ShapeDtypeStruct((M, Vpad), jnp.float32),
        grid=(1,),
        in_specs=[_const_spec(a.shape) for a in args],
        out_specs=_const_spec((M, Vpad)),
        compiler_params=_ARBITRARY,
    )(*args)


# ----------------------------------------------------------------------------
# Model forward (orchestration in plain JAX, jitted so launches dispatch
# back-to-back)
# ----------------------------------------------------------------------------

def transformer_forward(packed, src_ids, tgt_ids, src_mask, tgt_mask,
                        *, n_heads, tgt_vocab):
    D = packed['src_emb'].shape[1]
    B, Ls = src_ids.shape
    Lt = tgt_ids.shape[1]
    scale = math.sqrt(D)
    pe = packed['pe']

    # Embedding gather + sqrt(D) scale + positional encoding (plain JAX).
    src = jnp.take(packed['src_emb'], src_ids, axis=0) * scale + pe[None, :Ls]
    tgt = jnp.take(packed['tgt_emb'], tgt_ids, axis=0) * scale + pe[None, :Lt]

    # Additive masks (0 where visible, -1e9 where masked), kept un-broadcast:
    # the kernels broadcast over heads / query rows on-chip.
    src_amask = jnp.where(src_mask == 0, _NEG_INF, 0.0).astype(jnp.float32)
    tgt_amask = jnp.where(tgt_mask == 0, _NEG_INF, 0.0).astype(jnp.float32)

    # ---- encoder: one pallas_call, layer grid, residual resident in VMEM ----
    x = src.reshape(B * Ls, D)
    memory = encoder_forward(x, src_amask, packed['enc'], packed['enc_ln'],
                             B=B, L=Ls, H=n_heads)
    memory = memory.astype(jnp.bfloat16)   # halve cross-attention memory DMA

    # ---- decoder: one pallas_call, layer grid ----
    y = tgt.reshape(B * Lt, D)
    y = decoder_forward(y, memory, tgt_amask, src_amask, packed['dec'],
                        B=B, Lq=Lt, Lk=Ls, H=n_heads)

    # ---- generator: final decoder LN + projection + log_softmax ----
    out = generator_forward(y, packed['dec_ln'][0], packed['dec_ln'][1],
                            packed['out_w'], packed['out_b'])
    return out[:, :tgt_vocab].reshape(B, Lt, tgt_vocab)


# ----------------------------------------------------------------------------
# Deterministic parameter initialization (xavier_uniform for dim>1 params)
# ----------------------------------------------------------------------------

class KeyGen:
    def __init__(self, key):
        self._key = key

    def __call__(self):
        self._key, sub = jax.random.split(self._key)
        return sub


def xavier(key, shape):
    fan_in, fan_out = shape[0], shape[1]
    limit = math.sqrt(6.0 / (fan_in + fan_out))
    return jax.random.uniform(key, shape, jnp.float32, -limit, limit)


def attn_params(kg, d_model):
    p = {}
    for n in ('q', 'k', 'v', 'o'):
        p['w' + n] = xavier(kg(), (d_model, d_model))
        p['b' + n] = jnp.zeros((d_model,), jnp.float32)
    return p


def ff_params(kg, d_model, d_ff):
    return {'w1': xavier(kg(), (d_model, d_ff)),
            'b1': jnp.zeros((d_ff,), jnp.float32),
            'w2': xavier(kg(), (d_ff, d_model)),
            'b2': jnp.zeros((d_model,), jnp.float32)}


def ln_params(d_model):
    return (jnp.ones((d_model,), jnp.float32),
            jnp.zeros((d_model,), jnp.float32))


def positional_encoding(max_len, d_model):
    pos = jnp.arange(max_len, dtype=jnp.float32)[:, None]
    div = jnp.exp(jnp.arange(0, d_model, 2, dtype=jnp.float32)
                  * -(math.log(10000.0) / d_model))
    pe = jnp.zeros((max_len, d_model), jnp.float32)
    pe = pe.at[:, 0::2].set(jnp.sin(pos * div))
    pe = pe.at[:, 1::2].set(jnp.cos(pos * div))
    return pe


def init_params(key, src_vocab, tgt_vocab, n_enc, n_dec, d_model, d_ff,
                max_len=64):
    kg = KeyGen(key)
    params = {
        'src_emb': xavier(kg(), (src_vocab, d_model)),
        'tgt_emb': xavier(kg(), (tgt_vocab, d_model)),
        'pe': positional_encoding(max_len, d_model),
        'enc_layers': [],
        'dec_layers': [],
        'enc_ln': ln_params(d_model),
        'dec_ln': ln_params(d_model),
        'out_w': xavier(kg(), (d_model, tgt_vocab)),
        'out_b': jnp.zeros((tgt_vocab,), jnp.float32),
    }
    for _ in range(n_enc):
        params['enc_layers'].append({
            'attn': attn_params(kg, d_model),
            'ff': ff_params(kg, d_model, d_ff),
            'ln1': ln_params(d_model),
            'ln2': ln_params(d_model),
        })
    for _ in range(n_dec):
        params['dec_layers'].append({
            'self_attn': attn_params(kg, d_model),
            'cross_attn': attn_params(kg, d_model),
            'ff': ff_params(kg, d_model, d_ff),
            'ln1': ln_params(d_model),
            'ln2': ln_params(d_model),
            'ln3': ln_params(d_model),
        })
    return params


def pack_params(raw, n_heads):
    """Fuse QKV/KV weights, fold 1/sqrt(dk) into Q, stack per-layer weights
    along a leading layer axis, pre-cast matmul weights to bf16, reshape
    biases / LN params to lane-dense (1, N) rows and pad the generator
    vocabulary to a multiple of 128."""
    bf16 = jnp.bfloat16
    D = raw['out_w'].shape[0]
    dk = D // n_heads
    qs = 1.0 / math.sqrt(dk)                 # folded attention score scale

    def row(b):
        return b.reshape(1, -1).astype(jnp.float32)

    def enc_layer(lp):
        a, f = lp['attn'], lp['ff']
        return {
            'wqkv': jnp.concatenate([a['wq'] * qs, a['wk'], a['wv']],
                                    axis=1).astype(bf16),
            'bqkv': jnp.concatenate([a['bq'] * qs, a['bk'],
                                     a['bv']]).reshape(1, -1),
            'wo': a['wo'].astype(bf16), 'bo': row(a['bo']),
            'ln1g': row(lp['ln1'][0]), 'ln1b': row(lp['ln1'][1]),
            'w1': f['w1'].astype(bf16), 'b1': row(f['b1']),
            'w2': f['w2'].astype(bf16), 'b2': row(f['b2']),
            'ln2g': row(lp['ln2'][0]), 'ln2b': row(lp['ln2'][1]),
        }

    def dec_layer(lp):
        sa, ca, f = lp['self_attn'], lp['cross_attn'], lp['ff']
        return {
            'wqkv': jnp.concatenate([sa['wq'] * qs, sa['wk'], sa['wv']],
                                    axis=1).astype(bf16),
            'bqkv': jnp.concatenate([sa['bq'] * qs, sa['bk'],
                                     sa['bv']]).reshape(1, -1),
            'wo1': sa['wo'].astype(bf16), 'bo1': row(sa['bo']),
            'ln1g': row(lp['ln1'][0]), 'ln1b': row(lp['ln1'][1]),
            'wq': (ca['wq'] * qs).astype(bf16), 'bq': row(ca['bq'] * qs),
            'wkv': jnp.concatenate([ca['wk'], ca['wv']],
                                   axis=1).astype(bf16),
            'bkv': jnp.concatenate([ca['bk'], ca['bv']]).reshape(1, -1),
            'wo2': ca['wo'].astype(bf16), 'bo2': row(ca['bo']),
            'ln2g': row(lp['ln2'][0]), 'ln2b': row(lp['ln2'][1]),
            'w1': f['w1'].astype(bf16), 'b1': row(f['b1']),
            'w2': f['w2'].astype(bf16), 'b2': row(f['b2']),
            'ln3g': row(lp['ln3'][0]), 'ln3b': row(lp['ln3'][1]),
        }

    enc_list = [enc_layer(lp) for lp in raw['enc_layers']]
    dec_list = [dec_layer(lp) for lp in raw['dec_layers']]
    enc_stk = {k: jnp.stack([d[k] for d in enc_list], 0) for k in enc_list[0]}
    dec_stk = {k: jnp.stack([d[k] for d in dec_list], 0) for k in dec_list[0]}

    # Lane-dense generator: pad vocab to a multiple of 128; padded columns get
    # bias -1e9 so they vanish from the log_softmax.
    V = raw['out_w'].shape[1]
    Vpad = max(128, ((V + 127) // 128) * 128)
    out_w = jnp.zeros((D, Vpad), jnp.float32).at[:, :V].set(raw['out_w'])
    out_b = jnp.full((1, Vpad), _NEG_INF, jnp.float32).at[0, :V].set(raw['out_b'])

    return {
        'src_emb': raw['src_emb'], 'tgt_emb': raw['tgt_emb'], 'pe': raw['pe'],
        'enc': enc_stk, 'dec': dec_stk,
        'enc_ln': (row(raw['enc_ln'][0]), row(raw['enc_ln'][1])),
        'dec_ln': (row(raw['dec_ln'][0]), row(raw['dec_ln'][1])),
        'out_w': out_w.astype(bf16), 'out_b': out_b,
    }


# ----------------------------------------------------------------------------
# Driver
# ----------------------------------------------------------------------------

if __name__ == "__main__":
    SRC_VOCAB, TGT_VOCAB = 11, 13
    N_ENC, N_DEC = 2, 2
    D_MODEL, D_FF, N_HEADS = 32, 64, 4
    B, LS, LT = 2, 8, 8

    key = jax.random.PRNGKey(0)
    k_params, k_src, k_tgt = jax.random.split(key, 3)

    raw_params = init_params(k_params, SRC_VOCAB, TGT_VOCAB,
                             N_ENC, N_DEC, D_MODEL, D_FF)
    params = pack_params(raw_params, N_HEADS)

    source_input = jax.random.randint(k_src, (B, LS), 0, SRC_VOCAB)
    target_input = jax.random.randint(k_tgt, (B, LT), 0, TGT_VOCAB)
    # source mask: all tokens visible; target mask: causal (subsequent) mask
    source_mask = jnp.ones((B, 1, LS), jnp.float32)
    target_mask = jnp.broadcast_to(
        jnp.tril(jnp.ones((LT, LT), jnp.float32))[None], (B, LT, LT))

    fwd = jax.jit(functools.partial(transformer_forward,
                                    n_heads=N_HEADS, tgt_vocab=TGT_VOCAB))
    out = fwd(params, source_input, target_input, source_mask, target_mask)
    out = jax.block_until_ready(out)

    assert out.shape == (B, LT, TGT_VOCAB), out.shape
    # log_softmax rows must (approximately) sum to 1 in prob space
    assert jnp.allclose(jnp.sum(jnp.exp(out), axis=-1), 1.0, atol=1e-3)
    print("KERNEL_OK")
</pallas_src>

<mosaic_0001>
module attributes {stable_mosaic.version = 11 : i64} {
  func.func @_generator_kernel(%arg0: i32, %arg1: memref<16x32xf32, #tpu.memory_space<vmem>>, %arg2: memref<1x32xf32, #tpu.memory_space<vmem>>, %arg3: memref<1x32xf32, #tpu.memory_space<vmem>>, %arg4: memref<32x128xbf16, #tpu.memory_space<vmem>>, %arg5: memref<1x128xf32, #tpu.memory_space<vmem>>, %arg6: memref<16x128xf32, #tpu.memory_space<vmem>>) attributes {dimension_semantics = [#tpu.dimension_semantics<arbitrary>], iteration_bounds = array<i64: 1>, scalar_prefetch = 0 : i64, scratch_operands = 0 : i64, tpu.core_type = #tpu.core_type<tc>, window_params = [{pipeline_mode = #tpu.pipeline_mode<synchronous>, transform_indices = @transform_0, window_bounds = array<i64: 16, 32>}, {pipeline_mode = #tpu.pipeline_mode<synchronous>, transform_indices = @transform_1, window_bounds = array<i64: 1, 32>}, {pipeline_mode = #tpu.pipeline_mode<synchronous>, transform_indices = @transform_2, window_bounds = array<i64: 1, 32>}, {pipeline_mode = #tpu.pipeline_mode<synchronous>, transform_indices = @transform_3, window_bounds = array<i64: 32, 128>}, {pipeline_mode = #tpu.pipeline_mode<synchronous>, transform_indices = @transform_4, window_bounds = array<i64: 1, 128>}, {pipeline_mode = #tpu.pipeline_mode<synchronous>, transform_indices = @transform_5, window_bounds = array<i64: 16, 128>}]} {
    %c0 = arith.constant 0 : index
    %c0_0 = arith.constant 0 : index
    %0 = vector.load %arg1[%c0, %c0_0] : memref<16x32xf32, #tpu.memory_space<vmem>>, vector<16x32xf32>
    %c0_1 = arith.constant 0 : index
    %c0_2 = arith.constant 0 : index
    %1 = vector.load %arg2[%c0_1, %c0_2] : memref<1x32xf32, #tpu.memory_space<vmem>>, vector<1x32xf32>
    %c0_3 = arith.constant 0 : index
    %c0_4 = arith.constant 0 : index
    %2 = vector.load %arg3[%c0_3, %c0_4] : memref<1x32xf32, #tpu.memory_space<vmem>>, vector<1x32xf32>
    %cst = arith.constant dense<0.000000e+00> : vector<16xf32>
    %3 = vector.multi_reduction <add>, %0, %cst [1] : vector<16x32xf32> to vector<16xf32>
    %4 = vector.shape_cast %3 : vector<16xf32> to vector<16x1xf32>
    %cst_5 = arith.constant 3.200000e+01 : f32
    %5 = vector.broadcast %cst_5 : f32 to vector<16x1xf32>
    %6 = arith.divf %4, %5 : vector<16x1xf32>
    %7 = vector.broadcast %6 : vector<16x1xf32> to vector<16x32xf32>
    %8 = arith.subf %0, %7 : vector<16x32xf32>
    %9 = arith.mulf %8, %8 : vector<16x32xf32>
    %cst_6 = arith.constant dense<0.000000e+00> : vector<16xf32>
    %10 = vector.multi_reduction <add>, %9, %cst_6 [1] : vector<16x32xf32> to vector<16xf32>
    %11 = vector.shape_cast %10 : vector<16xf32> to vector<16x1xf32>
    %cst_7 = arith.constant 0.0322580636 : f32
    %12 = vector.broadcast %cst_7 : f32 to vector<16x1xf32>
    %13 = arith.mulf %11, %12 : vector<16x1xf32>
    %14 = math.sqrt %13 : vector<16x1xf32>
    %cst_8 = arith.constant 9.99999997E-7 : f32
    %15 = vector.broadcast %cst_8 : f32 to vector<16x1xf32>
    %16 = arith.addf %14, %15 : vector<16x1xf32>
    %17 = tpu.reciprocal %16 {approx = true} : vector<16x1xf32> -> vector<16x1xf32>
    %18 = vector.broadcast %1 : vector<1x32xf32> to vector<16x32xf32>
    %19 = arith.mulf %18, %8 : vector<16x32xf32>
    %20 = vector.broadcast %17 : vector<16x1xf32> to vector<16x32xf32>
    %21 = arith.mulf %19, %20 : vector<16x32xf32>
    %22 = vector.broadcast %2 : vector<1x32xf32> to vector<16x32xf32>
    %23 = arith.addf %21, %22 : vector<16x32xf32>
    %24 = arith.truncf %23 : vector<16x32xf32> to vector<16x32xbf16>
    %c0_9 = arith.constant 0 : index
    %c0_10 = arith.constant 0 : index
    %25 = vector.load %arg4[%c0_9, %c0_10] : memref<32x128xbf16, #tpu.memory_space<vmem>>, vector<32x128xbf16>
    %cst_11 = arith.constant dense<0.000000e+00> : vector<16x128xf32>
    %26 = tpu.matmul %24, %25, %cst_11 {dimension_numbers = #tpu.dot_dimension_numbers<[1], [0], [0], [1], [0, 0, 1, 1], [], []>} : vector<16x32xbf16>, vector<32x128xbf16>, vector<16x128xf32> -> vector<16x128xf32>
    %c0_12 = arith.constant 0 : index
    %c0_13 = arith.constant 0 : index
    %27 = vector.load %arg5[%c0_12, %c0_13] : memref<1x128xf32, #tpu.memory_space<vmem>>, vector<1x128xf32>
    %28 = vector.broadcast %27 : vector<1x128xf32> to vector<16x128xf32>
    %29 = arith.addf %26, %28 : vector<16x128xf32>
    %cst_14 = arith.constant dense<0xFF800000> : vector<16xf32>
    %30 = vector.multi_reduction <maximumf>, %29, %cst_14 [1] : vector<16x128xf32> to vector<16xf32>
    %31 = vector.shape_cast %30 : vector<16xf32> to vector<16x1xf32>
    %32 = vector.broadcast %31 : vector<16x1xf32> to vector<16x128xf32>
    %33 = arith.subf %29, %32 : vector<16x128xf32>
    %34 = math.exp %33 : vector<16x128xf32>
    %cst_15 = arith.constant dense<0.000000e+00> : vector<16xf32>
    %35 = vector.multi_reduction <add>, %34, %cst_15 [1] : vector<16x128xf32> to vector<16xf32>
    %36 = vector.shape_cast %35 : vector<16xf32> to vector<16x1xf32>
    %37 = math.log %36 : vector<16x1xf32>
    %38 = vector.broadcast %37 : vector<16x1xf32> to vector<16x128xf32>
    %39 = arith.subf %33, %38 : vector<16x128xf32>
    %c0_16 = arith.constant 0 : index
    %c0_17 = arith.constant 0 : index
    %40 = vector.load %arg6[%c0_16, %c0_17] : memref<16x128xf32, #tpu.memory_space<vmem>>, vector<16x128xf32>
    tpu.vector_store %arg6[%c0_16, %c0_17], %39 {strides = array<i32>} : memref<16x128xf32, #tpu.memory_space<vmem>>, vector<16x128xf32>,
    return
  }
  func.func @transform_0(%arg0: i32) -> (i32, i32) {
    %c0_i32 = arith.constant 0 : i32
    %c0_i32_0 = arith.constant 0 : i32
    %c0_i32_1 = arith.constant 0 : i32
    return %c0_i32, %c0_i32_0 : i32, i32
  }
  func.func @transform_1(%arg0: i32) -> (i32, i32) {
    %c0_i32 = arith.constant 0 : i32
    %c0_i32_0 = arith.constant 0 : i32
    %c0_i32_1 = arith.constant 0 : i32
    return %c0_i32, %c0_i32_0 : i32, i32
  }
  func.func @transform_2(%arg0: i32) -> (i32, i32) {
    %c0_i32 = arith.constant 0 : i32
    %c0_i32_0 = arith.constant 0 : i32
    %c0_i32_1 = arith.constant 0 : i32
    return %c0_i32, %c0_i32_0 : i32, i32
  }
  func.func @transform_3(%arg0: i32) -> (i32, i32) {
    %c0_i32 = arith.constant 0 : i32
    %c0_i32_0 = arith.constant 0 : i32
    %c0_i32_1 = arith.constant 0 : i32
    return %c0_i32, %c0_i32_0 : i32, i32
  }
  func.func @transform_4(%arg0: i32) -> (i32, i32) {
    %c0_i32 = arith.constant 0 : i32
    %c0_i32_0 = arith.constant 0 : i32
    %c0_i32_1 = arith.constant 0 : i32
    return %c0_i32, %c0_i32_0 : i32, i32
  }
  func.func @transform_5(%arg0: i32) -> (i32, i32) {
    %c0_i32 = arith.constant 0 : i32
    %c0_i32_0 = arith.constant 0 : i32
    %c0_i32_1 = arith.constant 0 : i32
    return %c0_i32, %c0_i32_0 : i32, i32
  }
}

module attributes {stable_mosaic.version = 11 : i64} {
  func.func @_encoder_kernel(%arg0: i32, %arg1: memref<16x32xf32, #tpu.memory_space<vmem>>, %arg2: memref<2x1x8xf32, #tpu.memory_space<vmem>>, %arg3: memref<1x32x96xbf16, #tpu.memory_space<vmem>>, %arg4: memref<1x1x96xf32, #tpu.memory_space<vmem>>, %arg5: memref<1x32x32xbf16, #tpu.memory_space<vmem>>, %arg6: memref<1x1x32xf32, #tpu.memory_space<vmem>>, %arg7: memref<1x1x32xf32, #tpu.memory_space<vmem>>, %arg8: memref<1x1x32xf32, #tpu.memory_space<vmem>>, %arg9: memref<1x32x64xbf16, #tpu.memory_space<vmem>>, %arg10: memref<1x1x64xf32, #tpu.memory_space<vmem>>, %arg11: memref<1x64x32xbf16, #tpu.memory_space<vmem>>, %arg12: memref<1x1x32xf32, #tpu.memory_space<vmem>>, %arg13: memref<1x1x32xf32, #tpu.memory_space<vmem>>, %arg14: memref<1x1x32xf32, #tpu.memory_space<vmem>>, %arg15: memref<1x32xf32, #tpu.memory_space<vmem>>, %arg16: memref<1x32xf32, #tpu.memory_space<vmem>>, %arg17: memref<16x32xf32, #tpu.memory_space<vmem>>) attributes {dimension_semantics = [#tpu.dimension_semantics<arbitrary>], iteration_bounds = array<i64: 2>, scalar_prefetch = 0 : i64, scratch_operands = 0 : i64, tpu.core_type = #tpu.core_type<tc>, window_params = [{pipeline_mode = #tpu.pipeline_mode<synchronous>, transform_indices = @transform_0, window_bounds = array<i64: 16, 32>}, {pipeline_mode = #tpu.pipeline_mode<synchronous>, transform_indices = @transform_1, window_bounds = array<i64: 2, 1, 8>}, {transform_indices = @transform_2, window_bounds = array<i64: 1, 32, 96>}, {transform_indices = @transform_3, window_bounds = array<i64: 1, 1, 96>}, {transform_indices = @transform_4, window_bounds = array<i64: 1, 32, 32>}, {transform_indices = @transform_5, window_bounds = array<i64: 1, 1, 32>}, {transform_indices = @transform_6, window_bounds = array<i64: 1, 1, 32>}, {transform_indices = @transform_7, window_bounds = array<i64: 1, 1, 32>}, {transform_indices = @transform_8, window_bounds = array<i64: 1, 32, 64>}, {transform_indices = @transform_9, window_bounds = array<i64: 1, 1, 64>}, {transform_indices = @transform_10, window_bounds = array<i64: 1, 64, 32>}, {transform_indices = @transform_11, window_bounds = array<i64: 1, 1, 32>}, {transform_indices = @transform_12, window_bounds = array<i64: 1, 1, 32>}, {transform_indices = @transform_13, window_bounds = array<i64: 1, 1, 32>}, {pipeline_mode = #tpu.pipeline_mode<synchronous>, transform_indices = @transform_14, window_bounds = array<i64: 1, 32>}, {pipeline_mode = #tpu.pipeline_mode<synchronous>, transform_indices = @transform_15, window_bounds = array<i64: 1, 32>}, {pipeline_mode = #tpu.pipeline_mode<synchronous>, transform_indices = @transform_16, window_bounds = array<i64: 16, 32>}]} {
    %c0_i32 = arith.constant 0 : i32
    %0 = arith.cmpi eq, %arg0, %c0_i32 : i32
    %1 = arith.extui %0 : i1 to i32
    %c0_i32_0 = arith.constant 0 : i32
    %2 = arith.cmpi ne, %1, %c0_i32_0 : i32
    scf.if %2 {
      %c0_62 = arith.constant 0 : index
      %c0_63 = arith.constant 0 : index
      %155 = vector.load %arg1[%c0_62, %c0_63] : memref<16x32xf32, #tpu.memory_space<vmem>>, vector<16x32xf32>
      %c0_64 = arith.constant 0 : index
      %c0_65 = arith.constant 0 : index
      %156 = vector.load %arg17[%c0_64, %c0_65] : memref<16x32xf32, #tpu.memory_space<vmem>>, vector<16x32xf32>
      tpu.vector_store %arg17[%c0_64, %c0_65], %155 {strides = array<i32>} : memref<16x32xf32, #tpu.memory_space<vmem>>, vector<16x32xf32>,
    } else {
    }
    %c0 = arith.constant 0 : index
    %c0_1 = arith.constant 0 : index
    %3 = vector.load %arg17[%c0, %c0_1] : memref<16x32xf32, #tpu.memory_space<vmem>>, vector<16x32xf32>
    %c0_2 = arith.constant 0 : index
    %c0_3 = arith.constant 0 : index
    %c0_4 = arith.constant 0 : index
    %4 = vector.load %arg2[%c0_2, %c0_3, %c0_4] : memref<2x1x8xf32, #tpu.memory_space<vmem>>, vector<2x1x8xf32>
    %c0_5 = arith.constant 0 : index
    %c0_6 = arith.constant 0 : index
    %c0_7 = arith.constant 0 : index
    %5 = vector.load %arg7[%c0_5, %c0_6, %c0_7] : memref<1x1x32xf32, #tpu.memory_space<vmem>>, vector<1x1x32xf32>
    %6 = vector.shape_cast %5 : vector<1x1x32xf32> to vector<1x32xf32>
    %c0_8 = arith.constant 0 : index
    %c0_9 = arith.constant 0 : index
    %c0_10 = arith.constant 0 : index
    %7 = vector.load %arg8[%c0_8, %c0_9, %c0_10] : memref<1x1x32xf32, #tpu.memory_space<vmem>>, vector<1x1x32xf32>
    %8 = vector.shape_cast %7 : vector<1x1x32xf32> to vector<1x32xf32>
    %cst = arith.constant dense<0.000000e+00> : vector<16xf32>
    %9 = vector.multi_reduction <add>, %3, %cst [1] : vector<16x32xf32> to vector<16xf32>
    %10 = vector.shape_cast %9 : vector<16xf32> to vector<16x1xf32>
    %cst_11 = arith.constant 3.200000e+01 : f32
    %11 = vector.broadcast %cst_11 : f32 to vector<16x1xf32>
    %12 = arith.divf %10, %11 : vector<16x1xf32>
    %13 = vector.broadcast %12 : vector<16x1xf32> to vector<16x32xf32>
    %14 = arith.subf %3, %13 : vector<16x32xf32>
    %15 = arith.mulf %14, %14 : vector<16x32xf32>
    %cst_12 = arith.constant dense<0.000000e+00> : vector<16xf32>
    %16 = vector.multi_reduction <add>, %15, %cst_12 [1] : vector<16x32xf32> to vector<16xf32>
    %17 = vector.shape_cast %16 : vector<16xf32> to vector<16x1xf32>
    %cst_13 = arith.constant 0.0322580636 : f32
    %18 = vector.broadcast %cst_13 : f32 to vector<16x1xf32>
    %19 = arith.mulf %17, %18 : vector<16x1xf32>
    %20 = math.sqrt %19 : vector<16x1xf32>
    %cst_14 = arith.constant 9.99999997E-7 : f32
    %21 = vector.broadcast %cst_14 : f32 to vector<16x1xf32>
    %22 = arith.addf %20, %21 : vector<16x1xf32>
    %23 = tpu.reciprocal %22 {approx = true} : vector<16x1xf32> -> vector<16x1xf32>
    %24 = vector.broadcast %6 : vector<1x32xf32> to vector<16x32xf32>
    %25 = arith.mulf %24, %14 : vector<16x32xf32>
    %26 = vector.broadcast %23 : vector<16x1xf32> to vector<16x32xf32>
    %27 = arith.mulf %25, %26 : vector<16x32xf32>
    %28 = vector.broadcast %8 : vector<1x32xf32> to vector<16x32xf32>
    %29 = arith.addf %27, %28 : vector<16x32xf32>
    %30 = arith.truncf %29 : vector<16x32xf32> to vector<16x32xbf16>
    %c0_15 = arith.constant 0 : index
    %c0_16 = arith.constant 0 : index
    %c0_17 = arith.constant 0 : index
    %31 = vector.load %arg3[%c0_15, %c0_16, %c0_17] : memref<1x32x96xbf16, #tpu.memory_space<vmem>>, vector<1x32x96xbf16>
    %32 = vector.shape_cast %31 : vector<1x32x96xbf16> to vector<32x96xbf16>
    %cst_18 = arith.constant dense<0.000000e+00> : vector<16x96xf32>
    %33 = tpu.matmul %30, %32, %cst_18 {dimension_numbers = #tpu.dot_dimension_numbers<[1], [0], [0], [1], [0, 0, 1, 1], [], []>} : vector<16x32xbf16>, vector<32x96xbf16>, vector<16x96xf32> -> vector<16x96xf32>
    %c0_19 = arith.constant 0 : index
    %c0_20 = arith.constant 0 : index
    %c0_21 = arith.constant 0 : index
    %34 = vector.load %arg4[%c0_19, %c0_20, %c0_21] : memref<1x1x96xf32, #tpu.memory_space<vmem>>, vector<1x1x96xf32>
    %35 = vector.shape_cast %34 : vector<1x1x96xf32> to vector<1x96xf32>
    %36 = vector.broadcast %35 : vector<1x96xf32> to vector<16x96xf32>
    %37 = arith.addf %33, %36 : vector<16x96xf32>
    %38 = vector.extract_strided_slice %37 {offsets = [0, 0], sizes = [16, 32], strides = [1, 1]} : vector<16x96xf32> to vector<16x32xf32>
    %39 = vector.extract_strided_slice %37 {offsets = [0, 32], sizes = [16, 32], strides = [1, 1]} : vector<16x96xf32> to vector<16x32xf32>
    %40 = vector.extract_strided_slice %37 {offsets = [0, 64], sizes = [16, 32], strides = [1, 1]} : vector<16x96xf32> to vector<16x32xf32>
    %41 = vector.extract_strided_slice %38 {offsets = [0, 0], sizes = [16, 8], strides = [1, 1]} : vector<16x32xf32> to vector<16x8xf32>
    %42 = vector.shape_cast %41 : vector<16x8xf32> to vector<2x8x8xf32>
    %43 = vector.extract_strided_slice %38 {offsets = [0, 8], sizes = [16, 8], strides = [1, 1]} : vector<16x32xf32> to vector<16x8xf32>
    %44 = vector.shape_cast %43 : vector<16x8xf32> to vector<2x8x8xf32>
    %45 = vector.extract_strided_slice %38 {offsets = [0, 16], sizes = [16, 8], strides = [1, 1]} : vector<16x32xf32> to vector<16x8xf32>
    %46 = vector.shape_cast %45 : vector<16x8xf32> to vector<2x8x8xf32>
    %47 = vector.extract_strided_slice %38 {offsets = [0, 24], sizes = [16, 8], strides = [1, 1]} : vector<16x32xf32> to vector<16x8xf32>
    %48 = vector.shape_cast %47 : vector<16x8xf32> to vector<2x8x8xf32>
    %49 = tpu.concatenate %42, %44, %46, %48 in 0 : vector<2x8x8xf32>, vector<2x8x8xf32>, vector<2x8x8xf32>, vector<2x8x8xf32> -> vector<8x8x8xf32>
    %50 = vector.extract_strided_slice %39 {offsets = [0, 0], sizes = [16, 8], strides = [1, 1]} : vector<16x32xf32> to vector<16x8xf32>
    %51 = vector.shape_cast %50 : vector<16x8xf32> to vector<2x8x8xf32>
    %52 = vector.extract_strided_slice %39 {offsets = [0, 8], sizes = [16, 8], strides = [1, 1]} : vector<16x32xf32> to vector<16x8xf32>
    %53 = vector.shape_cast %52 : vector<16x8xf32> to vector<2x8x8xf32>
    %54 = vector.extract_strided_slice %39 {offsets = [0, 16], sizes = [16, 8], strides = [1, 1]} : vector<16x32xf32> to vector<16x8xf32>
    %55 = vector.shape_cast %54 : vector<16x8xf32> to vector<2x8x8xf32>
    %56 = vector.extract_strided_slice %39 {offsets = [0, 24], sizes = [16, 8], strides = [1, 1]} : vector<16x32xf32> to vector<16x8xf32>
    %57 = vector.shape_cast %56 : vector<16x8xf32> to vector<2x8x8xf32>
    %58 = tpu.concatenate %51, %53, %55, %57 in 0 : vector<2x8x8xf32>, vector<2x8x8xf32>, vector<2x8x8xf32>, vector<2x8x8xf32> -> vector<8x8x8xf32>
    %59 = vector.extract_strided_slice %40 {offsets = [0, 0], sizes = [16, 8], strides = [1, 1]} : vector<16x32xf32> to vector<16x8xf32>
    %60 = vector.shape_cast %59 : vector<16x8xf32> to vector<2x8x8xf32>
    %61 = vector.extract_strided_slice %40 {offsets = [0, 8], sizes = [16, 8], strides = [1, 1]} : vector<16x32xf32> to vector<16x8xf32>
    %62 = vector.shape_cast %61 : vector<16x8xf32> to vector<2x8x8xf32>
    %63 = vector.extract_strided_slice %40 {offsets = [0, 16], sizes = [16, 8], strides = [1, 1]} : vector<16x32xf32> to vector<16x8xf32>
    %64 = vector.shape_cast %63 : vector<16x8xf32> to vector<2x8x8xf32>
    %65 = vector.extract_strided_slice %40 {offsets = [0, 24], sizes = [16, 8], strides = [1, 1]} : vector<16x32xf32> to vector<16x8xf32>
    %66 = vector.shape_cast %65 : vector<16x8xf32> to vector<2x8x8xf32>
    %67 = tpu.concatenate %60, %62, %64, %66 in 0 : vector<2x8x8xf32>, vector<2x8x8xf32>, vector<2x8x8xf32>, vector<2x8x8xf32> -> vector<8x8x8xf32>
    %68 = arith.truncf %49 : vector<8x8x8xf32> to vector<8x8x8xbf16>
    %69 = arith.truncf %58 : vector<8x8x8xf32> to vector<8x8x8xbf16>
    "tpu.trace_start"() <{level = 10 : i32, message = "bqd,bkd->bqk"}> : () -> ()
    %cst_22 = arith.constant dense<0.000000e+00> : vector<8x8x8xf32>
    %70 = tpu.matmul %68, %69, %cst_22 {dimension_numbers = #tpu.dot_dimension_numbers<[2], [2], [1], [1], [0, 0, 0, 1, 1, 1], [0], [0]>} : vector<8x8x8xbf16>, vector<8x8x8xbf16>, vector<8x8x8xf32> -> vector<8x8x8xf32>
    "tpu.trace_stop"() : () -> ()
    %71 = vector.shape_cast %70 : vector<8x8x8xf32> to vector<4x2x8x8xf32>
    %72 = vector.shape_cast %4 : vector<2x1x8xf32> to vector<1x2x1x8xf32>
    %73 = vector.broadcast %72 : vector<1x2x1x8xf32> to vector<4x2x8x8xf32>
    %74 = arith.addf %71, %73 : vector<4x2x8x8xf32>
    %75 = vector.shape_cast %74 : vector<4x2x8x8xf32> to vector<8x8x8xf32>
    %cst_23 = arith.constant dense<0xFF800000> : vector<8x8xf32>
    %76 = vector.multi_reduction <maximumf>, %75, %cst_23 [2] : vector<8x8x8xf32> to vector<8x8xf32>
    %77 = vector.shape_cast %76 : vector<8x8xf32> to vector<8x8x1xf32>
    %78 = vector.broadcast %77 : vector<8x8x1xf32> to vector<8x8x8xf32>
    %79 = arith.subf %75, %78 : vector<8x8x8xf32>
    %80 = math.exp %79 : vector<8x8x8xf32>
    %cst_24 = arith.constant dense<0.000000e+00> : vector<8x8xf32>
    %81 = vector.multi_reduction <add>, %80, %cst_24 [2] : vector<8x8x8xf32> to vector<8x8xf32>
    %82 = vector.shape_cast %81 : vector<8x8xf32> to vector<8x8x1xf32>
    %83 = tpu.reciprocal %82 {approx = true} : vector<8x8x1xf32> -> vector<8x8x1xf32>
    %84 = vector.broadcast %83 : vector<8x8x1xf32> to vector<8x8x8xf32>
    %85 = arith.mulf %80, %84 : vector<8x8x8xf32>
    %86 = arith.truncf %85 : vector<8x8x8xf32> to vector<8x8x8xbf16>
    %87 = arith.truncf %67 : vector<8x8x8xf32> to vector<8x8x8xbf16>
    "tpu.trace_start"() <{level = 10 : i32, message = "bqk,bkd->bqd"}> : () -> ()
    %cst_25 = arith.constant dense<0.000000e+00> : vector<8x8x8xf32>
    %88 = tpu.matmul %86, %87, %cst_25 {dimension_numbers = #tpu.dot_dimension_numbers<[2], [1], [1], [2], [0, 0, 0, 1, 1, 2], [0], [0]>} : vector<8x8x8xbf16>, vector<8x8x8xbf16>, vector<8x8x8xf32> -> vector<8x8x8xf32>
    "tpu.trace_stop"() : () -> ()
    %89 = vector.extract_strided_slice %88 {offsets = [0, 0, 0], sizes = [2, 8, 8], strides = [1, 1, 1]} : vector<8x8x8xf32> to vector<2x8x8xf32>
    %90 = vector.shape_cast %89 : vector<2x8x8xf32> to vector<16x8xf32>
    %91 = vector.extract_strided_slice %88 {offsets = [2, 0, 0], sizes = [2, 8, 8], strides = [1, 1, 1]} : vector<8x8x8xf32> to vector<2x8x8xf32>
    %92 = vector.shape_cast %91 : vector<2x8x8xf32> to vector<16x8xf32>
    %93 = vector.extract_strided_slice %88 {offsets = [4, 0, 0], sizes = [2, 8, 8], strides = [1, 1, 1]} : vector<8x8x8xf32> to vector<2x8x8xf32>
    %94 = vector.shape_cast %93 : vector<2x8x8xf32> to vector<16x8xf32>
    %95 = vector.extract_strided_slice %88 {offsets = [6, 0, 0], sizes = [2, 8, 8], strides = [1, 1, 1]} : vector<8x8x8xf32> to vector<2x8x8xf32>
    %96 = vector.shape_cast %95 : vector<2x8x8xf32> to vector<16x8xf32>
    %97 = tpu.concatenate %90, %92, %94, %96 in 1 : vector<16x8xf32>, vector<16x8xf32>, vector<16x8xf32>, vector<16x8xf32> -> vector<16x32xf32>
    %98 = arith.truncf %97 : vector<16x32xf32> to vector<16x32xbf16>
    %c0_26 = arith.constant 0 : index
    %c0_27 = arith.constant 0 : index
    %c0_28 = arith.constant 0 : index
    %99 = vector.load %arg5[%c0_26, %c0_27, %c0_28] : memref<1x32x32xbf16, #tpu.memory_space<vmem>>, vector<1x32x32xbf16>
    %100 = vector.shape_cast %99 : vector<1x32x32xbf16> to vector<32x32xbf16>
    %cst_29 = arith.constant dense<0.000000e+00> : vector<16x32xf32>
    %101 = tpu.matmul %98, %100, %cst_29 {dimension_numbers = #tpu.dot_dimension_numbers<[1], [0], [0], [1], [0, 0, 1, 1], [], []>} : vector<16x32xbf16>, vector<32x32xbf16>, vector<16x32xf32> -> vector<16x32xf32>
    %102 = arith.addf %3, %101 : vector<16x32xf32>
    %c0_30 = arith.constant 0 : index
    %c0_31 = arith.constant 0 : index
    %c0_32 = arith.constant 0 : index
    %103 = vector.load %arg6[%c0_30, %c0_31, %c0_32] : memref<1x1x32xf32, #tpu.memory_space<vmem>>, vector<1x1x32xf32>
    %104 = vector.shape_cast %103 : vector<1x1x32xf32> to vector<1x32xf32>
    %105 = vector.broadcast %104 : vector<1x32xf32> to vector<16x32xf32>
    %106 = arith.addf %102, %105 : vector<16x32xf32>
    %c0_33 = arith.constant 0 : index
    %c0_34 = arith.constant 0 : index
    %c0_35 = arith.constant 0 : index
    %107 = vector.load %arg13[%c0_33, %c0_34, %c0_35] : memref<1x1x32xf32, #tpu.memory_space<vmem>>, vector<1x1x32xf32>
    %108 = vector.shape_cast %107 : vector<1x1x32xf32> to vector<1x32xf32>
    %c0_36 = arith.constant 0 : index
    %c0_37 = arith.constant 0 : index
    %c0_38 = arith.constant 0 : index
    %109 = vector.load %arg14[%c0_36, %c0_37, %c0_38] : memref<1x1x32xf32, #tpu.memory_space<vmem>>, vector<1x1x32xf32>
    %110 = vector.shape_cast %109 : vector<1x1x32xf32> to vector<1x32xf32>
    %cst_39 = arith.constant dense<0.000000e+00> : vector<16xf32>
    %111 = vector.multi_reduction <add>, %106, %cst_39 [1] : vector<16x32xf32> to vector<16xf32>
    %112 = vector.shape_cast %111 : vector<16xf32> to vector<16x1xf32>
    %cst_40 = arith.constant 3.200000e+01 : f32
    %113 = vector.broadcast %cst_40 : f32 to vector<16x1xf32>
    %114 = arith.divf %112, %113 : vector<16x1xf32>
    %115 = vector.broadcast %114 : vector<16x1xf32> to vector<16x32xf32>
    %116 = arith.subf %106, %115 : vector<16x32xf32>
    %117 = arith.mulf %116, %116 : vector<16x32xf32>
    %cst_41 = arith.constant dense<0.000000e+00> : vector<16xf32>
    %118 = vector.multi_reduction <add>, %117, %cst_41 [1] : vector<16x32xf32> to vector<16xf32>
    %119 = vector.shape_cast %118 : vector<16xf32> to vector<16x1xf32>
    %cst_42 = arith.constant 0.0322580636 : f32
    %120 = vector.broadcast %cst_42 : f32 to vector<16x1xf32>
    %121 = arith.mulf %119, %120 : vector<16x1xf32>
    %122 = math.sqrt %121 : vector<16x1xf32>
    %cst_43 = arith.constant 9.99999997E-7 : f32
    %123 = vector.broadcast %cst_43 : f32 to vector<16x1xf32>
    %124 = arith.addf %122, %123 : vector<16x1xf32>
    %125 = tpu.reciprocal %124 {approx = true} : vector<16x1xf32> -> vector<16x1xf32>
    %126 = vector.broadcast %108 : vector<1x32xf32> to vector<16x32xf32>
    %127 = arith.mulf %126, %116 : vector<16x32xf32>
    %128 = vector.broadcast %125 : vector<16x1xf32> to vector<16x32xf32>
    %129 = arith.mulf %127, %128 : vector<16x32xf32>
    %130 = vector.broadcast %110 : vector<1x32xf32> to vector<16x32xf32>
    %131 = arith.addf %129, %130 : vector<16x32xf32>
    %132 = arith.truncf %131 : vector<16x32xf32> to vector<16x32xbf16>
    %c0_44 = arith.constant 0 : index
    %c0_45 = arith.constant 0 : index
    %c0_46 = arith.constant 0 : index
    %133 = vector.load %arg9[%c0_44, %c0_45, %c0_46] : memref<1x32x64xbf16, #tpu.memory_space<vmem>>, vector<1x32x64xbf16>
    %134 = vector.shape_cast %133 : vector<1x32x64xbf16> to vector<32x64xbf16>
    %cst_47 = arith.constant dense<0.000000e+00> : vector<16x64xf32>
    %135 = tpu.matmul %132, %134, %cst_47 {dimension_numbers = #tpu.dot_dimension_numbers<[1], [0], [0], [1], [0, 0, 1, 1], [], []>} : vector<16x32xbf16>, vector<32x64xbf16>, vector<16x64xf32> -> vector<16x64xf32>
    %c0_48 = arith.constant 0 : index
    %c0_49 = arith.constant 0 : index
    %c0_50 = arith.constant 0 : index
    %136 = vector.load %arg10[%c0_48, %c0_49, %c0_50] : memref<1x1x64xf32, #tpu.memory_space<vmem>>, vector<1x1x64xf32>
    %137 = vector.shape_cast %136 : vector<1x1x64xf32> to vector<1x64xf32>
    %138 = vector.broadcast %137 : vector<1x64xf32> to vector<16x64xf32>
    %139 = arith.addf %135, %138 : vector<16x64xf32>
    %cst_51 = arith.constant 0.000000e+00 : f32
    %140 = vector.broadcast %cst_51 : f32 to vector<16x64xf32>
    %141 = arith.maximumf %139, %140 : vector<16x64xf32>
    %142 = arith.truncf %141 : vector<16x64xf32> to vector<16x64xbf16>
    %c0_52 = arith.constant 0 : index
    %c0_53 = arith.constant 0 : index
    %c0_54 = arith.constant 0 : index
    %143 = vector.load %arg11[%c0_52, %c0_53, %c0_54] : memref<1x64x32xbf16, #tpu.memory_space<vmem>>, vector<1x64x32xbf16>
    %144 = vector.shape_cast %143 : vector<1x64x32xbf16> to vector<64x32xbf16>
    %cst_55 = arith.constant dense<0.000000e+00> : vector<16x32xf32>
    %145 = tpu.matmul %142, %144, %cst_55 {dimension_numbers = #tpu.dot_dimension_numbers<[1], [0], [0], [1], [0, 0, 1, 1], [], []>} : vector<16x64xbf16>, vector<64x32xbf16>, vector<16x32xf32> -> vector<16x32xf32>
    %146 = arith.addf %106, %145 : vector<16x32xf32>
    %c0_56 = arith.constant 0 : index
    %c0_57 = arith.constant 0 : index
    %c0_58 = arith.constant 0 : index
    %147 = vector.load %arg12[%c0_56, %c0_57, %c0_58] : memref<1x1x32xf32, #tpu.memory_space<vmem>>, vector<1x1x32xf32>
    %148 = vector.shape_cast %147 : vector<1x1x32xf32> to vector<1x32xf32>
    %149 = vector.broadcast %148 : vector<1x32xf32> to vector<16x32xf32>
    %150 = arith.addf %146, %149 : vector<16x32xf32>
    %c0_59 = arith.constant 0 : index
    %c0_60 = arith.constant 0 : index
    %151 = vector.load %arg17[%c0_59, %c0_60] : memref<16x32xf32, #tpu.memory_space<vmem>>, vector<16x32xf32>
    tpu.vector_store %arg17[%c0_59, %c0_60], %150 {strides = array<i32>} : memref<16x32xf32, #tpu.memory_space<vmem>>, vector<16x32xf32>,
    %c1_i32 = arith.constant 1 : i32
    %152 = arith.cmpi eq, %arg0, %c1_i32 : i32
    %153 = arith.extui %152 : i1 to i32
    %c0_i32_61 = arith.constant 0 : i32
    %154 = arith.cmpi ne, %153, %c0_i32_61 : i32
    scf.if %154 {
      %c0_62 = arith.constant 0 : index
      %c0_63 = arith.constant 0 : index
      %155 = vector.load %arg15[%c0_62, %c0_63] : memref<1x32xf32, #tpu.memory_space<vmem>>, vector<1x32xf32>
      %c0_64 = arith.constant 0 : index
      %c0_65 = arith.constant 0 : index
      %156 = vector.load %arg16[%c0_64, %c0_65] : memref<1x32xf32, #tpu.memory_space<vmem>>, vector<1x32xf32>
      %cst_66 = arith.constant dense<0.000000e+00> : vector<16xf32>
      %157 = vector.multi_reduction <add>, %150, %cst_66 [1] : vector<16x32xf32> to vector<16xf32>
      %158 = vector.shape_cast %157 : vector<16xf32> to vector<16x1xf32>
      %cst_67 = arith.constant 3.200000e+01 : f32
      %159 = vector.broadcast %cst_67 : f32 to vector<16x1xf32>
      %160 = arith.divf %158, %159 : vector<16x1xf32>
      %161 = vector.broadcast %160 : vector<16x1xf32> to vector<16x32xf32>
      %162 = arith.subf %150, %161 : vector<16x32xf32>
      %163 = arith.mulf %162, %162 : vector<16x32xf32>
      %cst_68 = arith.constant dense<0.000000e+00> : vector<16xf32>
      %164 = vector.multi_reduction <add>, %163, %cst_68 [1] : vector<16x32xf32> to vector<16xf32>
      %165 = vector.shape_cast %164 : vector<16xf32> to vector<16x1xf32>
      %cst_69 = arith.constant 0.0322580636 : f32
      %166 = vector.broadcast %cst_69 : f32 to vector<16x1xf32>
      %167 = arith.mulf %165, %166 : vector<16x1xf32>
      %168 = math.sqrt %167 : vector<16x1xf32>
      %cst_70 = arith.constant 9.99999997E-7 : f32
      %169 = vector.broadcast %cst_70 : f32 to vector<16x1xf32>
      %170 = arith.addf %168, %169 : vector<16x1xf32>
      %171 = tpu.reciprocal %170 {approx = true} : vector<16x1xf32> -> vector<16x1xf32>
      %172 = vector.broadcast %155 : vector<1x32xf32> to vector<16x32xf32>
      %173 = arith.mulf %172, %162 : vector<16x32xf32>
      %174 = vector.broadcast %171 : vector<16x1xf32> to vector<16x32xf32>
      %175 = arith.mulf %173, %174 : vector<16x32xf32>
      %176 = vector.broadcast %156 : vector<1x32xf32> to vector<16x32xf32>
      %177 = arith.addf %175, %176 : vector<16x32xf32>
      %c0_71 = arith.constant 0 : index
      %c0_72 = arith.constant 0 : index
      %178 = vector.load %arg17[%c0_71, %c0_72] : memref<16x32xf32, #tpu.memory_space<vmem>>, vector<16x32xf32>
      tpu.vector_store %arg17[%c0_71, %c0_72], %177 {strides = array<i32>} : memref<16x32xf32, #tpu.memory_space<vmem>>, vector<16x32xf32>,
    } else {
    }
    return
  }
  func.func @transform_0(%arg0: i32) -> (i32, i32) {
    %c0_i32 = arith.constant 0 : i32
    %c0_i32_0 = arith.constant 0 : i32
    %c0_i32_1 = arith.constant 0 : i32
    return %c0_i32, %c0_i32_0 : i32, i32
  }
  func.func @transform_1(%arg0: i32) -> (i32, i32, i32) {
    %c0_i32 = arith.constant 0 : i32
    %c0_i32_0 = arith.constant 0 : i32
    %c0_i32_1 = arith.constant 0 : i32
    %c0_i32_2 = arith.constant 0 : i32
    return %c0_i32, %c0_i32_0, %c0_i32_1 : i32, i32, i32
  }
  func.func @transform_2(%arg0: i32) -> (i32, i32, i32) {
    %c0_i32 = arith.constant 0 : i32
    %c0_i32_0 = arith.constant 0 : i32
    %c0_i32_1 = arith.constant 0 : i32
    return %arg0, %c0_i32, %c0_i32_0 : i32, i32, i32
  }
  func.func @transform_3(%arg0: i32) -> (i32, i32, i32) {
    %c0_i32 = arith.constant 0 : i32
    %c0_i32_0 = arith.constant 0 : i32
    %c0_i32_1 = arith.constant 0 : i32
    return %arg0, %c0_i32, %c0_i32_0 : i32, i32, i32
  }
  func.func @transform_4(%arg0: i32) -> (i32, i32, i32) {
    %c0_i32 = arith.constant 0 : i32
    %c0_i32_0 = arith.constant 0 : i32
    %c0_i32_1 = arith.constant 0 : i32
    return %arg0, %c0_i32, %c0_i32_0 : i32, i32, i32
  }
  func.func @transform_5(%arg0: i32) -> (i32, i32, i32) {
    %c0_i32 = arith.constant 0 : i32
    %c0_i32_0 = arith.constant 0 : i32
    %c0_i32_1 = arith.constant 0 : i32
    return %arg0, %c0_i32, %c0_i32_0 : i32, i32, i32
  }
  func.func @transform_6(%arg0: i32) -> (i32, i32, i32) {
    %c0_i32 = arith.constant 0 : i32
    %c0_i32_0 = arith.constant 0 : i32
    %c0_i32_1 = arith.constant 0 : i32
    return %arg0, %c0_i32, %c0_i32_0 : i32, i32, i32
  }
  func.func @transform_7(%arg0: i32) -> (i32, i32, i32) {
    %c0_i32 = arith.constant 0 : i32
    %c0_i32_0 = arith.constant 0 : i32
    %c0_i32_1 = arith.constant 0 : i32
    return %arg0, %c0_i32, %c0_i32_0 : i32, i32, i32
  }
  func.func @transform_8(%arg0: i32) -> (i32, i32, i32) {
    %c0_i32 = arith.constant 0 : i32
    %c0_i32_0 = arith.constant 0 : i32
    %c0_i32_1 = arith.constant 0 : i32
    return %arg0, %c0_i32, %c0_i32_0 : i32, i32, i32
  }
  func.func @transform_9(%arg0: i32) -> (i32, i32, i32) {
    %c0_i32 = arith.constant 0 : i32
    %c0_i32_0 = arith.constant 0 : i32
    %c0_i32_1 = arith.constant 0 : i32
    return %arg0, %c0_i32, %c0_i32_0 : i32, i32, i32
  }
  func.func @transform_10(%arg0: i32) -> (i32, i32, i32) {
    %c0_i32 = arith.constant 0 : i32
    %c0_i32_0 = arith.constant 0 : i32
    %c0_i32_1 = arith.constant 0 : i32
    return %arg0, %c0_i32, %c0_i32_0 : i32, i32, i32
  }
  func.func @transform_11(%arg0: i32) -> (i32, i32, i32) {
    %c0_i32 = arith.constant 0 : i32
    %c0_i32_0 = arith.constant 0 : i32
    %c0_i32_1 = arith.constant 0 : i32
    return %arg0, %c0_i32, %c0_i32_0 : i32, i32, i32
  }
  func.func @transform_12(%arg0: i32) -> (i32, i32, i32) {
    %c0_i32 = arith.constant 0 : i32
    %c0_i32_0 = arith.constant 0 : i32
    %c0_i32_1 = arith.constant 0 : i32
    return %arg0, %c0_i32, %c0_i32_0 : i32, i32, i32
  }
  func.func @transform_13(%arg0: i32) -> (i32, i32, i32) {
    %c0_i32 = arith.constant 0 : i32
    %c0_i32_0 = arith.constant 0 : i32
    %c0_i32_1 = arith.constant 0 : i32
    return %arg0, %c0_i32, %c0_i32_0 : i32, i32, i32
  }
  func.func @transform_14(%arg0: i32) -> (i32, i32) {
    %c0_i32 = arith.constant 0 : i32
    %c0_i32_0 = arith.constant 0 : i32
    %c0_i32_1 = arith.constant 0 : i32
    return %c0_i32, %c0_i32_0 : i32, i32
  }
  func.func @transform_15(%arg0: i32) -> (i32, i32) {
    %c0_i32 = arith.constant 0 : i32
    %c0_i32_0 = arith.constant 0 : i32
    %c0_i32_1 = arith.constant 0 : i32
    return %c0_i32, %c0_i32_0 : i32, i32
  }
  func.func @transform_16(%arg0: i32) -> (i32, i32) {
    %c0_i32 = arith.constant 0 : i32
    %c0_i32_0 = arith.constant 0 : i32
    %c0_i32_1 = arith.constant 0 : i32
    return %c0_i32, %c0_i32_0 : i32, i32
  }
}

module attributes {stable_mosaic.version = 11 : i64} {
  func.func @_decoder_kernel(%arg0: i32, %arg1: memref<16x32xf32, #tpu.memory_space<vmem>>, %arg2: memref<16x32xbf16, #tpu.memory_space<vmem>>, %arg3: memref<2x8x8xf32, #tpu.memory_space<vmem>>, %arg4: memref<2x1x8xf32, #tpu.memory_space<vmem>>, %arg5: memref<1x32x96xbf16, #tpu.memory_space<vmem>>, %arg6: memref<1x1x96xf32, #tpu.memory_space<vmem>>, %arg7: memref<1x32x32xbf16, #tpu.memory_space<vmem>>, %arg8: memref<1x1x32xf32, #tpu.memory_space<vmem>>, %arg9: memref<1x1x32xf32, #tpu.memory_space<vmem>>, %arg10: memref<1x1x32xf32, #tpu.memory_space<vmem>>, %arg11: memref<1x32x32xbf16, #tpu.memory_space<vmem>>, %arg12: memref<1x1x32xf32, #tpu.memory_space<vmem>>, %arg13: memref<1x32x64xbf16, #tpu.memory_space<vmem>>, %arg14: memref<1x1x64xf32, #tpu.memory_space<vmem>>, %arg15: memref<1x32x32xbf16, #tpu.memory_space<vmem>>, %arg16: memref<1x1x32xf32, #tpu.memory_space<vmem>>, %arg17: memref<1x1x32xf32, #tpu.memory_space<vmem>>, %arg18: memref<1x1x32xf32, #tpu.memory_space<vmem>>, %arg19: memref<1x32x64xbf16, #tpu.memory_space<vmem>>, %arg20: memref<1x1x64xf32, #tpu.memory_space<vmem>>, %arg21: memref<1x64x32xbf16, #tpu.memory_space<vmem>>, %arg22: memref<1x1x32xf32, #tpu.memory_space<vmem>>, %arg23: memref<1x1x32xf32, #tpu.memory_space<vmem>>, %arg24: memref<1x1x32xf32, #tpu.memory_space<vmem>>, %arg25: memref<16x32xf32, #tpu.memory_space<vmem>>) attributes {dimension_semantics = [#tpu.dimension_semantics<arbitrary>], iteration_bounds = array<i64: 2>, scalar_prefetch = 0 : i64, scratch_operands = 0 : i64, tpu.core_type = #tpu.core_type<tc>, window_params = [{pipeline_mode = #tpu.pipeline_mode<synchronous>, transform_indices = @transform_0, window_bounds = array<i64: 16, 32>}, {pipeline_mode = #tpu.pipeline_mode<synchronous>, transform_indices = @transform_1, window_bounds = array<i64: 16, 32>}, {pipeline_mode = #tpu.pipeline_mode<synchronous>, transform_indices = @transform_2, window_bounds = array<i64: 2, 8, 8>}, {pipeline_mode = #tpu.pipeline_mode<synchronous>, transform_indices = @transform_3, window_bounds = array<i64: 2, 1, 8>}, {transform_indices = @transform_4, window_bounds = array<i64: 1, 32, 96>}, {transform_indices = @transform_5, window_bounds = array<i64: 1, 1, 96>}, {transform_indices = @transform_6, window_bounds = array<i64: 1, 32, 32>}, {transform_indices = @transform_7, window_bounds = array<i64: 1, 1, 32>}, {transform_indices = @transform_8, window_bounds = array<i64: 1, 1, 32>}, {transform_indices = @transform_9, window_bounds = array<i64: 1, 1, 32>}, {transform_indices = @transform_10, window_bounds = array<i64: 1, 32, 32>}, {transform_indices = @transform_11, window_bounds = array<i64: 1, 1, 32>}, {transform_indices = @transform_12, window_bounds = array<i64: 1, 32, 64>}, {transform_indices = @transform_13, window_bounds = array<i64: 1, 1, 64>}, {transform_indices = @transform_14, window_bounds = array<i64: 1, 32, 32>}, {transform_indices = @transform_15, window_bounds = array<i64: 1, 1, 32>}, {transform_indices = @transform_16, window_bounds = array<i64: 1, 1, 32>}, {transform_indices = @transform_17, window_bounds = array<i64: 1, 1, 32>}, {transform_indices = @transform_18, window_bounds = array<i64: 1, 32, 64>}, {transform_indices = @transform_19, window_bounds = array<i64: 1, 1, 64>}, {transform_indices = @transform_20, window_bounds = array<i64: 1, 64, 32>}, {transform_indices = @transform_21, window_bounds = array<i64: 1, 1, 32>}, {transform_indices = @transform_22, window_bounds = array<i64: 1, 1, 32>}, {transform_indices = @transform_23, window_bounds = array<i64: 1, 1, 32>}, {pipeline_mode = #tpu.pipeline_mode<synchronous>, transform_indices = @transform_24, window_bounds = array<i64: 16, 32>}]} {
    %c0_i32 = arith.constant 0 : i32
    %0 = arith.cmpi eq, %arg0, %c0_i32 : i32
    %1 = arith.extui %0 : i1 to i32
    %c0_i32_0 = arith.constant 0 : i32
    %2 = arith.cmpi ne, %1, %c0_i32_0 : i32
    scf.if %2 {
      %c0_102 = arith.constant 0 : index
      %c0_103 = arith.constant 0 : index
      %262 = vector.load %arg1[%c0_102, %c0_103] : memref<16x32xf32, #tpu.memory_space<vmem>>, vector<16x32xf32>
      %c0_104 = arith.constant 0 : index
      %c0_105 = arith.constant 0 : index
      %263 = vector.load %arg25[%c0_104, %c0_105] : memref<16x32xf32, #tpu.memory_space<vmem>>, vector<16x32xf32>
      tpu.vector_store %arg25[%c0_104, %c0_105], %262 {strides = array<i32>} : memref<16x32xf32, #tpu.memory_space<vmem>>, vector<16x32xf32>,
    } else {
    }
    %c0 = arith.constant 0 : index
    %c0_1 = arith.constant 0 : index
    %3 = vector.load %arg25[%c0, %c0_1] : memref<16x32xf32, #tpu.memory_space<vmem>>, vector<16x32xf32>
    %c0_2 = arith.constant 0 : index
    %c0_3 = arith.constant 0 : index
    %c0_4 = arith.constant 0 : index
    %4 = vector.load %arg9[%c0_2, %c0_3, %c0_4] : memref<1x1x32xf32, #tpu.memory_space<vmem>>, vector<1x1x32xf32>
    %5 = vector.shape_cast %4 : vector<1x1x32xf32> to vector<1x32xf32>
    %c0_5 = arith.constant 0 : index
    %c0_6 = arith.constant 0 : index
    %c0_7 = arith.constant 0 : index
    %6 = vector.load %arg10[%c0_5, %c0_6, %c0_7] : memref<1x1x32xf32, #tpu.memory_space<vmem>>, vector<1x1x32xf32>
    %7 = vector.shape_cast %6 : vector<1x1x32xf32> to vector<1x32xf32>
    %cst = arith.constant dense<0.000000e+00> : vector<16xf32>
    %8 = vector.multi_reduction <add>, %3, %cst [1] : vector<16x32xf32> to vector<16xf32>
    %9 = vector.shape_cast %8 : vector<16xf32> to vector<16x1xf32>
    %cst_8 = arith.constant 3.200000e+01 : f32
    %10 = vector.broadcast %cst_8 : f32 to vector<16x1xf32>
    %11 = arith.divf %9, %10 : vector<16x1xf32>
    %12 = vector.broadcast %11 : vector<16x1xf32> to vector<16x32xf32>
    %13 = arith.subf %3, %12 : vector<16x32xf32>
    %14 = arith.mulf %13, %13 : vector<16x32xf32>
    %cst_9 = arith.constant dense<0.000000e+00> : vector<16xf32>
    %15 = vector.multi_reduction <add>, %14, %cst_9 [1] : vector<16x32xf32> to vector<16xf32>
    %16 = vector.shape_cast %15 : vector<16xf32> to vector<16x1xf32>
    %cst_10 = arith.constant 0.0322580636 : f32
    %17 = vector.broadcast %cst_10 : f32 to vector<16x1xf32>
    %18 = arith.mulf %16, %17 : vector<16x1xf32>
    %19 = math.sqrt %18 : vector<16x1xf32>
    %cst_11 = arith.constant 9.99999997E-7 : f32
    %20 = vector.broadcast %cst_11 : f32 to vector<16x1xf32>
    %21 = arith.addf %19, %20 : vector<16x1xf32>
    %22 = tpu.reciprocal %21 {approx = true} : vector<16x1xf32> -> vector<16x1xf32>
    %23 = vector.broadcast %5 : vector<1x32xf32> to vector<16x32xf32>
    %24 = arith.mulf %23, %13 : vector<16x32xf32>
    %25 = vector.broadcast %22 : vector<16x1xf32> to vector<16x32xf32>
    %26 = arith.mulf %24, %25 : vector<16x32xf32>
    %27 = vector.broadcast %7 : vector<1x32xf32> to vector<16x32xf32>
    %28 = arith.addf %26, %27 : vector<16x32xf32>
    %29 = arith.truncf %28 : vector<16x32xf32> to vector<16x32xbf16>
    %c0_12 = arith.constant 0 : index
    %c0_13 = arith.constant 0 : index
    %c0_14 = arith.constant 0 : index
    %30 = vector.load %arg5[%c0_12, %c0_13, %c0_14] : memref<1x32x96xbf16, #tpu.memory_space<vmem>>, vector<1x32x96xbf16>
    %31 = vector.shape_cast %30 : vector<1x32x96xbf16> to vector<32x96xbf16>
    %cst_15 = arith.constant dense<0.000000e+00> : vector<16x96xf32>
    %32 = tpu.matmul %29, %31, %cst_15 {dimension_numbers = #tpu.dot_dimension_numbers<[1], [0], [0], [1], [0, 0, 1, 1], [], []>} : vector<16x32xbf16>, vector<32x96xbf16>, vector<16x96xf32> -> vector<16x96xf32>
    %c0_16 = arith.constant 0 : index
    %c0_17 = arith.constant 0 : index
    %c0_18 = arith.constant 0 : index
    %33 = vector.load %arg6[%c0_16, %c0_17, %c0_18] : memref<1x1x96xf32, #tpu.memory_space<vmem>>, vector<1x1x96xf32>
    %34 = vector.shape_cast %33 : vector<1x1x96xf32> to vector<1x96xf32>
    %35 = vector.broadcast %34 : vector<1x96xf32> to vector<16x96xf32>
    %36 = arith.addf %32, %35 : vector<16x96xf32>
    %37 = vector.extract_strided_slice %36 {offsets = [0, 0], sizes = [16, 32], strides = [1, 1]} : vector<16x96xf32> to vector<16x32xf32>
    %38 = vector.extract_strided_slice %36 {offsets = [0, 32], sizes = [16, 32], strides = [1, 1]} : vector<16x96xf32> to vector<16x32xf32>
    %39 = vector.extract_strided_slice %36 {offsets = [0, 64], sizes = [16, 32], strides = [1, 1]} : vector<16x96xf32> to vector<16x32xf32>
    %c0_19 = arith.constant 0 : index
    %c0_20 = arith.constant 0 : index
    %c0_21 = arith.constant 0 : index
    %40 = vector.load %arg3[%c0_19, %c0_20, %c0_21] : memref<2x8x8xf32, #tpu.memory_space<vmem>>, vector<2x8x8xf32>
    %41 = vector.extract_strided_slice %37 {offsets = [0, 0], sizes = [16, 8], strides = [1, 1]} : vector<16x32xf32> to vector<16x8xf32>
    %42 = vector.shape_cast %41 : vector<16x8xf32> to vector<2x8x8xf32>
    %43 = vector.extract_strided_slice %37 {offsets = [0, 8], sizes = [16, 8], strides = [1, 1]} : vector<16x32xf32> to vector<16x8xf32>
    %44 = vector.shape_cast %43 : vector<16x8xf32> to vector<2x8x8xf32>
    %45 = vector.extract_strided_slice %37 {offsets = [0, 16], sizes = [16, 8], strides = [1, 1]} : vector<16x32xf32> to vector<16x8xf32>
    %46 = vector.shape_cast %45 : vector<16x8xf32> to vector<2x8x8xf32>
    %47 = vector.extract_strided_slice %37 {offsets = [0, 24], sizes = [16, 8], strides = [1, 1]} : vector<16x32xf32> to vector<16x8xf32>
    %48 = vector.shape_cast %47 : vector<16x8xf32> to vector<2x8x8xf32>
    %49 = tpu.concatenate %42, %44, %46, %48 in 0 : vector<2x8x8xf32>, vector<2x8x8xf32>, vector<2x8x8xf32>, vector<2x8x8xf32> -> vector<8x8x8xf32>
    %50 = vector.extract_strided_slice %38 {offsets = [0, 0], sizes = [16, 8], strides = [1, 1]} : vector<16x32xf32> to vector<16x8xf32>
    %51 = vector.shape_cast %50 : vector<16x8xf32> to vector<2x8x8xf32>
    %52 = vector.extract_strided_slice %38 {offsets = [0, 8], sizes = [16, 8], strides = [1, 1]} : vector<16x32xf32> to vector<16x8xf32>
    %53 = vector.shape_cast %52 : vector<16x8xf32> to vector<2x8x8xf32>
    %54 = vector.extract_strided_slice %38 {offsets = [0, 16], sizes = [16, 8], strides = [1, 1]} : vector<16x32xf32> to vector<16x8xf32>
    %55 = vector.shape_cast %54 : vector<16x8xf32> to vector<2x8x8xf32>
    %56 = vector.extract_strided_slice %38 {offsets = [0, 24], sizes = [16, 8], strides = [1, 1]} : vector<16x32xf32> to vector<16x8xf32>
    %57 = vector.shape_cast %56 : vector<16x8xf32> to vector<2x8x8xf32>
    %58 = tpu.concatenate %51, %53, %55, %57 in 0 : vector<2x8x8xf32>, vector<2x8x8xf32>, vector<2x8x8xf32>, vector<2x8x8xf32> -> vector<8x8x8xf32>
    %59 = vector.extract_strided_slice %39 {offsets = [0, 0], sizes = [16, 8], strides = [1, 1]} : vector<16x32xf32> to vector<16x8xf32>
    %60 = vector.shape_cast %59 : vector<16x8xf32> to vector<2x8x8xf32>
    %61 = vector.extract_strided_slice %39 {offsets = [0, 8], sizes = [16, 8], strides = [1, 1]} : vector<16x32xf32> to vector<16x8xf32>
    %62 = vector.shape_cast %61 : vector<16x8xf32> to vector<2x8x8xf32>
    %63 = vector.extract_strided_slice %39 {offsets = [0, 16], sizes = [16, 8], strides = [1, 1]} : vector<16x32xf32> to vector<16x8xf32>
    %64 = vector.shape_cast %63 : vector<16x8xf32> to vector<2x8x8xf32>
    %65 = vector.extract_strided_slice %39 {offsets = [0, 24], sizes = [16, 8], strides = [1, 1]} : vector<16x32xf32> to vector<16x8xf32>
    %66 = vector.shape_cast %65 : vector<16x8xf32> to vector<2x8x8xf32>
    %67 = tpu.concatenate %60, %62, %64, %66 in 0 : vector<2x8x8xf32>, vector<2x8x8xf32>, vector<2x8x8xf32>, vector<2x8x8xf32> -> vector<8x8x8xf32>
    %68 = arith.truncf %49 : vector<8x8x8xf32> to vector<8x8x8xbf16>
    %69 = arith.truncf %58 : vector<8x8x8xf32> to vector<8x8x8xbf16>
    "tpu.trace_start"() <{level = 10 : i32, message = "bqd,bkd->bqk"}> : () -> ()
    %cst_22 = arith.constant dense<0.000000e+00> : vector<8x8x8xf32>
    %70 = tpu.matmul %68, %69, %cst_22 {dimension_numbers = #tpu.dot_dimension_numbers<[2], [2], [1], [1], [0, 0, 0, 1, 1, 1], [0], [0]>} : vector<8x8x8xbf16>, vector<8x8x8xbf16>, vector<8x8x8xf32> -> vector<8x8x8xf32>
    "tpu.trace_stop"() : () -> ()
    %71 = vector.shape_cast %70 : vector<8x8x8xf32> to vector<4x2x8x8xf32>
    %72 = vector.shape_cast %40 : vector<2x8x8xf32> to vector<1x2x8x8xf32>
    %73 = vector.broadcast %72 : vector<1x2x8x8xf32> to vector<4x2x8x8xf32>
    %74 = arith.addf %71, %73 : vector<4x2x8x8xf32>
    %75 = vector.shape_cast %74 : vector<4x2x8x8xf32> to vector<8x8x8xf32>
    %cst_23 = arith.constant dense<0xFF800000> : vector<8x8xf32>
    %76 = vector.multi_reduction <maximumf>, %75, %cst_23 [2] : vector<8x8x8xf32> to vector<8x8xf32>
    %77 = vector.shape_cast %76 : vector<8x8xf32> to vector<8x8x1xf32>
    %78 = vector.broadcast %77 : vector<8x8x1xf32> to vector<8x8x8xf32>
    %79 = arith.subf %75, %78 : vector<8x8x8xf32>
    %80 = math.exp %79 : vector<8x8x8xf32>
    %cst_24 = arith.constant dense<0.000000e+00> : vector<8x8xf32>
    %81 = vector.multi_reduction <add>, %80, %cst_24 [2] : vector<8x8x8xf32> to vector<8x8xf32>
    %82 = vector.shape_cast %81 : vector<8x8xf32> to vector<8x8x1xf32>
    %83 = tpu.reciprocal %82 {approx = true} : vector<8x8x1xf32> -> vector<8x8x1xf32>
    %84 = vector.broadcast %83 : vector<8x8x1xf32> to vector<8x8x8xf32>
    %85 = arith.mulf %80, %84 : vector<8x8x8xf32>
    %86 = arith.truncf %85 : vector<8x8x8xf32> to vector<8x8x8xbf16>
    %87 = arith.truncf %67 : vector<8x8x8xf32> to vector<8x8x8xbf16>
    "tpu.trace_start"() <{level = 10 : i32, message = "bqk,bkd->bqd"}> : () -> ()
    %cst_25 = arith.constant dense<0.000000e+00> : vector<8x8x8xf32>
    %88 = tpu.matmul %86, %87, %cst_25 {dimension_numbers = #tpu.dot_dimension_numbers<[2], [1], [1], [2], [0, 0, 0, 1, 1, 2], [0], [0]>} : vector<8x8x8xbf16>, vector<8x8x8xbf16>, vector<8x8x8xf32> -> vector<8x8x8xf32>
    "tpu.trace_stop"() : () -> ()
    %89 = vector.extract_strided_slice %88 {offsets = [0, 0, 0], sizes = [2, 8, 8], strides = [1, 1, 1]} : vector<8x8x8xf32> to vector<2x8x8xf32>
    %90 = vector.shape_cast %89 : vector<2x8x8xf32> to vector<16x8xf32>
    %91 = vector.extract_strided_slice %88 {offsets = [2, 0, 0], sizes = [2, 8, 8], strides = [1, 1, 1]} : vector<8x8x8xf32> to vector<2x8x8xf32>
    %92 = vector.shape_cast %91 : vector<2x8x8xf32> to vector<16x8xf32>
    %93 = vector.extract_strided_slice %88 {offsets = [4, 0, 0], sizes = [2, 8, 8], strides = [1, 1, 1]} : vector<8x8x8xf32> to vector<2x8x8xf32>
    %94 = vector.shape_cast %93 : vector<2x8x8xf32> to vector<16x8xf32>
    %95 = vector.extract_strided_slice %88 {offsets = [6, 0, 0], sizes = [2, 8, 8], strides = [1, 1, 1]} : vector<8x8x8xf32> to vector<2x8x8xf32>
    %96 = vector.shape_cast %95 : vector<2x8x8xf32> to vector<16x8xf32>
    %97 = tpu.concatenate %90, %92, %94, %96 in 1 : vector<16x8xf32>, vector<16x8xf32>, vector<16x8xf32>, vector<16x8xf32> -> vector<16x32xf32>
    %98 = arith.truncf %97 : vector<16x32xf32> to vector<16x32xbf16>
    %c0_26 = arith.constant 0 : index
    %c0_27 = arith.constant 0 : index
    %c0_28 = arith.constant 0 : index
    %99 = vector.load %arg7[%c0_26, %c0_27, %c0_28] : memref<1x32x32xbf16, #tpu.memory_space<vmem>>, vector<1x32x32xbf16>
    %100 = vector.shape_cast %99 : vector<1x32x32xbf16> to vector<32x32xbf16>
    %cst_29 = arith.constant dense<0.000000e+00> : vector<16x32xf32>
    %101 = tpu.matmul %98, %100, %cst_29 {dimension_numbers = #tpu.dot_dimension_numbers<[1], [0], [0], [1], [0, 0, 1, 1], [], []>} : vector<16x32xbf16>, vector<32x32xbf16>, vector<16x32xf32> -> vector<16x32xf32>
    %102 = arith.addf %3, %101 : vector<16x32xf32>
    %c0_30 = arith.constant 0 : index
    %c0_31 = arith.constant 0 : index
    %c0_32 = arith.constant 0 : index
    %103 = vector.load %arg8[%c0_30, %c0_31, %c0_32] : memref<1x1x32xf32, #tpu.memory_space<vmem>>, vector<1x1x32xf32>
    %104 = vector.shape_cast %103 : vector<1x1x32xf32> to vector<1x32xf32>
    %105 = vector.broadcast %104 : vector<1x32xf32> to vector<16x32xf32>
    %106 = arith.addf %102, %105 : vector<16x32xf32>
    %c0_33 = arith.constant 0 : index
    %c0_34 = arith.constant 0 : index
    %c0_35 = arith.constant 0 : index
    %107 = vector.load %arg17[%c0_33, %c0_34, %c0_35] : memref<1x1x32xf32, #tpu.memory_space<vmem>>, vector<1x1x32xf32>
    %108 = vector.shape_cast %107 : vector<1x1x32xf32> to vector<1x32xf32>
    %c0_36 = arith.constant 0 : index
    %c0_37 = arith.constant 0 : index
    %c0_38 = arith.constant 0 : index
    %109 = vector.load %arg18[%c0_36, %c0_37, %c0_38] : memref<1x1x32xf32, #tpu.memory_space<vmem>>, vector<1x1x32xf32>
    %110 = vector.shape_cast %109 : vector<1x1x32xf32> to vector<1x32xf32>
    %cst_39 = arith.constant dense<0.000000e+00> : vector<16xf32>
    %111 = vector.multi_reduction <add>, %106, %cst_39 [1] : vector<16x32xf32> to vector<16xf32>
    %112 = vector.shape_cast %111 : vector<16xf32> to vector<16x1xf32>
    %cst_40 = arith.constant 3.200000e+01 : f32
    %113 = vector.broadcast %cst_40 : f32 to vector<16x1xf32>
    %114 = arith.divf %112, %113 : vector<16x1xf32>
    %115 = vector.broadcast %114 : vector<16x1xf32> to vector<16x32xf32>
    %116 = arith.subf %106, %115 : vector<16x32xf32>
    %117 = arith.mulf %116, %116 : vector<16x32xf32>
    %cst_41 = arith.constant dense<0.000000e+00> : vector<16xf32>
    %118 = vector.multi_reduction <add>, %117, %cst_41 [1] : vector<16x32xf32> to vector<16xf32>
    %119 = vector.shape_cast %118 : vector<16xf32> to vector<16x1xf32>
    %cst_42 = arith.constant 0.0322580636 : f32
    %120 = vector.broadcast %cst_42 : f32 to vector<16x1xf32>
    %121 = arith.mulf %119, %120 : vector<16x1xf32>
    %122 = math.sqrt %121 : vector<16x1xf32>
    %cst_43 = arith.constant 9.99999997E-7 : f32
    %123 = vector.broadcast %cst_43 : f32 to vector<16x1xf32>
    %124 = arith.addf %122, %123 : vector<16x1xf32>
    %125 = tpu.reciprocal %124 {approx = true} : vector<16x1xf32> -> vector<16x1xf32>
    %126 = vector.broadcast %108 : vector<1x32xf32> to vector<16x32xf32>
    %127 = arith.mulf %126, %116 : vector<16x32xf32>
    %128 = vector.broadcast %125 : vector<16x1xf32> to vector<16x32xf32>
    %129 = arith.mulf %127, %128 : vector<16x32xf32>
    %130 = vector.broadcast %110 : vector<1x32xf32> to vector<16x32xf32>
    %131 = arith.addf %129, %130 : vector<16x32xf32>
    %132 = arith.truncf %131 : vector<16x32xf32> to vector<16x32xbf16>
    %c0_44 = arith.constant 0 : index
    %c0_45 = arith.constant 0 : index
    %c0_46 = arith.constant 0 : index
    %133 = vector.load %arg11[%c0_44, %c0_45, %c0_46] : memref<1x32x32xbf16, #tpu.memory_space<vmem>>, vector<1x32x32xbf16>
    %134 = vector.shape_cast %133 : vector<1x32x32xbf16> to vector<32x32xbf16>
    %cst_47 = arith.constant dense<0.000000e+00> : vector<16x32xf32>
    %135 = tpu.matmul %132, %134, %cst_47 {dimension_numbers = #tpu.dot_dimension_numbers<[1], [0], [0], [1], [0, 0, 1, 1], [], []>} : vector<16x32xbf16>, vector<32x32xbf16>, vector<16x32xf32> -> vector<16x32xf32>
    %c0_48 = arith.constant 0 : index
    %c0_49 = arith.constant 0 : index
    %c0_50 = arith.constant 0 : index
    %136 = vector.load %arg12[%c0_48, %c0_49, %c0_50] : memref<1x1x32xf32, #tpu.memory_space<vmem>>, vector<1x1x32xf32>
    %137 = vector.shape_cast %136 : vector<1x1x32xf32> to vector<1x32xf32>
    %138 = vector.broadcast %137 : vector<1x32xf32> to vector<16x32xf32>
    %139 = arith.addf %135, %138 : vector<16x32xf32>
    %c0_51 = arith.constant 0 : index
    %c0_52 = arith.constant 0 : index
    %140 = vector.load %arg2[%c0_51, %c0_52] : memref<16x32xbf16, #tpu.memory_space<vmem>>, vector<16x32xbf16>
    %c0_53 = arith.constant 0 : index
    %c0_54 = arith.constant 0 : index
    %c0_55 = arith.constant 0 : index
    %141 = vector.load %arg13[%c0_53, %c0_54, %c0_55] : memref<1x32x64xbf16, #tpu.memory_space<vmem>>, vector<1x32x64xbf16>
    %142 = vector.shape_cast %141 : vector<1x32x64xbf16> to vector<32x64xbf16>
    %cst_56 = arith.constant dense<0.000000e+00> : vector<16x64xf32>
    %143 = tpu.matmul %140, %142, %cst_56 {dimension_numbers = #tpu.dot_dimension_numbers<[1], [0], [0], [1], [0, 0, 1, 1], [], []>} : vector<16x32xbf16>, vector<32x64xbf16>, vector<16x64xf32> -> vector<16x64xf32>
    %c0_57 = arith.constant 0 : index
    %c0_58 = arith.constant 0 : index
    %c0_59 = arith.constant 0 : index
    %144 = vector.load %arg14[%c0_57, %c0_58, %c0_59] : memref<1x1x64xf32, #tpu.memory_space<vmem>>, vector<1x1x64xf32>
    %145 = vector.shape_cast %144 : vector<1x1x64xf32> to vector<1x64xf32>
    %146 = vector.broadcast %145 : vector<1x64xf32> to vector<16x64xf32>
    %147 = arith.addf %143, %146 : vector<16x64xf32>
    %148 = vector.extract_strided_slice %147 {offsets = [0, 0], sizes = [16, 32], strides = [1, 1]} : vector<16x64xf32> to vector<16x32xf32>
    %149 = vector.extract_strided_slice %147 {offsets = [0, 32], sizes = [16, 32], strides = [1, 1]} : vector<16x64xf32> to vector<16x32xf32>
    %c0_60 = arith.constant 0 : index
    %c0_61 = arith.constant 0 : index
    %c0_62 = arith.constant 0 : index
    %150 = vector.load %arg4[%c0_60, %c0_61, %c0_62] : memref<2x1x8xf32, #tpu.memory_space<vmem>>, vector<2x1x8xf32>
    %151 = vector.extract_strided_slice %139 {offsets = [0, 0], sizes = [16, 8], strides = [1, 1]} : vector<16x32xf32> to vector<16x8xf32>
    %152 = vector.shape_cast %151 : vector<16x8xf32> to vector<2x8x8xf32>
    %153 = vector.extract_strided_slice %139 {offsets = [0, 8], sizes = [16, 8], strides = [1, 1]} : vector<16x32xf32> to vector<16x8xf32>
    %154 = vector.shape_cast %153 : vector<16x8xf32> to vector<2x8x8xf32>
    %155 = vector.extract_strided_slice %139 {offsets = [0, 16], sizes = [16, 8], strides = [1, 1]} : vector<16x32xf32> to vector<16x8xf32>
    %156 = vector.shape_cast %155 : vector<16x8xf32> to vector<2x8x8xf32>
    %157 = vector.extract_strided_slice %139 {offsets = [0, 24], sizes = [16, 8], strides = [1, 1]} : vector<16x32xf32> to vector<16x8xf32>
    %158 = vector.shape_cast %157 : vector<16x8xf32> to vector<2x8x8xf32>
    %159 = tpu.concatenate %152, %154, %156, %158 in 0 : vector<2x8x8xf32>, vector<2x8x8xf32>, vector<2x8x8xf32>, vector<2x8x8xf32> -> vector<8x8x8xf32>
    %160 = vector.extract_strided_slice %148 {offsets = [0, 0], sizes = [16, 8], strides = [1, 1]} : vector<16x32xf32> to vector<16x8xf32>
    %161 = vector.shape_cast %160 : vector<16x8xf32> to vector<2x8x8xf32>
    %162 = vector.extract_strided_slice %148 {offsets = [0, 8], sizes = [16, 8], strides = [1, 1]} : vector<16x32xf32> to vector<16x8xf32>
    %163 = vector.shape_cast %162 : vector<16x8xf32> to vector<2x8x8xf32>
    %164 = vector.extract_strided_slice %148 {offsets = [0, 16], sizes = [16, 8], strides = [1, 1]} : vector<16x32xf32> to vector<16x8xf32>
    %165 = vector.shape_cast %164 : vector<16x8xf32> to vector<2x8x8xf32>
    %166 = vector.extract_strided_slice %148 {offsets = [0, 24], sizes = [16, 8], strides = [1, 1]} : vector<16x32xf32> to vector<16x8xf32>
    %167 = vector.shape_cast %166 : vector<16x8xf32> to vector<2x8x8xf32>
    %168 = tpu.concatenate %161, %163, %165, %167 in 0 : vector<2x8x8xf32>, vector<2x8x8xf32>, vector<2x8x8xf32>, vector<2x8x8xf32> -> vector<8x8x8xf32>
    %169 = vector.extract_strided_slice %149 {offsets = [0, 0], sizes = [16, 8], strides = [1, 1]} : vector<16x32xf32> to vector<16x8xf32>
    %170 = vector.shape_cast %169 : vector<16x8xf32> to vector<2x8x8xf32>
    %171 = vector.extract_strided_slice %149 {offsets = [0, 8], sizes = [16, 8], strides = [1, 1]} : vector<16x32xf32> to vector<16x8xf32>
    %172 = vector.shape_cast %171 : vector<16x8xf32> to vector<2x8x8xf32>
    %173 = vector.extract_strided_slice %149 {offsets = [0, 16], sizes = [16, 8], strides = [1, 1]} : vector<16x32xf32> to vector<16x8xf32>
    %174 = vector.shape_cast %173 : vector<16x8xf32> to vector<2x8x8xf32>
    %175 = vector.extract_strided_slice %149 {offsets = [0, 24], sizes = [16, 8], strides = [1, 1]} : vector<16x32xf32> to vector<16x8xf32>
    %176 = vector.shape_cast %175 : vector<16x8xf32> to vector<2x8x8xf32>
    %177 = tpu.concatenate %170, %172, %174, %176 in 0 : vector<2x8x8xf32>, vector<2x8x8xf32>, vector<2x8x8xf32>, vector<2x8x8xf32> -> vector<8x8x8xf32>
    %178 = arith.truncf %159 : vector<8x8x8xf32> to vector<8x8x8xbf16>
    %179 = arith.truncf %168 : vector<8x8x8xf32> to vector<8x8x8xbf16>
    "tpu.trace_start"() <{level = 10 : i32, message = "bqd,bkd->bqk"}> : () -> ()
    %cst_63 = arith.constant dense<0.000000e+00> : vector<8x8x8xf32>
    %180 = tpu.matmul %178, %179, %cst_63 {dimension_numbers = #tpu.dot_dimension_numbers<[2], [2], [1], [1], [0, 0, 0, 1, 1, 1], [0], [0]>} : vector<8x8x8xbf16>, vector<8x8x8xbf16>, vector<8x8x8xf32> -> vector<8x8x8xf32>
    "tpu.trace_stop"() : () -> ()
    %181 = vector.shape_cast %180 : vector<8x8x8xf32> to vector<4x2x8x8xf32>
    %182 = vector.shape_cast %150 : vector<2x1x8xf32> to vector<1x2x1x8xf32>
    %183 = vector.broadcast %182 : vector<1x2x1x8xf32> to vector<4x2x8x8xf32>
    %184 = arith.addf %181, %183 : vector<4x2x8x8xf32>
    %185 = vector.shape_cast %184 : vector<4x2x8x8xf32> to vector<8x8x8xf32>
    %cst_64 = arith.constant dense<0xFF800000> : vector<8x8xf32>
    %186 = vector.multi_reduction <maximumf>, %185, %cst_64 [2] : vector<8x8x8xf32> to vector<8x8xf32>
    %187 = vector.shape_cast %186 : vector<8x8xf32> to vector<8x8x1xf32>
    %188 = vector.broadcast %187 : vector<8x8x1xf32> to vector<8x8x8xf32>
    %189 = arith.subf %185, %188 : vector<8x8x8xf32>
    %190 = math.exp %189 : vector<8x8x8xf32>
    %cst_65 = arith.constant dense<0.000000e+00> : vector<8x8xf32>
    %191 = vector.multi_reduction <add>, %190, %cst_65 [2] : vector<8x8x8xf32> to vector<8x8xf32>
    %192 = vector.shape_cast %191 : vector<8x8xf32> to vector<8x8x1xf32>
    %193 = tpu.reciprocal %192 {approx = true} : vector<8x8x1xf32> -> vector<8x8x1xf32>
    %194 = vector.broadcast %193 : vector<8x8x1xf32> to vector<8x8x8xf32>
    %195 = arith.mulf %190, %194 : vector<8x8x8xf32>
    %196 = arith.truncf %195 : vector<8x8x8xf32> to vector<8x8x8xbf16>
    %197 = arith.truncf %177 : vector<8x8x8xf32> to vector<8x8x8xbf16>
    "tpu.trace_start"() <{level = 10 : i32, message = "bqk,bkd->bqd"}> : () -> ()
    %cst_66 = arith.constant dense<0.000000e+00> : vector<8x8x8xf32>
    %198 = tpu.matmul %196, %197, %cst_66 {dimension_numbers = #tpu.dot_dimension_numbers<[2], [1], [1], [2], [0, 0, 0, 1, 1, 2], [0], [0]>} : vector<8x8x8xbf16>, vector<8x8x8xbf16>, vector<8x8x8xf32> -> vector<8x8x8xf32>
    "tpu.trace_stop"() : () -> ()
    %199 = vector.extract_strided_slice %198 {offsets = [0, 0, 0], sizes = [2, 8, 8], strides = [1, 1, 1]} : vector<8x8x8xf32> to vector<2x8x8xf32>
    %200 = vector.shape_cast %199 : vector<2x8x8xf32> to vector<16x8xf32>
    %201 = vector.extract_strided_slice %198 {offsets = [2, 0, 0], sizes = [2, 8, 8], strides = [1, 1, 1]} : vector<8x8x8xf32> to vector<2x8x8xf32>
    %202 = vector.shape_cast %201 : vector<2x8x8xf32> to vector<16x8xf32>
    %203 = vector.extract_strided_slice %198 {offsets = [4, 0, 0], sizes = [2, 8, 8], strides = [1, 1, 1]} : vector<8x8x8xf32> to vector<2x8x8xf32>
    %204 = vector.shape_cast %203 : vector<2x8x8xf32> to vector<16x8xf32>
    %205 = vector.extract_strided_slice %198 {offsets = [6, 0, 0], sizes = [2, 8, 8], strides = [1, 1, 1]} : vector<8x8x8xf32> to vector<2x8x8xf32>
    %206 = vector.shape_cast %205 : vector<2x8x8xf32> to vector<16x8xf32>
    %207 = tpu.concatenate %200, %202, %204, %206 in 1 : vector<16x8xf32>, vector<16x8xf32>, vector<16x8xf32>, vector<16x8xf32> -> vector<16x32xf32>
    %208 = arith.truncf %207 : vector<16x32xf32> to vector<16x32xbf16>
    %c0_67 = arith.constant 0 : index
    %c0_68 = arith.constant 0 : index
    %c0_69 = arith.constant 0 : index
    %209 = vector.load %arg15[%c0_67, %c0_68, %c0_69] : memref<1x32x32xbf16, #tpu.memory_space<vmem>>, vector<1x32x32xbf16>
    %210 = vector.shape_cast %209 : vector<1x32x32xbf16> to vector<32x32xbf16>
    %cst_70 = arith.constant dense<0.000000e+00> : vector<16x32xf32>
    %211 = tpu.matmul %208, %210, %cst_70 {dimension_numbers = #tpu.dot_dimension_numbers<[1], [0], [0], [1], [0, 0, 1, 1], [], []>} : vector<16x32xbf16>, vector<32x32xbf16>, vector<16x32xf32> -> vector<16x32xf32>
    %212 = arith.addf %106, %211 : vector<16x32xf32>
    %c0_71 = arith.constant 0 : index
    %c0_72 = arith.constant 0 : index
    %c0_73 = arith.constant 0 : index
    %213 = vector.load %arg16[%c0_71, %c0_72, %c0_73] : memref<1x1x32xf32, #tpu.memory_space<vmem>>, vector<1x1x32xf32>
    %214 = vector.shape_cast %213 : vector<1x1x32xf32> to vector<1x32xf32>
    %215 = vector.broadcast %214 : vector<1x32xf32> to vector<16x32xf32>
    %216 = arith.addf %212, %215 : vector<16x32xf32>
    %c0_74 = arith.constant 0 : index
    %c0_75 = arith.constant 0 : index
    %c0_76 = arith.constant 0 : index
    %217 = vector.load %arg23[%c0_74, %c0_75, %c0_76] : memref<1x1x32xf32, #tpu.memory_space<vmem>>, vector<1x1x32xf32>
    %218 = vector.shape_cast %217 : vector<1x1x32xf32> to vector<1x32xf32>
    %c0_77 = arith.constant 0 : index
    %c0_78 = arith.constant 0 : index
    %c0_79 = arith.constant 0 : index
    %219 = vector.load %arg24[%c0_77, %c0_78, %c0_79] : memref<1x1x32xf32, #tpu.memory_space<vmem>>, vector<1x1x32xf32>
    %220 = vector.shape_cast %219 : vector<1x1x32xf32> to vector<1x32xf32>
    %cst_80 = arith.constant dense<0.000000e+00> : vector<16xf32>
    %221 = vector.multi_reduction <add>, %216, %cst_80 [1] : vector<16x32xf32> to vector<16xf32>
    %222 = vector.shape_cast %221 : vector<16xf32> to vector<16x1xf32>
    %cst_81 = arith.constant 3.200000e+01 : f32
    %223 = vector.broadcast %cst_81 : f32 to vector<16x1xf32>
    %224 = arith.divf %222, %223 : vector<16x1xf32>
    %225 = vector.broadcast %224 : vector<16x1xf32> to vector<16x32xf32>
    %226 = arith.subf %216, %225 : vector<16x32xf32>
    %227 = arith.mulf %226, %226 : vector<16x32xf32>
    %cst_82 = arith.constant dense<0.000000e+00> : vector<16xf32>
    %228 = vector.multi_reduction <add>, %227, %cst_82 [1] : vector<16x32xf32> to vector<16xf32>
    %229 = vector.shape_cast %228 : vector<16xf32> to vector<16x1xf32>
    %cst_83 = arith.constant 0.0322580636 : f32
    %230 = vector.broadcast %cst_83 : f32 to vector<16x1xf32>
    %231 = arith.mulf %229, %230 : vector<16x1xf32>
    %232 = math.sqrt %231 : vector<16x1xf32>
    %cst_84 = arith.constant 9.99999997E-7 : f32
    %233 = vector.broadcast %cst_84 : f32 to vector<16x1xf32>
    %234 = arith.addf %232, %233 : vector<16x1xf32>
    %235 = tpu.reciprocal %234 {approx = true} : vector<16x1xf32> -> vector<16x1xf32>
    %236 = vector.broadcast %218 : vector<1x32xf32> to vector<16x32xf32>
    %237 = arith.mulf %236, %226 : vector<16x32xf32>
    %238 = vector.broadcast %235 : vector<16x1xf32> to vector<16x32xf32>
    %239 = arith.mulf %237, %238 : vector<16x32xf32>
    %240 = vector.broadcast %220 : vector<1x32xf32> to vector<16x32xf32>
    %241 = arith.addf %239, %240 : vector<16x32xf32>
    %242 = arith.truncf %241 : vector<16x32xf32> to vector<16x32xbf16>
    %c0_85 = arith.constant 0 : index
    %c0_86 = arith.constant 0 : index
    %c0_87 = arith.constant 0 : index
    %243 = vector.load %arg19[%c0_85, %c0_86, %c0_87] : memref<1x32x64xbf16, #tpu.memory_space<vmem>>, vector<1x32x64xbf16>
    %244 = vector.shape_cast %243 : vector<1x32x64xbf16> to vector<32x64xbf16>
    %cst_88 = arith.constant dense<0.000000e+00> : vector<16x64xf32>
    %245 = tpu.matmul %242, %244, %cst_88 {dimension_numbers = #tpu.dot_dimension_numbers<[1], [0], [0], [1], [0, 0, 1, 1], [], []>} : vector<16x32xbf16>, vector<32x64xbf16>, vector<16x64xf32> -> vector<16x64xf32>
    %c0_89 = arith.constant 0 : index
    %c0_90 = arith.constant 0 : index
    %c0_91 = arith.constant 0 : index
    %246 = vector.load %arg20[%c0_89, %c0_90, %c0_91] : memref<1x1x64xf32, #tpu.memory_space<vmem>>, vector<1x1x64xf32>
    %247 = vector.shape_cast %246 : vector<1x1x64xf32> to vector<1x64xf32>
    %248 = vector.broadcast %247 : vector<1x64xf32> to vector<16x64xf32>
    %249 = arith.addf %245, %248 : vector<16x64xf32>
    %cst_92 = arith.constant 0.000000e+00 : f32
    %250 = vector.broadcast %cst_92 : f32 to vector<16x64xf32>
    %251 = arith.maximumf %249, %250 : vector<16x64xf32>
    %252 = arith.truncf %251 : vector<16x64xf32> to vector<16x64xbf16>
    %c0_93 = arith.constant 0 : index
    %c0_94 = arith.constant 0 : index
    %c0_95 = arith.constant 0 : index
    %253 = vector.load %arg21[%c0_93, %c0_94, %c0_95] : memref<1x64x32xbf16, #tpu.memory_space<vmem>>, vector<1x64x32xbf16>
    %254 = vector.shape_cast %253 : vector<1x64x32xbf16> to vector<64x32xbf16>
    %cst_96 = arith.constant dense<0.000000e+00> : vector<16x32xf32>
    %255 = tpu.matmul %252, %254, %cst_96 {dimension_numbers = #tpu.dot_dimension_numbers<[1], [0], [0], [1], [0, 0, 1, 1], [], []>} : vector<16x64xbf16>, vector<64x32xbf16>, vector<16x32xf32> -> vector<16x32xf32>
    %256 = arith.addf %216, %255 : vector<16x32xf32>
    %c0_97 = arith.constant 0 : index
    %c0_98 = arith.constant 0 : index
    %c0_99 = arith.constant 0 : index
    %257 = vector.load %arg22[%c0_97, %c0_98, %c0_99] : memref<1x1x32xf32, #tpu.memory_space<vmem>>, vector<1x1x32xf32>
    %258 = vector.shape_cast %257 : vector<1x1x32xf32> to vector<1x32xf32>
    %259 = vector.broadcast %258 : vector<1x32xf32> to vector<16x32xf32>
    %260 = arith.addf %256, %259 : vector<16x32xf32>
    %c0_100 = arith.constant 0 : index
    %c0_101 = arith.constant 0 : index
    %261 = vector.load %arg25[%c0_100, %c0_101] : memref<16x32xf32, #tpu.memory_space<vmem>>, vector<16x32xf32>
    tpu.vector_store %arg25[%c0_100, %c0_101], %260 {strides = array<i32>} : memref<16x32xf32, #tpu.memory_space<vmem>>, vector<16x32xf32>,
    return
  }
  func.func @transform_0(%arg0: i32) -> (i32, i32) {
    %c0_i32 = arith.constant 0 : i32
    %c0_i32_0 = arith.constant 0 : i32
    %c0_i32_1 = arith.constant 0 : i32
    return %c0_i32, %c0_i32_0 : i32, i32
  }
  func.func @transform_1(%arg0: i32) -> (i32, i32) {
    %c0_i32 = arith.constant 0 : i32
    %c0_i32_0 = arith.constant 0 : i32
    %c0_i32_1 = arith.constant 0 : i32
    return %c0_i32, %c0_i32_0 : i32, i32
  }
  func.func @transform_2(%arg0: i32) -> (i32, i32, i32) {
    %c0_i32 = arith.constant 0 : i32
    %c0_i32_0 = arith.constant 0 : i32
    %c0_i32_1 = arith.constant 0 : i32
    %c0_i32_2 = arith.constant 0 : i32
    return %c0_i32, %c0_i32_0, %c0_i32_1 : i32, i32, i32
  }
  func.func @transform_3(%arg0: i32) -> (i32, i32, i32) {
    %c0_i32 = arith.constant 0 : i32
    %c0_i32_0 = arith.constant 0 : i32
    %c0_i32_1 = arith.constant 0 : i32
    %c0_i32_2 = arith.constant 0 : i32
    return %c0_i32, %c0_i32_0, %c0_i32_1 : i32, i32, i32
  }
  func.func @transform_4(%arg0: i32) -> (i32, i32, i32) {
    %c0_i32 = arith.constant 0 : i32
    %c0_i32_0 = arith.constant 0 : i32
    %c0_i32_1 = arith.constant 0 : i32
    return %arg0, %c0_i32, %c0_i32_0 : i32, i32, i32
  }
  func.func @transform_5(%arg0: i32) -> (i32, i32, i32) {
    %c0_i32 = arith.constant 0 : i32
    %c0_i32_0 = arith.constant 0 : i32
    %c0_i32_1 = arith.constant 0 : i32
    return %arg0, %c0_i32, %c0_i32_0 : i32, i32, i32
  }
  func.func @transform_6(%arg0: i32) -> (i32, i32, i32) {
    %c0_i32 = arith.constant 0 : i32
    %c0_i32_0 = arith.constant 0 : i32
    %c0_i32_1 = arith.constant 0 : i32
    return %arg0, %c0_i32, %c0_i32_0 : i32, i32, i32
  }
  func.func @transform_7(%arg0: i32) -> (i32, i32, i32) {
    %c0_i32 = arith.constant 0 : i32
    %c0_i32_0 = arith.constant 0 : i32
    %c0_i32_1 = arith.constant 0 : i32
    return %arg0, %c0_i32, %c0_i32_0 : i32, i32, i32
  }
  func.func @transform_8(%arg0: i32) -> (i32, i32, i32) {
    %c0_i32 = arith.constant 0 : i32
    %c0_i32_0 = arith.constant 0 : i32
    %c0_i32_1 = arith.constant 0 : i32
    return %arg0, %c0_i32, %c0_i32_0 : i32, i32, i32
  }
  func.func @transform_9(%arg0: i32) -> (i32, i32, i32) {
    %c0_i32 = arith.constant 0 : i32
    %c0_i32_0 = arith.constant 0 : i32
    %c0_i32_1 = arith.constant 0 : i32
    return %arg0, %c0_i32, %c0_i32_0 : i32, i32, i32
  }
  func.func @transform_10(%arg0: i32) -> (i32, i32, i32) {
    %c0_i32 = arith.constant 0 : i32
    %c0_i32_0 = arith.constant 0 : i32
    %c0_i32_1 = arith.constant 0 : i32
    return %arg0, %c0_i32, %c0_i32_0 : i32, i32, i32
  }
  func.func @transform_11(%arg0: i32) -> (i32, i32, i32) {
    %c0_i32 = arith.constant 0 : i32
    %c0_i32_0 = arith.constant 0 : i32
    %c0_i32_1 = arith.constant 0 : i32
    return %arg0, %c0_i32, %c0_i32_0 : i32, i32, i32
  }
  func.func @transform_12(%arg0: i32) -> (i32, i32, i32) {
    %c0_i32 = arith.constant 0 : i32
    %c0_i32_0 = arith.constant 0 : i32
    %c0_i32_1 = arith.constant 0 : i32
    return %arg0, %c0_i32, %c0_i32_0 : i32, i32, i32
  }
  func.func @transform_13(%arg0: i32) -> (i32, i32, i32) {
    %c0_i32 = arith.constant 0 : i32
    %c0_i32_0 = arith.constant 0 : i32
    %c0_i32_1 = arith.constant 0 : i32
    return %arg0, %c0_i32, %c0_i32_0 : i32, i32, i32
  }
  func.func @transform_14(%arg0: i32) -> (i32, i32, i32) {
    %c0_i32 = arith.constant 0 : i32
    %c0_i32_0 = arith.constant 0 : i32
    %c0_i32_1 = arith.constant 0 : i32
    return %arg0, %c0_i32, %c0_i32_0 : i32, i32, i32
  }
  func.func @transform_15(%arg0: i32) -> (i32, i32, i32) {
    %c0_i32 = arith.constant 0 : i32
    %c0_i32_0 = arith.constant 0 : i32
    %c0_i32_1 = arith.constant 0 : i32
    return %arg0, %c0_i32, %c0_i32_0 : i32, i32, i32
  }
  func.func @transform_16(%arg0: i32) -> (i32, i32, i32) {
    %c0_i32 = arith.constant 0 : i32
    %c0_i32_0 = arith.constant 0 : i32
    %c0_i32_1 = arith.constant 0 : i32
    return %arg0, %c0_i32, %c0_i32_0 : i32, i32, i32
  }
  func.func @transform_17(%arg0: i32) -> (i32, i32, i32) {
    %c0_i32 = arith.constant 0 : i32
    %c0_i32_0 = arith.constant 0 : i32
    %c0_i32_1 = arith.constant 0 : i32
    return %arg0, %c0_i32, %c0_i32_0 : i32, i32, i32
  }
  func.func @transform_18(%arg0: i32) -> (i32, i32, i32) {
    %c0_i32 = arith.constant 0 : i32
    %c0_i32_0 = arith.constant 0 : i32
    %c0_i32_1 = arith.constant 0 : i32
    return %arg0, %c0_i32, %c0_i32_0 : i32, i32, i32
  }
  func.func @transform_19(%arg0: i32) -> (i32, i32, i32) {
    %c0_i32 = arith.constant 0 : i32
    %c0_i32_0 = arith.constant 0 : i32
    %c0_i32_1 = arith.constant 0 : i32
    return %arg0, %c0_i32, %c0_i32_0 : i32, i32, i32
  }
  func.func @transform_20(%arg0: i32) -> (i32, i32, i32) {
    %c0_i32 = arith.constant 0 : i32
    %c0_i32_0 = arith.constant 0 : i32
    %c0_i32_1 = arith.constant 0 : i32
    return %arg0, %c0_i32, %c0_i32_0 : i32, i32, i32
  }
  func.func @transform_21(%arg0: i32) -> (i32, i32, i32) {
    %c0_i32 = arith.constant 0 : i32
    %c0_i32_0 = arith.constant 0 : i32
    %c0_i32_1 = arith.constant 0 : i32
    return %arg0, %c0_i32, %c0_i32_0 : i32, i32, i32
  }
  func.func @transform_22(%arg0: i32) -> (i32, i32, i32) {
    %c0_i32 = arith.constant 0 : i32
    %c0_i32_0 = arith.constant 0 : i32
    %c0_i32_1 = arith.constant 0 : i32
    return %arg0, %c0_i32, %c0_i32_0 : i32, i32, i32
  }
  func.func @transform_23(%arg0: i32) -> (i32, i32, i32) {
    %c0_i32 = arith.constant 0 : i32
    %c0_i32_0 = arith.constant 0 : i32
    %c0_i32_1 = arith.constant 0 : i32
    return %arg0, %c0_i32, %c0_i32_0 : i32, i32, i32
  }
  func.func @transform_24(%arg0: i32) -> (i32, i32) {
    %c0_i32 = arith.constant 0 : i32
    %c0_i32_0 = arith.constant 0 : i32
    %c0_i32_1 = arith.constant 0 : i32
    return %c0_i32, %c0_i32_0 : i32, i32
  }
}

</mosaic_0001>

<llo_original>
// kernel: transformer_forward.5
$region0: #{transformer_forward.5}
  #allocation0 [shape = 'u32[]', space=smem, size = 0x4, offset = 0x4, fixed_abs, tag = 'smem constant byte address 0x4 - core index']
  #allocation1 [shape = 'u32[144,128]{1,0:T(1,128)}', space=vmem, size = 0x12000, scoped, tag = 'internal scratch']
  %s0 = inlined_call_operand.vmem [shape: f32[16,32], index: 0, kind: input, shape index: {}]
  %s1 = inlined_call_operand.vmem [shape: f32[1,32], index: 1, kind: input, shape index: {}]
  %s2 = inlined_call_operand.vmem [shape: f32[1,32], index: 2, kind: input, shape index: {}]
  %s3 = inlined_call_operand.vmem [shape: bf16[32,128], index: 3, kind: input, shape index: {}]
  %s4 = inlined_call_operand.vmem [shape: f32[1,128], index: 4, kind: input, shape index: {}]
  %s5 = inlined_call_operand.vmem [shape: f32[16,128], index: 5, kind: output, shape index: {}]
  %s6 = sld [smem:[#allocation0]]
  $region30: #{transformer_forward.5} parent=0
    _
  %s8 = ssub.s32 1, %s6
  %s9 = scalar_select 0, %s8, %s6
  // Predicated region
  $region2: #{transformer_forward.5} parent=0 // pred_check
    _
  $region3: #{transformer_forward.5} parent=0 // pred_check_branch
    %11 = sbr.rel (0) target = $region5
  $region4: #{transformer_forward.5} parent=0 // pred_region
    _
  $region5: #{transformer_forward.5} parent=0 // pred_fallthru
    _
  // Predicated region
  $region6: #{transformer_forward.5} parent=0 // pred_check
    _
  $region7: #{transformer_forward.5} parent=0 // pred_check_branch
    %13 = sbr.rel (0) target = $region9
  $region8: #{transformer_forward.5} parent=0 // pred_region
    _
  $region9: #{transformer_forward.5} parent=0 // pred_fallthru
    _
  // Predicated region
  $region10: #{transformer_forward.5} parent=0 // pred_check
    _
  $region11: #{transformer_forward.5} parent=0 // pred_check_branch
    %15 = sbr.rel (0) target = $region13
  $region12: #{transformer_forward.5} parent=0 // pred_region
    _
  $region13: #{transformer_forward.5} parent=0 // pred_fallthru
    _
  // Predicated region
  $region14: #{transformer_forward.5} parent=0 // pred_check
    _
  $region15: #{transformer_forward.5} parent=0 // pred_check_branch
    %17 = sbr.rel (0) target = $region17
  $region16: #{transformer_forward.5} parent=0 // pred_region
    _
  $region17: #{transformer_forward.5} parent=0 // pred_fallthru
    _
  // Predicated region
  $region18: #{transformer_forward.5} parent=0 // pred_check
    _
  $region19: #{transformer_forward.5} parent=0 // pred_check_branch
    %19 = sbr.rel (0) target = $region21
  $region20: #{transformer_forward.5} parent=0 // pred_region
    _
  $region21: #{transformer_forward.5} parent=0 // pred_fallthru
    _
  %v21 = vld [vmem:[%s0] sm:$0xff]
  %v22 = vld [vmem:[%s0 + $0x8] sm:$0xff]
  %v23 = vld [vmem:[%s1] sm:$0x1]
  %v24 = vld [vmem:[%s2] sm:$0x1]
  %vm25 = vcmask 261120
  %v26 = vsel %vm25, %v21, 0.0
  %27 = vadd.xlane.f32.xlu0 %v26
  %v28 = vpop.xlane.xlu0 %27
  %v29 = vsel %vm25, %v22, 0.0
  %30 = vadd.xlane.f32.xlu0 %v29
  %v31 = vpop.xlane.xlu0 %30
  %v32 = vrcp.pop 32.0
  %v33 = vmul.f32 %v28, %v32
  %v34 = vmul.f32 %v31, %v32
  %v35 = vsub.f32 %v21, %v33
  %v36 = vsub.f32 %v22, %v34
  %v37 = vmul.f32 %v35, %v35
  %v38 = vmul.f32 %v36, %v36
  %v39 = vsel %vm25, %v37, 0.0
  %40 = vadd.xlane.f32.xlu0 %v39
  %v41 = vpop.xlane.xlu0 %40
  %v42 = vsel %vm25, %v38, 0.0
  %43 = vadd.xlane.f32.xlu0 %v42
  %v44 = vpop.xlane.xlu0 %43
  %v45 = vmul.f32 %v41, 0.032258064
  %v46 = vmul.f32 %v44, 0.032258064
  %v47 = vrsqrt.pop %v45
  %v48 = vmul.f32 %v45, %v47
  %vm49 = vcmp.eq.f32.partialorder %v45, inf
  %v50 = vsel %vm49, %v45, %v48
  %vm51 = vcmp.eq.f32.partialorder %v45, 0.0
  %v52 = vand.u32 %v45, 2147483648
  %v53 = vsel %vm51, %v52, %v50
  %v54 = vrsqrt.pop %v46
  %v55 = vmul.f32 %v46, %v54
  %vm56 = vcmp.eq.f32.partialorder %v46, inf
  %v57 = vsel %vm56, %v46, %v55
  %vm58 = vcmp.eq.f32.partialorder %v46, 0.0
  %v59 = vand.u32 %v46, 2147483648
  %v60 = vsel %vm58, %v59, %v57
  %v61 = vadd.f32 %v53, 1e-06
  %v62 = vadd.f32 %v60, 1e-06
  %v63 = vrcp.pop %v61
  %v64 = vrcp.pop %v62
  %v66 = vlaneseq
  %v67 = vshrl.u32 %v66, 7
  %v68 = vsub.s32 0, %v67
  %v69 = vrot.slane %v23, %v68
  %v71 = vmul.f32 %v69, %v35
  %v72 = vmul.f32 %v69, %v36
  %v73 = vmul.f32 %v71, %v63
  %v74 = vmul.f32 %v72, %v64
  %v76 = vlaneseq
  %v77 = vshrl.u32 %v76, 7
  %v78 = vsub.s32 0, %v77
  %v79 = vrot.slane %v24, %v78
  %v81 = vadd.f32 %v73, %v79
  %v82 = vadd.f32 %v74, %v79
  %v83 = vpack.c.bf16 %v82, %v81
  %v84 = vld [vmem:[%s3] sm:$0xf]
  %v85 = vld [vmem:[%s3 + $0x4] sm:$0xf]
  %v86 = vld [vmem:[%s3 + $0x8] sm:$0xf]
  %v87 = vld [vmem:[%s3 + $0xc] sm:$0xf]
  %v88 = vld [vmem:[%s4] sm:$0x1]
  %v90 = vlaneseq
  %v91 = vshrl.u32 %v90, 7
  %v92 = vsub.s32 0, %v91
  %v93 = vrot.slane %v88, %v92
  %v99 = vunpack.c.l.b16 %v84
  %v100 = vunpack.c.l.b16 %v85
  %v101 = vunpack.c.l.b16 %v86
  %v102 = vunpack.c.l.b16 %v87
  %v103 = vpack.c.b16 %v100, %v99
  %v104 = vpack.c.b16 %v102, %v101
  %v108 = vsel %vm25, %v83, 0
  %110 = vmatprep.subr.bf16.mxu0 0
  %111 = vmatpush1.bf16.msra.mxu0 0
  %112 = vmatprep.subr.bf16.mxu0 0
  %113 = vmatpush1.bf16.msra.mxu0 0
  %114 = vmatprep.subr.bf16.mxu0 0
  %115 = vmatpush1.bf16.msra.mxu0 0
  %116 = vmatprep.subr.bf16.mxu0 0
  %117 = vmatpush1.bf16.msra.mxu0 0
  %118 = vmatprep.subr.bf16.mxu0 0
  %119 = vmatpush1.bf16.msra.mxu0 0
  %120 = vmatprep.subr.bf16.mxu0 0
  %121 = vmatpush1.bf16.msra.mxu0 0
  %122 = vmatprep.subr.bf16.mxu0 0
  %123 = vmatpush1.bf16.msra.mxu0 %v104
  %124 = vmatprep.subr.bf16.mxu0 0
  %125 = vmatpush1.bf16.msra.mxu0 %v103
  %126 = vmatprep.subr.bf16.mxu0 0
  %127 = vmatpush2.bf16.msra.mxu0 0
  %128 = vmatprep.subr.bf16.mxu0 0
  %129 = vmatpush2.bf16.msra.mxu0 0
  %130 = vmatprep.subr.bf16.mxu0 0
  %131 = vmatpush2.bf16.msra.mxu0 0
  %132 = vmatprep.subr.bf16.mxu0 0
  %133 = vmatpush2.bf16.msra.mxu0 0
  %134 = vmatprep.subr.bf16.mxu0 0
  %135 = vmatpush2.bf16.msra.mxu0 0
  %136 = vmatprep.subr.bf16.mxu0 0
  %137 = vmatpush2.bf16.msra.mxu0 0
  %138 = vmatprep.subr.bf16.mxu0 0
  %139 = vmatpush2.bf16.msra.mxu0 0
  %140 = vmatprep.subr.bf16.mxu0 0
  %141 = vmatpush2.bf16.msra.mxu0 0
  %142 = vmatprep.mubr.bf16.mxu0 0
  %143 = vmatmul.mubr.bf16.gmra.mxu0 %v108
  %v144 = vpop.f32.mrf.mxu0
  %v145 = vadd.f32 %v93, %v144
  %v146 = vpop.f32.mrf.mxu0
  %v147 = vpop.f32.mrf.mxu0
  %v148 = vadd.f32 %v93, %v147
  %v149 = vpop.f32.mrf.mxu0
  %150 = vdwg.mxu0
  %151 = vmax.xlane.f32.xlu0 %v145
  %v152 = vpop.xlane.xlu0 %151
  %153 = vmax.xlane.f32.xlu0 %v148
  %v154 = vpop.xlane.xlu0 %153
  %v155 = vsub.f32 %v145, %v152
  %v156 = vsub.f32 %v148, %v154
  %v157 = vmul.f32 %v155, 1.442695
  %v158 = vpow.pop %v157
  %v159 = vmul.f32 %v156, 1.442695
  %v160 = vpow.pop %v159
  %161 = vadd.xlane.f32.xlu0 %v158
  %v162 = vpop.xlane.xlu0 %161
  %163 = vadd.xlane.f32.xlu0 %v160
  %v164 = vpop.xlane.xlu0 %163
  %v165 = vlog2.pop %v162
  %v166 = vmul.f32 %v165, 0.6931472
  %v167 = vlog2.pop %v164
  %v168 = vmul.f32 %v167, 0.6931472
  %v169 = vsub.f32 %v155, %v166
  %v170 = vsub.f32 %v156, %v168
  %171 = vst [vmem:[%s5] sm:$0xff] %v169
  %172 = vst [vmem:[%s5 + $0x8] sm:$0xff] %v170
  // Predicated region
  $region22: #{transformer_forward.5} parent=0 // pred_check
    _
  $region23: #{transformer_forward.5} parent=0 // pred_check_branch
    %174 = sbr.rel (0) target = $region25
  $region24: #{transformer_forward.5} parent=0 // pred_region
    _
  $region25: #{transformer_forward.5} parent=0 // pred_fallthru
    _
  // Predicated region
  $region26: #{transformer_forward.5} parent=0 // pred_check
    _
  $region27: #{transformer_forward.5} parent=0 // pred_check_branch
    %176 = sbr.rel (0) target = $region29
  $region28: #{transformer_forward.5} parent=0 // pred_region
    _
  $region29: #{transformer_forward.5} parent=0 // pred_fallthru
    _

// kernel: transformer_forward.3
$region0: #{transformer_forward.3}
  #allocation0 [shape = 'u32[]', space=smem, size = 0x4, offset = 0x4, fixed_abs, tag = 'smem constant byte address 0x4 - core index']
  #allocation1 [shape = 'u32[144,128]{1,0:T(1,128)}', space=vmem, size = 0x12000, scoped, tag = 'internal scratch']
  %s0 = inlined_call_operand.vmem [shape: f32[16,32], index: 0, kind: input, shape index: {}]
  %s1 = inlined_call_operand.vmem [shape: f32[2,1,8], index: 1, kind: input, shape index: {}]
  %s2 = inlined_call_operand.vmem [shape: bf16[2,32,96], index: 2, kind: input, shape index: {}]
  %s3 = inlined_call_operand.vmem [shape: f32[2,1,96], index: 3, kind: input, shape index: {}]
  %s4 = inlined_call_operand.vmem [shape: bf16[2,32,32], index: 4, kind: input, shape index: {}]
  %s5 = inlined_call_operand.vmem [shape: f32[2,1,32], index: 5, kind: input, shape index: {}]
  %s6 = inlined_call_operand.vmem [shape: f32[2,1,32], index: 6, kind: input, shape index: {}]
  %s7 = inlined_call_operand.vmem [shape: f32[2,1,32], index: 7, kind: input, shape index: {}]
  %s8 = inlined_call_operand.vmem [shape: bf16[2,32,64], index: 8, kind: input, shape index: {}]
  %s9 = inlined_call_operand.vmem [shape: f32[2,1,64], index: 9, kind: input, shape index: {}]
  %s10 = inlined_call_operand.vmem [shape: bf16[2,64,32], index: 10, kind: input, shape index: {}]
  %s11 = inlined_call_operand.vmem [shape: f32[2,1,32], index: 11, kind: input, shape index: {}]
  %s12 = inlined_call_operand.vmem [shape: f32[2,1,32], index: 12, kind: input, shape index: {}]
  %s13 = inlined_call_operand.vmem [shape: f32[2,1,32], index: 13, kind: input, shape index: {}]
  %s14 = inlined_call_operand.vmem [shape: f32[1,32], index: 14, kind: input, shape index: {}]
  %s15 = inlined_call_operand.vmem [shape: f32[1,32], index: 15, kind: input, shape index: {}]
  %s16 = inlined_call_operand.vmem [shape: f32[16,32], index: 16, kind: output, shape index: {}]
  %s17 = sld [smem:[#allocation0]]
  $region105: #{transformer_forward.3} parent=0
    _
  %s19 = ssub.s32 1, %s17
  %s20 = scalar_select 0, %s19, %s17
  loop: start=0, step=1, limit=4
  $region2: #{transformer_forward.3} parent=0 // loop_pre_header
    _
  $region3: #{transformer_forward.3} parent=0 // loop_header
    %s22 = sphi 0, %s26
    %p23 = scmp.ge.s32.totalorder %s22, 4
    %s30 = sphi 0, %s30
    %s32 = sphi 0, %s30
    %s33 = sphi 0, %s32
    %s47 = sphi 0, %s33
    %s51 = sphi 0, %s51
    %s53 = sphi 0, %s51
    %s54 = sphi 0, %s53
    %s68 = sphi 0, %s54
    %s74 = sphi 0, %s76
    %s77 = sphi 0, %s74
    %s78 = sphi 0, %s77
    %s94 = sphi 0, %s78
    %s100 = sphi 0, %s102
    %s103 = sphi 0, %s100
    %s104 = sphi 0, %s103
    %s120 = sphi 0, %s104
    %s126 = sphi 0, %s128
    %s129 = sphi 0, %s126
    %s130 = sphi 0, %s129
    %s146 = sphi 0, %s130
    %s152 = sphi 0, %s154
    %s155 = sphi 0, %s152
    %s156 = sphi 0, %s155
    %s172 = sphi 0, %s156
    %s178 = sphi 0, %s180
    %s181 = sphi 0, %s178
    %s182 = sphi 0, %s181
    %s198 = sphi 0, %s182
    %s204 = sphi 0, %s206
    %s207 = sphi 0, %s204
    %s208 = sphi 0, %s207
    %s224 = sphi 0, %s208
    %s230 = sphi 0, %s232
    %s233 = sphi 0, %s230
    %s234 = sphi 0, %s233
    %s250 = sphi 0, %s234
    %s256 = sphi 0, %s258
    %s259 = sphi 0, %s256
    %s260 = sphi 0, %s259
    %s276 = sphi 0, %s260
    %s282 = sphi 0, %s284
    %s285 = sphi 0, %s282
    %s286 = sphi 0, %s285
    %s302 = sphi 0, %s286
    %s308 = sphi 0, %s310
    %s311 = sphi 0, %s308
    %s312 = sphi 0, %s311
    %s328 = sphi 0, %s312
    %s334 = sphi 0, %s336
    %s337 = sphi 0, %s334
    %s338 = sphi 0, %s337
    %s354 = sphi 0, %s338
    %s360 = sphi 0, %s362
    %s363 = sphi 0, %s360
    %s364 = sphi 0, %s363
    %s380 = sphi 0, %s364
    %s384 = sphi 0, %s384
    %s386 = sphi 0, %s384
    %s387 = sphi 0, %s386
    %s401 = sphi 0, %s387
    %s405 = sphi 0, %s405
    %s407 = sphi 0, %s405
    %s408 = sphi 0, %s407
    %s422 = sphi 0, %s408
    %s426 = sphi 0, %s426
    %s428 = sphi 0, %s426
    %s429 = sphi 0, %s428
    %s443 = sphi 0, %s429
  $region4: #{transformer_forward.3} parent=0 // loop_header_branch
    %25 = sbr.rel (%p23) target = $region8
  $region5: #{transformer_forward.3} parent=0 // loop_body
    %s27 = ssub.s32 %s22, 1
    %s28 = ssub.s32 %s22, 2
    %s29 = sadd.s32 %s22, 1
    %s31 = sadd.s32 %s30, 1
    %p34 = scmp.eq.s32.totalorder %s22, 1
    %p35 = scmp.ne.s32.totalorder %s30, %s32
    %p36 = scmp.eq.s32.totalorder %s22, 0
    %p37 = por %p35, %p36
    %p38 = scmp.ne.s32.totalorder %s30, %s32
    %p39 = scmp.eq.s32.totalorder %s27, 1
    %p40 = por %p38, %p39
    %p41 = scmp.ne.s32.totalorder %s32, %s33
    %p42 = scmp.eq.s32.totalorder %s27, 0
    %p43 = por %p41, %p42
    %p44 = scmp.ne.s32.totalorder %s32, %s33
    %p45 = scmp.eq.s32.totalorder %s28, 1
    %p46 = por %p44, %p45
    %p48 = scmp.ne.s32.totalorder %s33, %s47
    %p49 = scmp.eq.s32.totalorder %s28, 0
    %p50 = por %p48, %p49
    %s52 = sadd.s32 %s51, 1
    %p55 = scmp.eq.s32.totalorder %s22, 1
    %p56 = scmp.ne.s32.totalorder %s51, %s53
    %p57 = scmp.eq.s32.totalorder %s22, 0
    %p58 = por %p56, %p57
    %p59 = scmp.ne.s32.totalorder %s51, %s53
    %p60 = scmp.eq.s32.totalorder %s27, 1
    %p61 = por %p59, %p60
    %p62 = scmp.ne.s32.totalorder %s53, %s54
    %p63 = scmp.eq.s32.totalorder %s27, 0
    %p64 = por %p62, %p63
    %p65 = scmp.ne.s32.totalorder %s53, %s54
    %p66 = scmp.eq.s32.totalorder %s28, 1
    %p67 = por %p65, %p66
    %p69 = scmp.ne.s32.totalorder %s54, %s68
    %p70 = scmp.eq.s32.totalorder %s28, 0
    %p71 = por %p69, %p70
    %s72 = ssub.s32 %s22, %s29
    %p73 = scmp.eq.s32.totalorder %s72, 0
    %s75 = sadd.s32 %s74, 1
    %s76 = scalar_select %p73, %s74, %s75
    %p79 = pneg %p73
    %p80 = scmp.eq.s32.totalorder %s22, 1
    %p81 = por %p79, %p80
    %p82 = scmp.ne.s32.totalorder %s74, %s77
    %p83 = scmp.eq.s32.totalorder %s22, 0
    %p84 = por %p82, %p83
    %p85 = scmp.ne.s32.totalorder %s74, %s77
    %p86 = scmp.eq.s32.totalorder %s27, 1
    %p87 = por %p85, %p86
    %p88 = scmp.ne.s32.totalorder %s77, %s78
    %p89 = scmp.eq.s32.totalorder %s27, 0
    %p90 = por %p88, %p89
    %p91 = scmp.ne.s32.totalorder %s77, %s78
    %p92 = scmp.eq.s32.totalorder %s28, 1
    %p93 = por %p91, %p92
    %p95 = scmp.ne.s32.totalorder %s78, %s94
    %p96 = scmp.eq.s32.totalorder %s28, 0
    %p97 = por %p95, %p96
    %s98 = ssub.s32 %s22, %s29
    %p99 = scmp.eq.s32.totalorder %s98, 0
    %s101 = sadd.s32 %s100, 1
    %s102 = scalar_select %p99, %s100, %s101
    %p105 = pneg %p99
    %p106 = scmp.eq.s32.totalorder %s22, 1
    %p107 = por %p105, %p106
    %p108 = scmp.ne.s32.totalorder %s100, %s103
    %p109 = scmp.eq.s32.totalorder %s22, 0
    %p110 = por %p108, %p109
    %p111 = scmp.ne.s32.totalorder %s100, %s103
    %p112 = scmp.eq.s32.totalorder %s27, 1
    %p113 = por %p111, %p112
    %p114 = scmp.ne.s32.totalorder %s103, %s104
    %p115 = scmp.eq.s32.totalorder %s27, 0
    %p116 = por %p114, %p115
    %p117 = scmp.ne.s32.totalorder %s103, %s104
    %p118 = scmp.eq.s32.totalorder %s28, 1
    %p119 = por %p117, %p118
    %p121 = scmp.ne.s32.totalorder %s104, %s120
    %p122 = scmp.eq.s32.totalorder %s28, 0
    %p123 = por %p121, %p122
    %s124 = ssub.s32 %s22, %s29
    %p125 = scmp.eq.s32.totalorder %s124, 0
    %s127 = sadd.s32 %s126, 1
    %s128 = scalar_select %p125, %s126, %s127
    %p131 = pneg %p125
    %p132 = scmp.eq.s32.totalorder %s22, 1
    %p133 = por %p131, %p132
    %p134 = scmp.ne.s32.totalorder %s126, %s129
    %p135 = scmp.eq.s32.totalorder %s22, 0
    %p136 = por %p134, %p135
    %p137 = scmp.ne.s32.totalorder %s126, %s129
    %p138 = scmp.eq.s32.totalorder %s27, 1
    %p139 = por %p137, %p138
    %p140 = scmp.ne.s32.totalorder %s129, %s130
    %p141 = scmp.eq.s32.totalorder %s27, 0
    %p142 = por %p140, %p141
    %p143 = scmp.ne.s32.totalorder %s129, %s130
    %p144 = scmp.eq.s32.totalorder %s28, 1
    %p145 = por %p143, %p144
    %p147 = scmp.ne.s32.totalorder %s130, %s146
    %p148 = scmp.eq.s32.totalorder %s28, 0
    %p149 = por %p147, %p148
    %s150 = ssub.s32 %s22, %s29
    %p151 = scmp.eq.s32.totalorder %s150, 0
    %s153 = sadd.s32 %s152, 1
    %s154 = scalar_select %p151, %s152, %s153
    %p157 = pneg %p151
    %p158 = scmp.eq.s32.totalorder %s22, 1
    %p159 = por %p157, %p158
    %p160 = scmp.ne.s32.totalorder %s152, %s155
    %p161 = scmp.eq.s32.totalorder %s22, 0
    %p162 = por %p160, %p161
    %p163 = scmp.ne.s32.totalorder %s152, %s155
    %p164 = scmp.eq.s32.totalorder %s27, 1
    %p165 = por %p163, %p164
    %p166 = scmp.ne.s32.totalorder %s155, %s156
    %p167 = scmp.eq.s32.totalorder %s27, 0
    %p168 = por %p166, %p167
    %p169 = scmp.ne.s32.totalorder %s155, %s156
    %p170 = scmp.eq.s32.totalorder %s28, 1
    %p171 = por %p169, %p170
    %p173 = scmp.ne.s32.totalorder %s156, %s172
    %p174 = scmp.eq.s32.totalorder %s28, 0
    %p175 = por %p173, %p174
    %s176 = ssub.s32 %s22, %s29
    %p177 = scmp.eq.s32.totalorder %s176, 0
    %s179 = sadd.s32 %s178, 1
    %s180 = scalar_select %p177, %s178, %s179
    %p183 = pneg %p177
    %p184 = scmp.eq.s32.totalorder %s22, 1
    %p185 = por %p183, %p184
    %p186 = scmp.ne.s32.totalorder %s178, %s181
    %p187 = scmp.eq.s32.totalorder %s22, 0
    %p188 = por %p186, %p187
    %p189 = scmp.ne.s32.totalorder %s178, %s181
    %p190 = scmp.eq.s32.totalorder %s27, 1
    %p191 = por %p189, %p190
    %p192 = scmp.ne.s32.totalorder %s181, %s182
    %p193 = scmp.eq.s32.totalorder %s27, 0
    %p194 = por %p192, %p193
    %p195 = scmp.ne.s32.totalorder %s181, %s182
    %p196 = scmp.eq.s32.totalorder %s28, 1
    %p197 = por %p195, %p196
    %p199 = scmp.ne.s32.totalorder %s182, %s198
    %p200 = scmp.eq.s32.totalorder %s28, 0
    %p201 = por %p199, %p200
    %s202 = ssub.s32 %s22, %s29
    %p203 = scmp.eq.s32.totalorder %s202, 0
    %s205 = sadd.s32 %s204, 1
    %s206 = scalar_select %p203, %s204, %s205
    %p209 = pneg %p203
    %p210 = scmp.eq.s32.totalorder %s22, 1
    %p211 = por %p209, %p210
    %p212 = scmp.ne.s32.totalorder %s204, %s207
    %p213 = scmp.eq.s32.totalorder %s22, 0
    %p214 = por %p212, %p213
    %p215 = scmp.ne.s32.totalorder %s204, %s207
    %p216 = scmp.eq.s32.totalorder %s27, 1
    %p217 = por %p215, %p216
    %p218 = scmp.ne.s32.totalorder %s207, %s208
    %p219 = scmp.eq.s32.totalorder %s27, 0
    %p220 = por %p218, %p219
    %p221 = scmp.ne.s32.totalorder %s207, %s208
    %p222 = scmp.eq.s32.totalorder %s28, 1
    %p223 = por %p221, %p222
    %p225 = scmp.ne.s32.totalorder %s208, %s224
    %p226 = scmp.eq.s32.totalorder %s28, 0
    %p227 = por %p225, %p226
    %s228 = ssub.s32 %s22, %s29
    %p229 = scmp.eq.s32.totalorder %s228, 0
    %s231 = sadd.s32 %s230, 1
    %s232 = scalar_select %p229, %s230, %s231
    %p235 = pneg %p229
    %p236 = scmp.eq.s32.totalorder %s22, 1
    %p237 = por %p235, %p236
    %p238 = scmp.ne.s32.totalorder %s230, %s233
    %p239 = scmp.eq.s32.totalorder %s22, 0
    %p240 = por %p238, %p239
    %p241 = scmp.ne.s32.totalorder %s230, %s233
    %p242 = scmp.eq.s32.totalorder %s27, 1
    %p243 = por %p241, %p242
    %p244 = scmp.ne.s32.totalorder %s233, %s234
    %p245 = scmp.eq.s32.totalorder %s27, 0
    %p246 = por %p244, %p245
    %p247 = scmp.ne.s32.totalorder %s233, %s234
    %p248 = scmp.eq.s32.totalorder %s28, 1
    %p249 = por %p247, %p248
    %p251 = scmp.ne.s32.totalorder %s234, %s250
    %p252 = scmp.eq.s32.totalorder %s28, 0
    %p253 = por %p251, %p252
    %s254 = ssub.s32 %s22, %s29
    %p255 = scmp.eq.s32.totalorder %s254, 0
    %s257 = sadd.s32 %s256, 1
    %s258 = scalar_select %p255, %s256, %s257
    %p261 = pneg %p255
    %p262 = scmp.eq.s32.totalorder %s22, 1
    %p263 = por %p261, %p262
    %p264 = scmp.ne.s32.totalorder %s256, %s259
    %p265 = scmp.eq.s32.totalorder %s22, 0
    %p266 = por %p264, %p265
    %p267 = scmp.ne.s32.totalorder %s256, %s259
    %p268 = scmp.eq.s32.totalorder %s27, 1
    %p269 = por %p267, %p268
    %p270 = scmp.ne.s32.totalorder %s259, %s260
    %p271 = scmp.eq.s32.totalorder %s27, 0
    %p272 = por %p270, %p271
    %p273 = scmp.ne.s32.totalorder %s259, %s260
    %p274 = scmp.eq.s32.totalorder %s28, 1
    %p275 = por %p273, %p274
    %p277 = scmp.ne.s32.totalorder %s260, %s276
    %p278 = scmp.eq.s32.totalorder %s28, 0
    %p279 = por %p277, %p278
    %s280 = ssub.s32 %s22, %s29
    %p281 = scmp.eq.s32.totalorder %s280, 0
    %s283 = sadd.s32 %s282, 1
    %s284 = scalar_select %p281, %s282, %s283
    %p287 = pneg %p281
    %p288 = scmp.eq.s32.totalorder %s22, 1
    %p289 = por %p287, %p288
    %p290 = scmp.ne.s32.totalorder %s282, %s285
    %p291 = scmp.eq.s32.totalorder %s22, 0
    %p292 = por %p290, %p291
    %p293 = scmp.ne.s32.totalorder %s282, %s285
    %p294 = scmp.eq.s32.totalorder %s27, 1
    %p295 = por %p293, %p294
    %p296 = scmp.ne.s32.totalorder %s285, %s286
    %p297 = scmp.eq.s32.totalorder %s27, 0
    %p298 = por %p296, %p297
    %p299 = scmp.ne.s32.totalorder %s285, %s286
    %p300 = scmp.eq.s32.totalorder %s28, 1
    %p301 = por %p299, %p300
    %p303 = scmp.ne.s32.totalorder %s286, %s302
    %p304 = scmp.eq.s32.totalorder %s28, 0
    %p305 = por %p303, %p304
    %s306 = ssub.s32 %s22, %s29
    %p307 = scmp.eq.s32.totalorder %s306, 0
    %s309 = sadd.s32 %s308, 1
    %s310 = scalar_select %p307, %s308, %s309
    %p313 = pneg %p307
    %p314 = scmp.eq.s32.totalorder %s22, 1
    %p315 = por %p313, %p314
    %p316 = scmp.ne.s32.totalorder %s308, %s311
    %p317 = scmp.eq.s32.totalorder %s22, 0
    %p318 = por %p316, %p317
    %p319 = scmp.ne.s32.totalorder %s308, %s311
    %p320 = scmp.eq.s32.totalorder %s27, 1
    %p321 = por %p319, %p320
    %p322 = scmp.ne.s32.totalorder %s311, %s312
    %p323 = scmp.eq.s32.totalorder %s27, 0
    %p324 = por %p322, %p323
    %p325 = scmp.ne.s32.totalorder %s311, %s312
    %p326 = scmp.eq.s32.totalorder %s28, 1
    %p327 = por %p325, %p326
    %p329 = scmp.ne.s32.totalorder %s312, %s328
    %p330 = scmp.eq.s32.totalorder %s28, 0
    %p331 = por %p329, %p330
    %s332 = ssub.s32 %s22, %s29
    %p333 = scmp.eq.s32.totalorder %s332, 0
    %s335 = sadd.s32 %s334, 1
    %s336 = scalar_select %p333, %s334, %s335
    %p339 = pneg %p333
    %p340 = scmp.eq.s32.totalorder %s22, 1
    %p341 = por %p339, %p340
    %p342 = scmp.ne.s32.totalorder %s334, %s337
    %p343 = scmp.eq.s32.totalorder %s22, 0
    %p344 = por %p342, %p343
    %p345 = scmp.ne.s32.totalorder %s334, %s337
    %p346 = scmp.eq.s32.totalorder %s27, 1
    %p347 = por %p345, %p346
    %p348 = scmp.ne.s32.totalorder %s337, %s338
    %p349 = scmp.eq.s32.totalorder %s27, 0
    %p350 = por %p348, %p349
    %p351 = scmp.ne.s32.totalorder %s337, %s338
    %p352 = scmp.eq.s32.totalorder %s28, 1
    %p353 = por %p351, %p352
    %p355 = scmp.ne.s32.totalorder %s338, %s354
    %p356 = scmp.eq.s32.totalorder %s28, 0
    %p357 = por %p355, %p356
    %s358 = ssub.s32 %s22, %s29
    %p359 = scmp.eq.s32.totalorder %s358, 0
    %s361 = sadd.s32 %s360, 1
    %s362 = scalar_select %p359, %s360, %s361
    %p365 = pneg %p359
    %p366 = scmp.eq.s32.totalorder %s22, 1
    %p367 = por %p365, %p366
    %p368 = scmp.ne.s32.totalorder %s360, %s363
    %p369 = scmp.eq.s32.totalorder %s22, 0
    %p370 = por %p368, %p369
    %p371 = scmp.ne.s32.totalorder %s360, %s363
    %p372 = scmp.eq.s32.totalorder %s27, 1
    %p373 = por %p371, %p372
    %p374 = scmp.ne.s32.totalorder %s363, %s364
    %p375 = scmp.eq.s32.totalorder %s27, 0
    %p376 = por %p374, %p375
    %p377 = scmp.ne.s32.totalorder %s363, %s364
    %p378 = scmp.eq.s32.totalorder %s28, 1
    %p379 = por %p377, %p378
    %p381 = scmp.ne.s32.totalorder %s364, %s380
    %p382 = scmp.eq.s32.totalorder %s28, 0
    %p383 = por %p381, %p382
    %s385 = sadd.s32 %s384, 1
    %p388 = scmp.eq.s32.totalorder %s22, 1
    %p389 = scmp.ne.s32.totalorder %s384, %s386
    %p390 = scmp.eq.s32.totalorder %s22, 0
    %p391 = por %p389, %p390
    %p392 = scmp.ne.s32.totalorder %s384, %s386
    %p393 = scmp.eq.s32.totalorder %s27, 1
    %p394 = por %p392, %p393
    %p395 = scmp.ne.s32.totalorder %s386, %s387
    %p396 = scmp.eq.s32.totalorder %s27, 0
    %p397 = por %p395, %p396
    %p398 = scmp.ne.s32.totalorder %s386, %s387
    %p399 = scmp.eq.s32.totalorder %s28, 1
    %p400 = por %p398, %p399
    %p402 = scmp.ne.s32.totalorder %s387, %s401
    %p403 = scmp.eq.s32.totalorder %s28, 0
    %p404 = por %p402, %p403
    %s406 = sadd.s32 %s405, 1
    %p409 = scmp.eq.s32.totalorder %s22, 1
    %p410 = scmp.ne.s32.totalorder %s405, %s407
    %p411 = scmp.eq.s32.totalorder %s22, 0
    %p412 = por %p410, %p411
    %p413 = scmp.ne.s32.totalorder %s405, %s407
    %p414 = scmp.eq.s32.totalorder %s27, 1
    %p415 = por %p413, %p414
    %p416 = scmp.ne.s32.totalorder %s407, %s408
    %p417 = scmp.eq.s32.totalorder %s27, 0
    %p418 = por %p416, %p417
    %p419 = scmp.ne.s32.totalorder %s407, %s408
    %p420 = scmp.eq.s32.totalorder %s28, 1
    %p421 = por %p419, %p420
    %p423 = scmp.ne.s32.totalorder %s408, %s422
    %p424 = scmp.eq.s32.totalorder %s28, 0
    %p425 = por %p423, %p424
    %s427 = sadd.s32 %s426, 1
    %p430 = scmp.eq.s32.totalorder %s22, 1
    %p431 = scmp.ne.s32.totalorder %s426, %s428
    %p432 = scmp.eq.s32.totalorder %s22, 0
    %p433 = por %p431, %p432
    %p434 = scmp.ne.s32.totalorder %s426, %s428
    %p435 = scmp.eq.s32.totalorder %s27, 1
    %p436 = por %p434, %p435
    %p437 = scmp.ne.s32.totalorder %s428, %s429
    %p438 = scmp.eq.s32.totalorder %s27, 0
    %p439 = por %p437, %p438
    %p440 = scmp.ne.s32.totalorder %s428, %s429
    %p441 = scmp.eq.s32.totalorder %s28, 1
    %p442 = por %p440, %p441
    %p444 = scmp.ne.s32.totalorder %s429, %s443
    %p445 = scmp.eq.s32.totalorder %s28, 0
    %p446 = por %p444, %p445
    %p447 = scmp.le.s32.totalorder 1, %s22
    %p448 = scmp.lt.s32.totalorder %s22, 3
    %p449 = pnand %p447, %p448
    %p450 = pneg %p449
    // Predicated region
    $region9: #{transformer_forward.3} parent=5 // pred_check
      _
    $region10: #{transformer_forward.3} parent=5 // pred_check_branch
      %452 = sbr.rel (%p449) target = $region12
    $region11: #{transformer_forward.3} parent=5 // pred_region
      %s453 = ssub.s32 %s22, 1
      // Predicated region
      $region13: #{transformer_forward.3} parent=11 // pred_check
        %p454 = pneg %p43
      $region14: #{transformer_forward.3} parent=11 // pred_check_branch
        %456 = sbr.rel (%p454) target = $region16
      $region15: #{transformer_forward.3} parent=11 // pred_region
        _
      $region16: #{transformer_forward.3} parent=11 // pred_fallthru
        _
      // Predicated region
      $region17: #{transformer_forward.3} parent=11 // pred_check
        %p457 = pneg %p64
      $region18: #{transformer_forward.3} parent=11 // pred_check_branch
        %459 = sbr.rel (%p457) target = $region20
      $region19: #{transformer_forward.3} parent=11 // pred_region
        _
      $region20: #{transformer_forward.3} parent=11 // pred_fallthru
        _
      // Predicated region
      $region21: #{transformer_forward.3} parent=11 // pred_check
        %p460 = pneg %p397
      $region22: #{transformer_forward.3} parent=11 // pred_check_branch
        %462 = sbr.rel (%p460) target = $region24
      $region23: #{transformer_forward.3} parent=11 // pred_region
        _
      $region24: #{transformer_forward.3} parent=11 // pred_fallthru
        _
      // Predicated region
      $region25: #{transformer_forward.3} parent=11 // pred_check
        %p463 = pneg %p418
      $region26: #{transformer_forward.3} parent=11 // pred_check_branch
        %465 = sbr.rel (%p463) target = $region28
      $region27: #{transformer_forward.3} parent=11 // pred_region
        _
      $region28: #{transformer_forward.3} parent=11 // pred_fallthru
        _
    $region12: #{transformer_forward.3} parent=5 // pred_fallthru
      _
    %p466 = scmp.lt.s32.totalorder %s22, 2
    // Predicated region
    $region29: #{transformer_forward.3} parent=5 // pred_check
      %p467 = pneg %p466
    $region30: #{transformer_forward.3} parent=5 // pred_check_branch
      %469 = sbr.rel (%p467) target = $region32
    $region31: #{transformer_forward.3} parent=5 // pred_region
      // Predicated region
      $region33: #{transformer_forward.3} parent=31 // pred_check
        %p470 = pneg %p84
      $region34: #{transformer_forward.3} parent=31 // pred_check_branch
        %472 = sbr.rel (%p470) target = $region36
      $region35: #{transformer_forward.3} parent=31 // pred_region
        %p473 = scmp.lt.s32.totalorder %s22, 1
        %s474 = scalar_select %p473, %s22, 1
        %s475 = smul.addr %s474, 4
        %s476 = smul.addr %s475, 4
        %s477 = scalar_lea.vmem %s2, %s476
      $region36: #{transformer_forward.3} parent=31 // pred_fallthru
        _
      // Predicated region
      $region37: #{transformer_forward.3} parent=31 // pred_check
        %p478 = pneg %p110
      $region38: #{transformer_forward.3} parent=31 // pred_check_branch
        %480 = sbr.rel (%p478) target = $region40
      $region39: #{transformer_forward.3} parent=31 // pred_region
        %p481 = scmp.lt.s32.totalorder %s22, 1
        %s482 = scalar_select %p481, %s22, 1
        %s483 = scalar_lea.vmem %s3, %s482
      $region40: #{transformer_forward.3} parent=31 // pred_fallthru
        _
      // Predicated region
      $region41: #{transformer_forward.3} parent=31 // pred_check
        %p484 = pneg %p136
      $region42: #{transformer_forward.3} parent=31 // pred_check_branch
        %486 = sbr.rel (%p484) target = $region44
      $region43: #{transformer_forward.3} parent=31 // pred_region
        %p487 = scmp.lt.s32.totalorder %s22, 1
        %s488 = scalar_select %p487, %s22, 1
        %s489 = smul.addr %s488, 4
        %s490 = smul.addr %s489, 4
        %s491 = scalar_lea.vmem %s4, %s490
      $region44: #{transformer_forward.3} parent=31 // pred_fallthru
        _
      // Predicated region
      $region45: #{transformer_forward.3} parent=31 // pred_check
        %p492 = pneg %p162
      $region46: #{transformer_forward.3} parent=31 // pred_check_branch
        %494 = sbr.rel (%p492) target = $region48
      $region47: #{transformer_forward.3} parent=31 // pred_region
        %p495 = scmp.lt.s32.totalorder %s22, 1
        %s496 = scalar_select %p495, %s22, 1
        %s497 = scalar_lea.vmem %s5, %s496
      $region48: #{transformer_forward.3} parent=31 // pred_fallthru
        _
      // Predicated region
      $region49: #{transformer_forward.3} parent=31 // pred_check
        %p498 = pneg %p188
      $region50: #{transformer_forward.3} parent=31 // pred_check_branch
        %500 = sbr.rel (%p498) target = $region52
      $region51: #{transformer_forward.3} parent=31 // pred_region
        %p501 = scmp.lt.s32.totalorder %s22, 1
        %s502 = scalar_select %p501, %s22, 1
        %s503 = scalar_lea.vmem %s6, %s502
      $region52: #{transformer_forward.3} parent=31 // pred_fallthru
        _
      // Predicated region
      $region53: #{transformer_forward.3} parent=31 // pred_check
        %p504 = pneg %p214
      $region54: #{transformer_forward.3} parent=31 // pred_check_branch
        %506 = sbr.rel (%p504) target = $region56
      $region55: #{transformer_forward.3} parent=31 // pred_region
        %p507 = scmp.lt.s32.totalorder %s22, 1
        %s508 = scalar_select %p507, %s22, 1
        %s509 = scalar_lea.vmem %s7, %s508
      $region56: #{transformer_forward.3} parent=31 // pred_fallthru
        _
      // Predicated region
      $region57: #{transformer_forward.3} parent=31 // pred_check
        %p510 = pneg %p240
      $region58: #{transformer_forward.3} parent=31 // pred_check_branch
        %512 = sbr.rel (%p510) target = $region60
      $region59: #{transformer_forward.3} parent=31 // pred_region
        %p513 = scmp.lt.s32.totalorder %s22, 1
        %s514 = scalar_select %p513, %s22, 1
        %s515 = smul.addr %s514, 4
        %s516 = smul.addr %s515, 4
        %s517 = scalar_lea.vmem %s8, %s516
      $region60: #{transformer_forward.3} parent=31 // pred_fallthru
        _
      // Predicated region
      $region61: #{transformer_forward.3} parent=31 // pred_check
        %p518 = pneg %p266
      $region62: #{transformer_forward.3} parent=31 // pred_check_branch
        %520 = sbr.rel (%p518) target = $region64
      $region63: #{transformer_forward.3} parent=31 // pred_region
        %p521 = scmp.lt.s32.totalorder %s22, 1
        %s522 = scalar_select %p521, %s22, 1
        %s523 = scalar_lea.vmem %s9, %s522
      $region64: #{transformer_forward.3} parent=31 // pred_fallthru
        _
      // Predicated region
      $region65: #{transformer_forward.3} parent=31 // pred_check
        %p524 = pneg %p292
      $region66: #{transformer_forward.3} parent=31 // pred_check_branch
        %526 = sbr.rel (%p524) target = $region68
      $region67: #{transformer_forward.3} parent=31 // pred_region
        %p527 = scmp.lt.s32.totalorder %s22, 1
        %s528 = scalar_select %p527, %s22, 1
        %s529 = smul.addr %s528, 8
        %s530 = smul.addr %s529, 4
        %s531 = scalar_lea.vmem %s10, %s530
      $region68: #{transformer_forward.3} parent=31 // pred_fallthru
        _
      // Predicated region
      $region69: #{transformer_forward.3} parent=31 // pred_check
        %p532 = pneg %p318
      $region70: #{transformer_forward.3} parent=31 // pred_check_branch
        %534 = sbr.rel (%p532) target = $region72
      $region71: #{transformer_forward.3} parent=31 // pred_region
        %p535 = scmp.lt.s32.totalorder %s22, 1
        %s536 = scalar_select %p535, %s22, 1
        %s537 = scalar_lea.vmem %s11, %s536
      $region72: #{transformer_forward.3} parent=31 // pred_fallthru
        _
      // Predicated region
      $region73: #{transformer_forward.3} parent=31 // pred_check
        %p538 = pneg %p344
      $region74: #{transformer_forward.3} parent=31 // pred_check_branch
        %540 = sbr.rel (%p538) target = $region76
      $region75: #{transformer_forward.3} parent=31 // pred_region
        %p541 = scmp.lt.s32.totalorder %s22, 1
        %s542 = scalar_select %p541, %s22, 1
        %s543 = scalar_lea.vmem %s12, %s542
      $region76: #{transformer_forward.3} parent=31 // pred_fallthru
        _
      // Predicated region
      $region77: #{transformer_forward.3} parent=31 // pred_check
        %p544 = pneg %p370
      $region78: #{transformer_forward.3} parent=31 // pred_check_branch
        %546 = sbr.rel (%p544) target = $region80
      $region79: #{transformer_forward.3} parent=31 // pred_region
        %p547 = scmp.lt.s32.totalorder %s22, 1
        %s548 = scalar_select %p547, %s22, 1
        %s549 = scalar_lea.vmem %s13, %s548
      $region80: #{transformer_forward.3} parent=31 // pred_fallthru
        _
    $region32: #{transformer_forward.3} parent=5 // pred_fallthru
      _
    %p550 = scmp.le.s32.totalorder 1, %s22
    %p551 = scmp.lt.s32.totalorder %s22, 3
    %p552 = pnand %p550, %p551
    %p553 = pneg %p552
    // Predicated region
    $region81: #{transformer_forward.3} parent=5 // pred_check
      _
    $region82: #{transformer_forward.3} parent=5 // pred_check_branch
      %555 = sbr.rel (%p552) target = $region84
    $region83: #{transformer_forward.3} parent=5 // pred_region
      %s556 = ssub.s32 %s22, 1
      %p557 = pneg %p43
      %p558 = pneg %p40
      %p559 = pneg %p64
      %p560 = pneg %p61
      %p561 = scmp.lt.s32.totalorder %s27, 1
      %s562 = scalar_select %p561, %s27, 1
      %s563 = smul.addr %s562, 4
      %s564 = smul.addr %s563, 4
      %s565 = scalar_lea.vmem %s2, %s564
      %p566 = pneg %p90
      %p567 = pneg %p87
      %p568 = scmp.lt.s32.totalorder %s27, 1
      %s569 = scalar_select %p568, %s27, 1
      %s570 = scalar_lea.vmem %s3, %s569
      %p571 = pneg %p116
      %p572 = pneg %p113
      %p573 = scmp.lt.s32.totalorder %s27, 1
      %s574 = scalar_select %p573, %s27, 1
      %s575 = smul.addr %s574, 4
      %s576 = smul.addr %s575, 4
      %s577 = scalar_lea.vmem %s4, %s576
      %p578 = pneg %p142
      %p579 = pneg %p139
      %p580 = scmp.lt.s32.totalorder %s27, 1
      %s581 = scalar_select %p580, %s27, 1
      %s582 = scalar_lea.vmem %s5, %s581
      %p583 = pneg %p168
      %p584 = pneg %p165
      %p585 = scmp.lt.s32.totalorder %s27, 1
      %s586 = scalar_select %p585, %s27, 1
      %s587 = scalar_lea.vmem %s6, %s586
      %p588 = pneg %p194
      %p589 = pneg %p191
      %p590 = scmp.lt.s32.totalorder %s27, 1
      %s591 = scalar_select %p590, %s27, 1
      %s592 = scalar_lea.vmem %s7, %s591
      %p593 = pneg %p220
      %p594 = pneg %p217
      %p595 = scmp.lt.s32.totalorder %s27, 1
      %s596 = scalar_select %p595, %s27, 1
      %s597 = smul.addr %s596, 4
      %s598 = smul.addr %s597, 4
      %s599 = scalar_lea.vmem %s8, %s598
      %p600 = pneg %p246
      %p601 = pneg %p243
      %p602 = scmp.lt.s32.totalorder %s27, 1
      %s603 = scalar_select %p602, %s27, 1
      %s604 = scalar_lea.vmem %s9, %s603
      %p605 = pneg %p272
      %p606 = pneg %p269
      %p607 = scmp.lt.s32.totalorder %s27, 1
      %s608 = scalar_select %p607, %s27, 1
      %s609 = smul.addr %s608, 8
      %s610 = smul.addr %s609, 4
      %s611 = scalar_lea.vmem %s10, %s610
      %p612 = pneg %p298
      %p613 = pneg %p295
      %p614 = scmp.lt.s32.totalorder %s27, 1
      %s615 = scalar_select %p614, %s27, 1
      %s616 = scalar_lea.vmem %s11, %s615
      %p617 = pneg %p324
      %p618 = pneg %p321
      %p619 = scmp.lt.s32.totalorder %s27, 1
      %s620 = scalar_select %p619, %s27, 1
      %s621 = scalar_lea.vmem %s12, %s620
      %p622 = pneg %p350
      %p623 = pneg %p347
      %p624 = scmp.lt.s32.totalorder %s27, 1
      %s625 = scalar_select %p624, %s27, 1
      %s626 = scalar_lea.vmem %s13, %s625
      %p627 = pneg %p376
      %p628 = pneg %p373
      %p629 = pneg %p397
      %p630 = pneg %p394
      %p631 = pneg %p418
      %p632 = pneg %p415
      %p633 = pneg %p439
      %p634 = pneg %p436
      %p635 = scmp.lt.s32.totalorder %s27, 1
      %s636 = scalar_select %p635, %s27, 1
      %s637 = smul.addr %s636, 4
      %s638 = smul.addr %s637, 4
      %s639 = scalar_lea.vmem %s2, %s638
      %p640 = scmp.lt.s32.totalorder %s27, 1
      %s641 = scalar_select %p640, %s27, 1
      %s642 = scalar_lea.vmem %s3, %s641
      %p643 = scmp.lt.s32.totalorder %s27, 1
      %s644 = scalar_select %p643, %s27, 1
      %s645 = smul.addr %s644, 4
      %s646 = smul.addr %s645, 4
      %s647 = scalar_lea.vmem %s4, %s646
      %p648 = scmp.lt.s32.totalorder %s27, 1
      %s649 = scalar_select %p648, %s27, 1
      %s650 = scalar_lea.vmem %s5, %s649
      %p651 = scmp.lt.s32.totalorder %s27, 1
      %s652 = scalar_select %p651, %s27, 1
      %s653 = scalar_lea.vmem %s6, %s652
      %p654 = scmp.lt.s32.totalorder %s27, 1
      %s655 = scalar_select %p654, %s27, 1
      %s656 = scalar_lea.vmem %s7, %s655
      %p657 = scmp.lt.s32.totalorder %s27, 1
      %s658 = scalar_select %p657, %s27, 1
      %s659 = smul.addr %s658, 4
      %s660 = smul.addr %s659, 4
      %s661 = scalar_lea.vmem %s8, %s660
      %p662 = scmp.lt.s32.totalorder %s27, 1
      %s663 = scalar_select %p662, %s27, 1
      %s664 = scalar_lea.vmem %s9, %s663
      %p665 = scmp.lt.s32.totalorder %s27, 1
      %s666 = scalar_select %p665, %s27, 1
      %s667 = smul.addr %s666, 8
      %s668 = smul.addr %s667, 4
      %s669 = scalar_lea.vmem %s10, %s668
      %p670 = scmp.lt.s32.totalorder %s27, 1
      %s671 = scalar_select %p670, %s27, 1
      %s672 = scalar_lea.vmem %s11, %s671
      %p673 = scmp.lt.s32.totalorder %s27, 1
      %s674 = scalar_select %p673, %s27, 1
      %s675 = scalar_lea.vmem %s12, %s674
      %p676 = scmp.lt.s32.totalorder %s27, 1
      %s677 = scalar_select %p676, %s27, 1
      %s678 = scalar_lea.vmem %s13, %s677
      %p680 = scmp.eq.s32.totalorder %s27, 0
      // Predicated region
      $region85: #{transformer_forward.3} parent=83 // pred_check
        %p681 = pneg %p680
      $region86: #{transformer_forward.3} parent=83 // pred_check_branch
        %683 = sbr.rel (%p681) target = $region88
      $region87: #{transformer_forward.3} parent=83 // pred_region
        %v684 = vld [vmem:[%s0] sm:$0xff]
        %v685 = vld [vmem:[%s0 + $0x8] sm:$0xff]
        %vm686 = vcmask 261120
        %687 = vst.msk [vmem:[%s16] sm:$0xff] %vm686, %v684
        %688 = vst.msk [vmem:[%s16 + $0x8] sm:$0xff] %vm686, %v685
      $region88: #{transformer_forward.3} parent=83 // pred_fallthru
        _
      %v689 = vld [vmem:[%s16] sm:$0xff]
      %v690 = vld [vmem:[%s16 + $0x8] sm:$0xff]
      %v691 = vld [vmem:[%s1] sm:$0x1]
      %v692 = vld [vmem:[%s1 + $0x1] sm:$0x1]
      %v693 = vld [vmem:[%s653] sm:$0x1]
      %v694 = vld [vmem:[%s656] sm:$0x1]
      %vm695 = vcmask 261120
      %v696 = vsel %vm695, %v689, 0.0
      %697 = vadd.xlane.f32.xlu0 %v696
      %v698 = vpop.xlane.xlu0 %697
      %v699 = vsel %vm695, %v690, 0.0
      %700 = vadd.xlane.f32.xlu0 %v699
      %v701 = vpop.xlane.xlu0 %700
      %v702 = vrcp.pop 32.0
      %v703 = vmul.f32 %v698, %v702
      %v704 = vmul.f32 %v701, %v702
      %v705 = vsub.f32 %v689, %v703
      %v706 = vsub.f32 %v690, %v704
      %v707 = vmul.f32 %v705, %v705
      %v708 = vmul.f32 %v706, %v706
      %v709 = vsel %vm695, %v707, 0.0
      %710 = vadd.xlane.f32.xlu0 %v709
      %v711 = vpop.xlane.xlu0 %710
      %v712 = vsel %vm695, %v708, 0.0
      %713 = vadd.xlane.f32.xlu0 %v712
      %v714 = vpop.xlane.xlu0 %713
      %v715 = vmul.f32 %v711, 0.032258064
      %v716 = vmul.f32 %v714, 0.032258064
      %v717 = vrsqrt.pop %v715
      %v718 = vmul.f32 %v715, %v717
      %vm719 = vcmp.eq.f32.partialorder %v715, inf
      %v720 = vsel %vm719, %v715, %v718
      %vm721 = vcmp.eq.f32.partialorder %v715, 0.0
      %v722 = vand.u32 %v715, 2147483648
      %v723 = vsel %vm721, %v722, %v720
      %v724 = vrsqrt.pop %v716
      %v725 = vmul.f32 %v716, %v724
      %vm726 = vcmp.eq.f32.partialorder %v716, inf
      %v727 = vsel %vm726, %v716, %v725
      %vm728 = vcmp.eq.f32.partialorder %v716, 0.0
      %v729 = vand.u32 %v716, 2147483648
      %v730 = vsel %vm728, %v729, %v727
      %v731 = vadd.f32 %v723, 1e-06
      %v732 = vadd.f32 %v730, 1e-06
      %v733 = vrcp.pop %v731
      %v734 = vrcp.pop %v732
      %v736 = vlaneseq
      %v737 = vshrl.u32 %v736, 7
      %v738 = vsub.s32 0, %v737
      %v739 = vrot.slane %v693, %v738
      %v741 = vmul.f32 %v739, %v705
      %v742 = vmul.f32 %v739, %v706
      %v743 = vmul.f32 %v741, %v733
      %v744 = vmul.f32 %v742, %v734
      %v746 = vlaneseq
      %v747 = vshrl.u32 %v746, 7
      %v748 = vsub.s32 0, %v747
      %v749 = vrot.slane %v694, %v748
      %v751 = vadd.f32 %v743, %v749
      %v752 = vadd.f32 %v744, %v749
      %v753 = vpack.c.bf16 %v752, %v751
      %v754 = vld [vmem:[%s639] sm:$0xf]
      %v755 = vld [vmem:[%s639 + $0x4] sm:$0xf]
      %v756 = vld [vmem:[%s639 + $0x8] sm:$0xf]
      %v757 = vld [vmem:[%s639 + $0xc] sm:$0xf]
      %v758 = vld [vmem:[%s642] sm:$0x1]
      %v760 = vlaneseq
      %v761 = vshrl.u32 %v760, 7
      %v762 = vsub.s32 0, %v761
      %v763 = vrot.slane %v758, %v762
      %v769 = vunpack.c.l.b16 %v754
      %v770 = vunpack.c.l.b16 %v755
      %v771 = vunpack.c.l.b16 %v756
      %v772 = vunpack.c.l.b16 %v757
      %v773 = vpack.c.b16 %v770, %v769
      %v774 = vpack.c.b16 %v772, %v771
      %v778 = vsel %vm695, %v753, 0
      %780 = vmatprep.subr.bf16.mxu0 0
      %781 = vmatpush1.bf16.msra.mxu0 0
      %782 = vmatprep.subr.bf16.mxu0 0
      %783 = vmatpush1.bf16.msra.mxu0 0
      %784 = vmatprep.subr.bf16.mxu0 0
      %785 = vmatpush1.bf16.msra.mxu0 0
      %786 = vmatprep.subr.bf16.mxu0 0
      %787 = vmatpush1.bf16.msra.mxu0 0
      %788 = vmatprep.subr.bf16.mxu0 0
      %789 = vmatpush1.bf16.msra.mxu0 0
      %790 = vmatprep.subr.bf16.mxu0 0
      %791 = vmatpush1.bf16.msra.mxu0 0
      %792 = vmatprep.subr.bf16.mxu0 0
      %793 = vmatpush1.bf16.msra.mxu0 %v774
      %794 = vmatprep.subr.bf16.mxu0 0
      %795 = vmatpush1.bf16.msra.mxu0 %v773
      %796 = vmatprep.subr.bf16.mxu0 0
      %797 = vmatpush2.bf16.msra.mxu0 0
      %798 = vmatprep.subr.bf16.mxu0 0
      %799 = vmatpush2.bf16.msra.mxu0 0
      %800 = vmatprep.subr.bf16.mxu0 0
      %801 = vmatpush2.bf16.msra.mxu0 0
      %802 = vmatprep.subr.bf16.mxu0 0
      %803 = vmatpush2.bf16.msra.mxu0 0
      %804 = vmatprep.subr.bf16.mxu0 0
      %805 = vmatpush2.bf16.msra.mxu0 0
      %806 = vmatprep.subr.bf16.mxu0 0
      %807 = vmatpush2.bf16.msra.mxu0 0
      %808 = vmatprep.subr.bf16.mxu0 0
      %809 = vmatpush2.bf16.msra.mxu0 0
      %810 = vmatprep.subr.bf16.mxu0 0
      %811 = vmatpush2.bf16.msra.mxu0 0
      %812 = vmatprep.mubr.bf16.mxu0 0
      %813 = vmatmul.mubr.bf16.gmra.mxu0 %v778
      %v814 = vpop.f32.mrf.mxu0
      %v815 = vadd.f32 %v763, %v814
      %v816 = vpop.f32.mrf.mxu0
      %v817 = vpop.f32.mrf.mxu0
      %v818 = vadd.f32 %v763, %v817
      %v819 = vpop.f32.mrf.mxu0
      %820 = vdwg.mxu0
      %823 = vrot.lane.b32.xlu0 %v815, 120
      %v824 = vpop.permute.xlu0 %823
      %825 = vrot.lane.b32.xlu0 %v818, 120
      %v826 = vpop.permute.xlu0 %825
      %829 = vrot.lane.b32.xlu0 %v815, 112
      %v830 = vpop.permute.xlu0 %829
      %831 = vrot.lane.b32.xlu0 %v818, 112
      %v832 = vpop.permute.xlu0 %831
      %835 = vrot.lane.b32.xlu0 %v815, 104
      %v836 = vpop.permute.xlu0 %835
      %837 = vrot.lane.b32.xlu0 %v818, 104
      %v838 = vpop.permute.xlu0 %837
      %v841 = vpack.c.bf16 %v815, %v815
      %v842 = vpack.c.bf16 %v818, %v818
      %v843 = vpack.c.bf16 %v824, %v824
      %v844 = vpack.c.bf16 %v826, %v826
      %v845 = vpack.c.bf16 %v830, %v830
      %v846 = vpack.c.bf16 %v832, %v832
      %v847 = vpack.c.bf16 %v836, %v836
      %v848 = vpack.c.bf16 %v838, %v838
      %850 = vrot.lane.b32.xlu0 %v841, 96
      %v851 = vpop.permute.xlu0 %850
      %vm852 = vcmask 64512
      %v854 = vsel %vm852, %v841, 0
      %v857 = vsel %vm852, %v851, 0
      %859 = vmatprep.subr.bf16.mxu0 0
      %860 = vmatpush1.bf16.xpose.msra.mxu0 0
      %861 = vmatprep.subr.bf16.mxu0 0
      %862 = vmatpush1.bf16.xpose.msra.mxu0 0
      %863 = vmatprep.subr.bf16.mxu0 0
      %864 = vmatpush1.bf16.xpose.msra.mxu0 0
      %865 = vmatprep.subr.bf16.mxu0 0
      %866 = vmatpush1.bf16.xpose.msra.mxu0 0
      %867 = vmatprep.subr.bf16.mxu0 0
      %868 = vmatpush1.bf16.xpose.msra.mxu0 0
      %869 = vmatprep.subr.bf16.mxu0 0
      %870 = vmatpush1.bf16.xpose.msra.mxu0 0
      %871 = vmatprep.subr.bf16.mxu0 0
      %872 = vmatpush1.bf16.xpose.msra.mxu0 0
      %873 = vmatprep.subr.bf16.mxu0 0
      %874 = vmatpush1.bf16.xpose.msra.mxu0 %v857
      %875 = vmatprep.subr.bf16.mxu0 0
      %876 = vmatpush2.bf16.xpose.msra.mxu0 0
      %877 = vmatprep.subr.bf16.mxu0 0
      %878 = vmatpush2.bf16.xpose.msra.mxu0 0
      %879 = vmatprep.subr.bf16.mxu0 0
      %880 = vmatpush2.bf16.xpose.msra.mxu0 0
      %881 = vmatprep.subr.bf16.mxu0 0
      %882 = vmatpush2.bf16.xpose.msra.mxu0 0
      %883 = vmatprep.subr.bf16.mxu0 0
      %884 = vmatpush2.bf16.xpose.msra.mxu0 0
      %885 = vmatprep.subr.bf16.mxu0 0
      %886 = vmatpush2.bf16.xpose.msra.mxu0 0
      %887 = vmatprep.subr.bf16.mxu0 0
      %888 = vmatpush2.bf16.xpose.msra.mxu0 0
      %889 = vmatprep.subr.bf16.mxu0 0
      %890 = vmatpush2.bf16.xpose.msra.mxu0 0
      %891 = vmatprep.mubr.bf16.mxu0 0
      %892 = vmatmul.mubr.bf16.gmra.mxu0 %v854
      %v893 = vpop.f32.mrf.mxu0
      %v894 = vadd.f32 0.0, %v893
      %v895 = vpop.f32.mrf.mxu0
      %v896 = vpop.f32.mrf.mxu0
      %v897 = vpop.f32.mrf.mxu0
      %898 = vdwg.mxu0
      %900 = vrot.lane.b32.xlu0 %v842, 96
      %v901 = vpop.permute.xlu0 %900
      %v903 = vsel %vm852, %v842, 0
      %v906 = vsel %vm852, %v901, 0
      %908 = vmatprep.subr.bf16.mxu0 0
      %909 = vmatpush1.bf16.xpose.msra.mxu0 0
      %910 = vmatprep.subr.bf16.mxu0 0
      %911 = vmatpush1.bf16.xpose.msra.mxu0 0
      %912 = vmatprep.subr.bf16.mxu0 0
      %913 = vmatpush1.bf16.xpose.msra.mxu0 0
      %914 = vmatprep.subr.bf16.mxu0 0
      %915 = vmatpush1.bf16.xpose.msra.mxu0 0
      %916 = vmatprep.subr.bf16.mxu0 0
      %917 = vmatpush1.bf16.xpose.msra.mxu0 0
      %918 = vmatprep.subr.bf16.mxu0 0
      %919 = vmatpush1.bf16.xpose.msra.mxu0 0
      %920 = vmatprep.subr.bf16.mxu0 0
      %921 = vmatpush1.bf16.xpose.msra.mxu0 0
      %922 = vmatprep.subr.bf16.mxu0 0
      %923 = vmatpush1.bf16.xpose.msra.mxu0 %v906
      %924 = vmatprep.subr.bf16.mxu0 0
      %925 = vmatpush2.bf16.xpose.msra.mxu0 0
      %926 = vmatprep.subr.bf16.mxu0 0
      %927 = vmatpush2.bf16.xpose.msra.mxu0 0
      %928 = vmatprep.subr.bf16.mxu0 0
      %929 = vmatpush2.bf16.xpose.msra.mxu0 0
      %930 = vmatprep.subr.bf16.mxu0 0
      %931 = vmatpush2.bf16.xpose.msra.mxu0 0
      %932 = vmatprep.subr.bf16.mxu0 0
      %933 = vmatpush2.bf16.xpose.msra.mxu0 0
      %934 = vmatprep.subr.bf16.mxu0 0
      %935 = vmatpush2.bf16.xpose.msra.mxu0 0
      %936 = vmatprep.subr.bf16.mxu0 0
      %937 = vmatpush2.bf16.xpose.msra.mxu0 0
      %938 = vmatprep.subr.bf16.mxu0 0
      %939 = vmatpush2.bf16.xpose.msra.mxu0 0
      %940 = vmatprep.mubr.bf16.mxu0 0
      %941 = vmatmul.mubr.bf16.gmra.mxu0 %v903
      %v942 = vpop.f32.mrf.mxu0
      %v943 = vadd.f32 0.0, %v942
      %v944 = vpop.f32.mrf.mxu0
      %v945 = vpop.f32.mrf.mxu0
      %v946 = vpop.f32.mrf.mxu0
      %947 = vdwg.mxu0
      %949 = vrot.lane.b32.xlu0 %v843, 96
      %v950 = vpop.permute.xlu0 %949
      %v952 = vsel %vm852, %v843, 0
      %v955 = vsel %vm852, %v950, 0
      %957 = vmatprep.subr.bf16.mxu0 0
      %958 = vmatpush1.bf16.xpose.msra.mxu0 0
      %959 = vmatprep.subr.bf16.mxu0 0
      %960 = vmatpush1.bf16.xpose.msra.mxu0 0
      %961 = vmatprep.subr.bf16.mxu0 0
      %962 = vmatpush1.bf16.xpose.msra.mxu0 0
      %963 = vmatprep.subr.bf16.mxu0 0
      %964 = vmatpush1.bf16.xpose.msra.mxu0 0
      %965 = vmatprep.subr.bf16.mxu0 0
      %966 = vmatpush1.bf16.xpose.msra.mxu0 0
      %967 = vmatprep.subr.bf16.mxu0 0
      %968 = vmatpush1.bf16.xpose.msra.mxu0 0
      %969 = vmatprep.subr.bf16.mxu0 0
      %970 = vmatpush1.bf16.xpose.msra.mxu0 0
      %971 = vmatprep.subr.bf16.mxu0 0
      %972 = vmatpush1.bf16.xpose.msra.mxu0 %v955
      %973 = vmatprep.subr.bf16.mxu0 0
      %974 = vmatpush2.bf16.xpose.msra.mxu0 0
      %975 = vmatprep.subr.bf16.mxu0 0
      %976 = vmatpush2.bf16.xpose.msra.mxu0 0
      %977 = vmatprep.subr.bf16.mxu0 0
      %978 = vmatpush2.bf16.xpose.msra.mxu0 0
      %979 = vmatprep.subr.bf16.mxu0 0
      %980 = vmatpush2.bf16.xpose.msra.mxu0 0
      %981 = vmatprep.subr.bf16.mxu0 0
      %982 = vmatpush2.bf16.xpose.msra.mxu0 0
      %983 = vmatprep.subr.bf16.mxu0 0
      %984 = vmatpush2.bf16.xpose.msra.mxu0 0
      %985 = vmatprep.subr.bf16.mxu0 0
      %986 = vmatpush2.bf16.xpose.msra.mxu0 0
      %987 = vmatprep.subr.bf16.mxu0 0
      %988 = vmatpush2.bf16.xpose.msra.mxu0 0
      %989 = vmatprep.mubr.bf16.mxu0 0
      %990 = vmatmul.mubr.bf16.gmra.mxu0 %v952
      %v991 = vpop.f32.mrf.mxu0
      %v992 = vadd.f32 0.0, %v991
      %v993 = vpop.f32.mrf.mxu0
      %v994 = vpop.f32.mrf.mxu0
      %v995 = vpop.f32.mrf.mxu0
      %996 = vdwg.mxu0
      %998 = vrot.lane.b32.xlu0 %v844, 96
      %v999 = vpop.permute.xlu0 %998
      %v1001 = vsel %vm852, %v844, 0
      %v1004 = vsel %vm852, %v999, 0
      %1006 = vmatprep.subr.bf16.mxu0 0
      %1007 = vmatpush1.bf16.xpose.msra.mxu0 0
      %1008 = vmatprep.subr.bf16.mxu0 0
      %1009 = vmatpush1.bf16.xpose.msra.mxu0 0
      %1010 = vmatprep.subr.bf16.mxu0 0
      %1011 = vmatpush1.bf16.xpose.msra.mxu0 0
      %1012 = vmatprep.subr.bf16.mxu0 0
      %1013 = vmatpush1.bf16.xpose.msra.mxu0 0
      %1014 = vmatprep.subr.bf16.mxu0 0
      %1015 = vmatpush1.bf16.xpose.msra.mxu0 0
      %1016 = vmatprep.subr.bf16.mxu0 0
      %1017 = vmatpush1.bf16.xpose.msra.mxu0 0
      %1018 = vmatprep.subr.bf16.mxu0 0
      %1019 = vmatpush1.bf16.xpose.msra.mxu0 0
      %1020 = vmatprep.subr.bf16.mxu0 0
      %1021 = vmatpush1.bf16.xpose.msra.mxu0 %v1004
      %1022 = vmatprep.subr.bf16.mxu0 0
      %1023 = vmatpush2.bf16.xpose.msra.mxu0 0
      %1024 = vmatprep.subr.bf16.mxu0 0
      %1025 = vmatpush2.bf16.xpose.msra.mxu0 0
      %1026 = vmatprep.subr.bf16.mxu0 0
      %1027 = vmatpush2.bf16.xpose.msra.mxu0 0
      %1028 = vmatprep.subr.bf16.mxu0 0
      %1029 = vmatpush2.bf16.xpose.msra.mxu0 0
      %1030 = vmatprep.subr.bf16.mxu0 0
      %1031 = vmatpush2.bf16.xpose.msra.mxu0 0
      %1032 = vmatprep.subr.bf16.mxu0 0
      %1033 = vmatpush2.bf16.xpose.msra.mxu0 0
      %1034 = vmatprep.subr.bf16.mxu0 0
      %1035 = vmatpush2.bf16.xpose.msra.mxu0 0
      %1036 = vmatprep.subr.bf16.mxu0 0
      %1037 = vmatpush2.bf16.xpose.msra.mxu0 0
      %1038 = vmatprep.mubr.bf16.mxu0 0
      %1039 = vmatmul.mubr.bf16.gmra.mxu0 %v1001
      %v1040 = vpop.f32.mrf.mxu0
      %v1041 = vadd.f32 0.0, %v1040
      %v1042 = vpop.f32.mrf.mxu0
      %v1043 = vpop.f32.mrf.mxu0
      %v1044 = vpop.f32.mrf.mxu0
      %1045 = vdwg.mxu0
      %1047 = vrot.lane.b32.xlu0 %v845, 96
      %v1048 = vpop.permute.xlu0 %1047
      %v1050 = vsel %vm852, %v845, 0
      %v1053 = vsel %vm852, %v1048, 0
      %1055 = vmatprep.subr.bf16.mxu0 0
      %1056 = vmatpush1.bf16.xpose.msra.mxu0 0
      %1057 = vmatprep.subr.bf16.mxu0 0
      %1058 = vmatpush1.bf16.xpose.msra.mxu0 0
      %1059 = vmatprep.subr.bf16.mxu0 0
      %1060 = vmatpush1.bf16.xpose.msra.mxu0 0
      %1061 = vmatprep.subr.bf16.mxu0 0
      %1062 = vmatpush1.bf16.xpose.msra.mxu0 0
      %1063 = vmatprep.subr.bf16.mxu0 0
      %1064 = vmatpush1.bf16.xpose.msra.mxu0 0
      %1065 = vmatprep.subr.bf16.mxu0 0
      %1066 = vmatpush1.bf16.xpose.msra.mxu0 0
      %1067 = vmatprep.subr.bf16.mxu0 0
      %1068 = vmatpush1.bf16.xpose.msra.mxu0 0
      %1069 = vmatprep.subr.bf16.mxu0 0
      %1070 = vmatpush1.bf16.xpose.msra.mxu0 %v1053
      %1071 = vmatprep.subr.bf16.mxu0 0
      %1072 = vmatpush2.bf16.xpose.msra.mxu0 0
      %1073 = vmatprep.subr.bf16.mxu0 0
      %1074 = vmatpush2.bf16.xpose.msra.mxu0 0
      %1075 = vmatprep.subr.bf16.mxu0 0
      %1076 = vmatpush2.bf16.xpose.msra.mxu0 0
      %1077 = vmatprep.subr.bf16.mxu0 0
      %1078 = vmatpush2.bf16.xpose.msra.mxu0 0
      %1079 = vmatprep.subr.bf16.mxu0 0
      %1080 = vmatpush2.bf16.xpose.msra.mxu0 0
      %1081 = vmatprep.subr.bf16.mxu0 0
      %1082 = vmatpush2.bf16.xpose.msra.mxu0 0
      %1083 = vmatprep.subr.bf16.mxu0 0
      %1084 = vmatpush2.bf16.xpose.msra.mxu0 0
      %1085 = vmatprep.subr.bf16.mxu0 0
      %1086 = vmatpush2.bf16.xpose.msra.mxu0 0
      %1087 = vmatprep.mubr.bf16.mxu0 0
      %1088 = vmatmul.mubr.bf16.gmra.mxu0 %v1050
      %v1089 = vpop.f32.mrf.mxu0
      %v1090 = vadd.f32 0.0, %v1089
      %v1091 = vpop.f32.mrf.mxu0
      %v1092 = vpop.f32.mrf.mxu0
      %v1093 = vpop.f32.mrf.mxu0
      %1094 = vdwg.mxu0
      %1096 = vrot.lane.b32.xlu0 %v846, 96
      %v1097 = vpop.permute.xlu0 %1096
      %v1099 = vsel %vm852, %v846, 0
      %v1102 = vsel %vm852, %v1097, 0
      %1104 = vmatprep.subr.bf16.mxu0 0
      %1105 = vmatpush1.bf16.xpose.msra.mxu0 0
      %1106 = vmatprep.subr.bf16.mxu0 0
      %1107 = vmatpush1.bf16.xpose.msra.mxu0 0
      %1108 = vmatprep.subr.bf16.mxu0 0
      %1109 = vmatpush1.bf16.xpose.msra.mxu0 0
      %1110 = vmatprep.subr.bf16.mxu0 0
      %1111 = vmatpush1.bf16.xpose.msra.mxu0 0
      %1112 = vmatprep.subr.bf16.mxu0 0
      %1113 = vmatpush1.bf16.xpose.msra.mxu0 0
      %1114 = vmatprep.subr.bf16.mxu0 0
      %1115 = vmatpush1.bf16.xpose.msra.mxu0 0
      %1116 = vmatprep.subr.bf16.mxu0 0
      %1117 = vmatpush1.bf16.xpose.msra.mxu0 0
      %1118 = vmatprep.subr.bf16.mxu0 0
      %1119 = vmatpush1.bf16.xpose.msra.mxu0 %v1102
      %1120 = vmatprep.subr.bf16.mxu0 0
      %1121 = vmatpush2.bf16.xpose.msra.mxu0 0
      %1122 = vmatprep.subr.bf16.mxu0 0
      %1123 = vmatpush2.bf16.xpose.msra.mxu0 0
      %1124 = vmatprep.subr.bf16.mxu0 0
      %1125 = vmatpush2.bf16.xpose.msra.mxu0 0
      %1126 = vmatprep.subr.bf16.mxu0 0
      %1127 = vmatpush2.bf16.xpose.msra.mxu0 0
      %1128 = vmatprep.subr.bf16.mxu0 0
      %1129 = vmatpush2.bf16.xpose.msra.mxu0 0
      %1130 = vmatprep.subr.bf16.mxu0 0
      %1131 = vmatpush2.bf16.xpose.msra.mxu0 0
      %1132 = vmatprep.subr.bf16.mxu0 0
      %1133 = vmatpush2.bf16.xpose.msra.mxu0 0
      %1134 = vmatprep.subr.bf16.mxu0 0
      %1135 = vmatpush2.bf16.xpose.msra.mxu0 0
      %1136 = vmatprep.mubr.bf16.mxu0 0
      %1137 = vmatmul.mubr.bf16.gmra.mxu0 %v1099
      %v1138 = vpop.f32.mrf.mxu0
      %v1139 = vadd.f32 0.0, %v1138
      %v1140 = vpop.f32.mrf.mxu0
      %v1141 = vpop.f32.mrf.mxu0
      %v1142 = vpop.f32.mrf.mxu0
      %1143 = vdwg.mxu0
      %1145 = vrot.lane.b32.xlu0 %v847, 96
      %v1146 = vpop.permute.xlu0 %1145
      %v1148 = vsel %vm852, %v847, 0
      %v1151 = vsel %vm852, %v1146, 0
      %1153 = vmatprep.subr.bf16.mxu0 0
      %1154 = vmatpush1.bf16.xpose.msra.mxu0 0
      %1155 = vmatprep.subr.bf16.mxu0 0
      %1156 = vmatpush1.bf16.xpose.msra.mxu0 0
      %1157 = vmatprep.subr.bf16.mxu0 0
      %1158 = vmatpush1.bf16.xpose.msra.mxu0 0
      %1159 = vmatprep.subr.bf16.mxu0 0
      %1160 = vmatpush1.bf16.xpose.msra.mxu0 0
      %1161 = vmatprep.subr.bf16.mxu0 0
      %1162 = vmatpush1.bf16.xpose.msra.mxu0 0
      %1163 = vmatprep.subr.bf16.mxu0 0
      %1164 = vmatpush1.bf16.xpose.msra.mxu0 0
      %1165 = vmatprep.subr.bf16.mxu0 0
      %1166 = vmatpush1.bf16.xpose.msra.mxu0 0
      %1167 = vmatprep.subr.bf16.mxu0 0
      %1168 = vmatpush1.bf16.xpose.msra.mxu0 %v1151
      %1169 = vmatprep.subr.bf16.mxu0 0
      %1170 = vmatpush2.bf16.xpose.msra.mxu0 0
      %1171 = vmatprep.subr.bf16.mxu0 0
      %1172 = vmatpush2.bf16.xpose.msra.mxu0 0
      %1173 = vmatprep.subr.bf16.mxu0 0
      %1174 = vmatpush2.bf16.xpose.msra.mxu0 0
      %1175 = vmatprep.subr.bf16.mxu0 0
      %1176 = vmatpush2.bf16.xpose.msra.mxu0 0
      %1177 = vmatprep.subr.bf16.mxu0 0
      %1178 = vmatpush2.bf16.xpose.msra.mxu0 0
      %1179 = vmatprep.subr.bf16.mxu0 0
      %1180 = vmatpush2.bf16.xpose.msra.mxu0 0
      %1181 = vmatprep.subr.bf16.mxu0 0
      %1182 = vmatpush2.bf16.xpose.msra.mxu0 0
      %1183 = vmatprep.subr.bf16.mxu0 0
      %1184 = vmatpush2.bf16.xpose.msra.mxu0 0
      %1185 = vmatprep.mubr.bf16.mxu0 0
      %1186 = vmatmul.mubr.bf16.gmra.mxu0 %v1148
      %v1187 = vpop.f32.mrf.mxu0
      %v1188 = vadd.f32 0.0, %v1187
      %v1189 = vpop.f32.mrf.mxu0
      %v1190 = vpop.f32.mrf.mxu0
      %v1191 = vpop.f32.mrf.mxu0
      %1192 = vdwg.mxu0
      %1194 = vrot.lane.b32.xlu0 %v848, 96
      %v1195 = vpop.permute.xlu0 %1194
      %v1197 = vsel %vm852, %v848, 0
      %v1200 = vsel %vm852, %v1195, 0
      %1202 = vmatprep.subr.bf16.mxu0 0
      %1203 = vmatpush1.bf16.xpose.msra.mxu0 0
      %1204 = vmatprep.subr.bf16.mxu0 0
      %1205 = vmatpush1.bf16.xpose.msra.mxu0 0
      %1206 = vmatprep.subr.bf16.mxu0 0
      %1207 = vmatpush1.bf16.xpose.msra.mxu0 0
      %1208 = vmatprep.subr.bf16.mxu0 0
      %1209 = vmatpush1.bf16.xpose.msra.mxu0 0
      %1210 = vmatprep.subr.bf16.mxu0 0
      %1211 = vmatpush1.bf16.xpose.msra.mxu0 0
      %1212 = vmatprep.subr.bf16.mxu0 0
      %1213 = vmatpush1.bf16.xpose.msra.mxu0 0
      %1214 = vmatprep.subr.bf16.mxu0 0
      %1215 = vmatpush1.bf16.xpose.msra.mxu0 0
      %1216 = vmatprep.subr.bf16.mxu0 0
      %1217 = vmatpush1.bf16.xpose.msra.mxu0 %v1200
      %1218 = vmatprep.subr.bf16.mxu0 0
      %1219 = vmatpush2.bf16.xpose.msra.mxu0 0
      %1220 = vmatprep.subr.bf16.mxu0 0
      %1221 = vmatpush2.bf16.xpose.msra.mxu0 0
      %1222 = vmatprep.subr.bf16.mxu0 0
      %1223 = vmatpush2.bf16.xpose.msra.mxu0 0
      %1224 = vmatprep.subr.bf16.mxu0 0
      %1225 = vmatpush2.bf16.xpose.msra.mxu0 0
      %1226 = vmatprep.subr.bf16.mxu0 0
      %1227 = vmatpush2.bf16.xpose.msra.mxu0 0
      %1228 = vmatprep.subr.bf16.mxu0 0
      %1229 = vmatpush2.bf16.xpose.msra.mxu0 0
      %1230 = vmatprep.subr.bf16.mxu0 0
      %1231 = vmatpush2.bf16.xpose.msra.mxu0 0
      %1232 = vmatprep.subr.bf16.mxu0 0
      %1233 = vmatpush2.bf16.xpose.msra.mxu0 0
      %1234 = vmatprep.mubr.bf16.mxu0 0
      %1235 = vmatmul.mubr.bf16.gmra.mxu0 %v1197
      %v1236 = vpop.f32.mrf.mxu0
      %v1237 = vadd.f32 0.0, %v1236
      %v1238 = vpop.f32.mrf.mxu0
      %v1239 = vpop.f32.mrf.mxu0
      %v1240 = vpop.f32.mrf.mxu0
      %1241 = vdwg.mxu0
      %v1244 = vlaneseq
      %v1245 = vshrl.u32 %v1244, 7
      %v1246 = vsub.s32 0, %v1245
      %v1247 = vrot.slane %v691, %v1246
      %v1248 = vlaneseq
      %v1249 = vshrl.u32 %v1248, 7
      %v1250 = vsub.s32 0, %v1249
      %v1251 = vrot.slane %v692, %v1250
      %v1254 = vadd.f32 %v894, %v1247
      %v1255 = vadd.f32 %v943, %v1251
      %v1256 = vadd.f32 %v992, %v1247
      %v1257 = vadd.f32 %v1041, %v1251
      %v1258 = vadd.f32 %v1090, %v1247
      %v1259 = vadd.f32 %v1139, %v1251
      %v1260 = vadd.f32 %v1188, %v1247
      %v1261 = vadd.f32 %v1237, %v1251
      %v1262 = vsel %vm852, %v1254, -inf
      %1263 = vmax.xlane.f32.xlu0 %v1262
      %v1264 = vpop.xlane.xlu0 %1263
      %v1265 = vsel %vm852, %v1255, -inf
      %1266 = vmax.xlane.f32.xlu0 %v1265
      %v1267 = vpop.xlane.xlu0 %1266
      %v1268 = vsel %vm852, %v1256, -inf
      %1269 = vmax.xlane.f32.xlu0 %v1268
      %v1270 = vpop.xlane.xlu0 %1269
      %v1271 = vsel %vm852, %v1257, -inf
      %1272 = vmax.xlane.f32.xlu0 %v1271
      %v1273 = vpop.xlane.xlu0 %1272
      %v1274 = vsel %vm852, %v1258, -inf
      %1275 = vmax.xlane.f32.xlu0 %v1274
      %v1276 = vpop.xlane.xlu0 %1275
      %v1277 = vsel %vm852, %v1259, -inf
      %1278 = vmax.xlane.f32.xlu0 %v1277
      %v1279 = vpop.xlane.xlu0 %1278
      %v1280 = vsel %vm852, %v1260, -inf
      %1281 = vmax.xlane.f32.xlu0 %v1280
      %v1282 = vpop.xlane.xlu0 %1281
      %v1283 = vsel %vm852, %v1261, -inf
      %1284 = vmax.xlane.f32.xlu0 %v1283
      %v1285 = vpop.xlane.xlu0 %1284
      %v1286 = vsub.f32 %v1254, %v1264
      %v1287 = vsub.f32 %v1255, %v1267
      %v1288 = vsub.f32 %v1256, %v1270
      %v1289 = vsub.f32 %v1257, %v1273
      %v1290 = vsub.f32 %v1258, %v1276
      %v1291 = vsub.f32 %v1259, %v1279
      %v1292 = vsub.f32 %v1260, %v1282
      %v1293 = vsub.f32 %v1261, %v1285
      %v1294 = vmul.f32 %v1286, 1.442695
      %v1295 = vpow.pop %v1294
      %v1296 = vmul.f32 %v1287, 1.442695
      %v1297 = vpow.pop %v1296
      %v1298 = vmul.f32 %v1288, 1.442695
      %v1299 = vpow.pop %v1298
      %v1300 = vmul.f32 %v1289, 1.442695
      %v1301 = vpow.pop %v1300
      %v1302 = vmul.f32 %v1290, 1.442695
      %v1303 = vpow.pop %v1302
      %v1304 = vmul.f32 %v1291, 1.442695
      %v1305 = vpow.pop %v1304
      %v1306 = vmul.f32 %v1292, 1.442695
      %v1307 = vpow.pop %v1306
      %v1308 = vmul.f32 %v1293, 1.442695
      %v1309 = vpow.pop %v1308
      %v1310 = vsel %vm852, %v1295, 0.0
      %1311 = vadd.xlane.f32.xlu0 %v1310
      %v1312 = vpop.xlane.xlu0 %1311
      %v1313 = vsel %vm852, %v1297, 0.0
      %1314 = vadd.xlane.f32.xlu0 %v1313
      %v1315 = vpop.xlane.xlu0 %1314
      %v1316 = vsel %vm852, %v1299, 0.0
      %1317 = vadd.xlane.f32.xlu0 %v1316
      %v1318 = vpop.xlane.xlu0 %1317
      %v1319 = vsel %vm852, %v1301, 0.0
      %1320 = vadd.xlane.f32.xlu0 %v1319
      %v1321 = vpop.xlane.xlu0 %1320
      %v1322 = vsel %vm852, %v1303, 0.0
      %1323 = vadd.xlane.f32.xlu0 %v1322
      %v1324 = vpop.xlane.xlu0 %1323
      %v1325 = vsel %vm852, %v1305, 0.0
      %1326 = vadd.xlane.f32.xlu0 %v1325
      %v1327 = vpop.xlane.xlu0 %1326
      %v1328 = vsel %vm852, %v1307, 0.0
      %1329 = vadd.xlane.f32.xlu0 %v1328
      %v1330 = vpop.xlane.xlu0 %1329
      %v1331 = vsel %vm852, %v1309, 0.0
      %1332 = vadd.xlane.f32.xlu0 %v1331
      %v1333 = vpop.xlane.xlu0 %1332
      %v1334 = vrcp.pop %v1312
      %v1335 = vrcp.pop %v1315
      %v1336 = vrcp.pop %v1318
      %v1337 = vrcp.pop %v1321
      %v1338 = vrcp.pop %v1324
      %v1339 = vrcp.pop %v1327
      %v1340 = vrcp.pop %v1330
      %v1341 = vrcp.pop %v1333
      %v1342 = vmul.f32 %v1295, %v1334
      %v1343 = vmul.f32 %v1297, %v1335
      %v1344 = vmul.f32 %v1299, %v1336
      %v1345 = vmul.f32 %v1301, %v1337
      %v1346 = vmul.f32 %v1303, %v1338
      %v1347 = vmul.f32 %v1305, %v1339
      %v1348 = vmul.f32 %v1307, %v1340
      %v1349 = vmul.f32 %v1309, %v1341
      %v1350 = vpack.c.bf16 %v1342, %v1342
      %v1351 = vpack.c.bf16 %v1343, %v1343
      %v1352 = vpack.c.bf16 %v1344, %v1344
      %v1353 = vpack.c.bf16 %v1345, %v1345
      %v1354 = vpack.c.bf16 %v1346, %v1346
      %v1355 = vpack.c.bf16 %v1347, %v1347
      %v1356 = vpack.c.bf16 %v1348, %v1348
      %v1357 = vpack.c.bf16 %v1349, %v1349
      %1358 = vrot.lane.b32.xlu0 %v841, 64
      %v1359 = vpop.permute.xlu0 %1358
      %v1361 = vsel %vm852, %v1350, 0
      %vm1363 = vcmask 1043456
      %v1365 = vsel %vm1363, %v1359, 0
      %1367 = vmatprep.subr.bf16.mxu0 0
      %1368 = vmatpush1.bf16.msra.mxu0 0
      %1369 = vmatprep.subr.bf16.mxu0 0
      %1370 = vmatpush1.bf16.msra.mxu0 0
      %1371 = vmatprep.subr.bf16.mxu0 0
      %1372 = vmatpush1.bf16.msra.mxu0 0
      %1373 = vmatprep.subr.bf16.mxu0 0
      %1374 = vmatpush1.bf16.msra.mxu0 0
      %1375 = vmatprep.subr.bf16.mxu0 0
      %1376 = vmatpush1.bf16.msra.mxu0 0
      %1377 = vmatprep.subr.bf16.mxu0 0
      %1378 = vmatpush1.bf16.msra.mxu0 0
      %1379 = vmatprep.subr.bf16.mxu0 0
      %1380 = vmatpush1.bf16.msra.mxu0 0
      %1381 = vmatprep.subr.bf16.mxu0 0
      %1382 = vmatpush1.bf16.msra.mxu0 %v1365
      %1383 = vmatprep.subr.bf16.mxu0 0
      %1384 = vmatpush2.bf16.msra.mxu0 0
      %1385 = vmatprep.subr.bf16.mxu0 0
      %1386 = vmatpush2.bf16.msra.mxu0 0
      %1387 = vmatprep.subr.bf16.mxu0 0
      %1388 = vmatpush2.bf16.msra.mxu0 0
      %1389 = vmatprep.subr.bf16.mxu0 0
      %1390 = vmatpush2.bf16.msra.mxu0 0
      %1391 = vmatprep.subr.bf16.mxu0 0
      %1392 = vmatpush2.bf16.msra.mxu0 0
      %1393 = vmatprep.subr.bf16.mxu0 0
      %1394 = vmatpush2.bf16.msra.mxu0 0
      %1395 = vmatprep.subr.bf16.mxu0 0
      %1396 = vmatpush2.bf16.msra.mxu0 0
      %1397 = vmatprep.subr.bf16.mxu0 0
      %1398 = vmatpush2.bf16.msra.mxu0 0
      %1399 = vmatprep.mubr.bf16.mxu0 0
      %1400 = vmatmul.mubr.bf16.gmra.mxu0 %v1361
      %v1401 = vpop.f32.mrf.mxu0
      %v1402 = vadd.f32 0.0, %v1401
      %v1403 = vpop.f32.mrf.mxu0
      %v1404 = vpop.f32.mrf.mxu0
      %v1405 = vpop.f32.mrf.mxu0
      %1406 = vdwg.mxu0
      %1407 = vrot.lane.b32.xlu0 %v842, 64
      %v1408 = vpop.permute.xlu0 %1407
      %v1410 = vsel %vm852, %v1351, 0
      %v1413 = vsel %vm1363, %v1408, 0
      %1415 = vmatprep.subr.bf16.mxu0 0
      %1416 = vmatpush1.bf16.msra.mxu0 0
      %1417 = vmatprep.subr.bf16.mxu0 0
      %1418 = vmatpush1.bf16.msra.mxu0 0
      %1419 = vmatprep.subr.bf16.mxu0 0
      %1420 = vmatpush1.bf16.msra.mxu0 0
      %1421 = vmatprep.subr.bf16.mxu0 0
      %1422 = vmatpush1.bf16.msra.mxu0 0
      %1423 = vmatprep.subr.bf16.mxu0 0
      %1424 = vmatpush1.bf16.msra.mxu0 0
      %1425 = vmatprep.subr.bf16.mxu0 0
      %1426 = vmatpush1.bf16.msra.mxu0 0
      %1427 = vmatprep.subr.bf16.mxu0 0
      %1428 = vmatpush1.bf16.msra.mxu0 0
      %1429 = vmatprep.subr.bf16.mxu0 0
      %1430 = vmatpush1.bf16.msra.mxu0 %v1413
      %1431 = vmatprep.subr.bf16.mxu0 0
      %1432 = vmatpush2.bf16.msra.mxu0 0
      %1433 = vmatprep.subr.bf16.mxu0 0
      %1434 = vmatpush2.bf16.msra.mxu0 0
      %1435 = vmatprep.subr.bf16.mxu0 0
      %1436 = vmatpush2.bf16.msra.mxu0 0
      %1437 = vmatprep.subr.bf16.mxu0 0
      %1438 = vmatpush2.bf16.msra.mxu0 0
      %1439 = vmatprep.subr.bf16.mxu0 0
      %1440 = vmatpush2.bf16.msra.mxu0 0
      %1441 = vmatprep.subr.bf16.mxu0 0
      %1442 = vmatpush2.bf16.msra.mxu0 0
      %1443 = vmatprep.subr.bf16.mxu0 0
      %1444 = vmatpush2.bf16.msra.mxu0 0
      %1445 = vmatprep.subr.bf16.mxu0 0
      %1446 = vmatpush2.bf16.msra.mxu0 0
      %1447 = vmatprep.mubr.bf16.mxu0 0
      %1448 = vmatmul.mubr.bf16.gmra.mxu0 %v1410
      %v1449 = vpop.f32.mrf.mxu0
      %v1450 = vadd.f32 0.0, %v1449
      %v1451 = vpop.f32.mrf.mxu0
      %v1452 = vpop.f32.mrf.mxu0
      %v1453 = vpop.f32.mrf.mxu0
      %1454 = vdwg.mxu0
      %1455 = vrot.lane.b32.xlu0 %v843, 64
      %v1456 = vpop.permute.xlu0 %1455
      %v1458 = vsel %vm852, %v1352, 0
      %v1461 = vsel %vm1363, %v1456, 0
      %1463 = vmatprep.subr.bf16.mxu0 0
      %1464 = vmatpush1.bf16.msra.mxu0 0
      %1465 = vmatprep.subr.bf16.mxu0 0
      %1466 = vmatpush1.bf16.msra.mxu0 0
      %1467 = vmatprep.subr.bf16.mxu0 0
      %1468 = vmatpush1.bf16.msra.mxu0 0
      %1469 = vmatprep.subr.bf16.mxu0 0
      %1470 = vmatpush1.bf16.msra.mxu0 0
      %1471 = vmatprep.subr.bf16.mxu0 0
      %1472 = vmatpush1.bf16.msra.mxu0 0
      %1473 = vmatprep.subr.bf16.mxu0 0
      %1474 = vmatpush1.bf16.msra.mxu0 0
      %1475 = vmatprep.subr.bf16.mxu0 0
      %1476 = vmatpush1.bf16.msra.mxu0 0
      %1477 = vmatprep.subr.bf16.mxu0 0
      %1478 = vmatpush1.bf16.msra.mxu0 %v1461
      %1479 = vmatprep.subr.bf16.mxu0 0
      %1480 = vmatpush2.bf16.msra.mxu0 0
      %1481 = vmatprep.subr.bf16.mxu0 0
      %1482 = vmatpush2.bf16.msra.mxu0 0
      %1483 = vmatprep.subr.bf16.mxu0 0
      %1484 = vmatpush2.bf16.msra.mxu0 0
      %1485 = vmatprep.subr.bf16.mxu0 0
      %1486 = vmatpush2.bf16.msra.mxu0 0
      %1487 = vmatprep.subr.bf16.mxu0 0
      %1488 = vmatpush2.bf16.msra.mxu0 0
      %1489 = vmatprep.subr.bf16.mxu0 0
      %1490 = vmatpush2.bf16.msra.mxu0 0
      %1491 = vmatprep.subr.bf16.mxu0 0
      %1492 = vmatpush2.bf16.msra.mxu0 0
      %1493 = vmatprep.subr.bf16.mxu0 0
      %1494 = vmatpush2.bf16.msra.mxu0 0
      %1495 = vmatprep.mubr.bf16.mxu0 0
      %1496 = vmatmul.mubr.bf16.gmra.mxu0 %v1458
      %v1497 = vpop.f32.mrf.mxu0
      %v1498 = vadd.f32 0.0, %v1497
      %v1499 = vpop.f32.mrf.mxu0
      %v1500 = vpop.f32.mrf.mxu0
      %v1501 = vpop.f32.mrf.mxu0
      %1502 = vdwg.mxu0
      %1503 = vrot.lane.b32.xlu0 %v844, 64
      %v1504 = vpop.permute.xlu0 %1503
      %v1506 = vsel %vm852, %v1353, 0
      %v1509 = vsel %vm1363, %v1504, 0
      %1511 = vmatprep.subr.bf16.mxu0 0
      %1512 = vmatpush1.bf16.msra.mxu0 0
      %1513 = vmatprep.subr.bf16.mxu0 0
      %1514 = vmatpush1.bf16.msra.mxu0 0
      %1515 = vmatprep.subr.bf16.mxu0 0
      %1516 = vmatpush1.bf16.msra.mxu0 0
      %1517 = vmatprep.subr.bf16.mxu0 0
      %1518 = vmatpush1.bf16.msra.mxu0 0
      %1519 = vmatprep.subr.bf16.mxu0 0
      %1520 = vmatpush1.bf16.msra.mxu0 0
      %1521 = vmatprep.subr.bf16.mxu0 0
      %1522 = vmatpush1.bf16.msra.mxu0 0
      %1523 = vmatprep.subr.bf16.mxu0 0
      %1524 = vmatpush1.bf16.msra.mxu0 0
      %1525 = vmatprep.subr.bf16.mxu0 0
      %1526 = vmatpush1.bf16.msra.mxu0 %v1509
      %1527 = vmatprep.subr.bf16.mxu0 0
      %1528 = vmatpush2.bf16.msra.mxu0 0
      %1529 = vmatprep.subr.bf16.mxu0 0
      %1530 = vmatpush2.bf16.msra.mxu0 0
      %1531 = vmatprep.subr.bf16.mxu0 0
      %1532 = vmatpush2.bf16.msra.mxu0 0
      %1533 = vmatprep.subr.bf16.mxu0 0
      %1534 = vmatpush2.bf16.msra.mxu0 0
      %1535 = vmatprep.subr.bf16.mxu0 0
      %1536 = vmatpush2.bf16.msra.mxu0 0
      %1537 = vmatprep.subr.bf16.mxu0 0
      %1538 = vmatpush2.bf16.msra.mxu0 0
      %1539 = vmatprep.subr.bf16.mxu0 0
      %1540 = vmatpush2.bf16.msra.mxu0 0
      %1541 = vmatprep.subr.bf16.mxu0 0
      %1542 = vmatpush2.bf16.msra.mxu0 0
      %1543 = vmatprep.mubr.bf16.mxu0 0
      %1544 = vmatmul.mubr.bf16.gmra.mxu0 %v1506
      %v1545 = vpop.f32.mrf.mxu0
      %v1546 = vadd.f32 0.0, %v1545
      %v1547 = vpop.f32.mrf.mxu0
      %v1548 = vpop.f32.mrf.mxu0
      %v1549 = vpop.f32.mrf.mxu0
      %1550 = vdwg.mxu0
      %1551 = vrot.lane.b32.xlu0 %v845, 64
      %v1552 = vpop.permute.xlu0 %1551
      %v1554 = vsel %vm852, %v1354, 0
      %v1557 = vsel %vm1363, %v1552, 0
      %1559 = vmatprep.subr.bf16.mxu0 0
      %1560 = vmatpush1.bf16.msra.mxu0 0
      %1561 = vmatprep.subr.bf16.mxu0 0
      %1562 = vmatpush1.bf16.msra.mxu0 0
      %1563 = vmatprep.subr.bf16.mxu0 0
      %1564 = vmatpush1.bf16.msra.mxu0 0
      %1565 = vmatprep.subr.bf16.mxu0 0
      %1566 = vmatpush1.bf16.msra.mxu0 0
      %1567 = vmatprep.subr.bf16.mxu0 0
      %1568 = vmatpush1.bf16.msra.mxu0 0
      %1569 = vmatprep.subr.bf16.mxu0 0
      %1570 = vmatpush1.bf16.msra.mxu0 0
      %1571 = vmatprep.subr.bf16.mxu0 0
      %1572 = vmatpush1.bf16.msra.mxu0 0
      %1573 = vmatprep.subr.bf16.mxu0 0
      %1574 = vmatpush1.bf16.msra.mxu0 %v1557
      %1575 = vmatprep.subr.bf16.mxu0 0
      %1576 = vmatpush2.bf16.msra.mxu0 0
      %1577 = vmatprep.subr.bf16.mxu0 0
      %1578 = vmatpush2.bf16.msra.mxu0 0
      %1579 = vmatprep.subr.bf16.mxu0 0
      %1580 = vmatpush2.bf16.msra.mxu0 0
      %1581 = vmatprep.subr.bf16.mxu0 0
      %1582 = vmatpush2.bf16.msra.mxu0 0
      %1583 = vmatprep.subr.bf16.mxu0 0
      %1584 = vmatpush2.bf16.msra.mxu0 0
      %1585 = vmatprep.subr.bf16.mxu0 0
      %1586 = vmatpush2.bf16.msra.mxu0 0
      %1587 = vmatprep.subr.bf16.mxu0 0
      %1588 = vmatpush2.bf16.msra.mxu0 0
      %1589 = vmatprep.subr.bf16.mxu0 0
      %1590 = vmatpush2.bf16.msra.mxu0 0
      %1591 = vmatprep.mubr.bf16.mxu0 0
      %1592 = vmatmul.mubr.bf16.gmra.mxu0 %v1554
      %v1593 = vpop.f32.mrf.mxu0
      %v1594 = vadd.f32 0.0, %v1593
      %v1595 = vpop.f32.mrf.mxu0
      %v1596 = vpop.f32.mrf.mxu0
      %v1597 = vpop.f32.mrf.mxu0
      %1598 = vdwg.mxu0
      %1599 = vrot.lane.b32.xlu0 %v846, 64
      %v1600 = vpop.permute.xlu0 %1599
      %v1602 = vsel %vm852, %v1355, 0
      %v1605 = vsel %vm1363, %v1600, 0
      %1607 = vmatprep.subr.bf16.mxu0 0
      %1608 = vmatpush1.bf16.msra.mxu0 0
      %1609 = vmatprep.subr.bf16.mxu0 0
      %1610 = vmatpush1.bf16.msra.mxu0 0
      %1611 = vmatprep.subr.bf16.mxu0 0
      %1612 = vmatpush1.bf16.msra.mxu0 0
      %1613 = vmatprep.subr.bf16.mxu0 0
      %1614 = vmatpush1.bf16.msra.mxu0 0
      %1615 = vmatprep.subr.bf16.mxu0 0
      %1616 = vmatpush1.bf16.msra.mxu0 0
      %1617 = vmatprep.subr.bf16.mxu0 0
      %1618 = vmatpush1.bf16.msra.mxu0 0
      %1619 = vmatprep.subr.bf16.mxu0 0
      %1620 = vmatpush1.bf16.msra.mxu0 0
      %1621 = vmatprep.subr.bf16.mxu0 0
      %1622 = vmatpush1.bf16.msra.mxu0 %v1605
      %1623 = vmatprep.subr.bf16.mxu0 0
      %1624 = vmatpush2.bf16.msra.mxu0 0
      %1625 = vmatprep.subr.bf16.mxu0 0
      %1626 = vmatpush2.bf16.msra.mxu0 0
      %1627 = vmatprep.subr.bf16.mxu0 0
      %1628 = vmatpush2.bf16.msra.mxu0 0
      %1629 = vmatprep.subr.bf16.mxu0 0
      %1630 = vmatpush2.bf16.msra.mxu0 0
      %1631 = vmatprep.subr.bf16.mxu0 0
      %1632 = vmatpush2.bf16.msra.mxu0 0
      %1633 = vmatprep.subr.bf16.mxu0 0
      %1634 = vmatpush2.bf16.msra.mxu0 0
      %1635 = vmatprep.subr.bf16.mxu0 0
      %1636 = vmatpush2.bf16.msra.mxu0 0
      %1637 = vmatprep.subr.bf16.mxu0 0
      %1638 = vmatpush2.bf16.msra.mxu0 0
      %1639 = vmatprep.mubr.bf16.mxu0 0
      %1640 = vmatmul.mubr.bf16.gmra.mxu0 %v1602
      %v1641 = vpop.f32.mrf.mxu0
      %v1642 = vadd.f32 0.0, %v1641
      %v1643 = vpop.f32.mrf.mxu0
      %v1644 = vpop.f32.mrf.mxu0
      %v1645 = vpop.f32.mrf.mxu0
      %1646 = vdwg.mxu0
      %1647 = vrot.lane.b32.xlu0 %v847, 64
      %v1648 = vpop.permute.xlu0 %1647
      %v1650 = vsel %vm852, %v1356, 0
      %v1653 = vsel %vm1363, %v1648, 0
      %1655 = vmatprep.subr.bf16.mxu0 0
      %1656 = vmatpush1.bf16.msra.mxu0 0
      %1657 = vmatprep.subr.bf16.mxu0 0
      %1658 = vmatpush1.bf16.msra.mxu0 0
      %1659 = vmatprep.subr.bf16.mxu0 0
      %1660 = vmatpush1.bf16.msra.mxu0 0
      %1661 = vmatprep.subr.bf16.mxu0 0
      %1662 = vmatpush1.bf16.msra.mxu0 0
      %1663 = vmatprep.subr.bf16.mxu0 0
      %1664 = vmatpush1.bf16.msra.mxu0 0
      %1665 = vmatprep.subr.bf16.mxu0 0
      %1666 = vmatpush1.bf16.msra.mxu0 0
      %1667 = vmatprep.subr.bf16.mxu0 0
      %1668 = vmatpush1.bf16.msra.mxu0 0
      %1669 = vmatprep.subr.bf16.mxu0 0
      %1670 = vmatpush1.bf16.msra.mxu0 %v1653
      %1671 = vmatprep.subr.bf16.mxu0 0
      %1672 = vmatpush2.bf16.msra.mxu0 0
      %1673 = vmatprep.subr.bf16.mxu0 0
      %1674 = vmatpush2.bf16.msra.mxu0 0
      %1675 = vmatprep.subr.bf16.mxu0 0
      %1676 = vmatpush2.bf16.msra.mxu0 0
      %1677 = vmatprep.subr.bf16.mxu0 0
      %1678 = vmatpush2.bf16.msra.mxu0 0
      %1679 = vmatprep.subr.bf16.mxu0 0
      %1680 = vmatpush2.bf16.msra.mxu0 0
      %1681 = vmatprep.subr.bf16.mxu0 0
      %1682 = vmatpush2.bf16.msra.mxu0 0
      %1683 = vmatprep.subr.bf16.mxu0 0
      %1684 = vmatpush2.bf16.msra.mxu0 0
      %1685 = vmatprep.subr.bf16.mxu0 0
      %1686 = vmatpush2.bf16.msra.mxu0 0
      %1687 = vmatprep.mubr.bf16.mxu0 0
      %1688 = vmatmul.mubr.bf16.gmra.mxu0 %v1650
      %v1689 = vpop.f32.mrf.mxu0
      %v1690 = vadd.f32 0.0, %v1689
      %v1691 = vpop.f32.mrf.mxu0
      %v1692 = vpop.f32.mrf.mxu0
      %v1693 = vpop.f32.mrf.mxu0
      %1694 = vdwg.mxu0
      %1695 = vrot.lane.b32.xlu0 %v848, 64
      %v1696 = vpop.permute.xlu0 %1695
      %v1698 = vsel %vm852, %v1357, 0
      %v1701 = vsel %vm1363, %v1696, 0
      %1703 = vmatprep.subr.bf16.mxu0 0
      %1704 = vmatpush1.bf16.msra.mxu0 0
      %1705 = vmatprep.subr.bf16.mxu0 0
      %1706 = vmatpush1.bf16.msra.mxu0 0
      %1707 = vmatprep.subr.bf16.mxu0 0
      %1708 = vmatpush1.bf16.msra.mxu0 0
      %1709 = vmatprep.subr.bf16.mxu0 0
      %1710 = vmatpush1.bf16.msra.mxu0 0
      %1711 = vmatprep.subr.bf16.mxu0 0
      %1712 = vmatpush1.bf16.msra.mxu0 0
      %1713 = vmatprep.subr.bf16.mxu0 0
      %1714 = vmatpush1.bf16.msra.mxu0 0
      %1715 = vmatprep.subr.bf16.mxu0 0
      %1716 = vmatpush1.bf16.msra.mxu0 0
      %1717 = vmatprep.subr.bf16.mxu0 0
      %1718 = vmatpush1.bf16.msra.mxu0 %v1701
      %1719 = vmatprep.subr.bf16.mxu0 0
      %1720 = vmatpush2.bf16.msra.mxu0 0
      %1721 = vmatprep.subr.bf16.mxu0 0
      %1722 = vmatpush2.bf16.msra.mxu0 0
      %1723 = vmatprep.subr.bf16.mxu0 0
      %1724 = vmatpush2.bf16.msra.mxu0 0
      %1725 = vmatprep.subr.bf16.mxu0 0
      %1726 = vmatpush2.bf16.msra.mxu0 0
      %1727 = vmatprep.subr.bf16.mxu0 0
      %1728 = vmatpush2.bf16.msra.mxu0 0
      %1729 = vmatprep.subr.bf16.mxu0 0
      %1730 = vmatpush2.bf16.msra.mxu0 0
      %1731 = vmatprep.subr.bf16.mxu0 0
      %1732 = vmatpush2.bf16.msra.mxu0 0
      %1733 = vmatprep.subr.bf16.mxu0 0
      %1734 = vmatpush2.bf16.msra.mxu0 0
      %1735 = vmatprep.mubr.bf16.mxu0 0
      %1736 = vmatmul.mubr.bf16.gmra.mxu0 %v1698
      %v1737 = vpop.f32.mrf.mxu0
      %v1738 = vadd.f32 0.0, %v1737
      %v1739 = vpop.f32.mrf.mxu0
      %v1740 = vpop.f32.mrf.mxu0
      %v1741 = vpop.f32.mrf.mxu0
      %1742 = vdwg.mxu0
      %1745 = vrot.lane.b32.xlu0 %v1498, 8
      %v1746 = vpop.permute.xlu0 %1745
      %1747 = vrot.lane.b32.xlu0 %v1546, 8
      %v1748 = vpop.permute.xlu0 %1747
      %1753 = vrot.lane.b32.xlu0 %v1594, 16
      %v1754 = vpop.permute.xlu0 %1753
      %1755 = vrot.lane.b32.xlu0 %v1642, 16
      %v1756 = vpop.permute.xlu0 %1755
      %1761 = vrot.lane.b32.xlu0 %v1690, 24
      %v1762 = vpop.permute.xlu0 %1761
      %1763 = vrot.lane.b32.xlu0 %v1738, 24
      %v1764 = vpop.permute.xlu0 %1763
      %v1767 = vsel %vm852, %v1402, %v1746
      %v1768 = vsel %vm852, %v1450, %v1748
      %vm1769 = vcmask 130048
      %v1770 = vsel %vm1769, %v1767, %v1754
      %v1771 = vsel %vm1769, %v1768, %v1756
      %vm1772 = vcmask 195584
      %v1773 = vsel %vm1772, %v1770, %v1762
      %v1774 = vsel %vm1772, %v1771, %v1764
      %v1775 = vpack.c.bf16 %v1774, %v1773
      %v1776 = vld [vmem:[%s647] sm:$0xf]
      %v1777 = vld [vmem:[%s647 + $0x4] sm:$0xf]
      %v1778 = vld [vmem:[%s647 + $0x8] sm:$0xf]
      %v1779 = vld [vmem:[%s647 + $0xc] sm:$0xf]
      %v1784 = vunpack.c.l.b16 %v1776
      %v1785 = vunpack.c.l.b16 %v1777
      %v1786 = vunpack.c.l.b16 %v1778
      %v1787 = vunpack.c.l.b16 %v1779
      %v1788 = vpack.c.b16 %v1785, %v1784
      %v1789 = vpack.c.b16 %v1787, %v1786
      %v1793 = vsel %vm695, %v1775, 0
      %1795 = vmatprep.subr.bf16.mxu0 0
      %1796 = vmatpush1.bf16.msra.mxu0 0
      %1797 = vmatprep.subr.bf16.mxu0 0
      %1798 = vmatpush1.bf16.msra.mxu0 0
      %1799 = vmatprep.subr.bf16.mxu0 0
      %1800 = vmatpush1.bf16.msra.mxu0 0
      %1801 = vmatprep.subr.bf16.mxu0 0
      %1802 = vmatpush1.bf16.msra.mxu0 0
      %1803 = vmatprep.subr.bf16.mxu0 0
      %1804 = vmatpush1.bf16.msra.mxu0 0
      %1805 = vmatprep.subr.bf16.mxu0 0
      %1806 = vmatpush1.bf16.msra.mxu0 0
      %1807 = vmatprep.subr.bf16.mxu0 0
      %1808 = vmatpush1.bf16.msra.mxu0 %v1789
      %1809 = vmatprep.subr.bf16.mxu0 0
      %1810 = vmatpush1.bf16.msra.mxu0 %v1788
      %1811 = vmatprep.subr.bf16.mxu0 0
      %1812 = vmatpush2.bf16.msra.mxu0 0
      %1813 = vmatprep.subr.bf16.mxu0 0
      %1814 = vmatpush2.bf16.msra.mxu0 0
      %1815 = vmatprep.subr.bf16.mxu0 0
      %1816 = vmatpush2.bf16.msra.mxu0 0
      %1817 = vmatprep.subr.bf16.mxu0 0
      %1818 = vmatpush2.bf16.msra.mxu0 0
      %1819 = vmatprep.subr.bf16.mxu0 0
      %1820 = vmatpush2.bf16.msra.mxu0 0
      %1821 = vmatprep.subr.bf16.mxu0 0
      %1822 = vmatpush2.bf16.msra.mxu0 0
      %1823 = vmatprep.subr.bf16.mxu0 0
      %1824 = vmatpush2.bf16.msra.mxu0 0
      %1825 = vmatprep.subr.bf16.mxu0 0
      %1826 = vmatpush2.bf16.msra.mxu0 0
      %1827 = vmatprep.mubr.bf16.mxu0 0
      %1828 = vmatmul.mubr.bf16.gmra.mxu0 %v1793
      %v1829 = vpop.f32.mrf.mxu0
      %v1830 = vadd.f32 0.0, %v1829
      %v1831 = vpop.f32.mrf.mxu0
      %v1832 = vpop.f32.mrf.mxu0
      %v1833 = vadd.f32 0.0, %v1832
      %v1834 = vpop.f32.mrf.mxu0
      %1835 = vdwg.mxu0
      %v1836 = vadd.f32 %v689, %v1830
      %v1837 = vadd.f32 %v690, %v1833
      %v1838 = vld [vmem:[%s650] sm:$0x1]
      %v1840 = vlaneseq
      %v1841 = vshrl.u32 %v1840, 7
      %v1842 = vsub.s32 0, %v1841
      %v1843 = vrot.slane %v1838, %v1842
      %v1845 = vadd.f32 %v1836, %v1843
      %v1846 = vadd.f32 %v1837, %v1843
      %v1847 = vld [vmem:[%s675] sm:$0x1]
      %v1848 = vld [vmem:[%s678] sm:$0x1]
      %v1849 = vsel %vm695, %v1845, 0.0
      %1850 = vadd.xlane.f32.xlu0 %v1849
      %v1851 = vpop.xlane.xlu0 %1850
      %v1852 = vsel %vm695, %v1846, 0.0
      %1853 = vadd.xlane.f32.xlu0 %v1852
      %v1854 = vpop.xlane.xlu0 %1853
      %v1855 = vmul.f32 %v1851, %v702
      %v1856 = vmul.f32 %v1854, %v702
      %v1857 = vsub.f32 %v1845, %v1855
      %v1858 = vsub.f32 %v1846, %v1856
      %v1859 = vmul.f32 %v1857, %v1857
      %v1860 = vmul.f32 %v1858, %v1858
      %v1861 = vsel %vm695, %v1859, 0.0
      %1862 = vadd.xlane.f32.xlu0 %v1861
      %v1863 = vpop.xlane.xlu0 %1862
      %v1864 = vsel %vm695, %v1860, 0.0
      %1865 = vadd.xlane.f32.xlu0 %v1864
      %v1866 = vpop.xlane.xlu0 %1865
      %v1867 = vmul.f32 %v1863, 0.032258064
      %v1868 = vmul.f32 %v1866, 0.032258064
      %v1869 = vrsqrt.pop %v1867
      %v1870 = vmul.f32 %v1867, %v1869
      %vm1871 = vcmp.eq.f32.partialorder %v1867, inf
      %v1872 = vsel %vm1871, %v1867, %v1870
      %vm1873 = vcmp.eq.f32.partialorder %v1867, 0.0
      %v1874 = vand.u32 %v1867, 2147483648
      %v1875 = vsel %vm1873, %v1874, %v1872
      %v1876 = vrsqrt.pop %v1868
      %v1877 = vmul.f32 %v1868, %v1876
      %vm1878 = vcmp.eq.f32.partialorder %v1868, inf
      %v1879 = vsel %vm1878, %v1868, %v1877
      %vm1880 = vcmp.eq.f32.partialorder %v1868, 0.0
      %v1881 = vand.u32 %v1868, 2147483648
      %v1882 = vsel %vm1880, %v1881, %v1879
      %v1883 = vadd.f32 %v1875, 1e-06
      %v1884 = vadd.f32 %v1882, 1e-06
      %v1885 = vrcp.pop %v1883
      %v1886 = vrcp.pop %v1884
      %v1888 = vlaneseq
      %v1889 = vshrl.u32 %v1888, 7
      %v1890 = vsub.s32 0, %v1889
      %v1891 = vrot.slane %v1847, %v1890
      %v1893 = vmul.f32 %v1891, %v1857
      %v1894 = vmul.f32 %v1891, %v1858
      %v1895 = vmul.f32 %v1893, %v1885
      %v1896 = vmul.f32 %v1894, %v1886
      %v1898 = vlaneseq
      %v1899 = vshrl.u32 %v1898, 7
      %v1900 = vsub.s32 0, %v1899
      %v1901 = vrot.slane %v1848, %v1900
      %v1903 = vadd.f32 %v1895, %v1901
      %v1904 = vadd.f32 %v1896, %v1901
      %v1905 = vpack.c.bf16 %v1904, %v1903
      %v1906 = vld [vmem:[%s661] sm:$0xf]
      %v1907 = vld [vmem:[%s661 + $0x4] sm:$0xf]
      %v1908 = vld [vmem:[%s661 + $0x8] sm:$0xf]
      %v1909 = vld [vmem:[%s661 + $0xc] sm:$0xf]
      %v1910 = vld [vmem:[%s664] sm:$0x1]
      %v1912 = vlaneseq
      %v1913 = vshrl.u32 %v1912, 7
      %v1914 = vsub.s32 0, %v1913
      %v1915 = vrot.slane %v1910, %v1914
      %v1921 = vunpack.c.l.b16 %v1906
      %v1922 = vunpack.c.l.b16 %v1907
      %v1923 = vunpack.c.l.b16 %v1908
      %v1924 = vunpack.c.l.b16 %v1909
      %v1925 = vpack.c.b16 %v1922, %v1921
      %v1926 = vpack.c.b16 %v1924, %v1923
      %v1930 = vsel %vm695, %v1905, 0
      %1932 = vmatprep.subr.bf16.mxu0 0
      %1933 = vmatpush1.bf16.msra.mxu0 0
      %1934 = vmatprep.subr.bf16.mxu0 0
      %1935 = vmatpush1.bf16.msra.mxu0 0
      %1936 = vmatprep.subr.bf16.mxu0 0
      %1937 = vmatpush1.bf16.msra.mxu0 0
      %1938 = vmatprep.subr.bf16.mxu0 0
      %1939 = vmatpush1.bf16.msra.mxu0 0
      %1940 = vmatprep.subr.bf16.mxu0 0
      %1941 = vmatpush1.bf16.msra.mxu0 0
      %1942 = vmatprep.subr.bf16.mxu0 0
      %1943 = vmatpush1.bf16.msra.mxu0 0
      %1944 = vmatprep.subr.bf16.mxu0 0
      %1945 = vmatpush1.bf16.msra.mxu0 %v1926
      %1946 = vmatprep.subr.bf16.mxu0 0
      %1947 = vmatpush1.bf16.msra.mxu0 %v1925
      %1948 = vmatprep.subr.bf16.mxu0 0
      %1949 = vmatpush2.bf16.msra.mxu0 0
      %1950 = vmatprep.subr.bf16.mxu0 0
      %1951 = vmatpush2.bf16.msra.mxu0 0
      %1952 = vmatprep.subr.bf16.mxu0 0
      %1953 = vmatpush2.bf16.msra.mxu0 0
      %1954 = vmatprep.subr.bf16.mxu0 0
      %1955 = vmatpush2.bf16.msra.mxu0 0
      %1956 = vmatprep.subr.bf16.mxu0 0
      %1957 = vmatpush2.bf16.msra.mxu0 0
      %1958 = vmatprep.subr.bf16.mxu0 0
      %1959 = vmatpush2.bf16.msra.mxu0 0
      %1960 = vmatprep.subr.bf16.mxu0 0
      %1961 = vmatpush2.bf16.msra.mxu0 0
      %1962 = vmatprep.subr.bf16.mxu0 0
      %1963 = vmatpush2.bf16.msra.mxu0 0
      %1964 = vmatprep.mubr.bf16.mxu0 0
      %1965 = vmatmul.mubr.bf16.gmra.mxu0 %v1930
      %v1966 = vpop.f32.mrf.mxu0
      %v1967 = vadd.f32 %v1915, %v1966
      %v1968 = vpop.f32.mrf.mxu0
      %v1969 = vpop.f32.mrf.mxu0
      %v1970 = vadd.f32 %v1915, %v1969
      %v1971 = vpop.f32.mrf.mxu0
      %1972 = vdwg.mxu0
      %v1973 = vmax.f32 %v1967, 0.0
      %v1974 = vmax.f32 %v1970, 0.0
      %v1975 = vpack.c.bf16 %v1974, %v1973
      %v1976 = vld [vmem:[%s669] sm:$0xf]
      %v1977 = vld [vmem:[%s669 + $0x4] sm:$0xf]
      %v1978 = vld [vmem:[%s669 + $0x8] sm:$0xf]
      %v1979 = vld [vmem:[%s669 + $0xc] sm:$0xf]
      %v1980 = vld [vmem:[%s669 + $0x10] sm:$0xf]
      %v1981 = vld [vmem:[%s669 + $0x14] sm:$0xf]
      %v1982 = vld [vmem:[%s669 + $0x18] sm:$0xf]
      %v1983 = vld [vmem:[%s669 + $0x1c] sm:$0xf]
      %v1992 = vunpack.c.l.b16 %v1976
      %v1993 = vunpack.c.l.b16 %v1977
      %v1994 = vunpack.c.l.b16 %v1978
      %v1995 = vunpack.c.l.b16 %v1979
      %v1996 = vunpack.c.l.b16 %v1980
      %v1997 = vunpack.c.l.b16 %v1981
      %v1998 = vunpack.c.l.b16 %v1982
      %v1999 = vunpack.c.l.b16 %v1983
      %v2000 = vpack.c.b16 %v1993, %v1992
      %v2001 = vpack.c.b16 %v1995, %v1994
      %v2002 = vpack.c.b16 %v1997, %v1996
      %v2003 = vpack.c.b16 %v1999, %v1998
      %vm2008 = vcmask 523264
      %v2010 = vsel %vm2008, %v1975, 0
      %2012 = vmatprep.subr.bf16.mxu0 0
      %2013 = vmatpush1.bf16.msra.mxu0 0
      %2014 = vmatprep.subr.bf16.mxu0 0
      %2015 = vmatpush1.bf16.msra.mxu0 0
      %2016 = vmatprep.subr.bf16.mxu0 0
      %2017 = vmatpush1.bf16.msra.mxu0 0
      %2018 = vmatprep.subr.bf16.mxu0 0
      %2019 = vmatpush1.bf16.msra.mxu0 0
      %2020 = vmatprep.subr.bf16.mxu0 0
      %2021 = vmatpush1.bf16.msra.mxu0 %v2003
      %2022 = vmatprep.subr.bf16.mxu0 0
      %2023 = vmatpush1.bf16.msra.mxu0 %v2002
      %2024 = vmatprep.subr.bf16.mxu0 0
      %2025 = vmatpush1.bf16.msra.mxu0 %v2001
      %2026 = vmatprep.subr.bf16.mxu0 0
      %2027 = vmatpush1.bf16.msra.mxu0 %v2000
      %2028 = vmatprep.subr.bf16.mxu0 0
      %2029 = vmatpush2.bf16.msra.mxu0 0
      %2030 = vmatprep.subr.bf16.mxu0 0
      %2031 = vmatpush2.bf16.msra.mxu0 0
      %2032 = vmatprep.subr.bf16.mxu0 0
      %2033 = vmatpush2.bf16.msra.mxu0 0
      %2034 = vmatprep.subr.bf16.mxu0 0
      %2035 = vmatpush2.bf16.msra.mxu0 0
      %2036 = vmatprep.subr.bf16.mxu0 0
      %2037 = vmatpush2.bf16.msra.mxu0 0
      %2038 = vmatprep.subr.bf16.mxu0 0
      %2039 = vmatpush2.bf16.msra.mxu0 0
      %2040 = vmatprep.subr.bf16.mxu0 0
      %2041 = vmatpush2.bf16.msra.mxu0 0
      %2042 = vmatprep.subr.bf16.mxu0 0
      %2043 = vmatpush2.bf16.msra.mxu0 0
      %2044 = vmatprep.mubr.bf16.mxu0 0
      %2045 = vmatmul.mubr.bf16.gmra.mxu0 %v2010
      %v2046 = vpop.f32.mrf.mxu0
      %v2047 = vadd.f32 0.0, %v2046
      %v2048 = vpop.f32.mrf.mxu0
      %v2049 = vpop.f32.mrf.mxu0
      %v2050 = vadd.f32 0.0, %v2049
      %v2051 = vpop.f32.mrf.mxu0
      %2052 = vdwg.mxu0
      %v2053 = vadd.f32 %v1845, %v2047
      %v2054 = vadd.f32 %v1846, %v2050
      %v2055 = vld [vmem:[%s672] sm:$0x1]
      %v2057 = vlaneseq
      %v2058 = vshrl.u32 %v2057, 7
      %v2059 = vsub.s32 0, %v2058
      %v2060 = vrot.slane %v2055, %v2059
      %v2062 = vadd.f32 %v2053, %v2060
      %v2063 = vadd.f32 %v2054, %v2060
      %2064 = vst.msk [vmem:[%s16] sm:$0xff] %vm695, %v2062
      %2065 = vst.msk [vmem:[%s16 + $0x8] sm:$0xff] %vm695, %v2063
      %p2066 = scmp.eq.s32.totalorder %s27, 1
      // Predicated region
      $region89: #{transformer_forward.3} parent=83 // pred_check
        %p2067 = pneg %p2066
      $region90: #{transformer_forward.3} parent=83 // pred_check_branch
        %2069 = sbr.rel (%p2067) target = $region92
      $region91: #{transformer_forward.3} parent=83 // pred_region
        %v2070 = vld [vmem:[%s14] sm:$0x1]
        %v2071 = vld [vmem:[%s15] sm:$0x1]
        %v2072 = vsel %vm695, %v2062, 0.0
        %2073 = vadd.xlane.f32.xlu0 %v2072
        %v2074 = vpop.xlane.xlu0 %2073
        %v2075 = vsel %vm695, %v2063, 0.0
        %2076 = vadd.xlane.f32.xlu0 %v2075
        %v2077 = vpop.xlane.xlu0 %2076
        %v2078 = vmul.f32 %v2074, %v702
        %v2079 = vmul.f32 %v2077, %v702
        %v2080 = vsub.f32 %v2062, %v2078
        %v2081 = vsub.f32 %v2063, %v2079
        %v2082 = vmul.f32 %v2080, %v2080
        %v2083 = vmul.f32 %v2081, %v2081
        %v2084 = vsel %vm695, %v2082, 0.0
        %2085 = vadd.xlane.f32.xlu0 %v2084
        %v2086 = vpop.xlane.xlu0 %2085
        %v2087 = vsel %vm695, %v2083, 0.0
        %2088 = vadd.xlane.f32.xlu0 %v2087
        %v2089 = vpop.xlane.xlu0 %2088
        %v2090 = vmul.f32 %v2086, 0.032258064
        %v2091 = vmul.f32 %v2089, 0.032258064
        %v2092 = vrsqrt.pop %v2090
        %v2093 = vmul.f32 %v2090, %v2092
        %vm2094 = vcmp.eq.f32.partialorder %v2090, inf
        %v2095 = vsel %vm2094, %v2090, %v2093
        %vm2096 = vcmp.eq.f32.partialorder %v2090, 0.0
        %v2097 = vand.u32 %v2090, 2147483648
        %v2098 = vsel %vm2096, %v2097, %v2095
        %v2099 = vrsqrt.pop %v2091
        %v2100 = vmul.f32 %v2091, %v2099
        %vm2101 = vcmp.eq.f32.partialorder %v2091, inf
        %v2102 = vsel %vm2101, %v2091, %v2100
        %vm2103 = vcmp.eq.f32.partialorder %v2091, 0.0
        %v2104 = vand.u32 %v2091, 2147483648
        %v2105 = vsel %vm2103, %v2104, %v2102
        %v2106 = vadd.f32 %v2098, 1e-06
        %v2107 = vadd.f32 %v2105, 1e-06
        %v2108 = vrcp.pop %v2106
        %v2109 = vrcp.pop %v2107
        %v2111 = vlaneseq
        %v2112 = vshrl.u32 %v2111, 7
        %v2113 = vsub.s32 0, %v2112
        %v2114 = vrot.slane %v2070, %v2113
        %v2116 = vmul.f32 %v2114, %v2080
        %v2117 = vmul.f32 %v2114, %v2081
        %v2118 = vmul.f32 %v2116, %v2108
        %v2119 = vmul.f32 %v2117, %v2109
        %v2121 = vlaneseq
        %v2122 = vshrl.u32 %v2121, 7
        %v2123 = vsub.s32 0, %v2122
        %v2124 = vrot.slane %v2071, %v2123
        %v2126 = vadd.f32 %v2118, %v2124
        %v2127 = vadd.f32 %v2119, %v2124
        %2128 = vst.msk [vmem:[%s16] sm:$0xff] %vm695, %v2126
        %2129 = vst.msk [vmem:[%s16 + $0x8] sm:$0xff] %vm695, %v2127
      $region92: #{transformer_forward.3} parent=83 // pred_fallthru
        _
      // Predicated region
      $region93: #{transformer_forward.3} parent=83 // pred_check
        %p2130 = pneg %p436
      $region94: #{transformer_forward.3} parent=83 // pred_check_branch
        %2132 = sbr.rel (%p2130) target = $region96
      $region95: #{transformer_forward.3} parent=83 // pred_region
        _
      $region96: #{transformer_forward.3} parent=83 // pred_fallthru
        _
      // Predicated region
      $region97: #{transformer_forward.3} parent=83 // pred_check
        %p2133 = pneg %p436
      $region98: #{transformer_forward.3} parent=83 // pred_check_branch
        %2135 = sbr.rel (%p2133) target = $region100
      $region99: #{transformer_forward.3} parent=83 // pred_region
        _
      $region100: #{transformer_forward.3} parent=83 // pred_fallthru
        _
    $region84: #{transformer_forward.3} parent=5 // pred_fallthru
      _
    %p2136 = scmp.le.s32.totalorder 2, %s22
    // Predicated region
    $region101: #{transformer_forward.3} parent=5 // pred_check
      %p2137 = pneg %p2136
    $region102: #{transformer_forward.3} parent=5 // pred_check_branch
      %2139 = sbr.rel (%p2137) target = $region104
    $region103: #{transformer_forward.3} parent=5 // pred_region
      %s2140 = ssub.s32 %s22, 2
    $region104: #{transformer_forward.3} parent=5 // pred_fallthru
      _
  $region6: #{transformer_forward.3} parent=0 // loop_footer
    %s26 = sadd.s32 1, %s22
  $region7: #{transformer_forward.3} parent=0 // loop_footer_branch
    %21 = sbr.rel target = $region3
  $region8: #{transformer_forward.3} parent=0 // loop_exit
    _

// kernel: transformer_forward.4
$region0: #{transformer_forward.4}
  #allocation0 [shape = 'u32[]', space=smem, size = 0x4, offset = 0x4, fixed_abs, tag = 'smem constant byte address 0x4 - core index']
  #allocation1 [shape = 'u32[144,128]{1,0:T(1,128)}', space=vmem, size = 0x12000, scoped, tag = 'internal scratch']
  %s0 = inlined_call_operand.vmem [shape: f32[16,32], index: 0, kind: input, shape index: {}]
  %s1 = inlined_call_operand.vmem [shape: bf16[16,32], index: 1, kind: input, shape index: {}]
  %s2 = inlined_call_operand.vmem [shape: f32[2,8,8], index: 2, kind: input, shape index: {}]
  %s3 = inlined_call_operand.vmem [shape: f32[2,1,8], index: 3, kind: input, shape index: {}]
  %s4 = inlined_call_operand.vmem [shape: bf16[2,32,96], index: 4, kind: input, shape index: {}]
  %s5 = inlined_call_operand.vmem [shape: f32[2,1,96], index: 5, kind: input, shape index: {}]
  %s6 = inlined_call_operand.vmem [shape: bf16[2,32,32], index: 6, kind: input, shape index: {}]
  %s7 = inlined_call_operand.vmem [shape: f32[2,1,32], index: 7, kind: input, shape index: {}]
  %s8 = inlined_call_operand.vmem [shape: f32[2,1,32], index: 8, kind: input, shape index: {}]
  %s9 = inlined_call_operand.vmem [shape: f32[2,1,32], index: 9, kind: input, shape index: {}]
  %s10 = inlined_call_operand.vmem [shape: bf16[2,32,32], index: 10, kind: input, shape index: {}]
  %s11 = inlined_call_operand.vmem [shape: f32[2,1,32], index: 11, kind: input, shape index: {}]
  %s12 = inlined_call_operand.vmem [shape: bf16[2,32,64], index: 12, kind: input, shape index: {}]
  %s13 = inlined_call_operand.vmem [shape: f32[2,1,64], index: 13, kind: input, shape index: {}]
  %s14 = inlined_call_operand.vmem [shape: bf16[2,32,32], index: 14, kind: input, shape index: {}]
  %s15 = inlined_call_operand.vmem [shape: f32[2,1,32], index: 15, kind: input, shape index: {}]
  %s16 = inlined_call_operand.vmem [shape: f32[2,1,32], index: 16, kind: input, shape index: {}]
  %s17 = inlined_call_operand.vmem [shape: f32[2,1,32], index: 17, kind: input, shape index: {}]
  %s18 = inlined_call_operand.vmem [shape: bf16[2,32,64], index: 18, kind: input, shape index: {}]
  %s19 = inlined_call_operand.vmem [shape: f32[2,1,64], index: 19, kind: input, shape index: {}]
  %s20 = inlined_call_operand.vmem [shape: bf16[2,64,32], index: 20, kind: input, shape index: {}]
  %s21 = inlined_call_operand.vmem [shape: f32[2,1,32], index: 21, kind: input, shape index: {}]
  %s22 = inlined_call_operand.vmem [shape: f32[2,1,32], index: 22, kind: input, shape index: {}]
  %s23 = inlined_call_operand.vmem [shape: f32[2,1,32], index: 23, kind: input, shape index: {}]
  %s24 = inlined_call_operand.vmem [shape: f32[16,32], index: 24, kind: output, shape index: {}]
  %s25 = sld [smem:[#allocation0]]
  $region133: #{transformer_forward.4} parent=0
    _
  %s27 = ssub.s32 1, %s25
  %s28 = scalar_select 0, %s27, %s25
  loop: start=0, step=1, limit=4
  $region2: #{transformer_forward.4} parent=0 // loop_pre_header
    _
  $region3: #{transformer_forward.4} parent=0 // loop_header
    %s30 = sphi 0, %s34
    %p31 = scmp.ge.s32.totalorder %s30, 4
    %s38 = sphi 0, %s38
    %s40 = sphi 0, %s38
    %s41 = sphi 0, %s40
    %s55 = sphi 0, %s41
    %s59 = sphi 0, %s59
    %s61 = sphi 0, %s59
    %s62 = sphi 0, %s61
    %s76 = sphi 0, %s62
    %s80 = sphi 0, %s80
    %s82 = sphi 0, %s80
    %s83 = sphi 0, %s82
    %s97 = sphi 0, %s83
    %s101 = sphi 0, %s101
    %s103 = sphi 0, %s101
    %s104 = sphi 0, %s103
    %s118 = sphi 0, %s104
    %s124 = sphi 0, %s126
    %s127 = sphi 0, %s124
    %s128 = sphi 0, %s127
    %s144 = sphi 0, %s128
    %s150 = sphi 0, %s152
    %s153 = sphi 0, %s150
    %s154 = sphi 0, %s153
    %s170 = sphi 0, %s154
    %s176 = sphi 0, %s178
    %s179 = sphi 0, %s176
    %s180 = sphi 0, %s179
    %s196 = sphi 0, %s180
    %s202 = sphi 0, %s204
    %s205 = sphi 0, %s202
    %s206 = sphi 0, %s205
    %s222 = sphi 0, %s206
    %s228 = sphi 0, %s230
    %s231 = sphi 0, %s228
    %s232 = sphi 0, %s231
    %s248 = sphi 0, %s232
    %s254 = sphi 0, %s256
    %s257 = sphi 0, %s254
    %s258 = sphi 0, %s257
    %s274 = sphi 0, %s258
    %s280 = sphi 0, %s282
    %s283 = sphi 0, %s280
    %s284 = sphi 0, %s283
    %s300 = sphi 0, %s284
    %s306 = sphi 0, %s308
    %s309 = sphi 0, %s306
    %s310 = sphi 0, %s309
    %s326 = sphi 0, %s310
    %s332 = sphi 0, %s334
    %s335 = sphi 0, %s332
    %s336 = sphi 0, %s335
    %s352 = sphi 0, %s336
    %s358 = sphi 0, %s360
    %s361 = sphi 0, %s358
    %s362 = sphi 0, %s361
    %s378 = sphi 0, %s362
    %s384 = sphi 0, %s386
    %s387 = sphi 0, %s384
    %s388 = sphi 0, %s387
    %s404 = sphi 0, %s388
    %s410 = sphi 0, %s412
    %s413 = sphi 0, %s410
    %s414 = sphi 0, %s413
    %s430 = sphi 0, %s414
    %s436 = sphi 0, %s438
    %s439 = sphi 0, %s436
    %s440 = sphi 0, %s439
    %s456 = sphi 0, %s440
    %s462 = sphi 0, %s464
    %s465 = sphi 0, %s462
    %s466 = sphi 0, %s465
    %s482 = sphi 0, %s466
    %s488 = sphi 0, %s490
    %s491 = sphi 0, %s488
    %s492 = sphi 0, %s491
    %s508 = sphi 0, %s492
    %s514 = sphi 0, %s516
    %s517 = sphi 0, %s514
    %s518 = sphi 0, %s517
    %s534 = sphi 0, %s518
    %s540 = sphi 0, %s542
    %s543 = sphi 0, %s540
    %s544 = sphi 0, %s543
    %s560 = sphi 0, %s544
    %s566 = sphi 0, %s568
    %s569 = sphi 0, %s566
    %s570 = sphi 0, %s569
    %s586 = sphi 0, %s570
    %s592 = sphi 0, %s594
    %s595 = sphi 0, %s592
    %s596 = sphi 0, %s595
    %s612 = sphi 0, %s596
    %s618 = sphi 0, %s620
    %s621 = sphi 0, %s618
    %s622 = sphi 0, %s621
    %s638 = sphi 0, %s622
    %s642 = sphi 0, %s642
    %s644 = sphi 0, %s642
    %s645 = sphi 0, %s644
    %s659 = sphi 0, %s645
  $region4: #{transformer_forward.4} parent=0 // loop_header_branch
    %33 = sbr.rel (%p31) target = $region8
  $region5: #{transformer_forward.4} parent=0 // loop_body
    %s35 = ssub.s32 %s30, 1
    %s36 = ssub.s32 %s30, 2
    %s37 = sadd.s32 %s30, 1
    %s39 = sadd.s32 %s38, 1
    %p42 = scmp.eq.s32.totalorder %s30, 1
    %p43 = scmp.ne.s32.totalorder %s38, %s40
    %p44 = scmp.eq.s32.totalorder %s30, 0
    %p45 = por %p43, %p44
    %p46 = scmp.ne.s32.totalorder %s38, %s40
    %p47 = scmp.eq.s32.totalorder %s35, 1
    %p48 = por %p46, %p47
    %p49 = scmp.ne.s32.totalorder %s40, %s41
    %p50 = scmp.eq.s32.totalorder %s35, 0
    %p51 = por %p49, %p50
    %p52 = scmp.ne.s32.totalorder %s40, %s41
    %p53 = scmp.eq.s32.totalorder %s36, 1
    %p54 = por %p52, %p53
    %p56 = scmp.ne.s32.totalorder %s41, %s55
    %p57 = scmp.eq.s32.totalorder %s36, 0
    %p58 = por %p56, %p57
    %s60 = sadd.s32 %s59, 1
    %p63 = scmp.eq.s32.totalorder %s30, 1
    %p64 = scmp.ne.s32.totalorder %s59, %s61
    %p65 = scmp.eq.s32.totalorder %s30, 0
    %p66 = por %p64, %p65
    %p67 = scmp.ne.s32.totalorder %s59, %s61
    %p68 = scmp.eq.s32.totalorder %s35, 1
    %p69 = por %p67, %p68
    %p70 = scmp.ne.s32.totalorder %s61, %s62
    %p71 = scmp.eq.s32.totalorder %s35, 0
    %p72 = por %p70, %p71
    %p73 = scmp.ne.s32.totalorder %s61, %s62
    %p74 = scmp.eq.s32.totalorder %s36, 1
    %p75 = por %p73, %p74
    %p77 = scmp.ne.s32.totalorder %s62, %s76
    %p78 = scmp.eq.s32.totalorder %s36, 0
    %p79 = por %p77, %p78
    %s81 = sadd.s32 %s80, 1
    %p84 = scmp.eq.s32.totalorder %s30, 1
    %p85 = scmp.ne.s32.totalorder %s80, %s82
    %p86 = scmp.eq.s32.totalorder %s30, 0
    %p87 = por %p85, %p86
    %p88 = scmp.ne.s32.totalorder %s80, %s82
    %p89 = scmp.eq.s32.totalorder %s35, 1
    %p90 = por %p88, %p89
    %p91 = scmp.ne.s32.totalorder %s82, %s83
    %p92 = scmp.eq.s32.totalorder %s35, 0
    %p93 = por %p91, %p92
    %p94 = scmp.ne.s32.totalorder %s82, %s83
    %p95 = scmp.eq.s32.totalorder %s36, 1
    %p96 = por %p94, %p95
    %p98 = scmp.ne.s32.totalorder %s83, %s97
    %p99 = scmp.eq.s32.totalorder %s36, 0
    %p100 = por %p98, %p99
    %s102 = sadd.s32 %s101, 1
    %p105 = scmp.eq.s32.totalorder %s30, 1
    %p106 = scmp.ne.s32.totalorder %s101, %s103
    %p107 = scmp.eq.s32.totalorder %s30, 0
    %p108 = por %p106, %p107
    %p109 = scmp.ne.s32.totalorder %s101, %s103
    %p110 = scmp.eq.s32.totalorder %s35, 1
    %p111 = por %p109, %p110
    %p112 = scmp.ne.s32.totalorder %s103, %s104
    %p113 = scmp.eq.s32.totalorder %s35, 0
    %p114 = por %p112, %p113
    %p115 = scmp.ne.s32.totalorder %s103, %s104
    %p116 = scmp.eq.s32.totalorder %s36, 1
    %p117 = por %p115, %p116
    %p119 = scmp.ne.s32.totalorder %s104, %s118
    %p120 = scmp.eq.s32.totalorder %s36, 0
    %p121 = por %p119, %p120
    %s122 = ssub.s32 %s30, %s37
    %p123 = scmp.eq.s32.totalorder %s122, 0
    %s125 = sadd.s32 %s124, 1
    %s126 = scalar_select %p123, %s124, %s125
    %p129 = pneg %p123
    %p130 = scmp.eq.s32.totalorder %s30, 1
    %p131 = por %p129, %p130
    %p132 = scmp.ne.s32.totalorder %s124, %s127
    %p133 = scmp.eq.s32.totalorder %s30, 0
    %p134 = por %p132, %p133
    %p135 = scmp.ne.s32.totalorder %s124, %s127
    %p136 = scmp.eq.s32.totalorder %s35, 1
    %p137 = por %p135, %p136
    %p138 = scmp.ne.s32.totalorder %s127, %s128
    %p139 = scmp.eq.s32.totalorder %s35, 0
    %p140 = por %p138, %p139
    %p141 = scmp.ne.s32.totalorder %s127, %s128
    %p142 = scmp.eq.s32.totalorder %s36, 1
    %p143 = por %p141, %p142
    %p145 = scmp.ne.s32.totalorder %s128, %s144
    %p146 = scmp.eq.s32.totalorder %s36, 0
    %p147 = por %p145, %p146
    %s148 = ssub.s32 %s30, %s37
    %p149 = scmp.eq.s32.totalorder %s148, 0
    %s151 = sadd.s32 %s150, 1
    %s152 = scalar_select %p149, %s150, %s151
    %p155 = pneg %p149
    %p156 = scmp.eq.s32.totalorder %s30, 1
    %p157 = por %p155, %p156
    %p158 = scmp.ne.s32.totalorder %s150, %s153
    %p159 = scmp.eq.s32.totalorder %s30, 0
    %p160 = por %p158, %p159
    %p161 = scmp.ne.s32.totalorder %s150, %s153
    %p162 = scmp.eq.s32.totalorder %s35, 1
    %p163 = por %p161, %p162
    %p164 = scmp.ne.s32.totalorder %s153, %s154
    %p165 = scmp.eq.s32.totalorder %s35, 0
    %p166 = por %p164, %p165
    %p167 = scmp.ne.s32.totalorder %s153, %s154
    %p168 = scmp.eq.s32.totalorder %s36, 1
    %p169 = por %p167, %p168
    %p171 = scmp.ne.s32.totalorder %s154, %s170
    %p172 = scmp.eq.s32.totalorder %s36, 0
    %p173 = por %p171, %p172
    %s174 = ssub.s32 %s30, %s37
    %p175 = scmp.eq.s32.totalorder %s174, 0
    %s177 = sadd.s32 %s176, 1
    %s178 = scalar_select %p175, %s176, %s177
    %p181 = pneg %p175
    %p182 = scmp.eq.s32.totalorder %s30, 1
    %p183 = por %p181, %p182
    %p184 = scmp.ne.s32.totalorder %s176, %s179
    %p185 = scmp.eq.s32.totalorder %s30, 0
    %p186 = por %p184, %p185
    %p187 = scmp.ne.s32.totalorder %s176, %s179
    %p188 = scmp.eq.s32.totalorder %s35, 1
    %p189 = por %p187, %p188
    %p190 = scmp.ne.s32.totalorder %s179, %s180
    %p191 = scmp.eq.s32.totalorder %s35, 0
    %p192 = por %p190, %p191
    %p193 = scmp.ne.s32.totalorder %s179, %s180
    %p194 = scmp.eq.s32.totalorder %s36, 1
    %p195 = por %p193, %p194
    %p197 = scmp.ne.s32.totalorder %s180, %s196
    %p198 = scmp.eq.s32.totalorder %s36, 0
    %p199 = por %p197, %p198
    %s200 = ssub.s32 %s30, %s37
    %p201 = scmp.eq.s32.totalorder %s200, 0
    %s203 = sadd.s32 %s202, 1
    %s204 = scalar_select %p201, %s202, %s203
    %p207 = pneg %p201
    %p208 = scmp.eq.s32.totalorder %s30, 1
    %p209 = por %p207, %p208
    %p210 = scmp.ne.s32.totalorder %s202, %s205
    %p211 = scmp.eq.s32.totalorder %s30, 0
    %p212 = por %p210, %p211
    %p213 = scmp.ne.s32.totalorder %s202, %s205
    %p214 = scmp.eq.s32.totalorder %s35, 1
    %p215 = por %p213, %p214
    %p216 = scmp.ne.s32.totalorder %s205, %s206
    %p217 = scmp.eq.s32.totalorder %s35, 0
    %p218 = por %p216, %p217
    %p219 = scmp.ne.s32.totalorder %s205, %s206
    %p220 = scmp.eq.s32.totalorder %s36, 1
    %p221 = por %p219, %p220
    %p223 = scmp.ne.s32.totalorder %s206, %s222
    %p224 = scmp.eq.s32.totalorder %s36, 0
    %p225 = por %p223, %p224
    %s226 = ssub.s32 %s30, %s37
    %p227 = scmp.eq.s32.totalorder %s226, 0
    %s229 = sadd.s32 %s228, 1
    %s230 = scalar_select %p227, %s228, %s229
    %p233 = pneg %p227
    %p234 = scmp.eq.s32.totalorder %s30, 1
    %p235 = por %p233, %p234
    %p236 = scmp.ne.s32.totalorder %s228, %s231
    %p237 = scmp.eq.s32.totalorder %s30, 0
    %p238 = por %p236, %p237
    %p239 = scmp.ne.s32.totalorder %s228, %s231
    %p240 = scmp.eq.s32.totalorder %s35, 1
    %p241 = por %p239, %p240
    %p242 = scmp.ne.s32.totalorder %s231, %s232
    %p243 = scmp.eq.s32.totalorder %s35, 0
    %p244 = por %p242, %p243
    %p245 = scmp.ne.s32.totalorder %s231, %s232
    %p246 = scmp.eq.s32.totalorder %s36, 1
    %p247 = por %p245, %p246
    %p249 = scmp.ne.s32.totalorder %s232, %s248
    %p250 = scmp.eq.s32.totalorder %s36, 0
    %p251 = por %p249, %p250
    %s252 = ssub.s32 %s30, %s37
    %p253 = scmp.eq.s32.totalorder %s252, 0
    %s255 = sadd.s32 %s254, 1
    %s256 = scalar_select %p253, %s254, %s255
    %p259 = pneg %p253
    %p260 = scmp.eq.s32.totalorder %s30, 1
    %p261 = por %p259, %p260
    %p262 = scmp.ne.s32.totalorder %s254, %s257
    %p263 = scmp.eq.s32.totalorder %s30, 0
    %p264 = por %p262, %p263
    %p265 = scmp.ne.s32.totalorder %s254, %s257
    %p266 = scmp.eq.s32.totalorder %s35, 1
    %p267 = por %p265, %p266
    %p268 = scmp.ne.s32.totalorder %s257, %s258
    %p269 = scmp.eq.s32.totalorder %s35, 0
    %p270 = por %p268, %p269
    %p271 = scmp.ne.s32.totalorder %s257, %s258
    %p272 = scmp.eq.s32.totalorder %s36, 1
    %p273 = por %p271, %p272
    %p275 = scmp.ne.s32.totalorder %s258, %s274
    %p276 = scmp.eq.s32.totalorder %s36, 0
    %p277 = por %p275, %p276
    %s278 = ssub.s32 %s30, %s37
    %p279 = scmp.eq.s32.totalorder %s278, 0
    %s281 = sadd.s32 %s280, 1
    %s282 = scalar_select %p279, %s280, %s281
    %p285 = pneg %p279
    %p286 = scmp.eq.s32.totalorder %s30, 1
    %p287 = por %p285, %p286
    %p288 = scmp.ne.s32.totalorder %s280, %s283
    %p289 = scmp.eq.s32.totalorder %s30, 0
    %p290 = por %p288, %p289
    %p291 = scmp.ne.s32.totalorder %s280, %s283
    %p292 = scmp.eq.s32.totalorder %s35, 1
    %p293 = por %p291, %p292
    %p294 = scmp.ne.s32.totalorder %s283, %s284
    %p295 = scmp.eq.s32.totalorder %s35, 0
    %p296 = por %p294, %p295
    %p297 = scmp.ne.s32.totalorder %s283, %s284
    %p298 = scmp.eq.s32.totalorder %s36, 1
    %p299 = por %p297, %p298
    %p301 = scmp.ne.s32.totalorder %s284, %s300
    %p302 = scmp.eq.s32.totalorder %s36, 0
    %p303 = por %p301, %p302
    %s304 = ssub.s32 %s30, %s37
    %p305 = scmp.eq.s32.totalorder %s304, 0
    %s307 = sadd.s32 %s306, 1
    %s308 = scalar_select %p305, %s306, %s307
    %p311 = pneg %p305
    %p312 = scmp.eq.s32.totalorder %s30, 1
    %p313 = por %p311, %p312
    %p314 = scmp.ne.s32.totalorder %s306, %s309
    %p315 = scmp.eq.s32.totalorder %s30, 0
    %p316 = por %p314, %p315
    %p317 = scmp.ne.s32.totalorder %s306, %s309
    %p318 = scmp.eq.s32.totalorder %s35, 1
    %p319 = por %p317, %p318
    %p320 = scmp.ne.s32.totalorder %s309, %s310
    %p321 = scmp.eq.s32.totalorder %s35, 0
    %p322 = por %p320, %p321
    %p323 = scmp.ne.s32.totalorder %s309, %s310
    %p324 = scmp.eq.s32.totalorder %s36, 1
    %p325 = por %p323, %p324
    %p327 = scmp.ne.s32.totalorder %s310, %s326
    %p328 = scmp.eq.s32.totalorder %s36, 0
    %p329 = por %p327, %p328
    %s330 = ssub.s32 %s30, %s37
    %p331 = scmp.eq.s32.totalorder %s330, 0
    %s333 = sadd.s32 %s332, 1
    %s334 = scalar_select %p331, %s332, %s333
    %p337 = pneg %p331
    %p338 = scmp.eq.s32.totalorder %s30, 1
    %p339 = por %p337, %p338
    %p340 = scmp.ne.s32.totalorder %s332, %s335
    %p341 = scmp.eq.s32.totalorder %s30, 0
    %p342 = por %p340, %p341
    %p343 = scmp.ne.s32.totalorder %s332, %s335
    %p344 = scmp.eq.s32.totalorder %s35, 1
    %p345 = por %p343, %p344
    %p346 = scmp.ne.s32.totalorder %s335, %s336
    %p347 = scmp.eq.s32.totalorder %s35, 0
    %p348 = por %p346, %p347
    %p349 = scmp.ne.s32.totalorder %s335, %s336
    %p350 = scmp.eq.s32.totalorder %s36, 1
    %p351 = por %p349, %p350
    %p353 = scmp.ne.s32.totalorder %s336, %s352
    %p354 = scmp.eq.s32.totalorder %s36, 0
    %p355 = por %p353, %p354
    %s356 = ssub.s32 %s30, %s37
    %p357 = scmp.eq.s32.totalorder %s356, 0
    %s359 = sadd.s32 %s358, 1
    %s360 = scalar_select %p357, %s358, %s359
    %p363 = pneg %p357
    %p364 = scmp.eq.s32.totalorder %s30, 1
    %p365 = por %p363, %p364
    %p366 = scmp.ne.s32.totalorder %s358, %s361
    %p367 = scmp.eq.s32.totalorder %s30, 0
    %p368 = por %p366, %p367
    %p369 = scmp.ne.s32.totalorder %s358, %s361
    %p370 = scmp.eq.s32.totalorder %s35, 1
    %p371 = por %p369, %p370
    %p372 = scmp.ne.s32.totalorder %s361, %s362
    %p373 = scmp.eq.s32.totalorder %s35, 0
    %p374 = por %p372, %p373
    %p375 = scmp.ne.s32.totalorder %s361, %s362
    %p376 = scmp.eq.s32.totalorder %s36, 1
    %p377 = por %p375, %p376
    %p379 = scmp.ne.s32.totalorder %s362, %s378
    %p380 = scmp.eq.s32.totalorder %s36, 0
    %p381 = por %p379, %p380
    %s382 = ssub.s32 %s30, %s37
    %p383 = scmp.eq.s32.totalorder %s382, 0
    %s385 = sadd.s32 %s384, 1
    %s386 = scalar_select %p383, %s384, %s385
    %p389 = pneg %p383
    %p390 = scmp.eq.s32.totalorder %s30, 1
    %p391 = por %p389, %p390
    %p392 = scmp.ne.s32.totalorder %s384, %s387
    %p393 = scmp.eq.s32.totalorder %s30, 0
    %p394 = por %p392, %p393
    %p395 = scmp.ne.s32.totalorder %s384, %s387
    %p396 = scmp.eq.s32.totalorder %s35, 1
    %p397 = por %p395, %p396
    %p398 = scmp.ne.s32.totalorder %s387, %s388
    %p399 = scmp.eq.s32.totalorder %s35, 0
    %p400 = por %p398, %p399
    %p401 = scmp.ne.s32.totalorder %s387, %s388
    %p402 = scmp.eq.s32.totalorder %s36, 1
    %p403 = por %p401, %p402
    %p405 = scmp.ne.s32.totalorder %s388, %s404
    %p406 = scmp.eq.s32.totalorder %s36, 0
    %p407 = por %p405, %p406
    %s408 = ssub.s32 %s30, %s37
    %p409 = scmp.eq.s32.totalorder %s408, 0
    %s411 = sadd.s32 %s410, 1
    %s412 = scalar_select %p409, %s410, %s411
    %p415 = pneg %p409
    %p416 = scmp.eq.s32.totalorder %s30, 1
    %p417 = por %p415, %p416
    %p418 = scmp.ne.s32.totalorder %s410, %s413
    %p419 = scmp.eq.s32.totalorder %s30, 0
    %p420 = por %p418, %p419
    %p421 = scmp.ne.s32.totalorder %s410, %s413
    %p422 = scmp.eq.s32.totalorder %s35, 1
    %p423 = por %p421, %p422
    %p424 = scmp.ne.s32.totalorder %s413, %s414
    %p425 = scmp.eq.s32.totalorder %s35, 0
    %p426 = por %p424, %p425
    %p427 = scmp.ne.s32.totalorder %s413, %s414
    %p428 = scmp.eq.s32.totalorder %s36, 1
    %p429 = por %p427, %p428
    %p431 = scmp.ne.s32.totalorder %s414, %s430
    %p432 = scmp.eq.s32.totalorder %s36, 0
    %p433 = por %p431, %p432
    %s434 = ssub.s32 %s30, %s37
    %p435 = scmp.eq.s32.totalorder %s434, 0
    %s437 = sadd.s32 %s436, 1
    %s438 = scalar_select %p435, %s436, %s437
    %p441 = pneg %p435
    %p442 = scmp.eq.s32.totalorder %s30, 1
    %p443 = por %p441, %p442
    %p444 = scmp.ne.s32.totalorder %s436, %s439
    %p445 = scmp.eq.s32.totalorder %s30, 0
    %p446 = por %p444, %p445
    %p447 = scmp.ne.s32.totalorder %s436, %s439
    %p448 = scmp.eq.s32.totalorder %s35, 1
    %p449 = por %p447, %p448
    %p450 = scmp.ne.s32.totalorder %s439, %s440
    %p451 = scmp.eq.s32.totalorder %s35, 0
    %p452 = por %p450, %p451
    %p453 = scmp.ne.s32.totalorder %s439, %s440
    %p454 = scmp.eq.s32.totalorder %s36, 1
    %p455 = por %p453, %p454
    %p457 = scmp.ne.s32.totalorder %s440, %s456
    %p458 = scmp.eq.s32.totalorder %s36, 0
    %p459 = por %p457, %p458
    %s460 = ssub.s32 %s30, %s37
    %p461 = scmp.eq.s32.totalorder %s460, 0
    %s463 = sadd.s32 %s462, 1
    %s464 = scalar_select %p461, %s462, %s463
    %p467 = pneg %p461
    %p468 = scmp.eq.s32.totalorder %s30, 1
    %p469 = por %p467, %p468
    %p470 = scmp.ne.s32.totalorder %s462, %s465
    %p471 = scmp.eq.s32.totalorder %s30, 0
    %p472 = por %p470, %p471
    %p473 = scmp.ne.s32.totalorder %s462, %s465
    %p474 = scmp.eq.s32.totalorder %s35, 1
    %p475 = por %p473, %p474
    %p476 = scmp.ne.s32.totalorder %s465, %s466
    %p477 = scmp.eq.s32.totalorder %s35, 0
    %p478 = por %p476, %p477
    %p479 = scmp.ne.s32.totalorder %s465, %s466
    %p480 = scmp.eq.s32.totalorder %s36, 1
    %p481 = por %p479, %p480
    %p483 = scmp.ne.s32.totalorder %s466, %s482
    %p484 = scmp.eq.s32.totalorder %s36, 0
    %p485 = por %p483, %p484
    %s486 = ssub.s32 %s30, %s37
    %p487 = scmp.eq.s32.totalorder %s486, 0
    %s489 = sadd.s32 %s488, 1
    %s490 = scalar_select %p487, %s488, %s489
    %p493 = pneg %p487
    %p494 = scmp.eq.s32.totalorder %s30, 1
    %p495 = por %p493, %p494
    %p496 = scmp.ne.s32.totalorder %s488, %s491
    %p497 = scmp.eq.s32.totalorder %s30, 0
    %p498 = por %p496, %p497
    %p499 = scmp.ne.s32.totalorder %s488, %s491
    %p500 = scmp.eq.s32.totalorder %s35, 1
    %p501 = por %p499, %p500
    %p502 = scmp.ne.s32.totalorder %s491, %s492
    %p503 = scmp.eq.s32.totalorder %s35, 0
    %p504 = por %p502, %p503
    %p505 = scmp.ne.s32.totalorder %s491, %s492
    %p506 = scmp.eq.s32.totalorder %s36, 1
    %p507 = por %p505, %p506
    %p509 = scmp.ne.s32.totalorder %s492, %s508
    %p510 = scmp.eq.s32.totalorder %s36, 0
    %p511 = por %p509, %p510
    %s512 = ssub.s32 %s30, %s37
    %p513 = scmp.eq.s32.totalorder %s512, 0
    %s515 = sadd.s32 %s514, 1
    %s516 = scalar_select %p513, %s514, %s515
    %p519 = pneg %p513
    %p520 = scmp.eq.s32.totalorder %s30, 1
    %p521 = por %p519, %p520
    %p522 = scmp.ne.s32.totalorder %s514, %s517
    %p523 = scmp.eq.s32.totalorder %s30, 0
    %p524 = por %p522, %p523
    %p525 = scmp.ne.s32.totalorder %s514, %s517
    %p526 = scmp.eq.s32.totalorder %s35, 1
    %p527 = por %p525, %p526
    %p528 = scmp.ne.s32.totalorder %s517, %s518
    %p529 = scmp.eq.s32.totalorder %s35, 0
    %p530 = por %p528, %p529
    %p531 = scmp.ne.s32.totalorder %s517, %s518
    %p532 = scmp.eq.s32.totalorder %s36, 1
    %p533 = por %p531, %p532
    %p535 = scmp.ne.s32.totalorder %s518, %s534
    %p536 = scmp.eq.s32.totalorder %s36, 0
    %p537 = por %p535, %p536
    %s538 = ssub.s32 %s30, %s37
    %p539 = scmp.eq.s32.totalorder %s538, 0
    %s541 = sadd.s32 %s540, 1
    %s542 = scalar_select %p539, %s540, %s541
    %p545 = pneg %p539
    %p546 = scmp.eq.s32.totalorder %s30, 1
    %p547 = por %p545, %p546
    %p548 = scmp.ne.s32.totalorder %s540, %s543
    %p549 = scmp.eq.s32.totalorder %s30, 0
    %p550 = por %p548, %p549
    %p551 = scmp.ne.s32.totalorder %s540, %s543
    %p552 = scmp.eq.s32.totalorder %s35, 1
    %p553 = por %p551, %p552
    %p554 = scmp.ne.s32.totalorder %s543, %s544
    %p555 = scmp.eq.s32.totalorder %s35, 0
    %p556 = por %p554, %p555
    %p557 = scmp.ne.s32.totalorder %s543, %s544
    %p558 = scmp.eq.s32.totalorder %s36, 1
    %p559 = por %p557, %p558
    %p561 = scmp.ne.s32.totalorder %s544, %s560
    %p562 = scmp.eq.s32.totalorder %s36, 0
    %p563 = por %p561, %p562
    %s564 = ssub.s32 %s30, %s37
    %p565 = scmp.eq.s32.totalorder %s564, 0
    %s567 = sadd.s32 %s566, 1
    %s568 = scalar_select %p565, %s566, %s567
    %p571 = pneg %p565
    %p572 = scmp.eq.s32.totalorder %s30, 1
    %p573 = por %p571, %p572
    %p574 = scmp.ne.s32.totalorder %s566, %s569
    %p575 = scmp.eq.s32.totalorder %s30, 0
    %p576 = por %p574, %p575
    %p577 = scmp.ne.s32.totalorder %s566, %s569
    %p578 = scmp.eq.s32.totalorder %s35, 1
    %p579 = por %p577, %p578
    %p580 = scmp.ne.s32.totalorder %s569, %s570
    %p581 = scmp.eq.s32.totalorder %s35, 0
    %p582 = por %p580, %p581
    %p583 = scmp.ne.s32.totalorder %s569, %s570
    %p584 = scmp.eq.s32.totalorder %s36, 1
    %p585 = por %p583, %p584
    %p587 = scmp.ne.s32.totalorder %s570, %s586
    %p588 = scmp.eq.s32.totalorder %s36, 0
    %p589 = por %p587, %p588
    %s590 = ssub.s32 %s30, %s37
    %p591 = scmp.eq.s32.totalorder %s590, 0
    %s593 = sadd.s32 %s592, 1
    %s594 = scalar_select %p591, %s592, %s593
    %p597 = pneg %p591
    %p598 = scmp.eq.s32.totalorder %s30, 1
    %p599 = por %p597, %p598
    %p600 = scmp.ne.s32.totalorder %s592, %s595
    %p601 = scmp.eq.s32.totalorder %s30, 0
    %p602 = por %p600, %p601
    %p603 = scmp.ne.s32.totalorder %s592, %s595
    %p604 = scmp.eq.s32.totalorder %s35, 1
    %p605 = por %p603, %p604
    %p606 = scmp.ne.s32.totalorder %s595, %s596
    %p607 = scmp.eq.s32.totalorder %s35, 0
    %p608 = por %p606, %p607
    %p609 = scmp.ne.s32.totalorder %s595, %s596
    %p610 = scmp.eq.s32.totalorder %s36, 1
    %p611 = por %p609, %p610
    %p613 = scmp.ne.s32.totalorder %s596, %s612
    %p614 = scmp.eq.s32.totalorder %s36, 0
    %p615 = por %p613, %p614
    %s616 = ssub.s32 %s30, %s37
    %p617 = scmp.eq.s32.totalorder %s616, 0
    %s619 = sadd.s32 %s618, 1
    %s620 = scalar_select %p617, %s618, %s619
    %p623 = pneg %p617
    %p624 = scmp.eq.s32.totalorder %s30, 1
    %p625 = por %p623, %p624
    %p626 = scmp.ne.s32.totalorder %s618, %s621
    %p627 = scmp.eq.s32.totalorder %s30, 0
    %p628 = por %p626, %p627
    %p629 = scmp.ne.s32.totalorder %s618, %s621
    %p630 = scmp.eq.s32.totalorder %s35, 1
    %p631 = por %p629, %p630
    %p632 = scmp.ne.s32.totalorder %s621, %s622
    %p633 = scmp.eq.s32.totalorder %s35, 0
    %p634 = por %p632, %p633
    %p635 = scmp.ne.s32.totalorder %s621, %s622
    %p636 = scmp.eq.s32.totalorder %s36, 1
    %p637 = por %p635, %p636
    %p639 = scmp.ne.s32.totalorder %s622, %s638
    %p640 = scmp.eq.s32.totalorder %s36, 0
    %p641 = por %p639, %p640
    %s643 = sadd.s32 %s642, 1
    %p646 = scmp.eq.s32.totalorder %s30, 1
    %p647 = scmp.ne.s32.totalorder %s642, %s644
    %p648 = scmp.eq.s32.totalorder %s30, 0
    %p649 = por %p647, %p648
    %p650 = scmp.ne.s32.totalorder %s642, %s644
    %p651 = scmp.eq.s32.totalorder %s35, 1
    %p652 = por %p650, %p651
    %p653 = scmp.ne.s32.totalorder %s644, %s645
    %p654 = scmp.eq.s32.totalorder %s35, 0
    %p655 = por %p653, %p654
    %p656 = scmp.ne.s32.totalorder %s644, %s645
    %p657 = scmp.eq.s32.totalorder %s36, 1
    %p658 = por %p656, %p657
    %p660 = scmp.ne.s32.totalorder %s645, %s659
    %p661 = scmp.eq.s32.totalorder %s36, 0
    %p662 = por %p660, %p661
    %p663 = scmp.le.s32.totalorder 1, %s30
    %p664 = scmp.lt.s32.totalorder %s30, 3
    %p665 = pnand %p663, %p664
    %p666 = pneg %p665
    // Predicated region
    $region9: #{transformer_forward.4} parent=5 // pred_check
      _
    $region10: #{transformer_forward.4} parent=5 // pred_check_branch
      %668 = sbr.rel (%p665) target = $region12
    $region11: #{transformer_forward.4} parent=5 // pred_region
      %s669 = ssub.s32 %s30, 1
      // Predicated region
      $region13: #{transformer_forward.4} parent=11 // pred_check
        %p670 = pneg %p51
      $region14: #{transformer_forward.4} parent=11 // pred_check_branch
        %672 = sbr.rel (%p670) target = $region16
      $region15: #{transformer_forward.4} parent=11 // pred_region
        _
      $region16: #{transformer_forward.4} parent=11 // pred_fallthru
        _
      // Predicated region
      $region17: #{transformer_forward.4} parent=11 // pred_check
        %p673 = pneg %p72
      $region18: #{transformer_forward.4} parent=11 // pred_check_branch
        %675 = sbr.rel (%p673) target = $region20
      $region19: #{transformer_forward.4} parent=11 // pred_region
        _
      $region20: #{transformer_forward.4} parent=11 // pred_fallthru
        _
      // Predicated region
      $region21: #{transformer_forward.4} parent=11 // pred_check
        %p676 = pneg %p93
      $region22: #{transformer_forward.4} parent=11 // pred_check_branch
        %678 = sbr.rel (%p676) target = $region24
      $region23: #{transformer_forward.4} parent=11 // pred_region
        _
      $region24: #{transformer_forward.4} parent=11 // pred_fallthru
        _
      // Predicated region
      $region25: #{transformer_forward.4} parent=11 // pred_check
        %p679 = pneg %p114
      $region26: #{transformer_forward.4} parent=11 // pred_check_branch
        %681 = sbr.rel (%p679) target = $region28
      $region27: #{transformer_forward.4} parent=11 // pred_region
        _
      $region28: #{transformer_forward.4} parent=11 // pred_fallthru
        _
    $region12: #{transformer_forward.4} parent=5 // pred_fallthru
      _
    %p682 = scmp.lt.s32.totalorder %s30, 2
    // Predicated region
    $region29: #{transformer_forward.4} parent=5 // pred_check
      %p683 = pneg %p682
    $region30: #{transformer_forward.4} parent=5 // pred_check_branch
      %685 = sbr.rel (%p683) target = $region32
    $region31: #{transformer_forward.4} parent=5 // pred_region
      // Predicated region
      $region33: #{transformer_forward.4} parent=31 // pred_check
        %p686 = pneg %p134
      $region34: #{transformer_forward.4} parent=31 // pred_check_branch
        %688 = sbr.rel (%p686) target = $region36
      $region35: #{transformer_forward.4} parent=31 // pred_region
        %p689 = scmp.lt.s32.totalorder %s30, 1
        %s690 = scalar_select %p689, %s30, 1
        %s691 = smul.addr %s690, 4
        %s692 = smul.addr %s691, 4
        %s693 = scalar_lea.vmem %s4, %s692
      $region36: #{transformer_forward.4} parent=31 // pred_fallthru
        _
      // Predicated region
      $region37: #{transformer_forward.4} parent=31 // pred_check
        %p694 = pneg %p160
      $region38: #{transformer_forward.4} parent=31 // pred_check_branch
        %696 = sbr.rel (%p694) target = $region40
      $region39: #{transformer_forward.4} parent=31 // pred_region
        %p697 = scmp.lt.s32.totalorder %s30, 1
        %s698 = scalar_select %p697, %s30, 1
        %s699 = scalar_lea.vmem %s5, %s698
      $region40: #{transformer_forward.4} parent=31 // pred_fallthru
        _
      // Predicated region
      $region41: #{transformer_forward.4} parent=31 // pred_check
        %p700 = pneg %p186
      $region42: #{transformer_forward.4} parent=31 // pred_check_branch
        %702 = sbr.rel (%p700) target = $region44
      $region43: #{transformer_forward.4} parent=31 // pred_region
        %p703 = scmp.lt.s32.totalorder %s30, 1
        %s704 = scalar_select %p703, %s30, 1
        %s705 = smul.addr %s704, 4
        %s706 = smul.addr %s705, 4
        %s707 = scalar_lea.vmem %s6, %s706
      $region44: #{transformer_forward.4} parent=31 // pred_fallthru
        _
      // Predicated region
      $region45: #{transformer_forward.4} parent=31 // pred_check
        %p708 = pneg %p212
      $region46: #{transformer_forward.4} parent=31 // pred_check_branch
        %710 = sbr.rel (%p708) target = $region48
      $region47: #{transformer_forward.4} parent=31 // pred_region
        %p711 = scmp.lt.s32.totalorder %s30, 1
        %s712 = scalar_select %p711, %s30, 1
        %s713 = scalar_lea.vmem %s7, %s712
      $region48: #{transformer_forward.4} parent=31 // pred_fallthru
        _
      // Predicated region
      $region49: #{transformer_forward.4} parent=31 // pred_check
        %p714 = pneg %p238
      $region50: #{transformer_forward.4} parent=31 // pred_check_branch
        %716 = sbr.rel (%p714) target = $region52
      $region51: #{transformer_forward.4} parent=31 // pred_region
        %p717 = scmp.lt.s32.totalorder %s30, 1
        %s718 = scalar_select %p717, %s30, 1
        %s719 = scalar_lea.vmem %s8, %s718
      $region52: #{transformer_forward.4} parent=31 // pred_fallthru
        _
      // Predicated region
      $region53: #{transformer_forward.4} parent=31 // pred_check
        %p720 = pneg %p264
      $region54: #{transformer_forward.4} parent=31 // pred_check_branch
        %722 = sbr.rel (%p720) target = $region56
      $region55: #{transformer_forward.4} parent=31 // pred_region
        %p723 = scmp.lt.s32.totalorder %s30, 1
        %s724 = scalar_select %p723, %s30, 1
        %s725 = scalar_lea.vmem %s9, %s724
      $region56: #{transformer_forward.4} parent=31 // pred_fallthru
        _
      // Predicated region
      $region57: #{transformer_forward.4} parent=31 // pred_check
        %p726 = pneg %p290
      $region58: #{transformer_forward.4} parent=31 // pred_check_branch
        %728 = sbr.rel (%p726) target = $region60
      $region59: #{transformer_forward.4} parent=31 // pred_region
        %p729 = scmp.lt.s32.totalorder %s30, 1
        %s730 = scalar_select %p729, %s30, 1
        %s731 = smul.addr %s730, 4
        %s732 = smul.addr %s731, 4
        %s733 = scalar_lea.vmem %s10, %s732
      $region60: #{transformer_forward.4} parent=31 // pred_fallthru
        _
      // Predicated region
      $region61: #{transformer_forward.4} parent=31 // pred_check
        %p734 = pneg %p316
      $region62: #{transformer_forward.4} parent=31 // pred_check_branch
        %736 = sbr.rel (%p734) target = $region64
      $region63: #{transformer_forward.4} parent=31 // pred_region
        %p737 = scmp.lt.s32.totalorder %s30, 1
        %s738 = scalar_select %p737, %s30, 1
        %s739 = scalar_lea.vmem %s11, %s738
      $region64: #{transformer_forward.4} parent=31 // pred_fallthru
        _
      // Predicated region
      $region65: #{transformer_forward.4} parent=31 // pred_check
        %p740 = pneg %p342
      $region66: #{transformer_forward.4} parent=31 // pred_check_branch
        %742 = sbr.rel (%p740) target = $region68
      $region67: #{transformer_forward.4} parent=31 // pred_region
        %p743 = scmp.lt.s32.totalorder %s30, 1
        %s744 = scalar_select %p743, %s30, 1
        %s745 = smul.addr %s744, 4
        %s746 = smul.addr %s745, 4
        %s747 = scalar_lea.vmem %s12, %s746
      $region68: #{transformer_forward.4} parent=31 // pred_fallthru
        _
      // Predicated region
      $region69: #{transformer_forward.4} parent=31 // pred_check
        %p748 = pneg %p368
      $region70: #{transformer_forward.4} parent=31 // pred_check_branch
        %750 = sbr.rel (%p748) target = $region72
      $region71: #{transformer_forward.4} parent=31 // pred_region
        %p751 = scmp.lt.s32.totalorder %s30, 1
        %s752 = scalar_select %p751, %s30, 1
        %s753 = scalar_lea.vmem %s13, %s752
      $region72: #{transformer_forward.4} parent=31 // pred_fallthru
        _
      // Predicated region
      $region73: #{transformer_forward.4} parent=31 // pred_check
        %p754 = pneg %p394
      $region74: #{transformer_forward.4} parent=31 // pred_check_branch
        %756 = sbr.rel (%p754) target = $region76
      $region75: #{transformer_forward.4} parent=31 // pred_region
        %p757 = scmp.lt.s32.totalorder %s30, 1
        %s758 = scalar_select %p757, %s30, 1
        %s759 = smul.addr %s758, 4
        %s760 = smul.addr %s759, 4
        %s761 = scalar_lea.vmem %s14, %s760
      $region76: #{transformer_forward.4} parent=31 // pred_fallthru
        _
      // Predicated region
      $region77: #{transformer_forward.4} parent=31 // pred_check
        %p762 = pneg %p420
      $region78: #{transformer_forward.4} parent=31 // pred_check_branch
        %764 = sbr.rel (%p762) target = $region80
      $region79: #{transformer_forward.4} parent=31 // pred_region
        %p765 = scmp.lt.s32.totalorder %s30, 1
        %s766 = scalar_select %p765, %s30, 1
        %s767 = scalar_lea.vmem %s15, %s766
      $region80: #{transformer_forward.4} parent=31 // pred_fallthru
        _
      // Predicated region
      $region81: #{transformer_forward.4} parent=31 // pred_check
        %p768 = pneg %p446
      $region82: #{transformer_forward.4} parent=31 // pred_check_branch
        %770 = sbr.rel (%p768) target = $region84
      $region83: #{transformer_forward.4} parent=31 // pred_region
        %p771 = scmp.lt.s32.totalorder %s30, 1
        %s772 = scalar_select %p771, %s30, 1
        %s773 = scalar_lea.vmem %s16, %s772
      $region84: #{transformer_forward.4} parent=31 // pred_fallthru
        _
      // Predicated region
      $region85: #{transformer_forward.4} parent=31 // pred_check
        %p774 = pneg %p472
      $region86: #{transformer_forward.4} parent=31 // pred_check_branch
        %776 = sbr.rel (%p774) target = $region88
      $region87: #{transformer_forward.4} parent=31 // pred_region
        %p777 = scmp.lt.s32.totalorder %s30, 1
        %s778 = scalar_select %p777, %s30, 1
        %s779 = scalar_lea.vmem %s17, %s778
      $region88: #{transformer_forward.4} parent=31 // pred_fallthru
        _
      // Predicated region
      $region89: #{transformer_forward.4} parent=31 // pred_check
        %p780 = pneg %p498
      $region90: #{transformer_forward.4} parent=31 // pred_check_branch
        %782 = sbr.rel (%p780) target = $region92
      $region91: #{transformer_forward.4} parent=31 // pred_region
        %p783 = scmp.lt.s32.totalorder %s30, 1
        %s784 = scalar_select %p783, %s30, 1
        %s785 = smul.addr %s784, 4
        %s786 = smul.addr %s785, 4
        %s787 = scalar_lea.vmem %s18, %s786
      $region92: #{transformer_forward.4} parent=31 // pred_fallthru
        _
      // Predicated region
      $region93: #{transformer_forward.4} parent=31 // pred_check
        %p788 = pneg %p524
      $region94: #{transformer_forward.4} parent=31 // pred_check_branch
        %790 = sbr.rel (%p788) target = $region96
      $region95: #{transformer_forward.4} parent=31 // pred_region
        %p791 = scmp.lt.s32.totalorder %s30, 1
        %s792 = scalar_select %p791, %s30, 1
        %s793 = scalar_lea.vmem %s19, %s792
      $region96: #{transformer_forward.4} parent=31 // pred_fallthru
        _
      // Predicated region
      $region97: #{transformer_forward.4} parent=31 // pred_check
        %p794 = pneg %p550
      $region98: #{transformer_forward.4} parent=31 // pred_check_branch
        %796 = sbr.rel (%p794) target = $region100
      $region99: #{transformer_forward.4} parent=31 // pred_region
        %p797 = scmp.lt.s32.totalorder %s30, 1
        %s798 = scalar_select %p797, %s30, 1
        %s799 = smul.addr %s798, 8
        %s800 = smul.addr %s799, 4
        %s801 = scalar_lea.vmem %s20, %s800
      $region100: #{transformer_forward.4} parent=31 // pred_fallthru
        _
      // Predicated region
      $region101: #{transformer_forward.4} parent=31 // pred_check
        %p802 = pneg %p576
      $region102: #{transformer_forward.4} parent=31 // pred_check_branch
        %804 = sbr.rel (%p802) target = $region104
      $region103: #{transformer_forward.4} parent=31 // pred_region
        %p805 = scmp.lt.s32.totalorder %s30, 1
        %s806 = scalar_select %p805, %s30, 1
        %s807 = scalar_lea.vmem %s21, %s806
      $region104: #{transformer_forward.4} parent=31 // pred_fallthru
        _
      // Predicated region
      $region105: #{transformer_forward.4} parent=31 // pred_check
        %p808 = pneg %p602
      $region106: #{transformer_forward.4} parent=31 // pred_check_branch
        %810 = sbr.rel (%p808) target = $region108
      $region107: #{transformer_forward.4} parent=31 // pred_region
        %p811 = scmp.lt.s32.totalorder %s30, 1
        %s812 = scalar_select %p811, %s30, 1
        %s813 = scalar_lea.vmem %s22, %s812
      $region108: #{transformer_forward.4} parent=31 // pred_fallthru
        _
      // Predicated region
      $region109: #{transformer_forward.4} parent=31 // pred_check
        %p814 = pneg %p628
      $region110: #{transformer_forward.4} parent=31 // pred_check_branch
        %816 = sbr.rel (%p814) target = $region112
      $region111: #{transformer_forward.4} parent=31 // pred_region
        %p817 = scmp.lt.s32.totalorder %s30, 1
        %s818 = scalar_select %p817, %s30, 1
        %s819 = scalar_lea.vmem %s23, %s818
      $region112: #{transformer_forward.4} parent=31 // pred_fallthru
        _
    $region32: #{transformer_forward.4} parent=5 // pred_fallthru
      _
    %p820 = scmp.le.s32.totalorder 1, %s30
    %p821 = scmp.lt.s32.totalorder %s30, 3
    %p822 = pnand %p820, %p821
    %p823 = pneg %p822
    // Predicated region
    $region113: #{transformer_forward.4} parent=5 // pred_check
      _
    $region114: #{transformer_forward.4} parent=5 // pred_check_branch
      %825 = sbr.rel (%p822) target = $region116
    $region115: #{transformer_forward.4} parent=5 // pred_region
      %s826 = ssub.s32 %s30, 1
      %p827 = pneg %p51
      %p828 = pneg %p48
      %p829 = pneg %p72
      %p830 = pneg %p69
      %p831 = pneg %p93
      %p832 = pneg %p90
      %p833 = pneg %p114
      %p834 = pneg %p111
      %p835 = scmp.lt.s32.totalorder %s35, 1
      %s836 = scalar_select %p835, %s35, 1
      %s837 = smul.addr %s836, 4
      %s838 = smul.addr %s837, 4
      %s839 = scalar_lea.vmem %s4, %s838
      %p840 = pneg %p140
      %p841 = pneg %p137
      %p842 = scmp.lt.s32.totalorder %s35, 1
      %s843 = scalar_select %p842, %s35, 1
      %s844 = scalar_lea.vmem %s5, %s843
      %p845 = pneg %p166
      %p846 = pneg %p163
      %p847 = scmp.lt.s32.totalorder %s35, 1
      %s848 = scalar_select %p847, %s35, 1
      %s849 = smul.addr %s848, 4
      %s850 = smul.addr %s849, 4
      %s851 = scalar_lea.vmem %s6, %s850
      %p852 = pneg %p192
      %p853 = pneg %p189
      %p854 = scmp.lt.s32.totalorder %s35, 1
      %s855 = scalar_select %p854, %s35, 1
      %s856 = scalar_lea.vmem %s7, %s855
      %p857 = pneg %p218
      %p858 = pneg %p215
      %p859 = scmp.lt.s32.totalorder %s35, 1
      %s860 = scalar_select %p859, %s35, 1
      %s861 = scalar_lea.vmem %s8, %s860
      %p862 = pneg %p244
      %p863 = pneg %p241
      %p864 = scmp.lt.s32.totalorder %s35, 1
      %s865 = scalar_select %p864, %s35, 1
      %s866 = scalar_lea.vmem %s9, %s865
      %p867 = pneg %p270
      %p868 = pneg %p267
      %p869 = scmp.lt.s32.totalorder %s35, 1
      %s870 = scalar_select %p869, %s35, 1
      %s871 = smul.addr %s870, 4
      %s872 = smul.addr %s871, 4
      %s873 = scalar_lea.vmem %s10, %s872
      %p874 = pneg %p296
      %p875 = pneg %p293
      %p876 = scmp.lt.s32.totalorder %s35, 1
      %s877 = scalar_select %p876, %s35, 1
      %s878 = scalar_lea.vmem %s11, %s877
      %p879 = pneg %p322
      %p880 = pneg %p319
      %p881 = scmp.lt.s32.totalorder %s35, 1
      %s882 = scalar_select %p881, %s35, 1
      %s883 = smul.addr %s882, 4
      %s884 = smul.addr %s883, 4
      %s885 = scalar_lea.vmem %s12, %s884
      %p886 = pneg %p348
      %p887 = pneg %p345
      %p888 = scmp.lt.s32.totalorder %s35, 1
      %s889 = scalar_select %p888, %s35, 1
      %s890 = scalar_lea.vmem %s13, %s889
      %p891 = pneg %p374
      %p892 = pneg %p371
      %p893 = scmp.lt.s32.totalorder %s35, 1
      %s894 = scalar_select %p893, %s35, 1
      %s895 = smul.addr %s894, 4
      %s896 = smul.addr %s895, 4
      %s897 = scalar_lea.vmem %s14, %s896
      %p898 = pneg %p400
      %p899 = pneg %p397
      %p900 = scmp.lt.s32.totalorder %s35, 1
      %s901 = scalar_select %p900, %s35, 1
      %s902 = scalar_lea.vmem %s15, %s901
      %p903 = pneg %p426
      %p904 = pneg %p423
      %p905 = scmp.lt.s32.totalorder %s35, 1
      %s906 = scalar_select %p905, %s35, 1
      %s907 = scalar_lea.vmem %s16, %s906
      %p908 = pneg %p452
      %p909 = pneg %p449
      %p910 = scmp.lt.s32.totalorder %s35, 1
      %s911 = scalar_select %p910, %s35, 1
      %s912 = scalar_lea.vmem %s17, %s911
      %p913 = pneg %p478
      %p914 = pneg %p475
      %p915 = scmp.lt.s32.totalorder %s35, 1
      %s916 = scalar_select %p915, %s35, 1
      %s917 = smul.addr %s916, 4
      %s918 = smul.addr %s917, 4
      %s919 = scalar_lea.vmem %s18, %s918
      %p920 = pneg %p504
      %p921 = pneg %p501
      %p922 = scmp.lt.s32.totalorder %s35, 1
      %s923 = scalar_select %p922, %s35, 1
      %s924 = scalar_lea.vmem %s19, %s923
      %p925 = pneg %p530
      %p926 = pneg %p527
      %p927 = scmp.lt.s32.totalorder %s35, 1
      %s928 = scalar_select %p927, %s35, 1
      %s929 = smul.addr %s928, 8
      %s930 = smul.addr %s929, 4
      %s931 = scalar_lea.vmem %s20, %s930
      %p932 = pneg %p556
      %p933 = pneg %p553
      %p934 = scmp.lt.s32.totalorder %s35, 1
      %s935 = scalar_select %p934, %s35, 1
      %s936 = scalar_lea.vmem %s21, %s935
      %p937 = pneg %p582
      %p938 = pneg %p579
      %p939 = scmp.lt.s32.totalorder %s35, 1
      %s940 = scalar_select %p939, %s35, 1
      %s941 = scalar_lea.vmem %s22, %s940
      %p942 = pneg %p608
      %p943 = pneg %p605
      %p944 = scmp.lt.s32.totalorder %s35, 1
      %s945 = scalar_select %p944, %s35, 1
      %s946 = scalar_lea.vmem %s23, %s945
      %p947 = pneg %p634
      %p948 = pneg %p631
      %p949 = pneg %p655
      %p950 = pneg %p652
      %p951 = scmp.lt.s32.totalorder %s35, 1
      %s952 = scalar_select %p951, %s35, 1
      %s953 = smul.addr %s952, 4
      %s954 = smul.addr %s953, 4
      %s955 = scalar_lea.vmem %s4, %s954
      %p956 = scmp.lt.s32.totalorder %s35, 1
      %s957 = scalar_select %p956, %s35, 1
      %s958 = scalar_lea.vmem %s5, %s957
      %p959 = scmp.lt.s32.totalorder %s35, 1
      %s960 = scalar_select %p959, %s35, 1
      %s961 = smul.addr %s960, 4
      %s962 = smul.addr %s961, 4
      %s963 = scalar_lea.vmem %s6, %s962
      %p964 = scmp.lt.s32.totalorder %s35, 1
      %s965 = scalar_select %p964, %s35, 1
      %s966 = scalar_lea.vmem %s7, %s965
      %p967 = scmp.lt.s32.totalorder %s35, 1
      %s968 = scalar_select %p967, %s35, 1
      %s969 = scalar_lea.vmem %s8, %s968
      %p970 = scmp.lt.s32.totalorder %s35, 1
      %s971 = scalar_select %p970, %s35, 1
      %s972 = scalar_lea.vmem %s9, %s971
      %p973 = scmp.lt.s32.totalorder %s35, 1
      %s974 = scalar_select %p973, %s35, 1
      %s975 = smul.addr %s974, 4
      %s976 = smul.addr %s975, 4
      %s977 = scalar_lea.vmem %s10, %s976
      %p978 = scmp.lt.s32.totalorder %s35, 1
      %s979 = scalar_select %p978, %s35, 1
      %s980 = scalar_lea.vmem %s11, %s979
      %p981 = scmp.lt.s32.totalorder %s35, 1
      %s982 = scalar_select %p981, %s35, 1
      %s983 = smul.addr %s982, 4
      %s984 = smul.addr %s983, 4
      %s985 = scalar_lea.vmem %s12, %s984
      %p986 = scmp.lt.s32.totalorder %s35, 1
      %s987 = scalar_select %p986, %s35, 1
      %s988 = scalar_lea.vmem %s13, %s987
      %p989 = scmp.lt.s32.totalorder %s35, 1
      %s990 = scalar_select %p989, %s35, 1
      %s991 = smul.addr %s990, 4
      %s992 = smul.addr %s991, 4
      %s993 = scalar_lea.vmem %s14, %s992
      %p994 = scmp.lt.s32.totalorder %s35, 1
      %s995 = scalar_select %p994, %s35, 1
      %s996 = scalar_lea.vmem %s15, %s995
      %p997 = scmp.lt.s32.totalorder %s35, 1
      %s998 = scalar_select %p997, %s35, 1
      %s999 = scalar_lea.vmem %s16, %s998
      %p1000 = scmp.lt.s32.totalorder %s35, 1
      %s1001 = scalar_select %p1000, %s35, 1
      %s1002 = scalar_lea.vmem %s17, %s1001
      %p1003 = scmp.lt.s32.totalorder %s35, 1
      %s1004 = scalar_select %p1003, %s35, 1
      %s1005 = smul.addr %s1004, 4
      %s1006 = smul.addr %s1005, 4
      %s1007 = scalar_lea.vmem %s18, %s1006
      %p1008 = scmp.lt.s32.totalorder %s35, 1
      %s1009 = scalar_select %p1008, %s35, 1
      %s1010 = scalar_lea.vmem %s19, %s1009
      %p1011 = scmp.lt.s32.totalorder %s35, 1
      %s1012 = scalar_select %p1011, %s35, 1
      %s1013 = smul.addr %s1012, 8
      %s1014 = smul.addr %s1013, 4
      %s1015 = scalar_lea.vmem %s20, %s1014
      %p1016 = scmp.lt.s32.totalorder %s35, 1
      %s1017 = scalar_select %p1016, %s35, 1
      %s1018 = scalar_lea.vmem %s21, %s1017
      %p1019 = scmp.lt.s32.totalorder %s35, 1
      %s1020 = scalar_select %p1019, %s35, 1
      %s1021 = scalar_lea.vmem %s22, %s1020
      %p1022 = scmp.lt.s32.totalorder %s35, 1
      %s1023 = scalar_select %p1022, %s35, 1
      %s1024 = scalar_lea.vmem %s23, %s1023
      %p1026 = scmp.eq.s32.totalorder %s35, 0
      // Predicated region
      $region117: #{transformer_forward.4} parent=115 // pred_check
        %p1027 = pneg %p1026
      $region118: #{transformer_forward.4} parent=115 // pred_check_branch
        %1029 = sbr.rel (%p1027) target = $region120
      $region119: #{transformer_forward.4} parent=115 // pred_region
        %v1030 = vld [vmem:[%s0] sm:$0xff]
        %v1031 = vld [vmem:[%s0 + $0x8] sm:$0xff]
        %vm1032 = vcmask 261120
        %1033 = vst.msk [vmem:[%s24] sm:$0xff] %vm1032, %v1030
        %1034 = vst.msk [vmem:[%s24 + $0x8] sm:$0xff] %vm1032, %v1031
      $region120: #{transformer_forward.4} parent=115 // pred_fallthru
        _
      %v1035 = vld [vmem:[%s24] sm:$0xff]
      %v1036 = vld [vmem:[%s24 + $0x8] sm:$0xff]
      %v1037 = vld [vmem:[%s969] sm:$0x1]
      %v1038 = vld [vmem:[%s972] sm:$0x1]
      %vm1039 = vcmask 261120
      %v1040 = vsel %vm1039, %v1035, 0.0
      %1041 = vadd.xlane.f32.xlu0 %v1040
      %v1042 = vpop.xlane.xlu0 %1041
      %v1043 = vsel %vm1039, %v1036, 0.0
      %1044 = vadd.xlane.f32.xlu0 %v1043
      %v1045 = vpop.xlane.xlu0 %1044
      %v1046 = vrcp.pop 32.0
      %v1047 = vmul.f32 %v1042, %v1046
      %v1048 = vmul.f32 %v1045, %v1046
      %v1049 = vsub.f32 %v1035, %v1047
      %v1050 = vsub.f32 %v1036, %v1048
      %v1051 = vmul.f32 %v1049, %v1049
      %v1052 = vmul.f32 %v1050, %v1050
      %v1053 = vsel %vm1039, %v1051, 0.0
      %1054 = vadd.xlane.f32.xlu0 %v1053
      %v1055 = vpop.xlane.xlu0 %1054
      %v1056 = vsel %vm1039, %v1052, 0.0
      %1057 = vadd.xlane.f32.xlu0 %v1056
      %v1058 = vpop.xlane.xlu0 %1057
      %v1059 = vmul.f32 %v1055, 0.032258064
      %v1060 = vmul.f32 %v1058, 0.032258064
      %v1061 = vrsqrt.pop %v1059
      %v1062 = vmul.f32 %v1059, %v1061
      %vm1063 = vcmp.eq.f32.partialorder %v1059, inf
      %v1064 = vsel %vm1063, %v1059, %v1062
      %vm1065 = vcmp.eq.f32.partialorder %v1059, 0.0
      %v1066 = vand.u32 %v1059, 2147483648
      %v1067 = vsel %vm1065, %v1066, %v1064
      %v1068 = vrsqrt.pop %v1060
      %v1069 = vmul.f32 %v1060, %v1068
      %vm1070 = vcmp.eq.f32.partialorder %v1060, inf
      %v1071 = vsel %vm1070, %v1060, %v1069
      %vm1072 = vcmp.eq.f32.partialorder %v1060, 0.0
      %v1073 = vand.u32 %v1060, 2147483648
      %v1074 = vsel %vm1072, %v1073, %v1071
      %v1075 = vadd.f32 %v1067, 1e-06
      %v1076 = vadd.f32 %v1074, 1e-06
      %v1077 = vrcp.pop %v1075
      %v1078 = vrcp.pop %v1076
      %v1080 = vlaneseq
      %v1081 = vshrl.u32 %v1080, 7
      %v1082 = vsub.s32 0, %v1081
      %v1083 = vrot.slane %v1037, %v1082
      %v1085 = vmul.f32 %v1083, %v1049
      %v1086 = vmul.f32 %v1083, %v1050
      %v1087 = vmul.f32 %v1085, %v1077
      %v1088 = vmul.f32 %v1086, %v1078
      %v1090 = vlaneseq
      %v1091 = vshrl.u32 %v1090, 7
      %v1092 = vsub.s32 0, %v1091
      %v1093 = vrot.slane %v1038, %v1092
      %v1095 = vadd.f32 %v1087, %v1093
      %v1096 = vadd.f32 %v1088, %v1093
      %v1097 = vpack.c.bf16 %v1096, %v1095
      %v1098 = vld [vmem:[%s955] sm:$0xf]
      %v1099 = vld [vmem:[%s955 + $0x4] sm:$0xf]
      %v1100 = vld [vmem:[%s955 + $0x8] sm:$0xf]
      %v1101 = vld [vmem:[%s955 + $0xc] sm:$0xf]
      %v1102 = vld [vmem:[%s958] sm:$0x1]
      %v1104 = vlaneseq
      %v1105 = vshrl.u32 %v1104, 7
      %v1106 = vsub.s32 0, %v1105
      %v1107 = vrot.slane %v1102, %v1106
      %v1113 = vunpack.c.l.b16 %v1098
      %v1114 = vunpack.c.l.b16 %v1099
      %v1115 = vunpack.c.l.b16 %v1100
      %v1116 = vunpack.c.l.b16 %v1101
      %v1117 = vpack.c.b16 %v1114, %v1113
      %v1118 = vpack.c.b16 %v1116, %v1115
      %v1122 = vsel %vm1039, %v1097, 0
      %1124 = vmatprep.subr.bf16.mxu0 0
      %1125 = vmatpush1.bf16.msra.mxu0 0
      %1126 = vmatprep.subr.bf16.mxu0 0
      %1127 = vmatpush1.bf16.msra.mxu0 0
      %1128 = vmatprep.subr.bf16.mxu0 0
      %1129 = vmatpush1.bf16.msra.mxu0 0
      %1130 = vmatprep.subr.bf16.mxu0 0
      %1131 = vmatpush1.bf16.msra.mxu0 0
      %1132 = vmatprep.subr.bf16.mxu0 0
      %1133 = vmatpush1.bf16.msra.mxu0 0
      %1134 = vmatprep.subr.bf16.mxu0 0
      %1135 = vmatpush1.bf16.msra.mxu0 0
      %1136 = vmatprep.subr.bf16.mxu0 0
      %1137 = vmatpush1.bf16.msra.mxu0 %v1118
      %1138 = vmatprep.subr.bf16.mxu0 0
      %1139 = vmatpush1.bf16.msra.mxu0 %v1117
      %1140 = vmatprep.subr.bf16.mxu0 0
      %1141 = vmatpush2.bf16.msra.mxu0 0
      %1142 = vmatprep.subr.bf16.mxu0 0
      %1143 = vmatpush2.bf16.msra.mxu0 0
      %1144 = vmatprep.subr.bf16.mxu0 0
      %1145 = vmatpush2.bf16.msra.mxu0 0
      %1146 = vmatprep.subr.bf16.mxu0 0
      %1147 = vmatpush2.bf16.msra.mxu0 0
      %1148 = vmatprep.subr.bf16.mxu0 0
      %1149 = vmatpush2.bf16.msra.mxu0 0
      %1150 = vmatprep.subr.bf16.mxu0 0
      %1151 = vmatpush2.bf16.msra.mxu0 0
      %1152 = vmatprep.subr.bf16.mxu0 0
      %1153 = vmatpush2.bf16.msra.mxu0 0
      %1154 = vmatprep.subr.bf16.mxu0 0
      %1155 = vmatpush2.bf16.msra.mxu0 0
      %1156 = vmatprep.mubr.bf16.mxu0 0
      %1157 = vmatmul.mubr.bf16.gmra.mxu0 %v1122
      %v1158 = vpop.f32.mrf.mxu0
      %v1159 = vadd.f32 %v1107, %v1158
      %v1160 = vpop.f32.mrf.mxu0
      %v1161 = vpop.f32.mrf.mxu0
      %v1162 = vadd.f32 %v1107, %v1161
      %v1163 = vpop.f32.mrf.mxu0
      %1164 = vdwg.mxu0
      %v1165 = vld [vmem:[%s2] sm:$0xff]
      %v1166 = vld [vmem:[%s2 + $0x8] sm:$0xff]
      %1169 = vrot.lane.b32.xlu0 %v1159, 120
      %v1170 = vpop.permute.xlu0 %1169
      %1171 = vrot.lane.b32.xlu0 %v1162, 120
      %v1172 = vpop.permute.xlu0 %1171
      %1175 = vrot.lane.b32.xlu0 %v1159, 112
      %v1176 = vpop.permute.xlu0 %1175
      %1177 = vrot.lane.b32.xlu0 %v1162, 112
      %v1178 = vpop.permute.xlu0 %1177
      %1181 = vrot.lane.b32.xlu0 %v1159, 104
      %v1182 = vpop.permute.xlu0 %1181
      %1183 = vrot.lane.b32.xlu0 %v1162, 104
      %v1184 = vpop.permute.xlu0 %1183
      %v1187 = vpack.c.bf16 %v1159, %v1159
      %v1188 = vpack.c.bf16 %v1162, %v1162
      %v1189 = vpack.c.bf16 %v1170, %v1170
      %v1190 = vpack.c.bf16 %v1172, %v1172
      %v1191 = vpack.c.bf16 %v1176, %v1176
      %v1192 = vpack.c.bf16 %v1178, %v1178
      %v1193 = vpack.c.bf16 %v1182, %v1182
      %v1194 = vpack.c.bf16 %v1184, %v1184
      %1196 = vrot.lane.b32.xlu0 %v1187, 96
      %v1197 = vpop.permute.xlu0 %1196
      %vm1198 = vcmask 64512
      %v1200 = vsel %vm1198, %v1187, 0
      %v1203 = vsel %vm1198, %v1197, 0
      %1205 = vmatprep.subr.bf16.mxu0 0
      %1206 = vmatpush1.bf16.xpose.msra.mxu0 0
      %1207 = vmatprep.subr.bf16.mxu0 0
      %1208 = vmatpush1.bf16.xpose.msra.mxu0 0
      %1209 = vmatprep.subr.bf16.mxu0 0
      %1210 = vmatpush1.bf16.xpose.msra.mxu0 0
      %1211 = vmatprep.subr.bf16.mxu0 0
      %1212 = vmatpush1.bf16.xpose.msra.mxu0 0
      %1213 = vmatprep.subr.bf16.mxu0 0
      %1214 = vmatpush1.bf16.xpose.msra.mxu0 0
      %1215 = vmatprep.subr.bf16.mxu0 0
      %1216 = vmatpush1.bf16.xpose.msra.mxu0 0
      %1217 = vmatprep.subr.bf16.mxu0 0
      %1218 = vmatpush1.bf16.xpose.msra.mxu0 0
      %1219 = vmatprep.subr.bf16.mxu0 0
      %1220 = vmatpush1.bf16.xpose.msra.mxu0 %v1203
      %1221 = vmatprep.subr.bf16.mxu0 0
      %1222 = vmatpush2.bf16.xpose.msra.mxu0 0
      %1223 = vmatprep.subr.bf16.mxu0 0
      %1224 = vmatpush2.bf16.xpose.msra.mxu0 0
      %1225 = vmatprep.subr.bf16.mxu0 0
      %1226 = vmatpush2.bf16.xpose.msra.mxu0 0
      %1227 = vmatprep.subr.bf16.mxu0 0
      %1228 = vmatpush2.bf16.xpose.msra.mxu0 0
      %1229 = vmatprep.subr.bf16.mxu0 0
      %1230 = vmatpush2.bf16.xpose.msra.mxu0 0
      %1231 = vmatprep.subr.bf16.mxu0 0
      %1232 = vmatpush2.bf16.xpose.msra.mxu0 0
      %1233 = vmatprep.subr.bf16.mxu0 0
      %1234 = vmatpush2.bf16.xpose.msra.mxu0 0
      %1235 = vmatprep.subr.bf16.mxu0 0
      %1236 = vmatpush2.bf16.xpose.msra.mxu0 0
      %1237 = vmatprep.mubr.bf16.mxu0 0
      %1238 = vmatmul.mubr.bf16.gmra.mxu0 %v1200
      %v1239 = vpop.f32.mrf.mxu0
      %v1240 = vadd.f32 0.0, %v1239
      %v1241 = vpop.f32.mrf.mxu0
      %v1242 = vpop.f32.mrf.mxu0
      %v1243 = vpop.f32.mrf.mxu0
      %1244 = vdwg.mxu0
      %1246 = vrot.lane.b32.xlu0 %v1188, 96
      %v1247 = vpop.permute.xlu0 %1246
      %v1249 = vsel %vm1198, %v1188, 0
      %v1252 = vsel %vm1198, %v1247, 0
      %1254 = vmatprep.subr.bf16.mxu0 0
      %1255 = vmatpush1.bf16.xpose.msra.mxu0 0
      %1256 = vmatprep.subr.bf16.mxu0 0
      %1257 = vmatpush1.bf16.xpose.msra.mxu0 0
      %1258 = vmatprep.subr.bf16.mxu0 0
      %1259 = vmatpush1.bf16.xpose.msra.mxu0 0
      %1260 = vmatprep.subr.bf16.mxu0 0
      %1261 = vmatpush1.bf16.xpose.msra.mxu0 0
      %1262 = vmatprep.subr.bf16.mxu0 0
      %1263 = vmatpush1.bf16.xpose.msra.mxu0 0
      %1264 = vmatprep.subr.bf16.mxu0 0
      %1265 = vmatpush1.bf16.xpose.msra.mxu0 0
      %1266 = vmatprep.subr.bf16.mxu0 0
      %1267 = vmatpush1.bf16.xpose.msra.mxu0 0
      %1268 = vmatprep.subr.bf16.mxu0 0
      %1269 = vmatpush1.bf16.xpose.msra.mxu0 %v1252
      %1270 = vmatprep.subr.bf16.mxu0 0
      %1271 = vmatpush2.bf16.xpose.msra.mxu0 0
      %1272 = vmatprep.subr.bf16.mxu0 0
      %1273 = vmatpush2.bf16.xpose.msra.mxu0 0
      %1274 = vmatprep.subr.bf16.mxu0 0
      %1275 = vmatpush2.bf16.xpose.msra.mxu0 0
      %1276 = vmatprep.subr.bf16.mxu0 0
      %1277 = vmatpush2.bf16.xpose.msra.mxu0 0
      %1278 = vmatprep.subr.bf16.mxu0 0
      %1279 = vmatpush2.bf16.xpose.msra.mxu0 0
      %1280 = vmatprep.subr.bf16.mxu0 0
      %1281 = vmatpush2.bf16.xpose.msra.mxu0 0
      %1282 = vmatprep.subr.bf16.mxu0 0
      %1283 = vmatpush2.bf16.xpose.msra.mxu0 0
      %1284 = vmatprep.subr.bf16.mxu0 0
      %1285 = vmatpush2.bf16.xpose.msra.mxu0 0
      %1286 = vmatprep.mubr.bf16.mxu0 0
      %1287 = vmatmul.mubr.bf16.gmra.mxu0 %v1249
      %v1288 = vpop.f32.mrf.mxu0
      %v1289 = vadd.f32 0.0, %v1288
      %v1290 = vpop.f32.mrf.mxu0
      %v1291 = vpop.f32.mrf.mxu0
      %v1292 = vpop.f32.mrf.mxu0
      %1293 = vdwg.mxu0
      %1295 = vrot.lane.b32.xlu0 %v1189, 96
      %v1296 = vpop.permute.xlu0 %1295
      %v1298 = vsel %vm1198, %v1189, 0
      %v1301 = vsel %vm1198, %v1296, 0
      %1303 = vmatprep.subr.bf16.mxu0 0
      %1304 = vmatpush1.bf16.xpose.msra.mxu0 0
      %1305 = vmatprep.subr.bf16.mxu0 0
      %1306 = vmatpush1.bf16.xpose.msra.mxu0 0
      %1307 = vmatprep.subr.bf16.mxu0 0
      %1308 = vmatpush1.bf16.xpose.msra.mxu0 0
      %1309 = vmatprep.subr.bf16.mxu0 0
      %1310 = vmatpush1.bf16.xpose.msra.mxu0 0
      %1311 = vmatprep.subr.bf16.mxu0 0
      %1312 = vmatpush1.bf16.xpose.msra.mxu0 0
      %1313 = vmatprep.subr.bf16.mxu0 0
      %1314 = vmatpush1.bf16.xpose.msra.mxu0 0
      %1315 = vmatprep.subr.bf16.mxu0 0
      %1316 = vmatpush1.bf16.xpose.msra.mxu0 0
      %1317 = vmatprep.subr.bf16.mxu0 0
      %1318 = vmatpush1.bf16.xpose.msra.mxu0 %v1301
      %1319 = vmatprep.subr.bf16.mxu0 0
      %1320 = vmatpush2.bf16.xpose.msra.mxu0 0
      %1321 = vmatprep.subr.bf16.mxu0 0
      %1322 = vmatpush2.bf16.xpose.msra.mxu0 0
      %1323 = vmatprep.subr.bf16.mxu0 0
      %1324 = vmatpush2.bf16.xpose.msra.mxu0 0
      %1325 = vmatprep.subr.bf16.mxu0 0
      %1326 = vmatpush2.bf16.xpose.msra.mxu0 0
      %1327 = vmatprep.subr.bf16.mxu0 0
      %1328 = vmatpush2.bf16.xpose.msra.mxu0 0
      %1329 = vmatprep.subr.bf16.mxu0 0
      %1330 = vmatpush2.bf16.xpose.msra.mxu0 0
      %1331 = vmatprep.subr.bf16.mxu0 0
      %1332 = vmatpush2.bf16.xpose.msra.mxu0 0
      %1333 = vmatprep.subr.bf16.mxu0 0
      %1334 = vmatpush2.bf16.xpose.msra.mxu0 0
      %1335 = vmatprep.mubr.bf16.mxu0 0
      %1336 = vmatmul.mubr.bf16.gmra.mxu0 %v1298
      %v1337 = vpop.f32.mrf.mxu0
      %v1338 = vadd.f32 0.0, %v1337
      %v1339 = vpop.f32.mrf.mxu0
      %v1340 = vpop.f32.mrf.mxu0
      %v1341 = vpop.f32.mrf.mxu0
      %1342 = vdwg.mxu0
      %1344 = vrot.lane.b32.xlu0 %v1190, 96
      %v1345 = vpop.permute.xlu0 %1344
      %v1347 = vsel %vm1198, %v1190, 0
      %v1350 = vsel %vm1198, %v1345, 0
      %1352 = vmatprep.subr.bf16.mxu0 0
      %1353 = vmatpush1.bf16.xpose.msra.mxu0 0
      %1354 = vmatprep.subr.bf16.mxu0 0
      %1355 = vmatpush1.bf16.xpose.msra.mxu0 0
      %1356 = vmatprep.subr.bf16.mxu0 0
      %1357 = vmatpush1.bf16.xpose.msra.mxu0 0
      %1358 = vmatprep.subr.bf16.mxu0 0
      %1359 = vmatpush1.bf16.xpose.msra.mxu0 0
      %1360 = vmatprep.subr.bf16.mxu0 0
      %1361 = vmatpush1.bf16.xpose.msra.mxu0 0
      %1362 = vmatprep.subr.bf16.mxu0 0
      %1363 = vmatpush1.bf16.xpose.msra.mxu0 0
      %1364 = vmatprep.subr.bf16.mxu0 0
      %1365 = vmatpush1.bf16.xpose.msra.mxu0 0
      %1366 = vmatprep.subr.bf16.mxu0 0
      %1367 = vmatpush1.bf16.xpose.msra.mxu0 %v1350
      %1368 = vmatprep.subr.bf16.mxu0 0
      %1369 = vmatpush2.bf16.xpose.msra.mxu0 0
      %1370 = vmatprep.subr.bf16.mxu0 0
      %1371 = vmatpush2.bf16.xpose.msra.mxu0 0
      %1372 = vmatprep.subr.bf16.mxu0 0
      %1373 = vmatpush2.bf16.xpose.msra.mxu0 0
      %1374 = vmatprep.subr.bf16.mxu0 0
      %1375 = vmatpush2.bf16.xpose.msra.mxu0 0
      %1376 = vmatprep.subr.bf16.mxu0 0
      %1377 = vmatpush2.bf16.xpose.msra.mxu0 0
      %1378 = vmatprep.subr.bf16.mxu0 0
      %1379 = vmatpush2.bf16.xpose.msra.mxu0 0
      %1380 = vmatprep.subr.bf16.mxu0 0
      %1381 = vmatpush2.bf16.xpose.msra.mxu0 0
      %1382 = vmatprep.subr.bf16.mxu0 0
      %1383 = vmatpush2.bf16.xpose.msra.mxu0 0
      %1384 = vmatprep.mubr.bf16.mxu0 0
      %1385 = vmatmul.mubr.bf16.gmra.mxu0 %v1347
      %v1386 = vpop.f32.mrf.mxu0
      %v1387 = vadd.f32 0.0, %v1386
      %v1388 = vpop.f32.mrf.mxu0
      %v1389 = vpop.f32.mrf.mxu0
      %v1390 = vpop.f32.mrf.mxu0
      %1391 = vdwg.mxu0
      %1393 = vrot.lane.b32.xlu0 %v1191, 96
      %v1394 = vpop.permute.xlu0 %1393
      %v1396 = vsel %vm1198, %v1191, 0
      %v1399 = vsel %vm1198, %v1394, 0
      %1401 = vmatprep.subr.bf16.mxu0 0
      %1402 = vmatpush1.bf16.xpose.msra.mxu0 0
      %1403 = vmatprep.subr.bf16.mxu0 0
      %1404 = vmatpush1.bf16.xpose.msra.mxu0 0
      %1405 = vmatprep.subr.bf16.mxu0 0
      %1406 = vmatpush1.bf16.xpose.msra.mxu0 0
      %1407 = vmatprep.subr.bf16.mxu0 0
      %1408 = vmatpush1.bf16.xpose.msra.mxu0 0
      %1409 = vmatprep.subr.bf16.mxu0 0
      %1410 = vmatpush1.bf16.xpose.msra.mxu0 0
      %1411 = vmatprep.subr.bf16.mxu0 0
      %1412 = vmatpush1.bf16.xpose.msra.mxu0 0
      %1413 = vmatprep.subr.bf16.mxu0 0
      %1414 = vmatpush1.bf16.xpose.msra.mxu0 0
      %1415 = vmatprep.subr.bf16.mxu0 0
      %1416 = vmatpush1.bf16.xpose.msra.mxu0 %v1399
      %1417 = vmatprep.subr.bf16.mxu0 0
      %1418 = vmatpush2.bf16.xpose.msra.mxu0 0
      %1419 = vmatprep.subr.bf16.mxu0 0
      %1420 = vmatpush2.bf16.xpose.msra.mxu0 0
      %1421 = vmatprep.subr.bf16.mxu0 0
      %1422 = vmatpush2.bf16.xpose.msra.mxu0 0
      %1423 = vmatprep.subr.bf16.mxu0 0
      %1424 = vmatpush2.bf16.xpose.msra.mxu0 0
      %1425 = vmatprep.subr.bf16.mxu0 0
      %1426 = vmatpush2.bf16.xpose.msra.mxu0 0
      %1427 = vmatprep.subr.bf16.mxu0 0
      %1428 = vmatpush2.bf16.xpose.msra.mxu0 0
      %1429 = vmatprep.subr.bf16.mxu0 0
      %1430 = vmatpush2.bf16.xpose.msra.mxu0 0
      %1431 = vmatprep.subr.bf16.mxu0 0
      %1432 = vmatpush2.bf16.xpose.msra.mxu0 0
      %1433 = vmatprep.mubr.bf16.mxu0 0
      %1434 = vmatmul.mubr.bf16.gmra.mxu0 %v1396
      %v1435 = vpop.f32.mrf.mxu0
      %v1436 = vadd.f32 0.0, %v1435
      %v1437 = vpop.f32.mrf.mxu0
      %v1438 = vpop.f32.mrf.mxu0
      %v1439 = vpop.f32.mrf.mxu0
      %1440 = vdwg.mxu0
      %1442 = vrot.lane.b32.xlu0 %v1192, 96
      %v1443 = vpop.permute.xlu0 %1442
      %v1445 = vsel %vm1198, %v1192, 0
      %v1448 = vsel %vm1198, %v1443, 0
      %1450 = vmatprep.subr.bf16.mxu0 0
      %1451 = vmatpush1.bf16.xpose.msra.mxu0 0
      %1452 = vmatprep.subr.bf16.mxu0 0
      %1453 = vmatpush1.bf16.xpose.msra.mxu0 0
      %1454 = vmatprep.subr.bf16.mxu0 0
      %1455 = vmatpush1.bf16.xpose.msra.mxu0 0
      %1456 = vmatprep.subr.bf16.mxu0 0
      %1457 = vmatpush1.bf16.xpose.msra.mxu0 0
      %1458 = vmatprep.subr.bf16.mxu0 0
      %1459 = vmatpush1.bf16.xpose.msra.mxu0 0
      %1460 = vmatprep.subr.bf16.mxu0 0
      %1461 = vmatpush1.bf16.xpose.msra.mxu0 0
      %1462 = vmatprep.subr.bf16.mxu0 0
      %1463 = vmatpush1.bf16.xpose.msra.mxu0 0
      %1464 = vmatprep.subr.bf16.mxu0 0
      %1465 = vmatpush1.bf16.xpose.msra.mxu0 %v1448
      %1466 = vmatprep.subr.bf16.mxu0 0
      %1467 = vmatpush2.bf16.xpose.msra.mxu0 0
      %1468 = vmatprep.subr.bf16.mxu0 0
      %1469 = vmatpush2.bf16.xpose.msra.mxu0 0
      %1470 = vmatprep.subr.bf16.mxu0 0
      %1471 = vmatpush2.bf16.xpose.msra.mxu0 0
      %1472 = vmatprep.subr.bf16.mxu0 0
      %1473 = vmatpush2.bf16.xpose.msra.mxu0 0
      %1474 = vmatprep.subr.bf16.mxu0 0
      %1475 = vmatpush2.bf16.xpose.msra.mxu0 0
      %1476 = vmatprep.subr.bf16.mxu0 0
      %1477 = vmatpush2.bf16.xpose.msra.mxu0 0
      %1478 = vmatprep.subr.bf16.mxu0 0
      %1479 = vmatpush2.bf16.xpose.msra.mxu0 0
      %1480 = vmatprep.subr.bf16.mxu0 0
      %1481 = vmatpush2.bf16.xpose.msra.mxu0 0
      %1482 = vmatprep.mubr.bf16.mxu0 0
      %1483 = vmatmul.mubr.bf16.gmra.mxu0 %v1445
      %v1484 = vpop.f32.mrf.mxu0
      %v1485 = vadd.f32 0.0, %v1484
      %v1486 = vpop.f32.mrf.mxu0
      %v1487 = vpop.f32.mrf.mxu0
      %v1488 = vpop.f32.mrf.mxu0
      %1489 = vdwg.mxu0
      %1491 = vrot.lane.b32.xlu0 %v1193, 96
      %v1492 = vpop.permute.xlu0 %1491
      %v1494 = vsel %vm1198, %v1193, 0
      %v1497 = vsel %vm1198, %v1492, 0
      %1499 = vmatprep.subr.bf16.mxu0 0
      %1500 = vmatpush1.bf16.xpose.msra.mxu0 0
      %1501 = vmatprep.subr.bf16.mxu0 0
      %1502 = vmatpush1.bf16.xpose.msra.mxu0 0
      %1503 = vmatprep.subr.bf16.mxu0 0
      %1504 = vmatpush1.bf16.xpose.msra.mxu0 0
      %1505 = vmatprep.subr.bf16.mxu0 0
      %1506 = vmatpush1.bf16.xpose.msra.mxu0 0
      %1507 = vmatprep.subr.bf16.mxu0 0
      %1508 = vmatpush1.bf16.xpose.msra.mxu0 0
      %1509 = vmatprep.subr.bf16.mxu0 0
      %1510 = vmatpush1.bf16.xpose.msra.mxu0 0
      %1511 = vmatprep.subr.bf16.mxu0 0
      %1512 = vmatpush1.bf16.xpose.msra.mxu0 0
      %1513 = vmatprep.subr.bf16.mxu0 0
      %1514 = vmatpush1.bf16.xpose.msra.mxu0 %v1497
      %1515 = vmatprep.subr.bf16.mxu0 0
      %1516 = vmatpush2.bf16.xpose.msra.mxu0 0
      %1517 = vmatprep.subr.bf16.mxu0 0
      %1518 = vmatpush2.bf16.xpose.msra.mxu0 0
      %1519 = vmatprep.subr.bf16.mxu0 0
      %1520 = vmatpush2.bf16.xpose.msra.mxu0 0
      %1521 = vmatprep.subr.bf16.mxu0 0
      %1522 = vmatpush2.bf16.xpose.msra.mxu0 0
      %1523 = vmatprep.subr.bf16.mxu0 0
      %1524 = vmatpush2.bf16.xpose.msra.mxu0 0
      %1525 = vmatprep.subr.bf16.mxu0 0
      %1526 = vmatpush2.bf16.xpose.msra.mxu0 0
      %1527 = vmatprep.subr.bf16.mxu0 0
      %1528 = vmatpush2.bf16.xpose.msra.mxu0 0
      %1529 = vmatprep.subr.bf16.mxu0 0
      %1530 = vmatpush2.bf16.xpose.msra.mxu0 0
      %1531 = vmatprep.mubr.bf16.mxu0 0
      %1532 = vmatmul.mubr.bf16.gmra.mxu0 %v1494
      %v1533 = vpop.f32.mrf.mxu0
      %v1534 = vadd.f32 0.0, %v1533
      %v1535 = vpop.f32.mrf.mxu0
      %v1536 = vpop.f32.mrf.mxu0
      %v1537 = vpop.f32.mrf.mxu0
      %1538 = vdwg.mxu0
      %1540 = vrot.lane.b32.xlu0 %v1194, 96
      %v1541 = vpop.permute.xlu0 %1540
      %v1543 = vsel %vm1198, %v1194, 0
      %v1546 = vsel %vm1198, %v1541, 0
      %1548 = vmatprep.subr.bf16.mxu0 0
      %1549 = vmatpush1.bf16.xpose.msra.mxu0 0
      %1550 = vmatprep.subr.bf16.mxu0 0
      %1551 = vmatpush1.bf16.xpose.msra.mxu0 0
      %1552 = vmatprep.subr.bf16.mxu0 0
      %1553 = vmatpush1.bf16.xpose.msra.mxu0 0
      %1554 = vmatprep.subr.bf16.mxu0 0
      %1555 = vmatpush1.bf16.xpose.msra.mxu0 0
      %1556 = vmatprep.subr.bf16.mxu0 0
      %1557 = vmatpush1.bf16.xpose.msra.mxu0 0
      %1558 = vmatprep.subr.bf16.mxu0 0
      %1559 = vmatpush1.bf16.xpose.msra.mxu0 0
      %1560 = vmatprep.subr.bf16.mxu0 0
      %1561 = vmatpush1.bf16.xpose.msra.mxu0 0
      %1562 = vmatprep.subr.bf16.mxu0 0
      %1563 = vmatpush1.bf16.xpose.msra.mxu0 %v1546
      %1564 = vmatprep.subr.bf16.mxu0 0
      %1565 = vmatpush2.bf16.xpose.msra.mxu0 0
      %1566 = vmatprep.subr.bf16.mxu0 0
      %1567 = vmatpush2.bf16.xpose.msra.mxu0 0
      %1568 = vmatprep.subr.bf16.mxu0 0
      %1569 = vmatpush2.bf16.xpose.msra.mxu0 0
      %1570 = vmatprep.subr.bf16.mxu0 0
      %1571 = vmatpush2.bf16.xpose.msra.mxu0 0
      %1572 = vmatprep.subr.bf16.mxu0 0
      %1573 = vmatpush2.bf16.xpose.msra.mxu0 0
      %1574 = vmatprep.subr.bf16.mxu0 0
      %1575 = vmatpush2.bf16.xpose.msra.mxu0 0
      %1576 = vmatprep.subr.bf16.mxu0 0
      %1577 = vmatpush2.bf16.xpose.msra.mxu0 0
      %1578 = vmatprep.subr.bf16.mxu0 0
      %1579 = vmatpush2.bf16.xpose.msra.mxu0 0
      %1580 = vmatprep.mubr.bf16.mxu0 0
      %1581 = vmatmul.mubr.bf16.gmra.mxu0 %v1543
      %v1582 = vpop.f32.mrf.mxu0
      %v1583 = vadd.f32 0.0, %v1582
      %v1584 = vpop.f32.mrf.mxu0
      %v1585 = vpop.f32.mrf.mxu0
      %v1586 = vpop.f32.mrf.mxu0
      %1587 = vdwg.mxu0
      %v1588 = vadd.f32 %v1240, %v1165
      %v1589 = vadd.f32 %v1289, %v1166
      %v1590 = vadd.f32 %v1338, %v1165
      %v1591 = vadd.f32 %v1387, %v1166
      %v1592 = vadd.f32 %v1436, %v1165
      %v1593 = vadd.f32 %v1485, %v1166
      %v1594 = vadd.f32 %v1534, %v1165
      %v1595 = vadd.f32 %v1583, %v1166
      %v1596 = vsel %vm1198, %v1588, -inf
      %1597 = vmax.xlane.f32.xlu0 %v1596
      %v1598 = vpop.xlane.xlu0 %1597
      %v1599 = vsel %vm1198, %v1589, -inf
      %1600 = vmax.xlane.f32.xlu0 %v1599
      %v1601 = vpop.xlane.xlu0 %1600
      %v1602 = vsel %vm1198, %v1590, -inf
      %1603 = vmax.xlane.f32.xlu0 %v1602
      %v1604 = vpop.xlane.xlu0 %1603
      %v1605 = vsel %vm1198, %v1591, -inf
      %1606 = vmax.xlane.f32.xlu0 %v1605
      %v1607 = vpop.xlane.xlu0 %1606
      %v1608 = vsel %vm1198, %v1592, -inf
      %1609 = vmax.xlane.f32.xlu0 %v1608
      %v1610 = vpop.xlane.xlu0 %1609
      %v1611 = vsel %vm1198, %v1593, -inf
      %1612 = vmax.xlane.f32.xlu0 %v1611
      %v1613 = vpop.xlane.xlu0 %1612
      %v1614 = vsel %vm1198, %v1594, -inf
      %1615 = vmax.xlane.f32.xlu0 %v1614
      %v1616 = vpop.xlane.xlu0 %1615
      %v1617 = vsel %vm1198, %v1595, -inf
      %1618 = vmax.xlane.f32.xlu0 %v1617
      %v1619 = vpop.xlane.xlu0 %1618
      %v1620 = vsub.f32 %v1588, %v1598
      %v1621 = vsub.f32 %v1589, %v1601
      %v1622 = vsub.f32 %v1590, %v1604
      %v1623 = vsub.f32 %v1591, %v1607
      %v1624 = vsub.f32 %v1592, %v1610
      %v1625 = vsub.f32 %v1593, %v1613
      %v1626 = vsub.f32 %v1594, %v1616
      %v1627 = vsub.f32 %v1595, %v1619
      %v1628 = vmul.f32 %v1620, 1.442695
      %v1629 = vpow.pop %v1628
      %v1630 = vmul.f32 %v1621, 1.442695
      %v1631 = vpow.pop %v1630
      %v1632 = vmul.f32 %v1622, 1.442695
      %v1633 = vpow.pop %v1632
      %v1634 = vmul.f32 %v1623, 1.442695
      %v1635 = vpow.pop %v1634
      %v1636 = vmul.f32 %v1624, 1.442695
      %v1637 = vpow.pop %v1636
      %v1638 = vmul.f32 %v1625, 1.442695
      %v1639 = vpow.pop %v1638
      %v1640 = vmul.f32 %v1626, 1.442695
      %v1641 = vpow.pop %v1640
      %v1642 = vmul.f32 %v1627, 1.442695
      %v1643 = vpow.pop %v1642
      %v1644 = vsel %vm1198, %v1629, 0.0
      %1645 = vadd.xlane.f32.xlu0 %v1644
      %v1646 = vpop.xlane.xlu0 %1645
      %v1647 = vsel %vm1198, %v1631, 0.0
      %1648 = vadd.xlane.f32.xlu0 %v1647
      %v1649 = vpop.xlane.xlu0 %1648
      %v1650 = vsel %vm1198, %v1633, 0.0
      %1651 = vadd.xlane.f32.xlu0 %v1650
      %v1652 = vpop.xlane.xlu0 %1651
      %v1653 = vsel %vm1198, %v1635, 0.0
      %1654 = vadd.xlane.f32.xlu0 %v1653
      %v1655 = vpop.xlane.xlu0 %1654
      %v1656 = vsel %vm1198, %v1637, 0.0
      %1657 = vadd.xlane.f32.xlu0 %v1656
      %v1658 = vpop.xlane.xlu0 %1657
      %v1659 = vsel %vm1198, %v1639, 0.0
      %1660 = vadd.xlane.f32.xlu0 %v1659
      %v1661 = vpop.xlane.xlu0 %1660
      %v1662 = vsel %vm1198, %v1641, 0.0
      %1663 = vadd.xlane.f32.xlu0 %v1662
      %v1664 = vpop.xlane.xlu0 %1663
      %v1665 = vsel %vm1198, %v1643, 0.0
      %1666 = vadd.xlane.f32.xlu0 %v1665
      %v1667 = vpop.xlane.xlu0 %1666
      %v1668 = vrcp.pop %v1646
      %v1669 = vrcp.pop %v1649
      %v1670 = vrcp.pop %v1652
      %v1671 = vrcp.pop %v1655
      %v1672 = vrcp.pop %v1658
      %v1673 = vrcp.pop %v1661
      %v1674 = vrcp.pop %v1664
      %v1675 = vrcp.pop %v1667
      %v1676 = vmul.f32 %v1629, %v1668
      %v1677 = vmul.f32 %v1631, %v1669
      %v1678 = vmul.f32 %v1633, %v1670
      %v1679 = vmul.f32 %v1635, %v1671
      %v1680 = vmul.f32 %v1637, %v1672
      %v1681 = vmul.f32 %v1639, %v1673
      %v1682 = vmul.f32 %v1641, %v1674
      %v1683 = vmul.f32 %v1643, %v1675
      %v1684 = vpack.c.bf16 %v1676, %v1676
      %v1685 = vpack.c.bf16 %v1677, %v1677
      %v1686 = vpack.c.bf16 %v1678, %v1678
      %v1687 = vpack.c.bf16 %v1679, %v1679
      %v1688 = vpack.c.bf16 %v1680, %v1680
      %v1689 = vpack.c.bf16 %v1681, %v1681
      %v1690 = vpack.c.bf16 %v1682, %v1682
      %v1691 = vpack.c.bf16 %v1683, %v1683
      %1692 = vrot.lane.b32.xlu0 %v1187, 64
      %v1693 = vpop.permute.xlu0 %1692
      %v1695 = vsel %vm1198, %v1684, 0
      %vm1697 = vcmask 1043456
      %v1699 = vsel %vm1697, %v1693, 0
      %1701 = vmatprep.subr.bf16.mxu0 0
      %1702 = vmatpush1.bf16.msra.mxu0 0
      %1703 = vmatprep.subr.bf16.mxu0 0
      %1704 = vmatpush1.bf16.msra.mxu0 0
      %1705 = vmatprep.subr.bf16.mxu0 0
      %1706 = vmatpush1.bf16.msra.mxu0 0
      %1707 = vmatprep.subr.bf16.mxu0 0
      %1708 = vmatpush1.bf16.msra.mxu0 0
      %1709 = vmatprep.subr.bf16.mxu0 0
      %1710 = vmatpush1.bf16.msra.mxu0 0
      %1711 = vmatprep.subr.bf16.mxu0 0
      %1712 = vmatpush1.bf16.msra.mxu0 0
      %1713 = vmatprep.subr.bf16.mxu0 0
      %1714 = vmatpush1.bf16.msra.mxu0 0
      %1715 = vmatprep.subr.bf16.mxu0 0
      %1716 = vmatpush1.bf16.msra.mxu0 %v1699
      %1717 = vmatprep.subr.bf16.mxu0 0
      %1718 = vmatpush2.bf16.msra.mxu0 0
      %1719 = vmatprep.subr.bf16.mxu0 0
      %1720 = vmatpush2.bf16.msra.mxu0 0
      %1721 = vmatprep.subr.bf16.mxu0 0
      %1722 = vmatpush2.bf16.msra.mxu0 0
      %1723 = vmatprep.subr.bf16.mxu0 0
      %1724 = vmatpush2.bf16.msra.mxu0 0
      %1725 = vmatprep.subr.bf16.mxu0 0
      %1726 = vmatpush2.bf16.msra.mxu0 0
      %1727 = vmatprep.subr.bf16.mxu0 0
      %1728 = vmatpush2.bf16.msra.mxu0 0
      %1729 = vmatprep.subr.bf16.mxu0 0
      %1730 = vmatpush2.bf16.msra.mxu0 0
      %1731 = vmatprep.subr.bf16.mxu0 0
      %1732 = vmatpush2.bf16.msra.mxu0 0
      %1733 = vmatprep.mubr.bf16.mxu0 0
      %1734 = vmatmul.mubr.bf16.gmra.mxu0 %v1695
      %v1735 = vpop.f32.mrf.mxu0
      %v1736 = vadd.f32 0.0, %v1735
      %v1737 = vpop.f32.mrf.mxu0
      %v1738 = vpop.f32.mrf.mxu0
      %v1739 = vpop.f32.mrf.mxu0
      %1740 = vdwg.mxu0
      %1741 = vrot.lane.b32.xlu0 %v1188, 64
      %v1742 = vpop.permute.xlu0 %1741
      %v1744 = vsel %vm1198, %v1685, 0
      %v1747 = vsel %vm1697, %v1742, 0
      %1749 = vmatprep.subr.bf16.mxu0 0
      %1750 = vmatpush1.bf16.msra.mxu0 0
      %1751 = vmatprep.subr.bf16.mxu0 0
      %1752 = vmatpush1.bf16.msra.mxu0 0
      %1753 = vmatprep.subr.bf16.mxu0 0
      %1754 = vmatpush1.bf16.msra.mxu0 0
      %1755 = vmatprep.subr.bf16.mxu0 0
      %1756 = vmatpush1.bf16.msra.mxu0 0
      %1757 = vmatprep.subr.bf16.mxu0 0
      %1758 = vmatpush1.bf16.msra.mxu0 0
      %1759 = vmatprep.subr.bf16.mxu0 0
      %1760 = vmatpush1.bf16.msra.mxu0 0
      %1761 = vmatprep.subr.bf16.mxu0 0
      %1762 = vmatpush1.bf16.msra.mxu0 0
      %1763 = vmatprep.subr.bf16.mxu0 0
      %1764 = vmatpush1.bf16.msra.mxu0 %v1747
      %1765 = vmatprep.subr.bf16.mxu0 0
      %1766 = vmatpush2.bf16.msra.mxu0 0
      %1767 = vmatprep.subr.bf16.mxu0 0
      %1768 = vmatpush2.bf16.msra.mxu0 0
      %1769 = vmatprep.subr.bf16.mxu0 0
      %1770 = vmatpush2.bf16.msra.mxu0 0
      %1771 = vmatprep.subr.bf16.mxu0 0
      %1772 = vmatpush2.bf16.msra.mxu0 0
      %1773 = vmatprep.subr.bf16.mxu0 0
      %1774 = vmatpush2.bf16.msra.mxu0 0
      %1775 = vmatprep.subr.bf16.mxu0 0
      %1776 = vmatpush2.bf16.msra.mxu0 0
      %1777 = vmatprep.subr.bf16.mxu0 0
      %1778 = vmatpush2.bf16.msra.mxu0 0
      %1779 = vmatprep.subr.bf16.mxu0 0
      %1780 = vmatpush2.bf16.msra.mxu0 0
      %1781 = vmatprep.mubr.bf16.mxu0 0
      %1782 = vmatmul.mubr.bf16.gmra.mxu0 %v1744
      %v1783 = vpop.f32.mrf.mxu0
      %v1784 = vadd.f32 0.0, %v1783
      %v1785 = vpop.f32.mrf.mxu0
      %v1786 = vpop.f32.mrf.mxu0
      %v1787 = vpop.f32.mrf.mxu0
      %1788 = vdwg.mxu0
      %1789 = vrot.lane.b32.xlu0 %v1189, 64
      %v1790 = vpop.permute.xlu0 %1789
      %v1792 = vsel %vm1198, %v1686, 0
      %v1795 = vsel %vm1697, %v1790, 0
      %1797 = vmatprep.subr.bf16.mxu0 0
      %1798 = vmatpush1.bf16.msra.mxu0 0
      %1799 = vmatprep.subr.bf16.mxu0 0
      %1800 = vmatpush1.bf16.msra.mxu0 0
      %1801 = vmatprep.subr.bf16.mxu0 0
      %1802 = vmatpush1.bf16.msra.mxu0 0
      %1803 = vmatprep.subr.bf16.mxu0 0
      %1804 = vmatpush1.bf16.msra.mxu0 0
      %1805 = vmatprep.subr.bf16.mxu0 0
      %1806 = vmatpush1.bf16.msra.mxu0 0
      %1807 = vmatprep.subr.bf16.mxu0 0
      %1808 = vmatpush1.bf16.msra.mxu0 0
      %1809 = vmatprep.subr.bf16.mxu0 0
      %1810 = vmatpush1.bf16.msra.mxu0 0
      %1811 = vmatprep.subr.bf16.mxu0 0
      %1812 = vmatpush1.bf16.msra.mxu0 %v1795
      %1813 = vmatprep.subr.bf16.mxu0 0
      %1814 = vmatpush2.bf16.msra.mxu0 0
      %1815 = vmatprep.subr.bf16.mxu0 0
      %1816 = vmatpush2.bf16.msra.mxu0 0
      %1817 = vmatprep.subr.bf16.mxu0 0
      %1818 = vmatpush2.bf16.msra.mxu0 0
      %1819 = vmatprep.subr.bf16.mxu0 0
      %1820 = vmatpush2.bf16.msra.mxu0 0
      %1821 = vmatprep.subr.bf16.mxu0 0
      %1822 = vmatpush2.bf16.msra.mxu0 0
      %1823 = vmatprep.subr.bf16.mxu0 0
      %1824 = vmatpush2.bf16.msra.mxu0 0
      %1825 = vmatprep.subr.bf16.mxu0 0
      %1826 = vmatpush2.bf16.msra.mxu0 0
      %1827 = vmatprep.subr.bf16.mxu0 0
      %1828 = vmatpush2.bf16.msra.mxu0 0
      %1829 = vmatprep.mubr.bf16.mxu0 0
      %1830 = vmatmul.mubr.bf16.gmra.mxu0 %v1792
      %v1831 = vpop.f32.mrf.mxu0
      %v1832 = vadd.f32 0.0, %v1831
      %v1833 = vpop.f32.mrf.mxu0
      %v1834 = vpop.f32.mrf.mxu0
      %v1835 = vpop.f32.mrf.mxu0
      %1836 = vdwg.mxu0
      %1837 = vrot.lane.b32.xlu0 %v1190, 64
      %v1838 = vpop.permute.xlu0 %1837
      %v1840 = vsel %vm1198, %v1687, 0
      %v1843 = vsel %vm1697, %v1838, 0
      %1845 = vmatprep.subr.bf16.mxu0 0
      %1846 = vmatpush1.bf16.msra.mxu0 0
      %1847 = vmatprep.subr.bf16.mxu0 0
      %1848 = vmatpush1.bf16.msra.mxu0 0
      %1849 = vmatprep.subr.bf16.mxu0 0
      %1850 = vmatpush1.bf16.msra.mxu0 0
      %1851 = vmatprep.subr.bf16.mxu0 0
      %1852 = vmatpush1.bf16.msra.mxu0 0
      %1853 = vmatprep.subr.bf16.mxu0 0
      %1854 = vmatpush1.bf16.msra.mxu0 0
      %1855 = vmatprep.subr.bf16.mxu0 0
      %1856 = vmatpush1.bf16.msra.mxu0 0
      %1857 = vmatprep.subr.bf16.mxu0 0
      %1858 = vmatpush1.bf16.msra.mxu0 0
      %1859 = vmatprep.subr.bf16.mxu0 0
      %1860 = vmatpush1.bf16.msra.mxu0 %v1843
      %1861 = vmatprep.subr.bf16.mxu0 0
      %1862 = vmatpush2.bf16.msra.mxu0 0
      %1863 = vmatprep.subr.bf16.mxu0 0
      %1864 = vmatpush2.bf16.msra.mxu0 0
      %1865 = vmatprep.subr.bf16.mxu0 0
      %1866 = vmatpush2.bf16.msra.mxu0 0
      %1867 = vmatprep.subr.bf16.mxu0 0
      %1868 = vmatpush2.bf16.msra.mxu0 0
      %1869 = vmatprep.subr.bf16.mxu0 0
      %1870 = vmatpush2.bf16.msra.mxu0 0
      %1871 = vmatprep.subr.bf16.mxu0 0
      %1872 = vmatpush2.bf16.msra.mxu0 0
      %1873 = vmatprep.subr.bf16.mxu0 0
      %1874 = vmatpush2.bf16.msra.mxu0 0
      %1875 = vmatprep.subr.bf16.mxu0 0
      %1876 = vmatpush2.bf16.msra.mxu0 0
      %1877 = vmatprep.mubr.bf16.mxu0 0
      %1878 = vmatmul.mubr.bf16.gmra.mxu0 %v1840
      %v1879 = vpop.f32.mrf.mxu0
      %v1880 = vadd.f32 0.0, %v1879
      %v1881 = vpop.f32.mrf.mxu0
      %v1882 = vpop.f32.mrf.mxu0
      %v1883 = vpop.f32.mrf.mxu0
      %1884 = vdwg.mxu0
      %1885 = vrot.lane.b32.xlu0 %v1191, 64
      %v1886 = vpop.permute.xlu0 %1885
      %v1888 = vsel %vm1198, %v1688, 0
      %v1891 = vsel %vm1697, %v1886, 0
      %1893 = vmatprep.subr.bf16.mxu0 0
      %1894 = vmatpush1.bf16.msra.mxu0 0
      %1895 = vmatprep.subr.bf16.mxu0 0
      %1896 = vmatpush1.bf16.msra.mxu0 0
      %1897 = vmatprep.subr.bf16.mxu0 0
      %1898 = vmatpush1.bf16.msra.mxu0 0
      %1899 = vmatprep.subr.bf16.mxu0 0
      %1900 = vmatpush1.bf16.msra.mxu0 0
      %1901 = vmatprep.subr.bf16.mxu0 0
      %1902 = vmatpush1.bf16.msra.mxu0 0
      %1903 = vmatprep.subr.bf16.mxu0 0
      %1904 = vmatpush1.bf16.msra.mxu0 0
      %1905 = vmatprep.subr.bf16.mxu0 0
      %1906 = vmatpush1.bf16.msra.mxu0 0
      %1907 = vmatprep.subr.bf16.mxu0 0
      %1908 = vmatpush1.bf16.msra.mxu0 %v1891
      %1909 = vmatprep.subr.bf16.mxu0 0
      %1910 = vmatpush2.bf16.msra.mxu0 0
      %1911 = vmatprep.subr.bf16.mxu0 0
      %1912 = vmatpush2.bf16.msra.mxu0 0
      %1913 = vmatprep.subr.bf16.mxu0 0
      %1914 = vmatpush2.bf16.msra.mxu0 0
      %1915 = vmatprep.subr.bf16.mxu0 0
      %1916 = vmatpush2.bf16.msra.mxu0 0
      %1917 = vmatprep.subr.bf16.mxu0 0
      %1918 = vmatpush2.bf16.msra.mxu0 0
      %1919 = vmatprep.subr.bf16.mxu0 0
      %1920 = vmatpush2.bf16.msra.mxu0 0
      %1921 = vmatprep.subr.bf16.mxu0 0
      %1922 = vmatpush2.bf16.msra.mxu0 0
      %1923 = vmatprep.subr.bf16.mxu0 0
      %1924 = vmatpush2.bf16.msra.mxu0 0
      %1925 = vmatprep.mubr.bf16.mxu0 0
      %1926 = vmatmul.mubr.bf16.gmra.mxu0 %v1888
      %v1927 = vpop.f32.mrf.mxu0
      %v1928 = vadd.f32 0.0, %v1927
      %v1929 = vpop.f32.mrf.mxu0
      %v1930 = vpop.f32.mrf.mxu0
      %v1931 = vpop.f32.mrf.mxu0
      %1932 = vdwg.mxu0
      %1933 = vrot.lane.b32.xlu0 %v1192, 64
      %v1934 = vpop.permute.xlu0 %1933
      %v1936 = vsel %vm1198, %v1689, 0
      %v1939 = vsel %vm1697, %v1934, 0
      %1941 = vmatprep.subr.bf16.mxu0 0
      %1942 = vmatpush1.bf16.msra.mxu0 0
      %1943 = vmatprep.subr.bf16.mxu0 0
      %1944 = vmatpush1.bf16.msra.mxu0 0
      %1945 = vmatprep.subr.bf16.mxu0 0
      %1946 = vmatpush1.bf16.msra.mxu0 0
      %1947 = vmatprep.subr.bf16.mxu0 0
      %1948 = vmatpush1.bf16.msra.mxu0 0
      %1949 = vmatprep.subr.bf16.mxu0 0
      %1950 = vmatpush1.bf16.msra.mxu0 0
      %1951 = vmatprep.subr.bf16.mxu0 0
      %1952 = vmatpush1.bf16.msra.mxu0 0
      %1953 = vmatprep.subr.bf16.mxu0 0
      %1954 = vmatpush1.bf16.msra.mxu0 0
      %1955 = vmatprep.subr.bf16.mxu0 0
      %1956 = vmatpush1.bf16.msra.mxu0 %v1939
      %1957 = vmatprep.subr.bf16.mxu0 0
      %1958 = vmatpush2.bf16.msra.mxu0 0
      %1959 = vmatprep.subr.bf16.mxu0 0
      %1960 = vmatpush2.bf16.msra.mxu0 0
      %1961 = vmatprep.subr.bf16.mxu0 0
      %1962 = vmatpush2.bf16.msra.mxu0 0
      %1963 = vmatprep.subr.bf16.mxu0 0
      %1964 = vmatpush2.bf16.msra.mxu0 0
      %1965 = vmatprep.subr.bf16.mxu0 0
      %1966 = vmatpush2.bf16.msra.mxu0 0
      %1967 = vmatprep.subr.bf16.mxu0 0
      %1968 = vmatpush2.bf16.msra.mxu0 0
      %1969 = vmatprep.subr.bf16.mxu0 0
      %1970 = vmatpush2.bf16.msra.mxu0 0
      %1971 = vmatprep.subr.bf16.mxu0 0
      %1972 = vmatpush2.bf16.msra.mxu0 0
      %1973 = vmatprep.mubr.bf16.mxu0 0
      %1974 = vmatmul.mubr.bf16.gmra.mxu0 %v1936
      %v1975 = vpop.f32.mrf.mxu0
      %v1976 = vadd.f32 0.0, %v1975
      %v1977 = vpop.f32.mrf.mxu0
      %v1978 = vpop.f32.mrf.mxu0
      %v1979 = vpop.f32.mrf.mxu0
      %1980 = vdwg.mxu0
      %1981 = vrot.lane.b32.xlu0 %v1193, 64
      %v1982 = vpop.permute.xlu0 %1981
      %v1984 = vsel %vm1198, %v1690, 0
      %v1987 = vsel %vm1697, %v1982, 0
      %1989 = vmatprep.subr.bf16.mxu0 0
      %1990 = vmatpush1.bf16.msra.mxu0 0
      %1991 = vmatprep.subr.bf16.mxu0 0
      %1992 = vmatpush1.bf16.msra.mxu0 0
      %1993 = vmatprep.subr.bf16.mxu0 0
      %1994 = vmatpush1.bf16.msra.mxu0 0
      %1995 = vmatprep.subr.bf16.mxu0 0
      %1996 = vmatpush1.bf16.msra.mxu0 0
      %1997 = vmatprep.subr.bf16.mxu0 0
      %1998 = vmatpush1.bf16.msra.mxu0 0
      %1999 = vmatprep.subr.bf16.mxu0 0
      %2000 = vmatpush1.bf16.msra.mxu0 0
      %2001 = vmatprep.subr.bf16.mxu0 0
      %2002 = vmatpush1.bf16.msra.mxu0 0
      %2003 = vmatprep.subr.bf16.mxu0 0
      %2004 = vmatpush1.bf16.msra.mxu0 %v1987
      %2005 = vmatprep.subr.bf16.mxu0 0
      %2006 = vmatpush2.bf16.msra.mxu0 0
      %2007 = vmatprep.subr.bf16.mxu0 0
      %2008 = vmatpush2.bf16.msra.mxu0 0
      %2009 = vmatprep.subr.bf16.mxu0 0
      %2010 = vmatpush2.bf16.msra.mxu0 0
      %2011 = vmatprep.subr.bf16.mxu0 0
      %2012 = vmatpush2.bf16.msra.mxu0 0
      %2013 = vmatprep.subr.bf16.mxu0 0
      %2014 = vmatpush2.bf16.msra.mxu0 0
      %2015 = vmatprep.subr.bf16.mxu0 0
      %2016 = vmatpush2.bf16.msra.mxu0 0
      %2017 = vmatprep.subr.bf16.mxu0 0
      %2018 = vmatpush2.bf16.msra.mxu0 0
      %2019 = vmatprep.subr.bf16.mxu0 0
      %2020 = vmatpush2.bf16.msra.mxu0 0
      %2021 = vmatprep.mubr.bf16.mxu0 0
      %2022 = vmatmul.mubr.bf16.gmra.mxu0 %v1984
      %v2023 = vpop.f32.mrf.mxu0
      %v2024 = vadd.f32 0.0, %v2023
      %v2025 = vpop.f32.mrf.mxu0
      %v2026 = vpop.f32.mrf.mxu0
      %v2027 = vpop.f32.mrf.mxu0
      %2028 = vdwg.mxu0
      %2029 = vrot.lane.b32.xlu0 %v1194, 64
      %v2030 = vpop.permute.xlu0 %2029
      %v2032 = vsel %vm1198, %v1691, 0
      %v2035 = vsel %vm1697, %v2030, 0
      %2037 = vmatprep.subr.bf16.mxu0 0
      %2038 = vmatpush1.bf16.msra.mxu0 0
      %2039 = vmatprep.subr.bf16.mxu0 0
      %2040 = vmatpush1.bf16.msra.mxu0 0
      %2041 = vmatprep.subr.bf16.mxu0 0
      %2042 = vmatpush1.bf16.msra.mxu0 0
      %2043 = vmatprep.subr.bf16.mxu0 0
      %2044 = vmatpush1.bf16.msra.mxu0 0
      %2045 = vmatprep.subr.bf16.mxu0 0
      %2046 = vmatpush1.bf16.msra.mxu0 0
      %2047 = vmatprep.subr.bf16.mxu0 0
      %2048 = vmatpush1.bf16.msra.mxu0 0
      %2049 = vmatprep.subr.bf16.mxu0 0
      %2050 = vmatpush1.bf16.msra.mxu0 0
      %2051 = vmatprep.subr.bf16.mxu0 0
      %2052 = vmatpush1.bf16.msra.mxu0 %v2035
      %2053 = vmatprep.subr.bf16.mxu0 0
      %2054 = vmatpush2.bf16.msra.mxu0 0
      %2055 = vmatprep.subr.bf16.mxu0 0
      %2056 = vmatpush2.bf16.msra.mxu0 0
      %2057 = vmatprep.subr.bf16.mxu0 0
      %2058 = vmatpush2.bf16.msra.mxu0 0
      %2059 = vmatprep.subr.bf16.mxu0 0
      %2060 = vmatpush2.bf16.msra.mxu0 0
      %2061 = vmatprep.subr.bf16.mxu0 0
      %2062 = vmatpush2.bf16.msra.mxu0 0
      %2063 = vmatprep.subr.bf16.mxu0 0
      %2064 = vmatpush2.bf16.msra.mxu0 0
      %2065 = vmatprep.subr.bf16.mxu0 0
      %2066 = vmatpush2.bf16.msra.mxu0 0
      %2067 = vmatprep.subr.bf16.mxu0 0
      %2068 = vmatpush2.bf16.msra.mxu0 0
      %2069 = vmatprep.mubr.bf16.mxu0 0
      %2070 = vmatmul.mubr.bf16.gmra.mxu0 %v2032
      %v2071 = vpop.f32.mrf.mxu0
      %v2072 = vadd.f32 0.0, %v2071
      %v2073 = vpop.f32.mrf.mxu0
      %v2074 = vpop.f32.mrf.mxu0
      %v2075 = vpop.f32.mrf.mxu0
      %2076 = vdwg.mxu0
      %2079 = vrot.lane.b32.xlu0 %v1832, 8
      %v2080 = vpop.permute.xlu0 %2079
      %2081 = vrot.lane.b32.xlu0 %v1880, 8
      %v2082 = vpop.permute.xlu0 %2081
      %2087 = vrot.lane.b32.xlu0 %v1928, 16
      %v2088 = vpop.permute.xlu0 %2087
      %2089 = vrot.lane.b32.xlu0 %v1976, 16
      %v2090 = vpop.permute.xlu0 %2089
      %2095 = vrot.lane.b32.xlu0 %v2024, 24
      %v2096 = vpop.permute.xlu0 %2095
      %2097 = vrot.lane.b32.xlu0 %v2072, 24
      %v2098 = vpop.permute.xlu0 %2097
      %v2101 = vsel %vm1198, %v1736, %v2080
      %v2102 = vsel %vm1198, %v1784, %v2082
      %vm2103 = vcmask 130048
      %v2104 = vsel %vm2103, %v2101, %v2088
      %v2105 = vsel %vm2103, %v2102, %v2090
      %vm2106 = vcmask 195584
      %v2107 = vsel %vm2106, %v2104, %v2096
      %v2108 = vsel %vm2106, %v2105, %v2098
      %v2109 = vpack.c.bf16 %v2108, %v2107
      %v2110 = vld [vmem:[%s963] sm:$0xf]
      %v2111 = vld [vmem:[%s963 + $0x4] sm:$0xf]
      %v2112 = vld [vmem:[%s963 + $0x8] sm:$0xf]
      %v2113 = vld [vmem:[%s963 + $0xc] sm:$0xf]
      %v2118 = vunpack.c.l.b16 %v2110
      %v2119 = vunpack.c.l.b16 %v2111
      %v2120 = vunpack.c.l.b16 %v2112
      %v2121 = vunpack.c.l.b16 %v2113
      %v2122 = vpack.c.b16 %v2119, %v2118
      %v2123 = vpack.c.b16 %v2121, %v2120
      %v2127 = vsel %vm1039, %v2109, 0
      %2129 = vmatprep.subr.bf16.mxu0 0
      %2130 = vmatpush1.bf16.msra.mxu0 0
      %2131 = vmatprep.subr.bf16.mxu0 0
      %2132 = vmatpush1.bf16.msra.mxu0 0
      %2133 = vmatprep.subr.bf16.mxu0 0
      %2134 = vmatpush1.bf16.msra.mxu0 0
      %2135 = vmatprep.subr.bf16.mxu0 0
      %2136 = vmatpush1.bf16.msra.mxu0 0
      %2137 = vmatprep.subr.bf16.mxu0 0
      %2138 = vmatpush1.bf16.msra.mxu0 0
      %2139 = vmatprep.subr.bf16.mxu0 0
      %2140 = vmatpush1.bf16.msra.mxu0 0
      %2141 = vmatprep.subr.bf16.mxu0 0
      %2142 = vmatpush1.bf16.msra.mxu0 %v2123
      %2143 = vmatprep.subr.bf16.mxu0 0
      %2144 = vmatpush1.bf16.msra.mxu0 %v2122
      %2145 = vmatprep.subr.bf16.mxu0 0
      %2146 = vmatpush2.bf16.msra.mxu0 0
      %2147 = vmatprep.subr.bf16.mxu0 0
      %2148 = vmatpush2.bf16.msra.mxu0 0
      %2149 = vmatprep.subr.bf16.mxu0 0
      %2150 = vmatpush2.bf16.msra.mxu0 0
      %2151 = vmatprep.subr.bf16.mxu0 0
      %2152 = vmatpush2.bf16.msra.mxu0 0
      %2153 = vmatprep.subr.bf16.mxu0 0
      %2154 = vmatpush2.bf16.msra.mxu0 0
      %2155 = vmatprep.subr.bf16.mxu0 0
      %2156 = vmatpush2.bf16.msra.mxu0 0
      %2157 = vmatprep.subr.bf16.mxu0 0
      %2158 = vmatpush2.bf16.msra.mxu0 0
      %2159 = vmatprep.subr.bf16.mxu0 0
      %2160 = vmatpush2.bf16.msra.mxu0 0
      %2161 = vmatprep.mubr.bf16.mxu0 0
      %2162 = vmatmul.mubr.bf16.gmra.mxu0 %v2127
      %v2163 = vpop.f32.mrf.mxu0
      %v2164 = vadd.f32 0.0, %v2163
      %v2165 = vpop.f32.mrf.mxu0
      %v2166 = vpop.f32.mrf.mxu0
      %v2167 = vadd.f32 0.0, %v2166
      %v2168 = vpop.f32.mrf.mxu0
      %2169 = vdwg.mxu0
      %v2170 = vadd.f32 %v1035, %v2164
      %v2171 = vadd.f32 %v1036, %v2167
      %v2172 = vld [vmem:[%s966] sm:$0x1]
      %v2174 = vlaneseq
      %v2175 = vshrl.u32 %v2174, 7
      %v2176 = vsub.s32 0, %v2175
      %v2177 = vrot.slane %v2172, %v2176
      %v2179 = vadd.f32 %v2170, %v2177
      %v2180 = vadd.f32 %v2171, %v2177
      %v2181 = vld [vmem:[%s999] sm:$0x1]
      %v2182 = vld [vmem:[%s1002] sm:$0x1]
      %v2183 = vsel %vm1039, %v2179, 0.0
      %2184 = vadd.xlane.f32.xlu0 %v2183
      %v2185 = vpop.xlane.xlu0 %2184
      %v2186 = vsel %vm1039, %v2180, 0.0
      %2187 = vadd.xlane.f32.xlu0 %v2186
      %v2188 = vpop.xlane.xlu0 %2187
      %v2189 = vmul.f32 %v2185, %v1046
      %v2190 = vmul.f32 %v2188, %v1046
      %v2191 = vsub.f32 %v2179, %v2189
      %v2192 = vsub.f32 %v2180, %v2190
      %v2193 = vmul.f32 %v2191, %v2191
      %v2194 = vmul.f32 %v2192, %v2192
      %v2195 = vsel %vm1039, %v2193, 0.0
      %2196 = vadd.xlane.f32.xlu0 %v2195
      %v2197 = vpop.xlane.xlu0 %2196
      %v2198 = vsel %vm1039, %v2194, 0.0
      %2199 = vadd.xlane.f32.xlu0 %v2198
      %v2200 = vpop.xlane.xlu0 %2199
      %v2201 = vmul.f32 %v2197, 0.032258064
      %v2202 = vmul.f32 %v2200, 0.032258064
      %v2203 = vrsqrt.pop %v2201
      %v2204 = vmul.f32 %v2201, %v2203
      %vm2205 = vcmp.eq.f32.partialorder %v2201, inf
      %v2206 = vsel %vm2205, %v2201, %v2204
      %vm2207 = vcmp.eq.f32.partialorder %v2201, 0.0
      %v2208 = vand.u32 %v2201, 2147483648
      %v2209 = vsel %vm2207, %v2208, %v2206
      %v2210 = vrsqrt.pop %v2202
      %v2211 = vmul.f32 %v2202, %v2210
      %vm2212 = vcmp.eq.f32.partialorder %v2202, inf
      %v2213 = vsel %vm2212, %v2202, %v2211
      %vm2214 = vcmp.eq.f32.partialorder %v2202, 0.0
      %v2215 = vand.u32 %v2202, 2147483648
      %v2216 = vsel %vm2214, %v2215, %v2213
      %v2217 = vadd.f32 %v2209, 1e-06
      %v2218 = vadd.f32 %v2216, 1e-06
      %v2219 = vrcp.pop %v2217
      %v2220 = vrcp.pop %v2218
      %v2222 = vlaneseq
      %v2223 = vshrl.u32 %v2222, 7
      %v2224 = vsub.s32 0, %v2223
      %v2225 = vrot.slane %v2181, %v2224
      %v2227 = vmul.f32 %v2225, %v2191
      %v2228 = vmul.f32 %v2225, %v2192
      %v2229 = vmul.f32 %v2227, %v2219
      %v2230 = vmul.f32 %v2228, %v2220
      %v2232 = vlaneseq
      %v2233 = vshrl.u32 %v2232, 7
      %v2234 = vsub.s32 0, %v2233
      %v2235 = vrot.slane %v2182, %v2234
      %v2237 = vadd.f32 %v2229, %v2235
      %v2238 = vadd.f32 %v2230, %v2235
      %v2239 = vpack.c.bf16 %v2238, %v2237
      %v2240 = vld [vmem:[%s977] sm:$0xf]
      %v2241 = vld [vmem:[%s977 + $0x4] sm:$0xf]
      %v2242 = vld [vmem:[%s977 + $0x8] sm:$0xf]
      %v2243 = vld [vmem:[%s977 + $0xc] sm:$0xf]
      %v2244 = vld [vmem:[%s980] sm:$0x1]
      %v2246 = vlaneseq
      %v2247 = vshrl.u32 %v2246, 7
      %v2248 = vsub.s32 0, %v2247
      %v2249 = vrot.slane %v2244, %v2248
      %v2255 = vunpack.c.l.b16 %v2240
      %v2256 = vunpack.c.l.b16 %v2241
      %v2257 = vunpack.c.l.b16 %v2242
      %v2258 = vunpack.c.l.b16 %v2243
      %v2259 = vpack.c.b16 %v2256, %v2255
      %v2260 = vpack.c.b16 %v2258, %v2257
      %v2264 = vsel %vm1039, %v2239, 0
      %2266 = vmatprep.subr.bf16.mxu0 0
      %2267 = vmatpush1.bf16.msra.mxu0 0
      %2268 = vmatprep.subr.bf16.mxu0 0
      %2269 = vmatpush1.bf16.msra.mxu0 0
      %2270 = vmatprep.subr.bf16.mxu0 0
      %2271 = vmatpush1.bf16.msra.mxu0 0
      %2272 = vmatprep.subr.bf16.mxu0 0
      %2273 = vmatpush1.bf16.msra.mxu0 0
      %2274 = vmatprep.subr.bf16.mxu0 0
      %2275 = vmatpush1.bf16.msra.mxu0 0
      %2276 = vmatprep.subr.bf16.mxu0 0
      %2277 = vmatpush1.bf16.msra.mxu0 0
      %2278 = vmatprep.subr.bf16.mxu0 0
      %2279 = vmatpush1.bf16.msra.mxu0 %v2260
      %2280 = vmatprep.subr.bf16.mxu0 0
      %2281 = vmatpush1.bf16.msra.mxu0 %v2259
      %2282 = vmatprep.subr.bf16.mxu0 0
      %2283 = vmatpush2.bf16.msra.mxu0 0
      %2284 = vmatprep.subr.bf16.mxu0 0
      %2285 = vmatpush2.bf16.msra.mxu0 0
      %2286 = vmatprep.subr.bf16.mxu0 0
      %2287 = vmatpush2.bf16.msra.mxu0 0
      %2288 = vmatprep.subr.bf16.mxu0 0
      %2289 = vmatpush2.bf16.msra.mxu0 0
      %2290 = vmatprep.subr.bf16.mxu0 0
      %2291 = vmatpush2.bf16.msra.mxu0 0
      %2292 = vmatprep.subr.bf16.mxu0 0
      %2293 = vmatpush2.bf16.msra.mxu0 0
      %2294 = vmatprep.subr.bf16.mxu0 0
      %2295 = vmatpush2.bf16.msra.mxu0 0
      %2296 = vmatprep.subr.bf16.mxu0 0
      %2297 = vmatpush2.bf16.msra.mxu0 0
      %2298 = vmatprep.mubr.bf16.mxu0 0
      %2299 = vmatmul.mubr.bf16.gmra.mxu0 %v2264
      %v2300 = vpop.f32.mrf.mxu0
      %v2301 = vadd.f32 %v2249, %v2300
      %v2302 = vpop.f32.mrf.mxu0
      %v2303 = vpop.f32.mrf.mxu0
      %v2304 = vadd.f32 %v2249, %v2303
      %v2305 = vpop.f32.mrf.mxu0
      %2306 = vdwg.mxu0
      %v2307 = vld [vmem:[%s1] sm:$0xf]
      %v2308 = vld [vmem:[%s1 + $0x4] sm:$0xf]
      %v2309 = vld [vmem:[%s985] sm:$0xf]
      %v2310 = vld [vmem:[%s985 + $0x4] sm:$0xf]
      %v2311 = vld [vmem:[%s985 + $0x8] sm:$0xf]
      %v2312 = vld [vmem:[%s985 + $0xc] sm:$0xf]
      %v2313 = vld [vmem:[%s988] sm:$0x1]
      %v2315 = vlaneseq
      %v2316 = vshrl.u32 %v2315, 7
      %v2317 = vsub.s32 0, %v2316
      %v2318 = vrot.slane %v2313, %v2317
      %v2322 = vunpack.c.l.b16 %v2307
      %v2323 = vunpack.c.l.b16 %v2308
      %v2324 = vpack.c.b16 %v2323, %v2322
      %v2329 = vunpack.c.l.b16 %v2309
      %v2330 = vunpack.c.l.b16 %v2310
      %v2331 = vunpack.c.l.b16 %v2311
      %v2332 = vunpack.c.l.b16 %v2312
      %v2333 = vpack.c.b16 %v2330, %v2329
      %v2334 = vpack.c.b16 %v2332, %v2331
      %v2338 = vsel %vm1039, %v2324, 0
      %2340 = vmatprep.subr.bf16.mxu0 0
      %2341 = vmatpush1.bf16.msra.mxu0 0
      %2342 = vmatprep.subr.bf16.mxu0 0
      %2343 = vmatpush1.bf16.msra.mxu0 0
      %2344 = vmatprep.subr.bf16.mxu0 0
      %2345 = vmatpush1.bf16.msra.mxu0 0
      %2346 = vmatprep.subr.bf16.mxu0 0
      %2347 = vmatpush1.bf16.msra.mxu0 0
      %2348 = vmatprep.subr.bf16.mxu0 0
      %2349 = vmatpush1.bf16.msra.mxu0 0
      %2350 = vmatprep.subr.bf16.mxu0 0
      %2351 = vmatpush1.bf16.msra.mxu0 0
      %2352 = vmatprep.subr.bf16.mxu0 0
      %2353 = vmatpush1.bf16.msra.mxu0 %v2334
      %2354 = vmatprep.subr.bf16.mxu0 0
      %2355 = vmatpush1.bf16.msra.mxu0 %v2333
      %2356 = vmatprep.subr.bf16.mxu0 0
      %2357 = vmatpush2.bf16.msra.mxu0 0
      %2358 = vmatprep.subr.bf16.mxu0 0
      %2359 = vmatpush2.bf16.msra.mxu0 0
      %2360 = vmatprep.subr.bf16.mxu0 0
      %2361 = vmatpush2.bf16.msra.mxu0 0
      %2362 = vmatprep.subr.bf16.mxu0 0
      %2363 = vmatpush2.bf16.msra.mxu0 0
      %2364 = vmatprep.subr.bf16.mxu0 0
      %2365 = vmatpush2.bf16.msra.mxu0 0
      %2366 = vmatprep.subr.bf16.mxu0 0
      %2367 = vmatpush2.bf16.msra.mxu0 0
      %2368 = vmatprep.subr.bf16.mxu0 0
      %2369 = vmatpush2.bf16.msra.mxu0 0
      %2370 = vmatprep.subr.bf16.mxu0 0
      %2371 = vmatpush2.bf16.msra.mxu0 0
      %2372 = vmatprep.mubr.bf16.mxu0 0
      %2373 = vmatmul.mubr.bf16.gmra.mxu0 %v2338
      %v2374 = vpop.f32.mrf.mxu0
      %v2375 = vadd.f32 %v2318, %v2374
      %v2376 = vpop.f32.mrf.mxu0
      %v2377 = vpop.f32.mrf.mxu0
      %v2378 = vadd.f32 %v2318, %v2377
      %v2379 = vpop.f32.mrf.mxu0
      %2380 = vdwg.mxu0
      %v2381 = vld [vmem:[%s3] sm:$0x1]
      %v2382 = vld [vmem:[%s3 + $0x1] sm:$0x1]
      %2385 = vrot.lane.b32.xlu0 %v2301, 120
      %v2386 = vpop.permute.xlu0 %2385
      %2387 = vrot.lane.b32.xlu0 %v2304, 120
      %v2388 = vpop.permute.xlu0 %2387
      %2391 = vrot.lane.b32.xlu0 %v2301, 112
      %v2392 = vpop.permute.xlu0 %2391
      %2393 = vrot.lane.b32.xlu0 %v2304, 112
      %v2394 = vpop.permute.xlu0 %2393
      %2397 = vrot.lane.b32.xlu0 %v2301, 104
      %v2398 = vpop.permute.xlu0 %2397
      %2399 = vrot.lane.b32.xlu0 %v2304, 104
      %v2400 = vpop.permute.xlu0 %2399
      %2405 = vrot.lane.b32.xlu0 %v2375, 120
      %v2406 = vpop.permute.xlu0 %2405
      %2407 = vrot.lane.b32.xlu0 %v2378, 120
      %v2408 = vpop.permute.xlu0 %2407
      %2411 = vrot.lane.b32.xlu0 %v2375, 112
      %v2412 = vpop.permute.xlu0 %2411
      %2413 = vrot.lane.b32.xlu0 %v2378, 112
      %v2414 = vpop.permute.xlu0 %2413
      %2417 = vrot.lane.b32.xlu0 %v2375, 104
      %v2418 = vpop.permute.xlu0 %2417
      %2419 = vrot.lane.b32.xlu0 %v2378, 104
      %v2420 = vpop.permute.xlu0 %2419
      %v2423 = vpack.c.bf16 %v2301, %v2301
      %v2424 = vpack.c.bf16 %v2304, %v2304
      %v2425 = vpack.c.bf16 %v2386, %v2386
      %v2426 = vpack.c.bf16 %v2388, %v2388
      %v2427 = vpack.c.bf16 %v2392, %v2392
      %v2428 = vpack.c.bf16 %v2394, %v2394
      %v2429 = vpack.c.bf16 %v2398, %v2398
      %v2430 = vpack.c.bf16 %v2400, %v2400
      %v2431 = vpack.c.bf16 %v2375, %v2375
      %v2432 = vpack.c.bf16 %v2378, %v2378
      %v2433 = vpack.c.bf16 %v2406, %v2406
      %v2434 = vpack.c.bf16 %v2408, %v2408
      %v2435 = vpack.c.bf16 %v2412, %v2412
      %v2436 = vpack.c.bf16 %v2414, %v2414
      %v2437 = vpack.c.bf16 %v2418, %v2418
      %v2438 = vpack.c.bf16 %v2420, %v2420
      %v2440 = vsel %vm1198, %v2423, 0
      %v2443 = vsel %vm1198, %v2431, 0
      %2445 = vmatprep.subr.bf16.mxu0 0
      %2446 = vmatpush1.bf16.xpose.msra.mxu0 0
      %2447 = vmatprep.subr.bf16.mxu0 0
      %2448 = vmatpush1.bf16.xpose.msra.mxu0 0
      %2449 = vmatprep.subr.bf16.mxu0 0
      %2450 = vmatpush1.bf16.xpose.msra.mxu0 0
      %2451 = vmatprep.subr.bf16.mxu0 0
      %2452 = vmatpush1.bf16.xpose.msra.mxu0 0
      %2453 = vmatprep.subr.bf16.mxu0 0
      %2454 = vmatpush1.bf16.xpose.msra.mxu0 0
      %2455 = vmatprep.subr.bf16.mxu0 0
      %2456 = vmatpush1.bf16.xpose.msra.mxu0 0
      %2457 = vmatprep.subr.bf16.mxu0 0
      %2458 = vmatpush1.bf16.xpose.msra.mxu0 0
      %2459 = vmatprep.subr.bf16.mxu0 0
      %2460 = vmatpush1.bf16.xpose.msra.mxu0 %v2443
      %2461 = vmatprep.subr.bf16.mxu0 0
      %2462 = vmatpush2.bf16.xpose.msra.mxu0 0
      %2463 = vmatprep.subr.bf16.mxu0 0
      %2464 = vmatpush2.bf16.xpose.msra.mxu0 0
      %2465 = vmatprep.subr.bf16.mxu0 0
      %2466 = vmatpush2.bf16.xpose.msra.mxu0 0
      %2467 = vmatprep.subr.bf16.mxu0 0
      %2468 = vmatpush2.bf16.xpose.msra.mxu0 0
      %2469 = vmatprep.subr.bf16.mxu0 0
      %2470 = vmatpush2.bf16.xpose.msra.mxu0 0
      %2471 = vmatprep.subr.bf16.mxu0 0
      %2472 = vmatpush2.bf16.xpose.msra.mxu0 0
      %2473 = vmatprep.subr.bf16.mxu0 0
      %2474 = vmatpush2.bf16.xpose.msra.mxu0 0
      %2475 = vmatprep.subr.bf16.mxu0 0
      %2476 = vmatpush2.bf16.xpose.msra.mxu0 0
      %2477 = vmatprep.mubr.bf16.mxu0 0
      %2478 = vmatmul.mubr.bf16.gmra.mxu0 %v2440
      %v2479 = vpop.f32.mrf.mxu0
      %v2480 = vadd.f32 0.0, %v2479
      %v2481 = vpop.f32.mrf.mxu0
      %v2482 = vpop.f32.mrf.mxu0
      %v2483 = vpop.f32.mrf.mxu0
      %2484 = vdwg.mxu0
      %v2486 = vsel %vm1198, %v2424, 0
      %v2489 = vsel %vm1198, %v2432, 0
      %2491 = vmatprep.subr.bf16.mxu0 0
      %2492 = vmatpush1.bf16.xpose.msra.mxu0 0
      %2493 = vmatprep.subr.bf16.mxu0 0
      %2494 = vmatpush1.bf16.xpose.msra.mxu0 0
      %2495 = vmatprep.subr.bf16.mxu0 0
      %2496 = vmatpush1.bf16.xpose.msra.mxu0 0
      %2497 = vmatprep.subr.bf16.mxu0 0
      %2498 = vmatpush1.bf16.xpose.msra.mxu0 0
      %2499 = vmatprep.subr.bf16.mxu0 0
      %2500 = vmatpush1.bf16.xpose.msra.mxu0 0
      %2501 = vmatprep.subr.bf16.mxu0 0
      %2502 = vmatpush1.bf16.xpose.msra.mxu0 0
      %2503 = vmatprep.subr.bf16.mxu0 0
      %2504 = vmatpush1.bf16.xpose.msra.mxu0 0
      %2505 = vmatprep.subr.bf16.mxu0 0
      %2506 = vmatpush1.bf16.xpose.msra.mxu0 %v2489
      %2507 = vmatprep.subr.bf16.mxu0 0
      %2508 = vmatpush2.bf16.xpose.msra.mxu0 0
      %2509 = vmatprep.subr.bf16.mxu0 0
      %2510 = vmatpush2.bf16.xpose.msra.mxu0 0
      %2511 = vmatprep.subr.bf16.mxu0 0
      %2512 = vmatpush2.bf16.xpose.msra.mxu0 0
      %2513 = vmatprep.subr.bf16.mxu0 0
      %2514 = vmatpush2.bf16.xpose.msra.mxu0 0
      %2515 = vmatprep.subr.bf16.mxu0 0
      %2516 = vmatpush2.bf16.xpose.msra.mxu0 0
      %2517 = vmatprep.subr.bf16.mxu0 0
      %2518 = vmatpush2.bf16.xpose.msra.mxu0 0
      %2519 = vmatprep.subr.bf16.mxu0 0
      %2520 = vmatpush2.bf16.xpose.msra.mxu0 0
      %2521 = vmatprep.subr.bf16.mxu0 0
      %2522 = vmatpush2.bf16.xpose.msra.mxu0 0
      %2523 = vmatprep.mubr.bf16.mxu0 0
      %2524 = vmatmul.mubr.bf16.gmra.mxu0 %v2486
      %v2525 = vpop.f32.mrf.mxu0
      %v2526 = vadd.f32 0.0, %v2525
      %v2527 = vpop.f32.mrf.mxu0
      %v2528 = vpop.f32.mrf.mxu0
      %v2529 = vpop.f32.mrf.mxu0
      %2530 = vdwg.mxu0
      %v2532 = vsel %vm1198, %v2425, 0
      %v2535 = vsel %vm1198, %v2433, 0
      %2537 = vmatprep.subr.bf16.mxu0 0
      %2538 = vmatpush1.bf16.xpose.msra.mxu0 0
      %2539 = vmatprep.subr.bf16.mxu0 0
      %2540 = vmatpush1.bf16.xpose.msra.mxu0 0
      %2541 = vmatprep.subr.bf16.mxu0 0
      %2542 = vmatpush1.bf16.xpose.msra.mxu0 0
      %2543 = vmatprep.subr.bf16.mxu0 0
      %2544 = vmatpush1.bf16.xpose.msra.mxu0 0
      %2545 = vmatprep.subr.bf16.mxu0 0
      %2546 = vmatpush1.bf16.xpose.msra.mxu0 0
      %2547 = vmatprep.subr.bf16.mxu0 0
      %2548 = vmatpush1.bf16.xpose.msra.mxu0 0
      %2549 = vmatprep.subr.bf16.mxu0 0
      %2550 = vmatpush1.bf16.xpose.msra.mxu0 0
      %2551 = vmatprep.subr.bf16.mxu0 0
      %2552 = vmatpush1.bf16.xpose.msra.mxu0 %v2535
      %2553 = vmatprep.subr.bf16.mxu0 0
      %2554 = vmatpush2.bf16.xpose.msra.mxu0 0
      %2555 = vmatprep.subr.bf16.mxu0 0
      %2556 = vmatpush2.bf16.xpose.msra.mxu0 0
      %2557 = vmatprep.subr.bf16.mxu0 0
      %2558 = vmatpush2.bf16.xpose.msra.mxu0 0
      %2559 = vmatprep.subr.bf16.mxu0 0
      %2560 = vmatpush2.bf16.xpose.msra.mxu0 0
      %2561 = vmatprep.subr.bf16.mxu0 0
      %2562 = vmatpush2.bf16.xpose.msra.mxu0 0
      %2563 = vmatprep.subr.bf16.mxu0 0
      %2564 = vmatpush2.bf16.xpose.msra.mxu0 0
      %2565 = vmatprep.subr.bf16.mxu0 0
      %2566 = vmatpush2.bf16.xpose.msra.mxu0 0
      %2567 = vmatprep.subr.bf16.mxu0 0
      %2568 = vmatpush2.bf16.xpose.msra.mxu0 0
      %2569 = vmatprep.mubr.bf16.mxu0 0
      %2570 = vmatmul.mubr.bf16.gmra.mxu0 %v2532
      %v2571 = vpop.f32.mrf.mxu0
      %v2572 = vadd.f32 0.0, %v2571
      %v2573 = vpop.f32.mrf.mxu0
      %v2574 = vpop.f32.mrf.mxu0
      %v2575 = vpop.f32.mrf.mxu0
      %2576 = vdwg.mxu0
      %v2578 = vsel %vm1198, %v2426, 0
      %v2581 = vsel %vm1198, %v2434, 0
      %2583 = vmatprep.subr.bf16.mxu0 0
      %2584 = vmatpush1.bf16.xpose.msra.mxu0 0
      %2585 = vmatprep.subr.bf16.mxu0 0
      %2586 = vmatpush1.bf16.xpose.msra.mxu0 0
      %2587 = vmatprep.subr.bf16.mxu0 0
      %2588 = vmatpush1.bf16.xpose.msra.mxu0 0
      %2589 = vmatprep.subr.bf16.mxu0 0
      %2590 = vmatpush1.bf16.xpose.msra.mxu0 0
      %2591 = vmatprep.subr.bf16.mxu0 0
      %2592 = vmatpush1.bf16.xpose.msra.mxu0 0
      %2593 = vmatprep.subr.bf16.mxu0 0
      %2594 = vmatpush1.bf16.xpose.msra.mxu0 0
      %2595 = vmatprep.subr.bf16.mxu0 0
      %2596 = vmatpush1.bf16.xpose.msra.mxu0 0
      %2597 = vmatprep.subr.bf16.mxu0 0
      %2598 = vmatpush1.bf16.xpose.msra.mxu0 %v2581
      %2599 = vmatprep.subr.bf16.mxu0 0
      %2600 = vmatpush2.bf16.xpose.msra.mxu0 0
      %2601 = vmatprep.subr.bf16.mxu0 0
      %2602 = vmatpush2.bf16.xpose.msra.mxu0 0
      %2603 = vmatprep.subr.bf16.mxu0 0
      %2604 = vmatpush2.bf16.xpose.msra.mxu0 0
      %2605 = vmatprep.subr.bf16.mxu0 0
      %2606 = vmatpush2.bf16.xpose.msra.mxu0 0
      %2607 = vmatprep.subr.bf16.mxu0 0
      %2608 = vmatpush2.bf16.xpose.msra.mxu0 0
      %2609 = vmatprep.subr.bf16.mxu0 0
      %2610 = vmatpush2.bf16.xpose.msra.mxu0 0
      %2611 = vmatprep.subr.bf16.mxu0 0
      %2612 = vmatpush2.bf16.xpose.msra.mxu0 0
      %2613 = vmatprep.subr.bf16.mxu0 0
      %2614 = vmatpush2.bf16.xpose.msra.mxu0 0
      %2615 = vmatprep.mubr.bf16.mxu0 0
      %2616 = vmatmul.mubr.bf16.gmra.mxu0 %v2578
      %v2617 = vpop.f32.mrf.mxu0
      %v2618 = vadd.f32 0.0, %v2617
      %v2619 = vpop.f32.mrf.mxu0
      %v2620 = vpop.f32.mrf.mxu0
      %v2621 = vpop.f32.mrf.mxu0
      %2622 = vdwg.mxu0
      %v2624 = vsel %vm1198, %v2427, 0
      %v2627 = vsel %vm1198, %v2435, 0
      %2629 = vmatprep.subr.bf16.mxu0 0
      %2630 = vmatpush1.bf16.xpose.msra.mxu0 0
      %2631 = vmatprep.subr.bf16.mxu0 0
      %2632 = vmatpush1.bf16.xpose.msra.mxu0 0
      %2633 = vmatprep.subr.bf16.mxu0 0
      %2634 = vmatpush1.bf16.xpose.msra.mxu0 0
      %2635 = vmatprep.subr.bf16.mxu0 0
      %2636 = vmatpush1.bf16.xpose.msra.mxu0 0
      %2637 = vmatprep.subr.bf16.mxu0 0
      %2638 = vmatpush1.bf16.xpose.msra.mxu0 0
      %2639 = vmatprep.subr.bf16.mxu0 0
      %2640 = vmatpush1.bf16.xpose.msra.mxu0 0
      %2641 = vmatprep.subr.bf16.mxu0 0
      %2642 = vmatpush1.bf16.xpose.msra.mxu0 0
      %2643 = vmatprep.subr.bf16.mxu0 0
      %2644 = vmatpush1.bf16.xpose.msra.mxu0 %v2627
      %2645 = vmatprep.subr.bf16.mxu0 0
      %2646 = vmatpush2.bf16.xpose.msra.mxu0 0
      %2647 = vmatprep.subr.bf16.mxu0 0
      %2648 = vmatpush2.bf16.xpose.msra.mxu0 0
      %2649 = vmatprep.subr.bf16.mxu0 0
      %2650 = vmatpush2.bf16.xpose.msra.mxu0 0
      %2651 = vmatprep.subr.bf16.mxu0 0
      %2652 = vmatpush2.bf16.xpose.msra.mxu0 0
      %2653 = vmatprep.subr.bf16.mxu0 0
      %2654 = vmatpush2.bf16.xpose.msra.mxu0 0
      %2655 = vmatprep.subr.bf16.mxu0 0
      %2656 = vmatpush2.bf16.xpose.msra.mxu0 0
      %2657 = vmatprep.subr.bf16.mxu0 0
      %2658 = vmatpush2.bf16.xpose.msra.mxu0 0
      %2659 = vmatprep.subr.bf16.mxu0 0
      %2660 = vmatpush2.bf16.xpose.msra.mxu0 0
      %2661 = vmatprep.mubr.bf16.mxu0 0
      %2662 = vmatmul.mubr.bf16.gmra.mxu0 %v2624
      %v2663 = vpop.f32.mrf.mxu0
      %v2664 = vadd.f32 0.0, %v2663
      %v2665 = vpop.f32.mrf.mxu0
      %v2666 = vpop.f32.mrf.mxu0
      %v2667 = vpop.f32.mrf.mxu0
      %2668 = vdwg.mxu0
      %v2670 = vsel %vm1198, %v2428, 0
      %v2673 = vsel %vm1198, %v2436, 0
      %2675 = vmatprep.subr.bf16.mxu0 0
      %2676 = vmatpush1.bf16.xpose.msra.mxu0 0
      %2677 = vmatprep.subr.bf16.mxu0 0
      %2678 = vmatpush1.bf16.xpose.msra.mxu0 0
      %2679 = vmatprep.subr.bf16.mxu0 0
      %2680 = vmatpush1.bf16.xpose.msra.mxu0 0
      %2681 = vmatprep.subr.bf16.mxu0 0
      %2682 = vmatpush1.bf16.xpose.msra.mxu0 0
      %2683 = vmatprep.subr.bf16.mxu0 0
      %2684 = vmatpush1.bf16.xpose.msra.mxu0 0
      %2685 = vmatprep.subr.bf16.mxu0 0
      %2686 = vmatpush1.bf16.xpose.msra.mxu0 0
      %2687 = vmatprep.subr.bf16.mxu0 0
      %2688 = vmatpush1.bf16.xpose.msra.mxu0 0
      %2689 = vmatprep.subr.bf16.mxu0 0
      %2690 = vmatpush1.bf16.xpose.msra.mxu0 %v2673
      %2691 = vmatprep.subr.bf16.mxu0 0
      %2692 = vmatpush2.bf16.xpose.msra.mxu0 0
      %2693 = vmatprep.subr.bf16.mxu0 0
      %2694 = vmatpush2.bf16.xpose.msra.mxu0 0
      %2695 = vmatprep.subr.bf16.mxu0 0
      %2696 = vmatpush2.bf16.xpose.msra.mxu0 0
      %2697 = vmatprep.subr.bf16.mxu0 0
      %2698 = vmatpush2.bf16.xpose.msra.mxu0 0
      %2699 = vmatprep.subr.bf16.mxu0 0
      %2700 = vmatpush2.bf16.xpose.msra.mxu0 0
      %2701 = vmatprep.subr.bf16.mxu0 0
      %2702 = vmatpush2.bf16.xpose.msra.mxu0 0
      %2703 = vmatprep.subr.bf16.mxu0 0
      %2704 = vmatpush2.bf16.xpose.msra.mxu0 0
      %2705 = vmatprep.subr.bf16.mxu0 0
      %2706 = vmatpush2.bf16.xpose.msra.mxu0 0
      %2707 = vmatprep.mubr.bf16.mxu0 0
      %2708 = vmatmul.mubr.bf16.gmra.mxu0 %v2670
      %v2709 = vpop.f32.mrf.mxu0
      %v2710 = vadd.f32 0.0, %v2709
      %v2711 = vpop.f32.mrf.mxu0
      %v2712 = vpop.f32.mrf.mxu0
      %v2713 = vpop.f32.mrf.mxu0
      %2714 = vdwg.mxu0
      %v2716 = vsel %vm1198, %v2429, 0
      %v2719 = vsel %vm1198, %v2437, 0
      %2721 = vmatprep.subr.bf16.mxu0 0
      %2722 = vmatpush1.bf16.xpose.msra.mxu0 0
      %2723 = vmatprep.subr.bf16.mxu0 0
      %2724 = vmatpush1.bf16.xpose.msra.mxu0 0
      %2725 = vmatprep.subr.bf16.mxu0 0
      %2726 = vmatpush1.bf16.xpose.msra.mxu0 0
      %2727 = vmatprep.subr.bf16.mxu0 0
      %2728 = vmatpush1.bf16.xpose.msra.mxu0 0
      %2729 = vmatprep.subr.bf16.mxu0 0
      %2730 = vmatpush1.bf16.xpose.msra.mxu0 0
      %2731 = vmatprep.subr.bf16.mxu0 0
      %2732 = vmatpush1.bf16.xpose.msra.mxu0 0
      %2733 = vmatprep.subr.bf16.mxu0 0
      %2734 = vmatpush1.bf16.xpose.msra.mxu0 0
      %2735 = vmatprep.subr.bf16.mxu0 0
      %2736 = vmatpush1.bf16.xpose.msra.mxu0 %v2719
      %2737 = vmatprep.subr.bf16.mxu0 0
      %2738 = vmatpush2.bf16.xpose.msra.mxu0 0
      %2739 = vmatprep.subr.bf16.mxu0 0
      %2740 = vmatpush2.bf16.xpose.msra.mxu0 0
      %2741 = vmatprep.subr.bf16.mxu0 0
      %2742 = vmatpush2.bf16.xpose.msra.mxu0 0
      %2743 = vmatprep.subr.bf16.mxu0 0
      %2744 = vmatpush2.bf16.xpose.msra.mxu0 0
      %2745 = vmatprep.subr.bf16.mxu0 0
      %2746 = vmatpush2.bf16.xpose.msra.mxu0 0
      %2747 = vmatprep.subr.bf16.mxu0 0
      %2748 = vmatpush2.bf16.xpose.msra.mxu0 0
      %2749 = vmatprep.subr.bf16.mxu0 0
      %2750 = vmatpush2.bf16.xpose.msra.mxu0 0
      %2751 = vmatprep.subr.bf16.mxu0 0
      %2752 = vmatpush2.bf16.xpose.msra.mxu0 0
      %2753 = vmatprep.mubr.bf16.mxu0 0
      %2754 = vmatmul.mubr.bf16.gmra.mxu0 %v2716
      %v2755 = vpop.f32.mrf.mxu0
      %v2756 = vadd.f32 0.0, %v2755
      %v2757 = vpop.f32.mrf.mxu0
      %v2758 = vpop.f32.mrf.mxu0
      %v2759 = vpop.f32.mrf.mxu0
      %2760 = vdwg.mxu0
      %v2762 = vsel %vm1198, %v2430, 0
      %v2765 = vsel %vm1198, %v2438, 0
      %2767 = vmatprep.subr.bf16.mxu0 0
      %2768 = vmatpush1.bf16.xpose.msra.mxu0 0
      %2769 = vmatprep.subr.bf16.mxu0 0
      %2770 = vmatpush1.bf16.xpose.msra.mxu0 0
      %2771 = vmatprep.subr.bf16.mxu0 0
      %2772 = vmatpush1.bf16.xpose.msra.mxu0 0
      %2773 = vmatprep.subr.bf16.mxu0 0
      %2774 = vmatpush1.bf16.xpose.msra.mxu0 0
      %2775 = vmatprep.subr.bf16.mxu0 0
      %2776 = vmatpush1.bf16.xpose.msra.mxu0 0
      %2777 = vmatprep.subr.bf16.mxu0 0
      %2778 = vmatpush1.bf16.xpose.msra.mxu0 0
      %2779 = vmatprep.subr.bf16.mxu0 0
      %2780 = vmatpush1.bf16.xpose.msra.mxu0 0
      %2781 = vmatprep.subr.bf16.mxu0 0
      %2782 = vmatpush1.bf16.xpose.msra.mxu0 %v2765
      %2783 = vmatprep.subr.bf16.mxu0 0
      %2784 = vmatpush2.bf16.xpose.msra.mxu0 0
      %2785 = vmatprep.subr.bf16.mxu0 0
      %2786 = vmatpush2.bf16.xpose.msra.mxu0 0
      %2787 = vmatprep.subr.bf16.mxu0 0
      %2788 = vmatpush2.bf16.xpose.msra.mxu0 0
      %2789 = vmatprep.subr.bf16.mxu0 0
      %2790 = vmatpush2.bf16.xpose.msra.mxu0 0
      %2791 = vmatprep.subr.bf16.mxu0 0
      %2792 = vmatpush2.bf16.xpose.msra.mxu0 0
      %2793 = vmatprep.subr.bf16.mxu0 0
      %2794 = vmatpush2.bf16.xpose.msra.mxu0 0
      %2795 = vmatprep.subr.bf16.mxu0 0
      %2796 = vmatpush2.bf16.xpose.msra.mxu0 0
      %2797 = vmatprep.subr.bf16.mxu0 0
      %2798 = vmatpush2.bf16.xpose.msra.mxu0 0
      %2799 = vmatprep.mubr.bf16.mxu0 0
      %2800 = vmatmul.mubr.bf16.gmra.mxu0 %v2762
      %v2801 = vpop.f32.mrf.mxu0
      %v2802 = vadd.f32 0.0, %v2801
      %v2803 = vpop.f32.mrf.mxu0
      %v2804 = vpop.f32.mrf.mxu0
      %v2805 = vpop.f32.mrf.mxu0
      %2806 = vdwg.mxu0
      %v2809 = vlaneseq
      %v2810 = vshrl.u32 %v2809, 7
      %v2811 = vsub.s32 0, %v2810
      %v2812 = vrot.slane %v2381, %v2811
      %v2813 = vlaneseq
      %v2814 = vshrl.u32 %v2813, 7
      %v2815 = vsub.s32 0, %v2814
      %v2816 = vrot.slane %v2382, %v2815
      %v2819 = vadd.f32 %v2480, %v2812
      %v2820 = vadd.f32 %v2526, %v2816
      %v2821 = vadd.f32 %v2572, %v2812
      %v2822 = vadd.f32 %v2618, %v2816
      %v2823 = vadd.f32 %v2664, %v2812
      %v2824 = vadd.f32 %v2710, %v2816
      %v2825 = vadd.f32 %v2756, %v2812
      %v2826 = vadd.f32 %v2802, %v2816
      %v2827 = vsel %vm1198, %v2819, -inf
      %2828 = vmax.xlane.f32.xlu0 %v2827
      %v2829 = vpop.xlane.xlu0 %2828
      %v2830 = vsel %vm1198, %v2820, -inf
      %2831 = vmax.xlane.f32.xlu0 %v2830
      %v2832 = vpop.xlane.xlu0 %2831
      %v2833 = vsel %vm1198, %v2821, -inf
      %2834 = vmax.xlane.f32.xlu0 %v2833
      %v2835 = vpop.xlane.xlu0 %2834
      %v2836 = vsel %vm1198, %v2822, -inf
      %2837 = vmax.xlane.f32.xlu0 %v2836
      %v2838 = vpop.xlane.xlu0 %2837
      %v2839 = vsel %vm1198, %v2823, -inf
      %2840 = vmax.xlane.f32.xlu0 %v2839
      %v2841 = vpop.xlane.xlu0 %2840
      %v2842 = vsel %vm1198, %v2824, -inf
      %2843 = vmax.xlane.f32.xlu0 %v2842
      %v2844 = vpop.xlane.xlu0 %2843
      %v2845 = vsel %vm1198, %v2825, -inf
      %2846 = vmax.xlane.f32.xlu0 %v2845
      %v2847 = vpop.xlane.xlu0 %2846
      %v2848 = vsel %vm1198, %v2826, -inf
      %2849 = vmax.xlane.f32.xlu0 %v2848
      %v2850 = vpop.xlane.xlu0 %2849
      %v2851 = vsub.f32 %v2819, %v2829
      %v2852 = vsub.f32 %v2820, %v2832
      %v2853 = vsub.f32 %v2821, %v2835
      %v2854 = vsub.f32 %v2822, %v2838
      %v2855 = vsub.f32 %v2823, %v2841
      %v2856 = vsub.f32 %v2824, %v2844
      %v2857 = vsub.f32 %v2825, %v2847
      %v2858 = vsub.f32 %v2826, %v2850
      %v2859 = vmul.f32 %v2851, 1.442695
      %v2860 = vpow.pop %v2859
      %v2861 = vmul.f32 %v2852, 1.442695
      %v2862 = vpow.pop %v2861
      %v2863 = vmul.f32 %v2853, 1.442695
      %v2864 = vpow.pop %v2863
      %v2865 = vmul.f32 %v2854, 1.442695
      %v2866 = vpow.pop %v2865
      %v2867 = vmul.f32 %v2855, 1.442695
      %v2868 = vpow.pop %v2867
      %v2869 = vmul.f32 %v2856, 1.442695
      %v2870 = vpow.pop %v2869
      %v2871 = vmul.f32 %v2857, 1.442695
      %v2872 = vpow.pop %v2871
      %v2873 = vmul.f32 %v2858, 1.442695
      %v2874 = vpow.pop %v2873
      %v2875 = vsel %vm1198, %v2860, 0.0
      %2876 = vadd.xlane.f32.xlu0 %v2875
      %v2877 = vpop.xlane.xlu0 %2876
      %v2878 = vsel %vm1198, %v2862, 0.0
      %2879 = vadd.xlane.f32.xlu0 %v2878
      %v2880 = vpop.xlane.xlu0 %2879
      %v2881 = vsel %vm1198, %v2864, 0.0
      %2882 = vadd.xlane.f32.xlu0 %v2881
      %v2883 = vpop.xlane.xlu0 %2882
      %v2884 = vsel %vm1198, %v2866, 0.0
      %2885 = vadd.xlane.f32.xlu0 %v2884
      %v2886 = vpop.xlane.xlu0 %2885
      %v2887 = vsel %vm1198, %v2868, 0.0
      %2888 = vadd.xlane.f32.xlu0 %v2887
      %v2889 = vpop.xlane.xlu0 %2888
      %v2890 = vsel %vm1198, %v2870, 0.0
      %2891 = vadd.xlane.f32.xlu0 %v2890
      %v2892 = vpop.xlane.xlu0 %2891
      %v2893 = vsel %vm1198, %v2872, 0.0
      %2894 = vadd.xlane.f32.xlu0 %v2893
      %v2895 = vpop.xlane.xlu0 %2894
      %v2896 = vsel %vm1198, %v2874, 0.0
      %2897 = vadd.xlane.f32.xlu0 %v2896
      %v2898 = vpop.xlane.xlu0 %2897
      %v2899 = vrcp.pop %v2877
      %v2900 = vrcp.pop %v2880
      %v2901 = vrcp.pop %v2883
      %v2902 = vrcp.pop %v2886
      %v2903 = vrcp.pop %v2889
      %v2904 = vrcp.pop %v2892
      %v2905 = vrcp.pop %v2895
      %v2906 = vrcp.pop %v2898
      %v2907 = vmul.f32 %v2860, %v2899
      %v2908 = vmul.f32 %v2862, %v2900
      %v2909 = vmul.f32 %v2864, %v2901
      %v2910 = vmul.f32 %v2866, %v2902
      %v2911 = vmul.f32 %v2868, %v2903
      %v2912 = vmul.f32 %v2870, %v2904
      %v2913 = vmul.f32 %v2872, %v2905
      %v2914 = vmul.f32 %v2874, %v2906
      %v2915 = vpack.c.bf16 %v2907, %v2907
      %v2916 = vpack.c.bf16 %v2908, %v2908
      %v2917 = vpack.c.bf16 %v2909, %v2909
      %v2918 = vpack.c.bf16 %v2910, %v2910
      %v2919 = vpack.c.bf16 %v2911, %v2911
      %v2920 = vpack.c.bf16 %v2912, %v2912
      %v2921 = vpack.c.bf16 %v2913, %v2913
      %v2922 = vpack.c.bf16 %v2914, %v2914
      %2924 = vrot.lane.b32.xlu0 %v2431, 96
      %v2925 = vpop.permute.xlu0 %2924
      %v2927 = vsel %vm1198, %v2915, 0
      %v2930 = vsel %vm1697, %v2925, 0
      %2932 = vmatprep.subr.bf16.mxu0 0
      %2933 = vmatpush1.bf16.msra.mxu0 0
      %2934 = vmatprep.subr.bf16.mxu0 0
      %2935 = vmatpush1.bf16.msra.mxu0 0
      %2936 = vmatprep.subr.bf16.mxu0 0
      %2937 = vmatpush1.bf16.msra.mxu0 0
      %2938 = vmatprep.subr.bf16.mxu0 0
      %2939 = vmatpush1.bf16.msra.mxu0 0
      %2940 = vmatprep.subr.bf16.mxu0 0
      %2941 = vmatpush1.bf16.msra.mxu0 0
      %2942 = vmatprep.subr.bf16.mxu0 0
      %2943 = vmatpush1.bf16.msra.mxu0 0
      %2944 = vmatprep.subr.bf16.mxu0 0
      %2945 = vmatpush1.bf16.msra.mxu0 0
      %2946 = vmatprep.subr.bf16.mxu0 0
      %2947 = vmatpush1.bf16.msra.mxu0 %v2930
      %2948 = vmatprep.subr.bf16.mxu0 0
      %2949 = vmatpush2.bf16.msra.mxu0 0
      %2950 = vmatprep.subr.bf16.mxu0 0
      %2951 = vmatpush2.bf16.msra.mxu0 0
      %2952 = vmatprep.subr.bf16.mxu0 0
      %2953 = vmatpush2.bf16.msra.mxu0 0
      %2954 = vmatprep.subr.bf16.mxu0 0
      %2955 = vmatpush2.bf16.msra.mxu0 0
      %2956 = vmatprep.subr.bf16.mxu0 0
      %2957 = vmatpush2.bf16.msra.mxu0 0
      %2958 = vmatprep.subr.bf16.mxu0 0
      %2959 = vmatpush2.bf16.msra.mxu0 0
      %2960 = vmatprep.subr.bf16.mxu0 0
      %2961 = vmatpush2.bf16.msra.mxu0 0
      %2962 = vmatprep.subr.bf16.mxu0 0
      %2963 = vmatpush2.bf16.msra.mxu0 0
      %2964 = vmatprep.mubr.bf16.mxu0 0
      %2965 = vmatmul.mubr.bf16.gmra.mxu0 %v2927
      %v2966 = vpop.f32.mrf.mxu0
      %v2967 = vadd.f32 0.0, %v2966
      %v2968 = vpop.f32.mrf.mxu0
      %v2969 = vpop.f32.mrf.mxu0
      %v2970 = vpop.f32.mrf.mxu0
      %2971 = vdwg.mxu0
      %2973 = vrot.lane.b32.xlu0 %v2432, 96
      %v2974 = vpop.permute.xlu0 %2973
      %v2976 = vsel %vm1198, %v2916, 0
      %v2979 = vsel %vm1697, %v2974, 0
      %2981 = vmatprep.subr.bf16.mxu0 0
      %2982 = vmatpush1.bf16.msra.mxu0 0
      %2983 = vmatprep.subr.bf16.mxu0 0
      %2984 = vmatpush1.bf16.msra.mxu0 0
      %2985 = vmatprep.subr.bf16.mxu0 0
      %2986 = vmatpush1.bf16.msra.mxu0 0
      %2987 = vmatprep.subr.bf16.mxu0 0
      %2988 = vmatpush1.bf16.msra.mxu0 0
      %2989 = vmatprep.subr.bf16.mxu0 0
      %2990 = vmatpush1.bf16.msra.mxu0 0
      %2991 = vmatprep.subr.bf16.mxu0 0
      %2992 = vmatpush1.bf16.msra.mxu0 0
      %2993 = vmatprep.subr.bf16.mxu0 0
      %2994 = vmatpush1.bf16.msra.mxu0 0
      %2995 = vmatprep.subr.bf16.mxu0 0
      %2996 = vmatpush1.bf16.msra.mxu0 %v2979
      %2997 = vmatprep.subr.bf16.mxu0 0
      %2998 = vmatpush2.bf16.msra.mxu0 0
      %2999 = vmatprep.subr.bf16.mxu0 0
      %3000 = vmatpush2.bf16.msra.mxu0 0
      %3001 = vmatprep.subr.bf16.mxu0 0
      %3002 = vmatpush2.bf16.msra.mxu0 0
      %3003 = vmatprep.subr.bf16.mxu0 0
      %3004 = vmatpush2.bf16.msra.mxu0 0
      %3005 = vmatprep.subr.bf16.mxu0 0
      %3006 = vmatpush2.bf16.msra.mxu0 0
      %3007 = vmatprep.subr.bf16.mxu0 0
      %3008 = vmatpush2.bf16.msra.mxu0 0
      %3009 = vmatprep.subr.bf16.mxu0 0
      %3010 = vmatpush2.bf16.msra.mxu0 0
      %3011 = vmatprep.subr.bf16.mxu0 0
      %3012 = vmatpush2.bf16.msra.mxu0 0
      %3013 = vmatprep.mubr.bf16.mxu0 0
      %3014 = vmatmul.mubr.bf16.gmra.mxu0 %v2976
      %v3015 = vpop.f32.mrf.mxu0
      %v3016 = vadd.f32 0.0, %v3015
      %v3017 = vpop.f32.mrf.mxu0
      %v3018 = vpop.f32.mrf.mxu0
      %v3019 = vpop.f32.mrf.mxu0
      %3020 = vdwg.mxu0
      %3022 = vrot.lane.b32.xlu0 %v2433, 96
      %v3023 = vpop.permute.xlu0 %3022
      %v3025 = vsel %vm1198, %v2917, 0
      %v3028 = vsel %vm1697, %v3023, 0
      %3030 = vmatprep.subr.bf16.mxu0 0
      %3031 = vmatpush1.bf16.msra.mxu0 0
      %3032 = vmatprep.subr.bf16.mxu0 0
      %3033 = vmatpush1.bf16.msra.mxu0 0
      %3034 = vmatprep.subr.bf16.mxu0 0
      %3035 = vmatpush1.bf16.msra.mxu0 0
      %3036 = vmatprep.subr.bf16.mxu0 0
      %3037 = vmatpush1.bf16.msra.mxu0 0
      %3038 = vmatprep.subr.bf16.mxu0 0
      %3039 = vmatpush1.bf16.msra.mxu0 0
      %3040 = vmatprep.subr.bf16.mxu0 0
      %3041 = vmatpush1.bf16.msra.mxu0 0
      %3042 = vmatprep.subr.bf16.mxu0 0
      %3043 = vmatpush1.bf16.msra.mxu0 0
      %3044 = vmatprep.subr.bf16.mxu0 0
      %3045 = vmatpush1.bf16.msra.mxu0 %v3028
      %3046 = vmatprep.subr.bf16.mxu0 0
      %3047 = vmatpush2.bf16.msra.mxu0 0
      %3048 = vmatprep.subr.bf16.mxu0 0
      %3049 = vmatpush2.bf16.msra.mxu0 0
      %3050 = vmatprep.subr.bf16.mxu0 0
      %3051 = vmatpush2.bf16.msra.mxu0 0
      %3052 = vmatprep.subr.bf16.mxu0 0
      %3053 = vmatpush2.bf16.msra.mxu0 0
      %3054 = vmatprep.subr.bf16.mxu0 0
      %3055 = vmatpush2.bf16.msra.mxu0 0
      %3056 = vmatprep.subr.bf16.mxu0 0
      %3057 = vmatpush2.bf16.msra.mxu0 0
      %3058 = vmatprep.subr.bf16.mxu0 0
      %3059 = vmatpush2.bf16.msra.mxu0 0
      %3060 = vmatprep.subr.bf16.mxu0 0
      %3061 = vmatpush2.bf16.msra.mxu0 0
      %3062 = vmatprep.mubr.bf16.mxu0 0
      %3063 = vmatmul.mubr.bf16.gmra.mxu0 %v3025
      %v3064 = vpop.f32.mrf.mxu0
      %v3065 = vadd.f32 0.0, %v3064
      %v3066 = vpop.f32.mrf.mxu0
      %v3067 = vpop.f32.mrf.mxu0
      %v3068 = vpop.f32.mrf.mxu0
      %3069 = vdwg.mxu0
      %3071 = vrot.lane.b32.xlu0 %v2434, 96
      %v3072 = vpop.permute.xlu0 %3071
      %v3074 = vsel %vm1198, %v2918, 0
      %v3077 = vsel %vm1697, %v3072, 0
      %3079 = vmatprep.subr.bf16.mxu0 0
      %3080 = vmatpush1.bf16.msra.mxu0 0
      %3081 = vmatprep.subr.bf16.mxu0 0
      %3082 = vmatpush1.bf16.msra.mxu0 0
      %3083 = vmatprep.subr.bf16.mxu0 0
      %3084 = vmatpush1.bf16.msra.mxu0 0
      %3085 = vmatprep.subr.bf16.mxu0 0
      %3086 = vmatpush1.bf16.msra.mxu0 0
      %3087 = vmatprep.subr.bf16.mxu0 0
      %3088 = vmatpush1.bf16.msra.mxu0 0
      %3089 = vmatprep.subr.bf16.mxu0 0
      %3090 = vmatpush1.bf16.msra.mxu0 0
      %3091 = vmatprep.subr.bf16.mxu0 0
      %3092 = vmatpush1.bf16.msra.mxu0 0
      %3093 = vmatprep.subr.bf16.mxu0 0
      %3094 = vmatpush1.bf16.msra.mxu0 %v3077
      %3095 = vmatprep.subr.bf16.mxu0 0
      %3096 = vmatpush2.bf16.msra.mxu0 0
      %3097 = vmatprep.subr.bf16.mxu0 0
      %3098 = vmatpush2.bf16.msra.mxu0 0
      %3099 = vmatprep.subr.bf16.mxu0 0
      %3100 = vmatpush2.bf16.msra.mxu0 0
      %3101 = vmatprep.subr.bf16.mxu0 0
      %3102 = vmatpush2.bf16.msra.mxu0 0
      %3103 = vmatprep.subr.bf16.mxu0 0
      %3104 = vmatpush2.bf16.msra.mxu0 0
      %3105 = vmatprep.subr.bf16.mxu0 0
      %3106 = vmatpush2.bf16.msra.mxu0 0
      %3107 = vmatprep.subr.bf16.mxu0 0
      %3108 = vmatpush2.bf16.msra.mxu0 0
      %3109 = vmatprep.subr.bf16.mxu0 0
      %3110 = vmatpush2.bf16.msra.mxu0 0
      %3111 = vmatprep.mubr.bf16.mxu0 0
      %3112 = vmatmul.mubr.bf16.gmra.mxu0 %v3074
      %v3113 = vpop.f32.mrf.mxu0
      %v3114 = vadd.f32 0.0, %v3113
      %v3115 = vpop.f32.mrf.mxu0
      %v3116 = vpop.f32.mrf.mxu0
      %v3117 = vpop.f32.mrf.mxu0
      %3118 = vdwg.mxu0
      %3120 = vrot.lane.b32.xlu0 %v2435, 96
      %v3121 = vpop.permute.xlu0 %3120
      %v3123 = vsel %vm1198, %v2919, 0
      %v3126 = vsel %vm1697, %v3121, 0
      %3128 = vmatprep.subr.bf16.mxu0 0
      %3129 = vmatpush1.bf16.msra.mxu0 0
      %3130 = vmatprep.subr.bf16.mxu0 0
      %3131 = vmatpush1.bf16.msra.mxu0 0
      %3132 = vmatprep.subr.bf16.mxu0 0
      %3133 = vmatpush1.bf16.msra.mxu0 0
      %3134 = vmatprep.subr.bf16.mxu0 0
      %3135 = vmatpush1.bf16.msra.mxu0 0
      %3136 = vmatprep.subr.bf16.mxu0 0
      %3137 = vmatpush1.bf16.msra.mxu0 0
      %3138 = vmatprep.subr.bf16.mxu0 0
      %3139 = vmatpush1.bf16.msra.mxu0 0
      %3140 = vmatprep.subr.bf16.mxu0 0
      %3141 = vmatpush1.bf16.msra.mxu0 0
      %3142 = vmatprep.subr.bf16.mxu0 0
      %3143 = vmatpush1.bf16.msra.mxu0 %v3126
      %3144 = vmatprep.subr.bf16.mxu0 0
      %3145 = vmatpush2.bf16.msra.mxu0 0
      %3146 = vmatprep.subr.bf16.mxu0 0
      %3147 = vmatpush2.bf16.msra.mxu0 0
      %3148 = vmatprep.subr.bf16.mxu0 0
      %3149 = vmatpush2.bf16.msra.mxu0 0
      %3150 = vmatprep.subr.bf16.mxu0 0
      %3151 = vmatpush2.bf16.msra.mxu0 0
      %3152 = vmatprep.subr.bf16.mxu0 0
      %3153 = vmatpush2.bf16.msra.mxu0 0
      %3154 = vmatprep.subr.bf16.mxu0 0
      %3155 = vmatpush2.bf16.msra.mxu0 0
      %3156 = vmatprep.subr.bf16.mxu0 0
      %3157 = vmatpush2.bf16.msra.mxu0 0
      %3158 = vmatprep.subr.bf16.mxu0 0
      %3159 = vmatpush2.bf16.msra.mxu0 0
      %3160 = vmatprep.mubr.bf16.mxu0 0
      %3161 = vmatmul.mubr.bf16.gmra.mxu0 %v3123
      %v3162 = vpop.f32.mrf.mxu0
      %v3163 = vadd.f32 0.0, %v3162
      %v3164 = vpop.f32.mrf.mxu0
      %v3165 = vpop.f32.mrf.mxu0
      %v3166 = vpop.f32.mrf.mxu0
      %3167 = vdwg.mxu0
      %3169 = vrot.lane.b32.xlu0 %v2436, 96
      %v3170 = vpop.permute.xlu0 %3169
      %v3172 = vsel %vm1198, %v2920, 0
      %v3175 = vsel %vm1697, %v3170, 0
      %3177 = vmatprep.subr.bf16.mxu0 0
      %3178 = vmatpush1.bf16.msra.mxu0 0
      %3179 = vmatprep.subr.bf16.mxu0 0
      %3180 = vmatpush1.bf16.msra.mxu0 0
      %3181 = vmatprep.subr.bf16.mxu0 0
      %3182 = vmatpush1.bf16.msra.mxu0 0
      %3183 = vmatprep.subr.bf16.mxu0 0
      %3184 = vmatpush1.bf16.msra.mxu0 0
      %3185 = vmatprep.subr.bf16.mxu0 0
      %3186 = vmatpush1.bf16.msra.mxu0 0
      %3187 = vmatprep.subr.bf16.mxu0 0
      %3188 = vmatpush1.bf16.msra.mxu0 0
      %3189 = vmatprep.subr.bf16.mxu0 0
      %3190 = vmatpush1.bf16.msra.mxu0 0
      %3191 = vmatprep.subr.bf16.mxu0 0
      %3192 = vmatpush1.bf16.msra.mxu0 %v3175
      %3193 = vmatprep.subr.bf16.mxu0 0
      %3194 = vmatpush2.bf16.msra.mxu0 0
      %3195 = vmatprep.subr.bf16.mxu0 0
      %3196 = vmatpush2.bf16.msra.mxu0 0
      %3197 = vmatprep.subr.bf16.mxu0 0
      %3198 = vmatpush2.bf16.msra.mxu0 0
      %3199 = vmatprep.subr.bf16.mxu0 0
      %3200 = vmatpush2.bf16.msra.mxu0 0
      %3201 = vmatprep.subr.bf16.mxu0 0
      %3202 = vmatpush2.bf16.msra.mxu0 0
      %3203 = vmatprep.subr.bf16.mxu0 0
      %3204 = vmatpush2.bf16.msra.mxu0 0
      %3205 = vmatprep.subr.bf16.mxu0 0
      %3206 = vmatpush2.bf16.msra.mxu0 0
      %3207 = vmatprep.subr.bf16.mxu0 0
      %3208 = vmatpush2.bf16.msra.mxu0 0
      %3209 = vmatprep.mubr.bf16.mxu0 0
      %3210 = vmatmul.mubr.bf16.gmra.mxu0 %v3172
      %v3211 = vpop.f32.mrf.mxu0
      %v3212 = vadd.f32 0.0, %v3211
      %v3213 = vpop.f32.mrf.mxu0
      %v3214 = vpop.f32.mrf.mxu0
      %v3215 = vpop.f32.mrf.mxu0
      %3216 = vdwg.mxu0
      %3218 = vrot.lane.b32.xlu0 %v2437, 96
      %v3219 = vpop.permute.xlu0 %3218
      %v3221 = vsel %vm1198, %v2921, 0
      %v3224 = vsel %vm1697, %v3219, 0
      %3226 = vmatprep.subr.bf16.mxu0 0
      %3227 = vmatpush1.bf16.msra.mxu0 0
      %3228 = vmatprep.subr.bf16.mxu0 0
      %3229 = vmatpush1.bf16.msra.mxu0 0
      %3230 = vmatprep.subr.bf16.mxu0 0
      %3231 = vmatpush1.bf16.msra.mxu0 0
      %3232 = vmatprep.subr.bf16.mxu0 0
      %3233 = vmatpush1.bf16.msra.mxu0 0
      %3234 = vmatprep.subr.bf16.mxu0 0
      %3235 = vmatpush1.bf16.msra.mxu0 0
      %3236 = vmatprep.subr.bf16.mxu0 0
      %3237 = vmatpush1.bf16.msra.mxu0 0
      %3238 = vmatprep.subr.bf16.mxu0 0
      %3239 = vmatpush1.bf16.msra.mxu0 0
      %3240 = vmatprep.subr.bf16.mxu0 0
      %3241 = vmatpush1.bf16.msra.mxu0 %v3224
      %3242 = vmatprep.subr.bf16.mxu0 0
      %3243 = vmatpush2.bf16.msra.mxu0 0
      %3244 = vmatprep.subr.bf16.mxu0 0
      %3245 = vmatpush2.bf16.msra.mxu0 0
      %3246 = vmatprep.subr.bf16.mxu0 0
      %3247 = vmatpush2.bf16.msra.mxu0 0
      %3248 = vmatprep.subr.bf16.mxu0 0
      %3249 = vmatpush2.bf16.msra.mxu0 0
      %3250 = vmatprep.subr.bf16.mxu0 0
      %3251 = vmatpush2.bf16.msra.mxu0 0
      %3252 = vmatprep.subr.bf16.mxu0 0
      %3253 = vmatpush2.bf16.msra.mxu0 0
      %3254 = vmatprep.subr.bf16.mxu0 0
      %3255 = vmatpush2.bf16.msra.mxu0 0
      %3256 = vmatprep.subr.bf16.mxu0 0
      %3257 = vmatpush2.bf16.msra.mxu0 0
      %3258 = vmatprep.mubr.bf16.mxu0 0
      %3259 = vmatmul.mubr.bf16.gmra.mxu0 %v3221
      %v3260 = vpop.f32.mrf.mxu0
      %v3261 = vadd.f32 0.0, %v3260
      %v3262 = vpop.f32.mrf.mxu0
      %v3263 = vpop.f32.mrf.mxu0
      %v3264 = vpop.f32.mrf.mxu0
      %3265 = vdwg.mxu0
      %3267 = vrot.lane.b32.xlu0 %v2438, 96
      %v3268 = vpop.permute.xlu0 %3267
      %v3270 = vsel %vm1198, %v2922, 0
      %v3273 = vsel %vm1697, %v3268, 0
      %3275 = vmatprep.subr.bf16.mxu0 0
      %3276 = vmatpush1.bf16.msra.mxu0 0
      %3277 = vmatprep.subr.bf16.mxu0 0
      %3278 = vmatpush1.bf16.msra.mxu0 0
      %3279 = vmatprep.subr.bf16.mxu0 0
      %3280 = vmatpush1.bf16.msra.mxu0 0
      %3281 = vmatprep.subr.bf16.mxu0 0
      %3282 = vmatpush1.bf16.msra.mxu0 0
      %3283 = vmatprep.subr.bf16.mxu0 0
      %3284 = vmatpush1.bf16.msra.mxu0 0
      %3285 = vmatprep.subr.bf16.mxu0 0
      %3286 = vmatpush1.bf16.msra.mxu0 0
      %3287 = vmatprep.subr.bf16.mxu0 0
      %3288 = vmatpush1.bf16.msra.mxu0 0
      %3289 = vmatprep.subr.bf16.mxu0 0
      %3290 = vmatpush1.bf16.msra.mxu0 %v3273
      %3291 = vmatprep.subr.bf16.mxu0 0
      %3292 = vmatpush2.bf16.msra.mxu0 0
      %3293 = vmatprep.subr.bf16.mxu0 0
      %3294 = vmatpush2.bf16.msra.mxu0 0
      %3295 = vmatprep.subr.bf16.mxu0 0
      %3296 = vmatpush2.bf16.msra.mxu0 0
      %3297 = vmatprep.subr.bf16.mxu0 0
      %3298 = vmatpush2.bf16.msra.mxu0 0
      %3299 = vmatprep.subr.bf16.mxu0 0
      %3300 = vmatpush2.bf16.msra.mxu0 0
      %3301 = vmatprep.subr.bf16.mxu0 0
      %3302 = vmatpush2.bf16.msra.mxu0 0
      %3303 = vmatprep.subr.bf16.mxu0 0
      %3304 = vmatpush2.bf16.msra.mxu0 0
      %3305 = vmatprep.subr.bf16.mxu0 0
      %3306 = vmatpush2.bf16.msra.mxu0 0
      %3307 = vmatprep.mubr.bf16.mxu0 0
      %3308 = vmatmul.mubr.bf16.gmra.mxu0 %v3270
      %v3309 = vpop.f32.mrf.mxu0
      %v3310 = vadd.f32 0.0, %v3309
      %v3311 = vpop.f32.mrf.mxu0
      %v3312 = vpop.f32.mrf.mxu0
      %v3313 = vpop.f32.mrf.mxu0
      %3314 = vdwg.mxu0
      %3317 = vrot.lane.b32.xlu0 %v3065, 8
      %v3318 = vpop.permute.xlu0 %3317
      %3319 = vrot.lane.b32.xlu0 %v3114, 8
      %v3320 = vpop.permute.xlu0 %3319
      %3325 = vrot.lane.b32.xlu0 %v3163, 16
      %v3326 = vpop.permute.xlu0 %3325
      %3327 = vrot.lane.b32.xlu0 %v3212, 16
      %v3328 = vpop.permute.xlu0 %3327
      %3333 = vrot.lane.b32.xlu0 %v3261, 24
      %v3334 = vpop.permute.xlu0 %3333
      %3335 = vrot.lane.b32.xlu0 %v3310, 24
      %v3336 = vpop.permute.xlu0 %3335
      %v3339 = vsel %vm1198, %v2967, %v3318
      %v3340 = vsel %vm1198, %v3016, %v3320
      %v3341 = vsel %vm2103, %v3339, %v3326
      %v3342 = vsel %vm2103, %v3340, %v3328
      %v3343 = vsel %vm2106, %v3341, %v3334
      %v3344 = vsel %vm2106, %v3342, %v3336
      %v3345 = vpack.c.bf16 %v3344, %v3343
      %v3346 = vld [vmem:[%s993] sm:$0xf]
      %v3347 = vld [vmem:[%s993 + $0x4] sm:$0xf]
      %v3348 = vld [vmem:[%s993 + $0x8] sm:$0xf]
      %v3349 = vld [vmem:[%s993 + $0xc] sm:$0xf]
      %v3354 = vunpack.c.l.b16 %v3346
      %v3355 = vunpack.c.l.b16 %v3347
      %v3356 = vunpack.c.l.b16 %v3348
      %v3357 = vunpack.c.l.b16 %v3349
      %v3358 = vpack.c.b16 %v3355, %v3354
      %v3359 = vpack.c.b16 %v3357, %v3356
      %v3363 = vsel %vm1039, %v3345, 0
      %3365 = vmatprep.subr.bf16.mxu0 0
      %3366 = vmatpush1.bf16.msra.mxu0 0
      %3367 = vmatprep.subr.bf16.mxu0 0
      %3368 = vmatpush1.bf16.msra.mxu0 0
      %3369 = vmatprep.subr.bf16.mxu0 0
      %3370 = vmatpush1.bf16.msra.mxu0 0
      %3371 = vmatprep.subr.bf16.mxu0 0
      %3372 = vmatpush1.bf16.msra.mxu0 0
      %3373 = vmatprep.subr.bf16.mxu0 0
      %3374 = vmatpush1.bf16.msra.mxu0 0
      %3375 = vmatprep.subr.bf16.mxu0 0
      %3376 = vmatpush1.bf16.msra.mxu0 0
      %3377 = vmatprep.subr.bf16.mxu0 0
      %3378 = vmatpush1.bf16.msra.mxu0 %v3359
      %3379 = vmatprep.subr.bf16.mxu0 0
      %3380 = vmatpush1.bf16.msra.mxu0 %v3358
      %3381 = vmatprep.subr.bf16.mxu0 0
      %3382 = vmatpush2.bf16.msra.mxu0 0
      %3383 = vmatprep.subr.bf16.mxu0 0
      %3384 = vmatpush2.bf16.msra.mxu0 0
      %3385 = vmatprep.subr.bf16.mxu0 0
      %3386 = vmatpush2.bf16.msra.mxu0 0
      %3387 = vmatprep.subr.bf16.mxu0 0
      %3388 = vmatpush2.bf16.msra.mxu0 0
      %3389 = vmatprep.subr.bf16.mxu0 0
      %3390 = vmatpush2.bf16.msra.mxu0 0
      %3391 = vmatprep.subr.bf16.mxu0 0
      %3392 = vmatpush2.bf16.msra.mxu0 0
      %3393 = vmatprep.subr.bf16.mxu0 0
      %3394 = vmatpush2.bf16.msra.mxu0 0
      %3395 = vmatprep.subr.bf16.mxu0 0
      %3396 = vmatpush2.bf16.msra.mxu0 0
      %3397 = vmatprep.mubr.bf16.mxu0 0
      %3398 = vmatmul.mubr.bf16.gmra.mxu0 %v3363
      %v3399 = vpop.f32.mrf.mxu0
      %v3400 = vadd.f32 0.0, %v3399
      %v3401 = vpop.f32.mrf.mxu0
      %v3402 = vpop.f32.mrf.mxu0
      %v3403 = vadd.f32 0.0, %v3402
      %v3404 = vpop.f32.mrf.mxu0
      %3405 = vdwg.mxu0
      %v3406 = vadd.f32 %v2179, %v3400
      %v3407 = vadd.f32 %v2180, %v3403
      %v3408 = vld [vmem:[%s996] sm:$0x1]
      %v3410 = vlaneseq
      %v3411 = vshrl.u32 %v3410, 7
      %v3412 = vsub.s32 0, %v3411
      %v3413 = vrot.slane %v3408, %v3412
      %v3415 = vadd.f32 %v3406, %v3413
      %v3416 = vadd.f32 %v3407, %v3413
      %v3417 = vld [vmem:[%s1021] sm:$0x1]
      %v3418 = vld [vmem:[%s1024] sm:$0x1]
      %v3419 = vsel %vm1039, %v3415, 0.0
      %3420 = vadd.xlane.f32.xlu0 %v3419
      %v3421 = vpop.xlane.xlu0 %3420
      %v3422 = vsel %vm1039, %v3416, 0.0
      %3423 = vadd.xlane.f32.xlu0 %v3422
      %v3424 = vpop.xlane.xlu0 %3423
      %v3425 = vmul.f32 %v3421, %v1046
      %v3426 = vmul.f32 %v3424, %v1046
      %v3427 = vsub.f32 %v3415, %v3425
      %v3428 = vsub.f32 %v3416, %v3426
      %v3429 = vmul.f32 %v3427, %v3427
      %v3430 = vmul.f32 %v3428, %v3428
      %v3431 = vsel %vm1039, %v3429, 0.0
      %3432 = vadd.xlane.f32.xlu0 %v3431
      %v3433 = vpop.xlane.xlu0 %3432
      %v3434 = vsel %vm1039, %v3430, 0.0
      %3435 = vadd.xlane.f32.xlu0 %v3434
      %v3436 = vpop.xlane.xlu0 %3435
      %v3437 = vmul.f32 %v3433, 0.032258064
      %v3438 = vmul.f32 %v3436, 0.032258064
      %v3439 = vrsqrt.pop %v3437
      %v3440 = vmul.f32 %v3437, %v3439
      %vm3441 = vcmp.eq.f32.partialorder %v3437, inf
      %v3442 = vsel %vm3441, %v3437, %v3440
      %vm3443 = vcmp.eq.f32.partialorder %v3437, 0.0
      %v3444 = vand.u32 %v3437, 2147483648
      %v3445 = vsel %vm3443, %v3444, %v3442
      %v3446 = vrsqrt.pop %v3438
      %v3447 = vmul.f32 %v3438, %v3446
      %vm3448 = vcmp.eq.f32.partialorder %v3438, inf
      %v3449 = vsel %vm3448, %v3438, %v3447
      %vm3450 = vcmp.eq.f32.partialorder %v3438, 0.0
      %v3451 = vand.u32 %v3438, 2147483648
      %v3452 = vsel %vm3450, %v3451, %v3449
      %v3453 = vadd.f32 %v3445, 1e-06
      %v3454 = vadd.f32 %v3452, 1e-06
      %v3455 = vrcp.pop %v3453
      %v3456 = vrcp.pop %v3454
      %v3458 = vlaneseq
      %v3459 = vshrl.u32 %v3458, 7
      %v3460 = vsub.s32 0, %v3459
      %v3461 = vrot.slane %v3417, %v3460
      %v3463 = vmul.f32 %v3461, %v3427
      %v3464 = vmul.f32 %v3461, %v3428
      %v3465 = vmul.f32 %v3463, %v3455
      %v3466 = vmul.f32 %v3464, %v3456
      %v3468 = vlaneseq
      %v3469 = vshrl.u32 %v3468, 7
      %v3470 = vsub.s32 0, %v3469
      %v3471 = vrot.slane %v3418, %v3470
      %v3473 = vadd.f32 %v3465, %v3471
      %v3474 = vadd.f32 %v3466, %v3471
      %v3475 = vpack.c.bf16 %v3474, %v3473
      %v3476 = vld [vmem:[%s1007] sm:$0xf]
      %v3477 = vld [vmem:[%s1007 + $0x4] sm:$0xf]
      %v3478 = vld [vmem:[%s1007 + $0x8] sm:$0xf]
      %v3479 = vld [vmem:[%s1007 + $0xc] sm:$0xf]
      %v3480 = vld [vmem:[%s1010] sm:$0x1]
      %v3482 = vlaneseq
      %v3483 = vshrl.u32 %v3482, 7
      %v3484 = vsub.s32 0, %v3483
      %v3485 = vrot.slane %v3480, %v3484
      %v3491 = vunpack.c.l.b16 %v3476
      %v3492 = vunpack.c.l.b16 %v3477
      %v3493 = vunpack.c.l.b16 %v3478
      %v3494 = vunpack.c.l.b16 %v3479
      %v3495 = vpack.c.b16 %v3492, %v3491
      %v3496 = vpack.c.b16 %v3494, %v3493
      %v3500 = vsel %vm1039, %v3475, 0
      %3502 = vmatprep.subr.bf16.mxu0 0
      %3503 = vmatpush1.bf16.msra.mxu0 0
      %3504 = vmatprep.subr.bf16.mxu0 0
      %3505 = vmatpush1.bf16.msra.mxu0 0
      %3506 = vmatprep.subr.bf16.mxu0 0
      %3507 = vmatpush1.bf16.msra.mxu0 0
      %3508 = vmatprep.subr.bf16.mxu0 0
      %3509 = vmatpush1.bf16.msra.mxu0 0
      %3510 = vmatprep.subr.bf16.mxu0 0
      %3511 = vmatpush1.bf16.msra.mxu0 0
      %3512 = vmatprep.subr.bf16.mxu0 0
      %3513 = vmatpush1.bf16.msra.mxu0 0
      %3514 = vmatprep.subr.bf16.mxu0 0
      %3515 = vmatpush1.bf16.msra.mxu0 %v3496
      %3516 = vmatprep.subr.bf16.mxu0 0
      %3517 = vmatpush1.bf16.msra.mxu0 %v3495
      %3518 = vmatprep.subr.bf16.mxu0 0
      %3519 = vmatpush2.bf16.msra.mxu0 0
      %3520 = vmatprep.subr.bf16.mxu0 0
      %3521 = vmatpush2.bf16.msra.mxu0 0
      %3522 = vmatprep.subr.bf16.mxu0 0
      %3523 = vmatpush2.bf16.msra.mxu0 0
      %3524 = vmatprep.subr.bf16.mxu0 0
      %3525 = vmatpush2.bf16.msra.mxu0 0
      %3526 = vmatprep.subr.bf16.mxu0 0
      %3527 = vmatpush2.bf16.msra.mxu0 0
      %3528 = vmatprep.subr.bf16.mxu0 0
      %3529 = vmatpush2.bf16.msra.mxu0 0
      %3530 = vmatprep.subr.bf16.mxu0 0
      %3531 = vmatpush2.bf16.msra.mxu0 0
      %3532 = vmatprep.subr.bf16.mxu0 0
      %3533 = vmatpush2.bf16.msra.mxu0 0
      %3534 = vmatprep.mubr.bf16.mxu0 0
      %3535 = vmatmul.mubr.bf16.gmra.mxu0 %v3500
      %v3536 = vpop.f32.mrf.mxu0
      %v3537 = vadd.f32 %v3485, %v3536
      %v3538 = vpop.f32.mrf.mxu0
      %v3539 = vpop.f32.mrf.mxu0
      %v3540 = vadd.f32 %v3485, %v3539
      %v3541 = vpop.f32.mrf.mxu0
      %3542 = vdwg.mxu0
      %v3543 = vmax.f32 %v3537, 0.0
      %v3544 = vmax.f32 %v3540, 0.0
      %v3545 = vpack.c.bf16 %v3544, %v3543
      %v3546 = vld [vmem:[%s1015] sm:$0xf]
      %v3547 = vld [vmem:[%s1015 + $0x4] sm:$0xf]
      %v3548 = vld [vmem:[%s1015 + $0x8] sm:$0xf]
      %v3549 = vld [vmem:[%s1015 + $0xc] sm:$0xf]
      %v3550 = vld [vmem:[%s1015 + $0x10] sm:$0xf]
      %v3551 = vld [vmem:[%s1015 + $0x14] sm:$0xf]
      %v3552 = vld [vmem:[%s1015 + $0x18] sm:$0xf]
      %v3553 = vld [vmem:[%s1015 + $0x1c] sm:$0xf]
      %v3562 = vunpack.c.l.b16 %v3546
      %v3563 = vunpack.c.l.b16 %v3547
      %v3564 = vunpack.c.l.b16 %v3548
      %v3565 = vunpack.c.l.b16 %v3549
      %v3566 = vunpack.c.l.b16 %v3550
      %v3567 = vunpack.c.l.b16 %v3551
      %v3568 = vunpack.c.l.b16 %v3552
      %v3569 = vunpack.c.l.b16 %v3553
      %v3570 = vpack.c.b16 %v3563, %v3562
      %v3571 = vpack.c.b16 %v3565, %v3564
      %v3572 = vpack.c.b16 %v3567, %v3566
      %v3573 = vpack.c.b16 %v3569, %v3568
      %vm3578 = vcmask 523264
      %v3580 = vsel %vm3578, %v3545, 0
      %3582 = vmatprep.subr.bf16.mxu0 0
      %3583 = vmatpush1.bf16.msra.mxu0 0
      %3584 = vmatprep.subr.bf16.mxu0 0
      %3585 = vmatpush1.bf16.msra.mxu0 0
      %3586 = vmatprep.subr.bf16.mxu0 0
      %3587 = vmatpush1.bf16.msra.mxu0 0
      %3588 = vmatprep.subr.bf16.mxu0 0
      %3589 = vmatpush1.bf16.msra.mxu0 0
      %3590 = vmatprep.subr.bf16.mxu0 0
      %3591 = vmatpush1.bf16.msra.mxu0 %v3573
      %3592 = vmatprep.subr.bf16.mxu0 0
      %3593 = vmatpush1.bf16.msra.mxu0 %v3572
      %3594 = vmatprep.subr.bf16.mxu0 0
      %3595 = vmatpush1.bf16.msra.mxu0 %v3571
      %3596 = vmatprep.subr.bf16.mxu0 0
      %3597 = vmatpush1.bf16.msra.mxu0 %v3570
      %3598 = vmatprep.subr.bf16.mxu0 0
      %3599 = vmatpush2.bf16.msra.mxu0 0
      %3600 = vmatprep.subr.bf16.mxu0 0
      %3601 = vmatpush2.bf16.msra.mxu0 0
      %3602 = vmatprep.subr.bf16.mxu0 0
      %3603 = vmatpush2.bf16.msra.mxu0 0
      %3604 = vmatprep.subr.bf16.mxu0 0
      %3605 = vmatpush2.bf16.msra.mxu0 0
      %3606 = vmatprep.subr.bf16.mxu0 0
      %3607 = vmatpush2.bf16.msra.mxu0 0
      %3608 = vmatprep.subr.bf16.mxu0 0
      %3609 = vmatpush2.bf16.msra.mxu0 0
      %3610 = vmatprep.subr.bf16.mxu0 0
      %3611 = vmatpush2.bf16.msra.mxu0 0
      %3612 = vmatprep.subr.bf16.mxu0 0
      %3613 = vmatpush2.bf16.msra.mxu0 0
      %3614 = vmatprep.mubr.bf16.mxu0 0
      %3615 = vmatmul.mubr.bf16.gmra.mxu0 %v3580
      %v3616 = vpop.f32.mrf.mxu0
      %v3617 = vadd.f32 0.0, %v3616
      %v3618 = vpop.f32.mrf.mxu0
      %v3619 = vpop.f32.mrf.mxu0
      %v3620 = vadd.f32 0.0, %v3619
      %v3621 = vpop.f32.mrf.mxu0
      %3622 = vdwg.mxu0
      %v3623 = vadd.f32 %v3415, %v3617
      %v3624 = vadd.f32 %v3416, %v3620
      %v3625 = vld [vmem:[%s1018] sm:$0x1]
      %v3627 = vlaneseq
      %v3628 = vshrl.u32 %v3627, 7
      %v3629 = vsub.s32 0, %v3628
      %v3630 = vrot.slane %v3625, %v3629
      %v3632 = vadd.f32 %v3623, %v3630
      %v3633 = vadd.f32 %v3624, %v3630
      %3634 = vst.msk [vmem:[%s24] sm:$0xff] %vm1039, %v3632
      %3635 = vst.msk [vmem:[%s24 + $0x8] sm:$0xff] %vm1039, %v3633
      // Predicated region
      $region121: #{transformer_forward.4} parent=115 // pred_check
        %p3636 = pneg %p652
      $region122: #{transformer_forward.4} parent=115 // pred_check_branch
        %3638 = sbr.rel (%p3636) target = $region124
      $region123: #{transformer_forward.4} parent=115 // pred_region
        _
      $region124: #{transformer_forward.4} parent=115 // pred_fallthru
        _
      // Predicated region
      $region125: #{transformer_forward.4} parent=115 // pred_check
        %p3639 = pneg %p652
      $region126: #{transformer_forward.4} parent=115 // pred_check_branch
        %3641 = sbr.rel (%p3639) target = $region128
      $region127: #{transformer_forward.4} parent=115 // pred_region
        _
      $region128: #{transformer_forward.4} parent=115 // pred_fallthru
        _
    $region116: #{transformer_forward.4} parent=5 // pred_fallthru
      _
    %p3642 = scmp.le.s32.totalorder 2, %s30
    // Predicated region
    $region129: #{transformer_forward.4} parent=5 // pred_check
      %p3643 = pneg %p3642
    $region130: #{transformer_forward.4} parent=5 // pred_check_branch
      %3645 = sbr.rel (%p3643) target = $region132
    $region131: #{transformer_forward.4} parent=5 // pred_region
      %s3646 = ssub.s32 %s30, 2
    $region132: #{transformer_forward.4} parent=5 // pred_fallthru
      _
  $region6: #{transformer_forward.4} parent=0 // loop_footer
    %s34 = sadd.s32 1, %s30
  $region7: #{transformer_forward.4} parent=0 // loop_footer_branch
    %29 = sbr.rel target = $region3
  $region8: #{transformer_forward.4} parent=0 // loop_exit
    _

</llo_original>
